<compile_context>
chip_gen: v7x
topology: tpu7x:2x2x1
jax: 0.10.0
libtpu: 0.0.40
codegen_flags: <defaults>
</compile_context>

<pallas_src>
import math
import functools

import jax
import jax.numpy as jnp
from jax.experimental import pallas as pl
from jax.experimental.pallas import tpu as pltpu

D_MODEL = 32
NHEAD = 4
D_HID = 64
NLAYERS = 2
LN_EPS = 1e-5

# Fixed ordering of the packed weight arguments, shared by wrapper and kernel.
_WEIGHT_ORDER = (
    # encoder layers (stacked over L)
    'e_wqkv', 'e_bqkv', 'e_wo', 'e_bo', 'e_w1', 'e_b1', 'e_w2', 'e_b2',
    'e_g1', 'e_be1', 'e_g2', 'e_be2',
    # decoder layers (stacked over L)
    'd_wqkv', 'd_bqkv', 'd_wo', 'd_bo',
    'd_wq_c', 'd_bq_c', 'd_wkv_c', 'd_bkv_c', 'd_wo_c', 'd_bo_c',
    'd_w1', 'd_b1', 'd_w2', 'd_b2',
    'd_g1', 'd_be1', 'd_g2', 'd_be2', 'd_g3', 'd_be3',
    # stack-final norms and the output Linear
    'enc_norm_g', 'enc_norm_b', 'dec_norm_g', 'dec_norm_b', 'final_w', 'final_b',
)

# Matmul weights stored in bf16 (f32 accumulation in-kernel); biases/LN params stay f32.
_BF16_KEYS = frozenset((
    'e_wqkv', 'e_wo', 'e_w1', 'e_w2',
    'd_wqkv', 'd_wo', 'd_wq_c', 'd_wkv_c', 'd_wo_c', 'd_w1', 'd_w2',
    'final_w',
))


# ----------------------------- in-kernel helpers (operate on values) -----------------------------

def _layer_norm(x, g, b):
    mean = jnp.mean(x, axis=-1, keepdims=True)
    c = x - mean
    var = jnp.mean(c * c, axis=-1, keepdims=True)
    return c * jax.lax.rsqrt(var + LN_EPS) * g + b


def _linear(x, w, b):
    # bf16 MXU inputs, f32 accumulation, f32 bias add.
    return jnp.dot(x.astype(w.dtype), w, preferred_element_type=jnp.float32) + b


def _attention(q, k, v, wo, bo, nhead):
    """Multi-head scaled-dot-product attention for one batch element.

    q: [Sq, d] f32, k/v: [Sk, d] f32 (already projected).  Heads are static lane
    slices; outputs are lane-concatenated and pushed through a single fused
    [Sq,d]@[d,d] output projection.
    """
    d = q.shape[-1]
    hd = d // nhead
    scale = 1.0 / math.sqrt(hd)
    qb = q.astype(jnp.bfloat16)
    kb = k.astype(jnp.bfloat16)
    vb = v.astype(jnp.bfloat16)
    heads = []
    for h in range(nhead):
        sl = slice(h * hd, (h + 1) * hd)
        # q_h @ k_h^T without materializing the transpose (contract last dims).
        s = jax.lax.dot_general(qb[:, sl], kb[:, sl], (((1,), (1,)), ((), ())),
                                preferred_element_type=jnp.float32) * scale
        m = jnp.max(s, axis=-1, keepdims=True)
        e = jnp.exp(s - m)
        # reciprocal goes to the EUP slot instead of burning VPU divide throughput
        p = e * pl.reciprocal(jnp.sum(e, axis=-1, keepdims=True), approx=True)
        heads.append(jnp.dot(p.astype(jnp.bfloat16), vb[:, sl],
                             preferred_element_type=jnp.float32))
    o = jnp.concatenate(heads, axis=-1)                       # [Sq, d] f32
    return jnp.dot(o.astype(wo.dtype), wo, preferred_element_type=jnp.float32) + bo


# ----------------------------- the single fused kernel (one batch element per grid step) ---------

def _transformer_kernel(*refs, nhead, nlayers, d_model):
    it = iter(refs)
    src_ref, tgt_ref, pe_ref = next(it), next(it), next(it)
    p = {k: next(it) for k in _WEIGHT_ORDER}
    out_ref = next(it)
    d = d_model

    # Positional encoding indexed by the *batch* dim (original module's quirk).
    pe = pe_ref[0]                                            # [1, d]
    # TODO(synk): dropout (p=0.5) treated as identity (inference semantics).

    # ---------------- encoder stack ----------------
    x = src_ref[0].T + pe                                     # in-kernel NCL->NLD transpose, [S_src, d]
    for l in range(nlayers):
        qkv = _linear(x, p['e_wqkv'][l], p['e_bqkv'][l])                      # [S, 3d]
        sa = _attention(qkv[:, :d], qkv[:, d:2 * d], qkv[:, 2 * d:],
                        p['e_wo'][l], p['e_bo'][l], nhead)
        x = _layer_norm(x + sa, p['e_g1'][l], p['e_be1'][l])
        h = jnp.maximum(_linear(x, p['e_w1'][l], p['e_b1'][l]), 0.0)
        x = _layer_norm(x + _linear(h, p['e_w2'][l], p['e_b2'][l]),
                        p['e_g2'][l], p['e_be2'][l])
    mem = _layer_norm(x, p['enc_norm_g'][...], p['enc_norm_b'][...])          # encoder final norm

    # ---------------- decoder stack ----------------
    y = tgt_ref[0].T + pe                                     # [S_tgt, d]
    for l in range(nlayers):
        qkv = _linear(y, p['d_wqkv'][l], p['d_bqkv'][l])                      # self-attn fused QKV
        sa = _attention(qkv[:, :d], qkv[:, d:2 * d], qkv[:, 2 * d:],
                        p['d_wo'][l], p['d_bo'][l], nhead)
        y = _layer_norm(y + sa, p['d_g1'][l], p['d_be1'][l])
        q = _linear(y, p['d_wq_c'][l], p['d_bq_c'][l])                        # cross-attn Q from y
        kv = _linear(mem, p['d_wkv_c'][l], p['d_bkv_c'][l])                   # cross-attn KV from memory
        ca = _attention(q, kv[:, :d], kv[:, d:],
                        p['d_wo_c'][l], p['d_bo_c'][l], nhead)
        y = _layer_norm(y + ca, p['d_g2'][l], p['d_be2'][l])
        h = jnp.maximum(_linear(y, p['d_w1'][l], p['d_b1'][l]), 0.0)
        y = _layer_norm(y + _linear(h, p['d_w2'][l], p['d_b2'][l]),
                        p['d_g3'][l], p['d_be3'][l])
    y = _layer_norm(y, p['dec_norm_g'][...], p['dec_norm_b'][...])            # decoder final norm

    # final nn.Linear ("decoder" in the PyTorch module), written back already transposed (NLD->NCL)
    out = _linear(y, p['final_w'][...], p['final_b'][...])                    # [S_tgt, d] f32
    out_ref[0] = out.T                                                        # [d, S_tgt]


# ----------------------------- wrapper (one pallas_call per forward) -----------------------------

def transformer_forward(src, tgt, packed, *, nhead=NHEAD):
    # src, tgt: [batch, d_model, seq] (the module's NCL inputs, matching permute(0, 2, 1))
    B, d, S_src = src.shape
    S_tgt = tgt.shape[2]
    nlayers = packed['e_wqkv'].shape[0]

    weights = [packed[k] for k in _WEIGHT_ORDER]

    in_specs = [
        pl.BlockSpec((1, d, S_src), lambda b: (b, 0, 0)),     # src   [B, d, S_src]
        pl.BlockSpec((1, d, S_tgt), lambda b: (b, 0, 0)),     # tgt   [B, d, S_tgt]
        pl.BlockSpec((1, 1, d), lambda b: (b, 0, 0)),         # pe    [max_len, 1, d] (batch-indexed quirk)
    ]
    # Whole-array blocks with constant index maps: weights are DMA'd once and stay
    # VMEM-resident across the batch grid (total footprint ~100 KB).
    in_specs += [pl.BlockSpec(w.shape, lambda b, n=w.ndim: (0,) * n) for w in weights]

    kernel = functools.partial(_transformer_kernel, nhead=nhead,
                               nlayers=nlayers, d_model=d)
    return pl.pallas_call(
        kernel,
        out_shape=jax.ShapeDtypeStruct((B, d, S_tgt), jnp.float32),
        grid=(B,),
        in_specs=in_specs,
        out_specs=pl.BlockSpec((1, d, S_tgt), lambda b: (b, 0, 0)),
        compiler_params=pltpu.CompilerParams(dimension_semantics=("parallel",)),
    )(src, tgt, packed['pe3'], *weights)


# ----------------------------- parameter setup -----------------------------

def _uniform(key, shape, scale=0.1):
    return jax.random.uniform(key, shape, minval=-scale, maxval=scale, dtype=jnp.float32)


def _init_mha_fused(key, d):
    ks = jax.random.split(key, 4)
    return {'wqkv': _uniform(ks[0], (d, 3 * d)), 'bqkv': _uniform(ks[1], (1, 3 * d)),
            'wo': _uniform(ks[2], (d, d)), 'bo': _uniform(ks[3], (1, d))}


def _init_enc_layer(key, d, d_hid):
    ks = jax.random.split(key, 5)
    p = dict(_init_mha_fused(ks[0], d))
    p.update({
        'w1': _uniform(ks[1], (d, d_hid)), 'b1': _uniform(ks[2], (1, d_hid)),
        'w2': _uniform(ks[3], (d_hid, d)), 'b2': _uniform(ks[4], (1, d)),
        'g1': jnp.ones((1, d), jnp.float32), 'be1': jnp.zeros((1, d), jnp.float32),
        'g2': jnp.ones((1, d), jnp.float32), 'be2': jnp.zeros((1, d), jnp.float32),
    })
    return p


def _init_dec_layer(key, d, d_hid):
    ks = jax.random.split(key, 9)
    p = dict(_init_mha_fused(ks[0], d))                        # self-attention (fused QKV)
    p.update({                                                 # cross-attention (Q from tgt, KV from memory)
        'wq_c': _uniform(ks[1], (d, d)), 'bq_c': _uniform(ks[2], (1, d)),
        'wkv_c': _uniform(ks[3], (d, 2 * d)), 'bkv_c': _uniform(ks[4], (1, 2 * d)),
        'wo_c': _uniform(ks[5], (d, d)), 'bo_c': _uniform(ks[6], (1, d)),
    })
    p.update({
        'w1': _uniform(ks[7], (d, d_hid)), 'b1': jnp.zeros((1, d_hid), jnp.float32),
        'w2': _uniform(ks[8], (d_hid, d)), 'b2': jnp.zeros((1, d), jnp.float32),
        'g1': jnp.ones((1, d), jnp.float32), 'be1': jnp.zeros((1, d), jnp.float32),
        'g2': jnp.ones((1, d), jnp.float32), 'be2': jnp.zeros((1, d), jnp.float32),
        'g3': jnp.ones((1, d), jnp.float32), 'be3': jnp.zeros((1, d), jnp.float32),
    })
    return p


def make_pe(d, max_len=64):
    position = jnp.arange(max_len, dtype=jnp.float32)[:, None]
    div_term = jnp.exp(jnp.arange(0, d, 2, dtype=jnp.float32) * (-math.log(10000.0) / d))
    pe = jnp.zeros((max_len, d), jnp.float32)
    pe = pe.at[:, 0::2].set(jnp.sin(position * div_term))
    pe = pe.at[:, 1::2].set(jnp.cos(position * div_term))
    return pe


def init_params(key, d, d_hid, nlayers):
    keys = jax.random.split(key, 2 * nlayers + 1)
    return {
        'pe': make_pe(d),
        'enc': [_init_enc_layer(keys[i], d, d_hid) for i in range(nlayers)],
        'dec': [_init_dec_layer(keys[nlayers + i], d, d_hid) for i in range(nlayers)],
        'enc_norm_g': jnp.ones((1, d), jnp.float32),
        'enc_norm_b': jnp.zeros((1, d), jnp.float32),
        'dec_norm_g': jnp.ones((1, d), jnp.float32),
        'dec_norm_b': jnp.zeros((1, d), jnp.float32),
        # final nn.Linear: weight ~ U(-0.1, 0.1), bias zeroed (init_weights)
        'final_w': _uniform(keys[-1], (d, d)),
        'final_b': jnp.zeros((1, d), jnp.float32),
    }


def pack_params(params):
    """Host-side, one-time packing into the flat / stacked / bf16 kernel layout."""
    enc, dec = params['enc'], params['dec']

    def stack(layers, key):
        return jnp.stack([lp[key] for lp in layers], axis=0)

    enc_map = {'e_wqkv': 'wqkv', 'e_bqkv': 'bqkv', 'e_wo': 'wo', 'e_bo': 'bo',
               'e_w1': 'w1', 'e_b1': 'b1', 'e_w2': 'w2', 'e_b2': 'b2',
               'e_g1': 'g1', 'e_be1': 'be1', 'e_g2': 'g2', 'e_be2': 'be2'}
    dec_map = {'d_wqkv': 'wqkv', 'd_bqkv': 'bqkv', 'd_wo': 'wo', 'd_bo': 'bo',
               'd_wq_c': 'wq_c', 'd_bq_c': 'bq_c', 'd_wkv_c': 'wkv_c', 'd_bkv_c': 'bkv_c',
               'd_wo_c': 'wo_c', 'd_bo_c': 'bo_c',
               'd_w1': 'w1', 'd_b1': 'b1', 'd_w2': 'w2', 'd_b2': 'b2',
               'd_g1': 'g1', 'd_be1': 'be1', 'd_g2': 'g2', 'd_be2': 'be2',
               'd_g3': 'g3', 'd_be3': 'be3'}

    packed = {}
    for k, src_k in enc_map.items():
        packed[k] = stack(enc, src_k)
    for k, src_k in dec_map.items():
        packed[k] = stack(dec, src_k)
    for k in ('enc_norm_g', 'enc_norm_b', 'dec_norm_g', 'dec_norm_b', 'final_w', 'final_b'):
        packed[k] = params[k]
    for k in _BF16_KEYS:
        packed[k] = packed[k].astype(jnp.bfloat16)
    packed['pe3'] = params['pe'][:, None, :]        # [max_len, 1, d]
    return packed


# ----------------------------- main -----------------------------

if __name__ == "__main__":
    key = jax.random.PRNGKey(0)
    pkey, skey, tkey = jax.random.split(key, 3)

    params = init_params(pkey, D_MODEL, D_HID, NLAYERS)
    packed = pack_params(params)        # packed ONCE, outside jit — zero per-call packing ops

    B, S_SRC, S_TGT = 2, 8, 8
    src = jax.random.normal(skey, (B, D_MODEL, S_SRC), dtype=jnp.float32)
    tgt = jax.random.normal(tkey, (B, D_MODEL, S_TGT), dtype=jnp.float32)

    fwd = jax.jit(transformer_forward)
    out = fwd(src, tgt, packed)
    jax.block_until_ready(out)

    assert out.shape == (B, D_MODEL, S_TGT), out.shape
    assert bool(jnp.all(jnp.isfinite(out)))
    print("KERNEL_OK")
</pallas_src>

<mosaic_0001>
module attributes {stable_mosaic.version = 11 : i64} {
  func.func @_transformer_kernel(%arg0: i32, %arg1: memref<1x32x8xf32, #tpu.memory_space<vmem>>, %arg2: memref<1x32x8xf32, #tpu.memory_space<vmem>>, %arg3: memref<1x1x32xf32, #tpu.memory_space<vmem>>, %arg4: memref<2x32x96xbf16, #tpu.memory_space<vmem>>, %arg5: memref<2x1x96xf32, #tpu.memory_space<vmem>>, %arg6: memref<2x32x32xbf16, #tpu.memory_space<vmem>>, %arg7: memref<2x1x32xf32, #tpu.memory_space<vmem>>, %arg8: memref<2x32x64xbf16, #tpu.memory_space<vmem>>, %arg9: memref<2x1x64xf32, #tpu.memory_space<vmem>>, %arg10: memref<2x64x32xbf16, #tpu.memory_space<vmem>>, %arg11: memref<2x1x32xf32, #tpu.memory_space<vmem>>, %arg12: memref<2x1x32xf32, #tpu.memory_space<vmem>>, %arg13: memref<2x1x32xf32, #tpu.memory_space<vmem>>, %arg14: memref<2x1x32xf32, #tpu.memory_space<vmem>>, %arg15: memref<2x1x32xf32, #tpu.memory_space<vmem>>, %arg16: memref<2x32x96xbf16, #tpu.memory_space<vmem>>, %arg17: memref<2x1x96xf32, #tpu.memory_space<vmem>>, %arg18: memref<2x32x32xbf16, #tpu.memory_space<vmem>>, %arg19: memref<2x1x32xf32, #tpu.memory_space<vmem>>, %arg20: memref<2x32x32xbf16, #tpu.memory_space<vmem>>, %arg21: memref<2x1x32xf32, #tpu.memory_space<vmem>>, %arg22: memref<2x32x64xbf16, #tpu.memory_space<vmem>>, %arg23: memref<2x1x64xf32, #tpu.memory_space<vmem>>, %arg24: memref<2x32x32xbf16, #tpu.memory_space<vmem>>, %arg25: memref<2x1x32xf32, #tpu.memory_space<vmem>>, %arg26: memref<2x32x64xbf16, #tpu.memory_space<vmem>>, %arg27: memref<2x1x64xf32, #tpu.memory_space<vmem>>, %arg28: memref<2x64x32xbf16, #tpu.memory_space<vmem>>, %arg29: memref<2x1x32xf32, #tpu.memory_space<vmem>>, %arg30: memref<2x1x32xf32, #tpu.memory_space<vmem>>, %arg31: memref<2x1x32xf32, #tpu.memory_space<vmem>>, %arg32: memref<2x1x32xf32, #tpu.memory_space<vmem>>, %arg33: memref<2x1x32xf32, #tpu.memory_space<vmem>>, %arg34: memref<2x1x32xf32, #tpu.memory_space<vmem>>, %arg35: memref<2x1x32xf32, #tpu.memory_space<vmem>>, %arg36: memref<1x32xf32, #tpu.memory_space<vmem>>, %arg37: memref<1x32xf32, #tpu.memory_space<vmem>>, %arg38: memref<1x32xf32, #tpu.memory_space<vmem>>, %arg39: memref<1x32xf32, #tpu.memory_space<vmem>>, %arg40: memref<32x32xbf16, #tpu.memory_space<vmem>>, %arg41: memref<1x32xf32, #tpu.memory_space<vmem>>, %arg42: memref<1x32x8xf32, #tpu.memory_space<vmem>>) attributes {dimension_semantics = [#tpu.dimension_semantics<parallel>], iteration_bounds = array<i64: 2>, scalar_prefetch = 0 : i64, scratch_operands = 0 : i64, tpu.core_type = #tpu.core_type<tc>, window_params = [{transform_indices = @transform_0, window_bounds = array<i64: 1, 32, 8>}, {transform_indices = @transform_1, window_bounds = array<i64: 1, 32, 8>}, {transform_indices = @transform_2, window_bounds = array<i64: 1, 1, 32>}, {pipeline_mode = #tpu.pipeline_mode<synchronous>, transform_indices = @transform_3, window_bounds = array<i64: 2, 32, 96>}, {pipeline_mode = #tpu.pipeline_mode<synchronous>, transform_indices = @transform_4, window_bounds = array<i64: 2, 1, 96>}, {pipeline_mode = #tpu.pipeline_mode<synchronous>, transform_indices = @transform_5, window_bounds = array<i64: 2, 32, 32>}, {pipeline_mode = #tpu.pipeline_mode<synchronous>, transform_indices = @transform_6, window_bounds = array<i64: 2, 1, 32>}, {pipeline_mode = #tpu.pipeline_mode<synchronous>, transform_indices = @transform_7, window_bounds = array<i64: 2, 32, 64>}, {pipeline_mode = #tpu.pipeline_mode<synchronous>, transform_indices = @transform_8, window_bounds = array<i64: 2, 1, 64>}, {pipeline_mode = #tpu.pipeline_mode<synchronous>, transform_indices = @transform_9, window_bounds = array<i64: 2, 64, 32>}, {pipeline_mode = #tpu.pipeline_mode<synchronous>, transform_indices = @transform_10, window_bounds = array<i64: 2, 1, 32>}, {pipeline_mode = #tpu.pipeline_mode<synchronous>, transform_indices = @transform_11, window_bounds = array<i64: 2, 1, 32>}, {pipeline_mode = #tpu.pipeline_mode<synchronous>, transform_indices = @transform_12, window_bounds = array<i64: 2, 1, 32>}, {pipeline_mode = #tpu.pipeline_mode<synchronous>, transform_indices = @transform_13, window_bounds = array<i64: 2, 1, 32>}, {pipeline_mode = #tpu.pipeline_mode<synchronous>, transform_indices = @transform_14, window_bounds = array<i64: 2, 1, 32>}, {pipeline_mode = #tpu.pipeline_mode<synchronous>, transform_indices = @transform_15, window_bounds = array<i64: 2, 32, 96>}, {pipeline_mode = #tpu.pipeline_mode<synchronous>, transform_indices = @transform_16, window_bounds = array<i64: 2, 1, 96>}, {pipeline_mode = #tpu.pipeline_mode<synchronous>, transform_indices = @transform_17, window_bounds = array<i64: 2, 32, 32>}, {pipeline_mode = #tpu.pipeline_mode<synchronous>, transform_indices = @transform_18, window_bounds = array<i64: 2, 1, 32>}, {pipeline_mode = #tpu.pipeline_mode<synchronous>, transform_indices = @transform_19, window_bounds = array<i64: 2, 32, 32>}, {pipeline_mode = #tpu.pipeline_mode<synchronous>, transform_indices = @transform_20, window_bounds = array<i64: 2, 1, 32>}, {pipeline_mode = #tpu.pipeline_mode<synchronous>, transform_indices = @transform_21, window_bounds = array<i64: 2, 32, 64>}, {pipeline_mode = #tpu.pipeline_mode<synchronous>, transform_indices = @transform_22, window_bounds = array<i64: 2, 1, 64>}, {pipeline_mode = #tpu.pipeline_mode<synchronous>, transform_indices = @transform_23, window_bounds = array<i64: 2, 32, 32>}, {pipeline_mode = #tpu.pipeline_mode<synchronous>, transform_indices = @transform_24, window_bounds = array<i64: 2, 1, 32>}, {pipeline_mode = #tpu.pipeline_mode<synchronous>, transform_indices = @transform_25, window_bounds = array<i64: 2, 32, 64>}, {pipeline_mode = #tpu.pipeline_mode<synchronous>, transform_indices = @transform_26, window_bounds = array<i64: 2, 1, 64>}, {pipeline_mode = #tpu.pipeline_mode<synchronous>, transform_indices = @transform_27, window_bounds = array<i64: 2, 64, 32>}, {pipeline_mode = #tpu.pipeline_mode<synchronous>, transform_indices = @transform_28, window_bounds = array<i64: 2, 1, 32>}, {pipeline_mode = #tpu.pipeline_mode<synchronous>, transform_indices = @transform_29, window_bounds = array<i64: 2, 1, 32>}, {pipeline_mode = #tpu.pipeline_mode<synchronous>, transform_indices = @transform_30, window_bounds = array<i64: 2, 1, 32>}, {pipeline_mode = #tpu.pipeline_mode<synchronous>, transform_indices = @transform_31, window_bounds = array<i64: 2, 1, 32>}, {pipeline_mode = #tpu.pipeline_mode<synchronous>, transform_indices = @transform_32, window_bounds = array<i64: 2, 1, 32>}, {pipeline_mode = #tpu.pipeline_mode<synchronous>, transform_indices = @transform_33, window_bounds = array<i64: 2, 1, 32>}, {pipeline_mode = #tpu.pipeline_mode<synchronous>, transform_indices = @transform_34, window_bounds = array<i64: 2, 1, 32>}, {pipeline_mode = #tpu.pipeline_mode<synchronous>, transform_indices = @transform_35, window_bounds = array<i64: 1, 32>}, {pipeline_mode = #tpu.pipeline_mode<synchronous>, transform_indices = @transform_36, window_bounds = array<i64: 1, 32>}, {pipeline_mode = #tpu.pipeline_mode<synchronous>, transform_indices = @transform_37, window_bounds = array<i64: 1, 32>}, {pipeline_mode = #tpu.pipeline_mode<synchronous>, transform_indices = @transform_38, window_bounds = array<i64: 1, 32>}, {pipeline_mode = #tpu.pipeline_mode<synchronous>, transform_indices = @transform_39, window_bounds = array<i64: 32, 32>}, {pipeline_mode = #tpu.pipeline_mode<synchronous>, transform_indices = @transform_40, window_bounds = array<i64: 1, 32>}, {transform_indices = @transform_41, window_bounds = array<i64: 1, 32, 8>}]} {
    %c0 = arith.constant 0 : index
    %c0_0 = arith.constant 0 : index
    %c0_1 = arith.constant 0 : index
    %0 = vector.load %arg3[%c0, %c0_0, %c0_1] : memref<1x1x32xf32, #tpu.memory_space<vmem>>, vector<1x1x32xf32>
    %1 = vector.shape_cast %0 : vector<1x1x32xf32> to vector<1x32xf32>
    %c0_2 = arith.constant 0 : index
    %c0_3 = arith.constant 0 : index
    %c0_4 = arith.constant 0 : index
    %2 = vector.load %arg1[%c0_2, %c0_3, %c0_4] : memref<1x32x8xf32, #tpu.memory_space<vmem>>, vector<1x32x8xf32>
    %3 = vector.shape_cast %2 : vector<1x32x8xf32> to vector<32x8xf32>
    %4 = tpu.transpose %3, [1, 0] : vector<32x8xf32> -> vector<8x32xf32>
    %5 = vector.broadcast %1 : vector<1x32xf32> to vector<8x32xf32>
    %6 = arith.addf %4, %5 : vector<8x32xf32>
    %c0_5 = arith.constant 0 : index
    %c0_6 = arith.constant 0 : index
    %c0_7 = arith.constant 0 : index
    %7 = vector.load %arg4[%c0_5, %c0_6, %c0_7] : memref<2x32x96xbf16, #tpu.memory_space<vmem>>, vector<1x32x96xbf16>
    %8 = vector.shape_cast %7 : vector<1x32x96xbf16> to vector<32x96xbf16>
    %c0_8 = arith.constant 0 : index
    %c0_9 = arith.constant 0 : index
    %c0_10 = arith.constant 0 : index
    %9 = vector.load %arg5[%c0_8, %c0_9, %c0_10] : memref<2x1x96xf32, #tpu.memory_space<vmem>>, vector<1x1x96xf32>
    %10 = vector.shape_cast %9 : vector<1x1x96xf32> to vector<1x96xf32>
    %11 = arith.truncf %6 : vector<8x32xf32> to vector<8x32xbf16>
    %cst = arith.constant dense<0.000000e+00> : vector<8x96xf32>
    %12 = tpu.matmul %11, %8, %cst {dimension_numbers = #tpu.dot_dimension_numbers<[1], [0], [0], [1], [0, 0, 1, 1], [], []>} : vector<8x32xbf16>, vector<32x96xbf16>, vector<8x96xf32> -> vector<8x96xf32>
    %13 = vector.broadcast %10 : vector<1x96xf32> to vector<8x96xf32>
    %14 = arith.addf %12, %13 : vector<8x96xf32>
    %15 = vector.extract_strided_slice %14 {offsets = [0, 0], sizes = [8, 32], strides = [1, 1]} : vector<8x96xf32> to vector<8x32xf32>
    %16 = vector.extract_strided_slice %14 {offsets = [0, 32], sizes = [8, 32], strides = [1, 1]} : vector<8x96xf32> to vector<8x32xf32>
    %17 = vector.extract_strided_slice %14 {offsets = [0, 64], sizes = [8, 32], strides = [1, 1]} : vector<8x96xf32> to vector<8x32xf32>
    %c0_11 = arith.constant 0 : index
    %c0_12 = arith.constant 0 : index
    %c0_13 = arith.constant 0 : index
    %18 = vector.load %arg6[%c0_11, %c0_12, %c0_13] : memref<2x32x32xbf16, #tpu.memory_space<vmem>>, vector<1x32x32xbf16>
    %19 = vector.shape_cast %18 : vector<1x32x32xbf16> to vector<32x32xbf16>
    %c0_14 = arith.constant 0 : index
    %c0_15 = arith.constant 0 : index
    %c0_16 = arith.constant 0 : index
    %20 = vector.load %arg7[%c0_14, %c0_15, %c0_16] : memref<2x1x32xf32, #tpu.memory_space<vmem>>, vector<1x1x32xf32>
    %21 = vector.shape_cast %20 : vector<1x1x32xf32> to vector<1x32xf32>
    %22 = arith.truncf %15 : vector<8x32xf32> to vector<8x32xbf16>
    %23 = arith.truncf %16 : vector<8x32xf32> to vector<8x32xbf16>
    %24 = arith.truncf %17 : vector<8x32xf32> to vector<8x32xbf16>
    %25 = vector.extract_strided_slice %22 {offsets = [0, 0], sizes = [8, 8], strides = [1, 1]} : vector<8x32xbf16> to vector<8x8xbf16>
    %26 = vector.extract_strided_slice %23 {offsets = [0, 0], sizes = [8, 8], strides = [1, 1]} : vector<8x32xbf16> to vector<8x8xbf16>
    %cst_17 = arith.constant dense<0.000000e+00> : vector<8x8xf32>
    %27 = tpu.matmul %25, %26, %cst_17 {dimension_numbers = #tpu.dot_dimension_numbers<[1], [1], [0], [0], [0, 0, 1, 0], [], []>} : vector<8x8xbf16>, vector<8x8xbf16>, vector<8x8xf32> -> vector<8x8xf32>
    %cst_18 = arith.constant 0.353553385 : f32
    %28 = vector.broadcast %cst_18 : f32 to vector<8x8xf32>
    %29 = arith.mulf %27, %28 : vector<8x8xf32>
    %cst_19 = arith.constant dense<0xFF800000> : vector<8xf32>
    %30 = vector.multi_reduction <maximumf>, %29, %cst_19 [1] : vector<8x8xf32> to vector<8xf32>
    %31 = vector.shape_cast %30 : vector<8xf32> to vector<8x1xf32>
    %32 = vector.broadcast %31 : vector<8x1xf32> to vector<8x8xf32>
    %33 = arith.subf %29, %32 : vector<8x8xf32>
    %34 = math.exp %33 : vector<8x8xf32>
    %cst_20 = arith.constant dense<0.000000e+00> : vector<8xf32>
    %35 = vector.multi_reduction <add>, %34, %cst_20 [1] : vector<8x8xf32> to vector<8xf32>
    %36 = vector.shape_cast %35 : vector<8xf32> to vector<8x1xf32>
    %37 = tpu.reciprocal %36 {approx = true} : vector<8x1xf32> -> vector<8x1xf32>
    %38 = vector.broadcast %37 : vector<8x1xf32> to vector<8x8xf32>
    %39 = arith.mulf %34, %38 : vector<8x8xf32>
    %40 = arith.truncf %39 : vector<8x8xf32> to vector<8x8xbf16>
    %41 = vector.extract_strided_slice %24 {offsets = [0, 0], sizes = [8, 8], strides = [1, 1]} : vector<8x32xbf16> to vector<8x8xbf16>
    %cst_21 = arith.constant dense<0.000000e+00> : vector<8x8xf32>
    %42 = tpu.matmul %40, %41, %cst_21 {dimension_numbers = #tpu.dot_dimension_numbers<[1], [0], [0], [1], [0, 0, 1, 1], [], []>} : vector<8x8xbf16>, vector<8x8xbf16>, vector<8x8xf32> -> vector<8x8xf32>
    %43 = vector.extract_strided_slice %22 {offsets = [0, 8], sizes = [8, 8], strides = [1, 1]} : vector<8x32xbf16> to vector<8x8xbf16>
    %44 = vector.extract_strided_slice %23 {offsets = [0, 8], sizes = [8, 8], strides = [1, 1]} : vector<8x32xbf16> to vector<8x8xbf16>
    %cst_22 = arith.constant dense<0.000000e+00> : vector<8x8xf32>
    %45 = tpu.matmul %43, %44, %cst_22 {dimension_numbers = #tpu.dot_dimension_numbers<[1], [1], [0], [0], [0, 0, 1, 0], [], []>} : vector<8x8xbf16>, vector<8x8xbf16>, vector<8x8xf32> -> vector<8x8xf32>
    %cst_23 = arith.constant 0.353553385 : f32
    %46 = vector.broadcast %cst_23 : f32 to vector<8x8xf32>
    %47 = arith.mulf %45, %46 : vector<8x8xf32>
    %cst_24 = arith.constant dense<0xFF800000> : vector<8xf32>
    %48 = vector.multi_reduction <maximumf>, %47, %cst_24 [1] : vector<8x8xf32> to vector<8xf32>
    %49 = vector.shape_cast %48 : vector<8xf32> to vector<8x1xf32>
    %50 = vector.broadcast %49 : vector<8x1xf32> to vector<8x8xf32>
    %51 = arith.subf %47, %50 : vector<8x8xf32>
    %52 = math.exp %51 : vector<8x8xf32>
    %cst_25 = arith.constant dense<0.000000e+00> : vector<8xf32>
    %53 = vector.multi_reduction <add>, %52, %cst_25 [1] : vector<8x8xf32> to vector<8xf32>
    %54 = vector.shape_cast %53 : vector<8xf32> to vector<8x1xf32>
    %55 = tpu.reciprocal %54 {approx = true} : vector<8x1xf32> -> vector<8x1xf32>
    %56 = vector.broadcast %55 : vector<8x1xf32> to vector<8x8xf32>
    %57 = arith.mulf %52, %56 : vector<8x8xf32>
    %58 = arith.truncf %57 : vector<8x8xf32> to vector<8x8xbf16>
    %59 = vector.extract_strided_slice %24 {offsets = [0, 8], sizes = [8, 8], strides = [1, 1]} : vector<8x32xbf16> to vector<8x8xbf16>
    %cst_26 = arith.constant dense<0.000000e+00> : vector<8x8xf32>
    %60 = tpu.matmul %58, %59, %cst_26 {dimension_numbers = #tpu.dot_dimension_numbers<[1], [0], [0], [1], [0, 0, 1, 1], [], []>} : vector<8x8xbf16>, vector<8x8xbf16>, vector<8x8xf32> -> vector<8x8xf32>
    %61 = vector.extract_strided_slice %22 {offsets = [0, 16], sizes = [8, 8], strides = [1, 1]} : vector<8x32xbf16> to vector<8x8xbf16>
    %62 = vector.extract_strided_slice %23 {offsets = [0, 16], sizes = [8, 8], strides = [1, 1]} : vector<8x32xbf16> to vector<8x8xbf16>
    %cst_27 = arith.constant dense<0.000000e+00> : vector<8x8xf32>
    %63 = tpu.matmul %61, %62, %cst_27 {dimension_numbers = #tpu.dot_dimension_numbers<[1], [1], [0], [0], [0, 0, 1, 0], [], []>} : vector<8x8xbf16>, vector<8x8xbf16>, vector<8x8xf32> -> vector<8x8xf32>
    %cst_28 = arith.constant 0.353553385 : f32
    %64 = vector.broadcast %cst_28 : f32 to vector<8x8xf32>
    %65 = arith.mulf %63, %64 : vector<8x8xf32>
    %cst_29 = arith.constant dense<0xFF800000> : vector<8xf32>
    %66 = vector.multi_reduction <maximumf>, %65, %cst_29 [1] : vector<8x8xf32> to vector<8xf32>
    %67 = vector.shape_cast %66 : vector<8xf32> to vector<8x1xf32>
    %68 = vector.broadcast %67 : vector<8x1xf32> to vector<8x8xf32>
    %69 = arith.subf %65, %68 : vector<8x8xf32>
    %70 = math.exp %69 : vector<8x8xf32>
    %cst_30 = arith.constant dense<0.000000e+00> : vector<8xf32>
    %71 = vector.multi_reduction <add>, %70, %cst_30 [1] : vector<8x8xf32> to vector<8xf32>
    %72 = vector.shape_cast %71 : vector<8xf32> to vector<8x1xf32>
    %73 = tpu.reciprocal %72 {approx = true} : vector<8x1xf32> -> vector<8x1xf32>
    %74 = vector.broadcast %73 : vector<8x1xf32> to vector<8x8xf32>
    %75 = arith.mulf %70, %74 : vector<8x8xf32>
    %76 = arith.truncf %75 : vector<8x8xf32> to vector<8x8xbf16>
    %77 = vector.extract_strided_slice %24 {offsets = [0, 16], sizes = [8, 8], strides = [1, 1]} : vector<8x32xbf16> to vector<8x8xbf16>
    %cst_31 = arith.constant dense<0.000000e+00> : vector<8x8xf32>
    %78 = tpu.matmul %76, %77, %cst_31 {dimension_numbers = #tpu.dot_dimension_numbers<[1], [0], [0], [1], [0, 0, 1, 1], [], []>} : vector<8x8xbf16>, vector<8x8xbf16>, vector<8x8xf32> -> vector<8x8xf32>
    %79 = vector.extract_strided_slice %22 {offsets = [0, 24], sizes = [8, 8], strides = [1, 1]} : vector<8x32xbf16> to vector<8x8xbf16>
    %80 = vector.extract_strided_slice %23 {offsets = [0, 24], sizes = [8, 8], strides = [1, 1]} : vector<8x32xbf16> to vector<8x8xbf16>
    %cst_32 = arith.constant dense<0.000000e+00> : vector<8x8xf32>
    %81 = tpu.matmul %79, %80, %cst_32 {dimension_numbers = #tpu.dot_dimension_numbers<[1], [1], [0], [0], [0, 0, 1, 0], [], []>} : vector<8x8xbf16>, vector<8x8xbf16>, vector<8x8xf32> -> vector<8x8xf32>
    %cst_33 = arith.constant 0.353553385 : f32
    %82 = vector.broadcast %cst_33 : f32 to vector<8x8xf32>
    %83 = arith.mulf %81, %82 : vector<8x8xf32>
    %cst_34 = arith.constant dense<0xFF800000> : vector<8xf32>
    %84 = vector.multi_reduction <maximumf>, %83, %cst_34 [1] : vector<8x8xf32> to vector<8xf32>
    %85 = vector.shape_cast %84 : vector<8xf32> to vector<8x1xf32>
    %86 = vector.broadcast %85 : vector<8x1xf32> to vector<8x8xf32>
    %87 = arith.subf %83, %86 : vector<8x8xf32>
    %88 = math.exp %87 : vector<8x8xf32>
    %cst_35 = arith.constant dense<0.000000e+00> : vector<8xf32>
    %89 = vector.multi_reduction <add>, %88, %cst_35 [1] : vector<8x8xf32> to vector<8xf32>
    %90 = vector.shape_cast %89 : vector<8xf32> to vector<8x1xf32>
    %91 = tpu.reciprocal %90 {approx = true} : vector<8x1xf32> -> vector<8x1xf32>
    %92 = vector.broadcast %91 : vector<8x1xf32> to vector<8x8xf32>
    %93 = arith.mulf %88, %92 : vector<8x8xf32>
    %94 = arith.truncf %93 : vector<8x8xf32> to vector<8x8xbf16>
    %95 = vector.extract_strided_slice %24 {offsets = [0, 24], sizes = [8, 8], strides = [1, 1]} : vector<8x32xbf16> to vector<8x8xbf16>
    %cst_36 = arith.constant dense<0.000000e+00> : vector<8x8xf32>
    %96 = tpu.matmul %94, %95, %cst_36 {dimension_numbers = #tpu.dot_dimension_numbers<[1], [0], [0], [1], [0, 0, 1, 1], [], []>} : vector<8x8xbf16>, vector<8x8xbf16>, vector<8x8xf32> -> vector<8x8xf32>
    %97 = tpu.concatenate %42, %60, %78, %96 in 1 : vector<8x8xf32>, vector<8x8xf32>, vector<8x8xf32>, vector<8x8xf32> -> vector<8x32xf32>
    %98 = arith.truncf %97 : vector<8x32xf32> to vector<8x32xbf16>
    %cst_37 = arith.constant dense<0.000000e+00> : vector<8x32xf32>
    %99 = tpu.matmul %98, %19, %cst_37 {dimension_numbers = #tpu.dot_dimension_numbers<[1], [0], [0], [1], [0, 0, 1, 1], [], []>} : vector<8x32xbf16>, vector<32x32xbf16>, vector<8x32xf32> -> vector<8x32xf32>
    %100 = vector.broadcast %21 : vector<1x32xf32> to vector<8x32xf32>
    %101 = arith.addf %99, %100 : vector<8x32xf32>
    %102 = arith.addf %6, %101 : vector<8x32xf32>
    %c0_38 = arith.constant 0 : index
    %c0_39 = arith.constant 0 : index
    %c0_40 = arith.constant 0 : index
    %103 = vector.load %arg12[%c0_38, %c0_39, %c0_40] : memref<2x1x32xf32, #tpu.memory_space<vmem>>, vector<1x1x32xf32>
    %104 = vector.shape_cast %103 : vector<1x1x32xf32> to vector<1x32xf32>
    %c0_41 = arith.constant 0 : index
    %c0_42 = arith.constant 0 : index
    %c0_43 = arith.constant 0 : index
    %105 = vector.load %arg13[%c0_41, %c0_42, %c0_43] : memref<2x1x32xf32, #tpu.memory_space<vmem>>, vector<1x1x32xf32>
    %106 = vector.shape_cast %105 : vector<1x1x32xf32> to vector<1x32xf32>
    %cst_44 = arith.constant dense<0.000000e+00> : vector<8xf32>
    %107 = vector.multi_reduction <add>, %102, %cst_44 [1] : vector<8x32xf32> to vector<8xf32>
    %108 = vector.shape_cast %107 : vector<8xf32> to vector<8x1xf32>
    %cst_45 = arith.constant 3.200000e+01 : f32
    %109 = vector.broadcast %cst_45 : f32 to vector<8x1xf32>
    %110 = arith.divf %108, %109 : vector<8x1xf32>
    %111 = vector.broadcast %110 : vector<8x1xf32> to vector<8x32xf32>
    %112 = arith.subf %102, %111 : vector<8x32xf32>
    %113 = arith.mulf %112, %112 : vector<8x32xf32>
    %cst_46 = arith.constant dense<0.000000e+00> : vector<8xf32>
    %114 = vector.multi_reduction <add>, %113, %cst_46 [1] : vector<8x32xf32> to vector<8xf32>
    %115 = vector.shape_cast %114 : vector<8xf32> to vector<8x1xf32>
    %cst_47 = arith.constant 3.200000e+01 : f32
    %116 = vector.broadcast %cst_47 : f32 to vector<8x1xf32>
    %117 = arith.divf %115, %116 : vector<8x1xf32>
    %cst_48 = arith.constant 9.99999974E-6 : f32
    %118 = vector.broadcast %cst_48 : f32 to vector<8x1xf32>
    %119 = arith.addf %117, %118 : vector<8x1xf32>
    %120 = math.rsqrt %119 : vector<8x1xf32>
    %121 = vector.broadcast %120 : vector<8x1xf32> to vector<8x32xf32>
    %122 = arith.mulf %112, %121 : vector<8x32xf32>
    %123 = vector.broadcast %104 : vector<1x32xf32> to vector<8x32xf32>
    %124 = arith.mulf %122, %123 : vector<8x32xf32>
    %125 = vector.broadcast %106 : vector<1x32xf32> to vector<8x32xf32>
    %126 = arith.addf %124, %125 : vector<8x32xf32>
    %c0_49 = arith.constant 0 : index
    %c0_50 = arith.constant 0 : index
    %c0_51 = arith.constant 0 : index
    %127 = vector.load %arg8[%c0_49, %c0_50, %c0_51] : memref<2x32x64xbf16, #tpu.memory_space<vmem>>, vector<1x32x64xbf16>
    %128 = vector.shape_cast %127 : vector<1x32x64xbf16> to vector<32x64xbf16>
    %c0_52 = arith.constant 0 : index
    %c0_53 = arith.constant 0 : index
    %c0_54 = arith.constant 0 : index
    %129 = vector.load %arg9[%c0_52, %c0_53, %c0_54] : memref<2x1x64xf32, #tpu.memory_space<vmem>>, vector<1x1x64xf32>
    %130 = vector.shape_cast %129 : vector<1x1x64xf32> to vector<1x64xf32>
    %131 = arith.truncf %126 : vector<8x32xf32> to vector<8x32xbf16>
    %cst_55 = arith.constant dense<0.000000e+00> : vector<8x64xf32>
    %132 = tpu.matmul %131, %128, %cst_55 {dimension_numbers = #tpu.dot_dimension_numbers<[1], [0], [0], [1], [0, 0, 1, 1], [], []>} : vector<8x32xbf16>, vector<32x64xbf16>, vector<8x64xf32> -> vector<8x64xf32>
    %133 = vector.broadcast %130 : vector<1x64xf32> to vector<8x64xf32>
    %134 = arith.addf %132, %133 : vector<8x64xf32>
    %cst_56 = arith.constant 0.000000e+00 : f32
    %135 = vector.broadcast %cst_56 : f32 to vector<8x64xf32>
    %136 = arith.maximumf %134, %135 : vector<8x64xf32>
    %c0_57 = arith.constant 0 : index
    %c0_58 = arith.constant 0 : index
    %c0_59 = arith.constant 0 : index
    %137 = vector.load %arg10[%c0_57, %c0_58, %c0_59] : memref<2x64x32xbf16, #tpu.memory_space<vmem>>, vector<1x64x32xbf16>
    %138 = vector.shape_cast %137 : vector<1x64x32xbf16> to vector<64x32xbf16>
    %c0_60 = arith.constant 0 : index
    %c0_61 = arith.constant 0 : index
    %c0_62 = arith.constant 0 : index
    %139 = vector.load %arg11[%c0_60, %c0_61, %c0_62] : memref<2x1x32xf32, #tpu.memory_space<vmem>>, vector<1x1x32xf32>
    %140 = vector.shape_cast %139 : vector<1x1x32xf32> to vector<1x32xf32>
    %141 = arith.truncf %136 : vector<8x64xf32> to vector<8x64xbf16>
    %cst_63 = arith.constant dense<0.000000e+00> : vector<8x32xf32>
    %142 = tpu.matmul %141, %138, %cst_63 {dimension_numbers = #tpu.dot_dimension_numbers<[1], [0], [0], [1], [0, 0, 1, 1], [], []>} : vector<8x64xbf16>, vector<64x32xbf16>, vector<8x32xf32> -> vector<8x32xf32>
    %143 = vector.broadcast %140 : vector<1x32xf32> to vector<8x32xf32>
    %144 = arith.addf %142, %143 : vector<8x32xf32>
    %145 = arith.addf %126, %144 : vector<8x32xf32>
    %c0_64 = arith.constant 0 : index
    %c0_65 = arith.constant 0 : index
    %c0_66 = arith.constant 0 : index
    %146 = vector.load %arg14[%c0_64, %c0_65, %c0_66] : memref<2x1x32xf32, #tpu.memory_space<vmem>>, vector<1x1x32xf32>
    %147 = vector.shape_cast %146 : vector<1x1x32xf32> to vector<1x32xf32>
    %c0_67 = arith.constant 0 : index
    %c0_68 = arith.constant 0 : index
    %c0_69 = arith.constant 0 : index
    %148 = vector.load %arg15[%c0_67, %c0_68, %c0_69] : memref<2x1x32xf32, #tpu.memory_space<vmem>>, vector<1x1x32xf32>
    %149 = vector.shape_cast %148 : vector<1x1x32xf32> to vector<1x32xf32>
    %cst_70 = arith.constant dense<0.000000e+00> : vector<8xf32>
    %150 = vector.multi_reduction <add>, %145, %cst_70 [1] : vector<8x32xf32> to vector<8xf32>
    %151 = vector.shape_cast %150 : vector<8xf32> to vector<8x1xf32>
    %cst_71 = arith.constant 3.200000e+01 : f32
    %152 = vector.broadcast %cst_71 : f32 to vector<8x1xf32>
    %153 = arith.divf %151, %152 : vector<8x1xf32>
    %154 = vector.broadcast %153 : vector<8x1xf32> to vector<8x32xf32>
    %155 = arith.subf %145, %154 : vector<8x32xf32>
    %156 = arith.mulf %155, %155 : vector<8x32xf32>
    %cst_72 = arith.constant dense<0.000000e+00> : vector<8xf32>
    %157 = vector.multi_reduction <add>, %156, %cst_72 [1] : vector<8x32xf32> to vector<8xf32>
    %158 = vector.shape_cast %157 : vector<8xf32> to vector<8x1xf32>
    %cst_73 = arith.constant 3.200000e+01 : f32
    %159 = vector.broadcast %cst_73 : f32 to vector<8x1xf32>
    %160 = arith.divf %158, %159 : vector<8x1xf32>
    %cst_74 = arith.constant 9.99999974E-6 : f32
    %161 = vector.broadcast %cst_74 : f32 to vector<8x1xf32>
    %162 = arith.addf %160, %161 : vector<8x1xf32>
    %163 = math.rsqrt %162 : vector<8x1xf32>
    %164 = vector.broadcast %163 : vector<8x1xf32> to vector<8x32xf32>
    %165 = arith.mulf %155, %164 : vector<8x32xf32>
    %166 = vector.broadcast %147 : vector<1x32xf32> to vector<8x32xf32>
    %167 = arith.mulf %165, %166 : vector<8x32xf32>
    %168 = vector.broadcast %149 : vector<1x32xf32> to vector<8x32xf32>
    %169 = arith.addf %167, %168 : vector<8x32xf32>
    %c1 = arith.constant 1 : index
    %c0_75 = arith.constant 0 : index
    %c0_76 = arith.constant 0 : index
    %170 = vector.load %arg4[%c1, %c0_75, %c0_76] : memref<2x32x96xbf16, #tpu.memory_space<vmem>>, vector<1x32x96xbf16>
    %171 = vector.shape_cast %170 : vector<1x32x96xbf16> to vector<32x96xbf16>
    %c1_77 = arith.constant 1 : index
    %c0_78 = arith.constant 0 : index
    %c0_79 = arith.constant 0 : index
    %172 = vector.load %arg5[%c1_77, %c0_78, %c0_79] : memref<2x1x96xf32, #tpu.memory_space<vmem>>, vector<1x1x96xf32>
    %173 = vector.shape_cast %172 : vector<1x1x96xf32> to vector<1x96xf32>
    %174 = arith.truncf %169 : vector<8x32xf32> to vector<8x32xbf16>
    %cst_80 = arith.constant dense<0.000000e+00> : vector<8x96xf32>
    %175 = tpu.matmul %174, %171, %cst_80 {dimension_numbers = #tpu.dot_dimension_numbers<[1], [0], [0], [1], [0, 0, 1, 1], [], []>} : vector<8x32xbf16>, vector<32x96xbf16>, vector<8x96xf32> -> vector<8x96xf32>
    %176 = vector.broadcast %173 : vector<1x96xf32> to vector<8x96xf32>
    %177 = arith.addf %175, %176 : vector<8x96xf32>
    %178 = vector.extract_strided_slice %177 {offsets = [0, 0], sizes = [8, 32], strides = [1, 1]} : vector<8x96xf32> to vector<8x32xf32>
    %179 = vector.extract_strided_slice %177 {offsets = [0, 32], sizes = [8, 32], strides = [1, 1]} : vector<8x96xf32> to vector<8x32xf32>
    %180 = vector.extract_strided_slice %177 {offsets = [0, 64], sizes = [8, 32], strides = [1, 1]} : vector<8x96xf32> to vector<8x32xf32>
    %c1_81 = arith.constant 1 : index
    %c0_82 = arith.constant 0 : index
    %c0_83 = arith.constant 0 : index
    %181 = vector.load %arg6[%c1_81, %c0_82, %c0_83] : memref<2x32x32xbf16, #tpu.memory_space<vmem>>, vector<1x32x32xbf16>
    %182 = vector.shape_cast %181 : vector<1x32x32xbf16> to vector<32x32xbf16>
    %c1_84 = arith.constant 1 : index
    %c0_85 = arith.constant 0 : index
    %c0_86 = arith.constant 0 : index
    %183 = vector.load %arg7[%c1_84, %c0_85, %c0_86] : memref<2x1x32xf32, #tpu.memory_space<vmem>>, vector<1x1x32xf32>
    %184 = vector.shape_cast %183 : vector<1x1x32xf32> to vector<1x32xf32>
    %185 = arith.truncf %178 : vector<8x32xf32> to vector<8x32xbf16>
    %186 = arith.truncf %179 : vector<8x32xf32> to vector<8x32xbf16>
    %187 = arith.truncf %180 : vector<8x32xf32> to vector<8x32xbf16>
    %188 = vector.extract_strided_slice %185 {offsets = [0, 0], sizes = [8, 8], strides = [1, 1]} : vector<8x32xbf16> to vector<8x8xbf16>
    %189 = vector.extract_strided_slice %186 {offsets = [0, 0], sizes = [8, 8], strides = [1, 1]} : vector<8x32xbf16> to vector<8x8xbf16>
    %cst_87 = arith.constant dense<0.000000e+00> : vector<8x8xf32>
    %190 = tpu.matmul %188, %189, %cst_87 {dimension_numbers = #tpu.dot_dimension_numbers<[1], [1], [0], [0], [0, 0, 1, 0], [], []>} : vector<8x8xbf16>, vector<8x8xbf16>, vector<8x8xf32> -> vector<8x8xf32>
    %cst_88 = arith.constant 0.353553385 : f32
    %191 = vector.broadcast %cst_88 : f32 to vector<8x8xf32>
    %192 = arith.mulf %190, %191 : vector<8x8xf32>
    %cst_89 = arith.constant dense<0xFF800000> : vector<8xf32>
    %193 = vector.multi_reduction <maximumf>, %192, %cst_89 [1] : vector<8x8xf32> to vector<8xf32>
    %194 = vector.shape_cast %193 : vector<8xf32> to vector<8x1xf32>
    %195 = vector.broadcast %194 : vector<8x1xf32> to vector<8x8xf32>
    %196 = arith.subf %192, %195 : vector<8x8xf32>
    %197 = math.exp %196 : vector<8x8xf32>
    %cst_90 = arith.constant dense<0.000000e+00> : vector<8xf32>
    %198 = vector.multi_reduction <add>, %197, %cst_90 [1] : vector<8x8xf32> to vector<8xf32>
    %199 = vector.shape_cast %198 : vector<8xf32> to vector<8x1xf32>
    %200 = tpu.reciprocal %199 {approx = true} : vector<8x1xf32> -> vector<8x1xf32>
    %201 = vector.broadcast %200 : vector<8x1xf32> to vector<8x8xf32>
    %202 = arith.mulf %197, %201 : vector<8x8xf32>
    %203 = arith.truncf %202 : vector<8x8xf32> to vector<8x8xbf16>
    %204 = vector.extract_strided_slice %187 {offsets = [0, 0], sizes = [8, 8], strides = [1, 1]} : vector<8x32xbf16> to vector<8x8xbf16>
    %cst_91 = arith.constant dense<0.000000e+00> : vector<8x8xf32>
    %205 = tpu.matmul %203, %204, %cst_91 {dimension_numbers = #tpu.dot_dimension_numbers<[1], [0], [0], [1], [0, 0, 1, 1], [], []>} : vector<8x8xbf16>, vector<8x8xbf16>, vector<8x8xf32> -> vector<8x8xf32>
    %206 = vector.extract_strided_slice %185 {offsets = [0, 8], sizes = [8, 8], strides = [1, 1]} : vector<8x32xbf16> to vector<8x8xbf16>
    %207 = vector.extract_strided_slice %186 {offsets = [0, 8], sizes = [8, 8], strides = [1, 1]} : vector<8x32xbf16> to vector<8x8xbf16>
    %cst_92 = arith.constant dense<0.000000e+00> : vector<8x8xf32>
    %208 = tpu.matmul %206, %207, %cst_92 {dimension_numbers = #tpu.dot_dimension_numbers<[1], [1], [0], [0], [0, 0, 1, 0], [], []>} : vector<8x8xbf16>, vector<8x8xbf16>, vector<8x8xf32> -> vector<8x8xf32>
    %cst_93 = arith.constant 0.353553385 : f32
    %209 = vector.broadcast %cst_93 : f32 to vector<8x8xf32>
    %210 = arith.mulf %208, %209 : vector<8x8xf32>
    %cst_94 = arith.constant dense<0xFF800000> : vector<8xf32>
    %211 = vector.multi_reduction <maximumf>, %210, %cst_94 [1] : vector<8x8xf32> to vector<8xf32>
    %212 = vector.shape_cast %211 : vector<8xf32> to vector<8x1xf32>
    %213 = vector.broadcast %212 : vector<8x1xf32> to vector<8x8xf32>
    %214 = arith.subf %210, %213 : vector<8x8xf32>
    %215 = math.exp %214 : vector<8x8xf32>
    %cst_95 = arith.constant dense<0.000000e+00> : vector<8xf32>
    %216 = vector.multi_reduction <add>, %215, %cst_95 [1] : vector<8x8xf32> to vector<8xf32>
    %217 = vector.shape_cast %216 : vector<8xf32> to vector<8x1xf32>
    %218 = tpu.reciprocal %217 {approx = true} : vector<8x1xf32> -> vector<8x1xf32>
    %219 = vector.broadcast %218 : vector<8x1xf32> to vector<8x8xf32>
    %220 = arith.mulf %215, %219 : vector<8x8xf32>
    %221 = arith.truncf %220 : vector<8x8xf32> to vector<8x8xbf16>
    %222 = vector.extract_strided_slice %187 {offsets = [0, 8], sizes = [8, 8], strides = [1, 1]} : vector<8x32xbf16> to vector<8x8xbf16>
    %cst_96 = arith.constant dense<0.000000e+00> : vector<8x8xf32>
    %223 = tpu.matmul %221, %222, %cst_96 {dimension_numbers = #tpu.dot_dimension_numbers<[1], [0], [0], [1], [0, 0, 1, 1], [], []>} : vector<8x8xbf16>, vector<8x8xbf16>, vector<8x8xf32> -> vector<8x8xf32>
    %224 = vector.extract_strided_slice %185 {offsets = [0, 16], sizes = [8, 8], strides = [1, 1]} : vector<8x32xbf16> to vector<8x8xbf16>
    %225 = vector.extract_strided_slice %186 {offsets = [0, 16], sizes = [8, 8], strides = [1, 1]} : vector<8x32xbf16> to vector<8x8xbf16>
    %cst_97 = arith.constant dense<0.000000e+00> : vector<8x8xf32>
    %226 = tpu.matmul %224, %225, %cst_97 {dimension_numbers = #tpu.dot_dimension_numbers<[1], [1], [0], [0], [0, 0, 1, 0], [], []>} : vector<8x8xbf16>, vector<8x8xbf16>, vector<8x8xf32> -> vector<8x8xf32>
    %cst_98 = arith.constant 0.353553385 : f32
    %227 = vector.broadcast %cst_98 : f32 to vector<8x8xf32>
    %228 = arith.mulf %226, %227 : vector<8x8xf32>
    %cst_99 = arith.constant dense<0xFF800000> : vector<8xf32>
    %229 = vector.multi_reduction <maximumf>, %228, %cst_99 [1] : vector<8x8xf32> to vector<8xf32>
    %230 = vector.shape_cast %229 : vector<8xf32> to vector<8x1xf32>
    %231 = vector.broadcast %230 : vector<8x1xf32> to vector<8x8xf32>
    %232 = arith.subf %228, %231 : vector<8x8xf32>
    %233 = math.exp %232 : vector<8x8xf32>
    %cst_100 = arith.constant dense<0.000000e+00> : vector<8xf32>
    %234 = vector.multi_reduction <add>, %233, %cst_100 [1] : vector<8x8xf32> to vector<8xf32>
    %235 = vector.shape_cast %234 : vector<8xf32> to vector<8x1xf32>
    %236 = tpu.reciprocal %235 {approx = true} : vector<8x1xf32> -> vector<8x1xf32>
    %237 = vector.broadcast %236 : vector<8x1xf32> to vector<8x8xf32>
    %238 = arith.mulf %233, %237 : vector<8x8xf32>
    %239 = arith.truncf %238 : vector<8x8xf32> to vector<8x8xbf16>
    %240 = vector.extract_strided_slice %187 {offsets = [0, 16], sizes = [8, 8], strides = [1, 1]} : vector<8x32xbf16> to vector<8x8xbf16>
    %cst_101 = arith.constant dense<0.000000e+00> : vector<8x8xf32>
    %241 = tpu.matmul %239, %240, %cst_101 {dimension_numbers = #tpu.dot_dimension_numbers<[1], [0], [0], [1], [0, 0, 1, 1], [], []>} : vector<8x8xbf16>, vector<8x8xbf16>, vector<8x8xf32> -> vector<8x8xf32>
    %242 = vector.extract_strided_slice %185 {offsets = [0, 24], sizes = [8, 8], strides = [1, 1]} : vector<8x32xbf16> to vector<8x8xbf16>
    %243 = vector.extract_strided_slice %186 {offsets = [0, 24], sizes = [8, 8], strides = [1, 1]} : vector<8x32xbf16> to vector<8x8xbf16>
    %cst_102 = arith.constant dense<0.000000e+00> : vector<8x8xf32>
    %244 = tpu.matmul %242, %243, %cst_102 {dimension_numbers = #tpu.dot_dimension_numbers<[1], [1], [0], [0], [0, 0, 1, 0], [], []>} : vector<8x8xbf16>, vector<8x8xbf16>, vector<8x8xf32> -> vector<8x8xf32>
    %cst_103 = arith.constant 0.353553385 : f32
    %245 = vector.broadcast %cst_103 : f32 to vector<8x8xf32>
    %246 = arith.mulf %244, %245 : vector<8x8xf32>
    %cst_104 = arith.constant dense<0xFF800000> : vector<8xf32>
    %247 = vector.multi_reduction <maximumf>, %246, %cst_104 [1] : vector<8x8xf32> to vector<8xf32>
    %248 = vector.shape_cast %247 : vector<8xf32> to vector<8x1xf32>
    %249 = vector.broadcast %248 : vector<8x1xf32> to vector<8x8xf32>
    %250 = arith.subf %246, %249 : vector<8x8xf32>
    %251 = math.exp %250 : vector<8x8xf32>
    %cst_105 = arith.constant dense<0.000000e+00> : vector<8xf32>
    %252 = vector.multi_reduction <add>, %251, %cst_105 [1] : vector<8x8xf32> to vector<8xf32>
    %253 = vector.shape_cast %252 : vector<8xf32> to vector<8x1xf32>
    %254 = tpu.reciprocal %253 {approx = true} : vector<8x1xf32> -> vector<8x1xf32>
    %255 = vector.broadcast %254 : vector<8x1xf32> to vector<8x8xf32>
    %256 = arith.mulf %251, %255 : vector<8x8xf32>
    %257 = arith.truncf %256 : vector<8x8xf32> to vector<8x8xbf16>
    %258 = vector.extract_strided_slice %187 {offsets = [0, 24], sizes = [8, 8], strides = [1, 1]} : vector<8x32xbf16> to vector<8x8xbf16>
    %cst_106 = arith.constant dense<0.000000e+00> : vector<8x8xf32>
    %259 = tpu.matmul %257, %258, %cst_106 {dimension_numbers = #tpu.dot_dimension_numbers<[1], [0], [0], [1], [0, 0, 1, 1], [], []>} : vector<8x8xbf16>, vector<8x8xbf16>, vector<8x8xf32> -> vector<8x8xf32>
    %260 = tpu.concatenate %205, %223, %241, %259 in 1 : vector<8x8xf32>, vector<8x8xf32>, vector<8x8xf32>, vector<8x8xf32> -> vector<8x32xf32>
    %261 = arith.truncf %260 : vector<8x32xf32> to vector<8x32xbf16>
    %cst_107 = arith.constant dense<0.000000e+00> : vector<8x32xf32>
    %262 = tpu.matmul %261, %182, %cst_107 {dimension_numbers = #tpu.dot_dimension_numbers<[1], [0], [0], [1], [0, 0, 1, 1], [], []>} : vector<8x32xbf16>, vector<32x32xbf16>, vector<8x32xf32> -> vector<8x32xf32>
    %263 = vector.broadcast %184 : vector<1x32xf32> to vector<8x32xf32>
    %264 = arith.addf %262, %263 : vector<8x32xf32>
    %265 = arith.addf %169, %264 : vector<8x32xf32>
    %c1_108 = arith.constant 1 : index
    %c0_109 = arith.constant 0 : index
    %c0_110 = arith.constant 0 : index
    %266 = vector.load %arg12[%c1_108, %c0_109, %c0_110] : memref<2x1x32xf32, #tpu.memory_space<vmem>>, vector<1x1x32xf32>
    %267 = vector.shape_cast %266 : vector<1x1x32xf32> to vector<1x32xf32>
    %c1_111 = arith.constant 1 : index
    %c0_112 = arith.constant 0 : index
    %c0_113 = arith.constant 0 : index
    %268 = vector.load %arg13[%c1_111, %c0_112, %c0_113] : memref<2x1x32xf32, #tpu.memory_space<vmem>>, vector<1x1x32xf32>
    %269 = vector.shape_cast %268 : vector<1x1x32xf32> to vector<1x32xf32>
    %cst_114 = arith.constant dense<0.000000e+00> : vector<8xf32>
    %270 = vector.multi_reduction <add>, %265, %cst_114 [1] : vector<8x32xf32> to vector<8xf32>
    %271 = vector.shape_cast %270 : vector<8xf32> to vector<8x1xf32>
    %cst_115 = arith.constant 3.200000e+01 : f32
    %272 = vector.broadcast %cst_115 : f32 to vector<8x1xf32>
    %273 = arith.divf %271, %272 : vector<8x1xf32>
    %274 = vector.broadcast %273 : vector<8x1xf32> to vector<8x32xf32>
    %275 = arith.subf %265, %274 : vector<8x32xf32>
    %276 = arith.mulf %275, %275 : vector<8x32xf32>
    %cst_116 = arith.constant dense<0.000000e+00> : vector<8xf32>
    %277 = vector.multi_reduction <add>, %276, %cst_116 [1] : vector<8x32xf32> to vector<8xf32>
    %278 = vector.shape_cast %277 : vector<8xf32> to vector<8x1xf32>
    %cst_117 = arith.constant 3.200000e+01 : f32
    %279 = vector.broadcast %cst_117 : f32 to vector<8x1xf32>
    %280 = arith.divf %278, %279 : vector<8x1xf32>
    %cst_118 = arith.constant 9.99999974E-6 : f32
    %281 = vector.broadcast %cst_118 : f32 to vector<8x1xf32>
    %282 = arith.addf %280, %281 : vector<8x1xf32>
    %283 = math.rsqrt %282 : vector<8x1xf32>
    %284 = vector.broadcast %283 : vector<8x1xf32> to vector<8x32xf32>
    %285 = arith.mulf %275, %284 : vector<8x32xf32>
    %286 = vector.broadcast %267 : vector<1x32xf32> to vector<8x32xf32>
    %287 = arith.mulf %285, %286 : vector<8x32xf32>
    %288 = vector.broadcast %269 : vector<1x32xf32> to vector<8x32xf32>
    %289 = arith.addf %287, %288 : vector<8x32xf32>
    %c1_119 = arith.constant 1 : index
    %c0_120 = arith.constant 0 : index
    %c0_121 = arith.constant 0 : index
    %290 = vector.load %arg8[%c1_119, %c0_120, %c0_121] : memref<2x32x64xbf16, #tpu.memory_space<vmem>>, vector<1x32x64xbf16>
    %291 = vector.shape_cast %290 : vector<1x32x64xbf16> to vector<32x64xbf16>
    %c1_122 = arith.constant 1 : index
    %c0_123 = arith.constant 0 : index
    %c0_124 = arith.constant 0 : index
    %292 = vector.load %arg9[%c1_122, %c0_123, %c0_124] : memref<2x1x64xf32, #tpu.memory_space<vmem>>, vector<1x1x64xf32>
    %293 = vector.shape_cast %292 : vector<1x1x64xf32> to vector<1x64xf32>
    %294 = arith.truncf %289 : vector<8x32xf32> to vector<8x32xbf16>
    %cst_125 = arith.constant dense<0.000000e+00> : vector<8x64xf32>
    %295 = tpu.matmul %294, %291, %cst_125 {dimension_numbers = #tpu.dot_dimension_numbers<[1], [0], [0], [1], [0, 0, 1, 1], [], []>} : vector<8x32xbf16>, vector<32x64xbf16>, vector<8x64xf32> -> vector<8x64xf32>
    %296 = vector.broadcast %293 : vector<1x64xf32> to vector<8x64xf32>
    %297 = arith.addf %295, %296 : vector<8x64xf32>
    %cst_126 = arith.constant 0.000000e+00 : f32
    %298 = vector.broadcast %cst_126 : f32 to vector<8x64xf32>
    %299 = arith.maximumf %297, %298 : vector<8x64xf32>
    %c1_127 = arith.constant 1 : index
    %c0_128 = arith.constant 0 : index
    %c0_129 = arith.constant 0 : index
    %300 = vector.load %arg10[%c1_127, %c0_128, %c0_129] : memref<2x64x32xbf16, #tpu.memory_space<vmem>>, vector<1x64x32xbf16>
    %301 = vector.shape_cast %300 : vector<1x64x32xbf16> to vector<64x32xbf16>
    %c1_130 = arith.constant 1 : index
    %c0_131 = arith.constant 0 : index
    %c0_132 = arith.constant 0 : index
    %302 = vector.load %arg11[%c1_130, %c0_131, %c0_132] : memref<2x1x32xf32, #tpu.memory_space<vmem>>, vector<1x1x32xf32>
    %303 = vector.shape_cast %302 : vector<1x1x32xf32> to vector<1x32xf32>
    %304 = arith.truncf %299 : vector<8x64xf32> to vector<8x64xbf16>
    %cst_133 = arith.constant dense<0.000000e+00> : vector<8x32xf32>
    %305 = tpu.matmul %304, %301, %cst_133 {dimension_numbers = #tpu.dot_dimension_numbers<[1], [0], [0], [1], [0, 0, 1, 1], [], []>} : vector<8x64xbf16>, vector<64x32xbf16>, vector<8x32xf32> -> vector<8x32xf32>
    %306 = vector.broadcast %303 : vector<1x32xf32> to vector<8x32xf32>
    %307 = arith.addf %305, %306 : vector<8x32xf32>
    %308 = arith.addf %289, %307 : vector<8x32xf32>
    %c1_134 = arith.constant 1 : index
    %c0_135 = arith.constant 0 : index
    %c0_136 = arith.constant 0 : index
    %309 = vector.load %arg14[%c1_134, %c0_135, %c0_136] : memref<2x1x32xf32, #tpu.memory_space<vmem>>, vector<1x1x32xf32>
    %310 = vector.shape_cast %309 : vector<1x1x32xf32> to vector<1x32xf32>
    %c1_137 = arith.constant 1 : index
    %c0_138 = arith.constant 0 : index
    %c0_139 = arith.constant 0 : index
    %311 = vector.load %arg15[%c1_137, %c0_138, %c0_139] : memref<2x1x32xf32, #tpu.memory_space<vmem>>, vector<1x1x32xf32>
    %312 = vector.shape_cast %311 : vector<1x1x32xf32> to vector<1x32xf32>
    %cst_140 = arith.constant dense<0.000000e+00> : vector<8xf32>
    %313 = vector.multi_reduction <add>, %308, %cst_140 [1] : vector<8x32xf32> to vector<8xf32>
    %314 = vector.shape_cast %313 : vector<8xf32> to vector<8x1xf32>
    %cst_141 = arith.constant 3.200000e+01 : f32
    %315 = vector.broadcast %cst_141 : f32 to vector<8x1xf32>
    %316 = arith.divf %314, %315 : vector<8x1xf32>
    %317 = vector.broadcast %316 : vector<8x1xf32> to vector<8x32xf32>
    %318 = arith.subf %308, %317 : vector<8x32xf32>
    %319 = arith.mulf %318, %318 : vector<8x32xf32>
    %cst_142 = arith.constant dense<0.000000e+00> : vector<8xf32>
    %320 = vector.multi_reduction <add>, %319, %cst_142 [1] : vector<8x32xf32> to vector<8xf32>
    %321 = vector.shape_cast %320 : vector<8xf32> to vector<8x1xf32>
    %cst_143 = arith.constant 3.200000e+01 : f32
    %322 = vector.broadcast %cst_143 : f32 to vector<8x1xf32>
    %323 = arith.divf %321, %322 : vector<8x1xf32>
    %cst_144 = arith.constant 9.99999974E-6 : f32
    %324 = vector.broadcast %cst_144 : f32 to vector<8x1xf32>
    %325 = arith.addf %323, %324 : vector<8x1xf32>
    %326 = math.rsqrt %325 : vector<8x1xf32>
    %327 = vector.broadcast %326 : vector<8x1xf32> to vector<8x32xf32>
    %328 = arith.mulf %318, %327 : vector<8x32xf32>
    %329 = vector.broadcast %310 : vector<1x32xf32> to vector<8x32xf32>
    %330 = arith.mulf %328, %329 : vector<8x32xf32>
    %331 = vector.broadcast %312 : vector<1x32xf32> to vector<8x32xf32>
    %332 = arith.addf %330, %331 : vector<8x32xf32>
    %c0_145 = arith.constant 0 : index
    %c0_146 = arith.constant 0 : index
    %333 = vector.load %arg36[%c0_145, %c0_146] : memref<1x32xf32, #tpu.memory_space<vmem>>, vector<1x32xf32>
    %c0_147 = arith.constant 0 : index
    %c0_148 = arith.constant 0 : index
    %334 = vector.load %arg37[%c0_147, %c0_148] : memref<1x32xf32, #tpu.memory_space<vmem>>, vector<1x32xf32>
    %cst_149 = arith.constant dense<0.000000e+00> : vector<8xf32>
    %335 = vector.multi_reduction <add>, %332, %cst_149 [1] : vector<8x32xf32> to vector<8xf32>
    %336 = vector.shape_cast %335 : vector<8xf32> to vector<8x1xf32>
    %cst_150 = arith.constant 3.200000e+01 : f32
    %337 = vector.broadcast %cst_150 : f32 to vector<8x1xf32>
    %338 = arith.divf %336, %337 : vector<8x1xf32>
    %339 = vector.broadcast %338 : vector<8x1xf32> to vector<8x32xf32>
    %340 = arith.subf %332, %339 : vector<8x32xf32>
    %341 = arith.mulf %340, %340 : vector<8x32xf32>
    %cst_151 = arith.constant dense<0.000000e+00> : vector<8xf32>
    %342 = vector.multi_reduction <add>, %341, %cst_151 [1] : vector<8x32xf32> to vector<8xf32>
    %343 = vector.shape_cast %342 : vector<8xf32> to vector<8x1xf32>
    %cst_152 = arith.constant 3.200000e+01 : f32
    %344 = vector.broadcast %cst_152 : f32 to vector<8x1xf32>
    %345 = arith.divf %343, %344 : vector<8x1xf32>
    %cst_153 = arith.constant 9.99999974E-6 : f32
    %346 = vector.broadcast %cst_153 : f32 to vector<8x1xf32>
    %347 = arith.addf %345, %346 : vector<8x1xf32>
    %348 = math.rsqrt %347 : vector<8x1xf32>
    %349 = vector.broadcast %348 : vector<8x1xf32> to vector<8x32xf32>
    %350 = arith.mulf %340, %349 : vector<8x32xf32>
    %351 = vector.broadcast %333 : vector<1x32xf32> to vector<8x32xf32>
    %352 = arith.mulf %350, %351 : vector<8x32xf32>
    %353 = vector.broadcast %334 : vector<1x32xf32> to vector<8x32xf32>
    %354 = arith.addf %352, %353 : vector<8x32xf32>
    %c0_154 = arith.constant 0 : index
    %c0_155 = arith.constant 0 : index
    %c0_156 = arith.constant 0 : index
    %355 = vector.load %arg2[%c0_154, %c0_155, %c0_156] : memref<1x32x8xf32, #tpu.memory_space<vmem>>, vector<1x32x8xf32>
    %356 = vector.shape_cast %355 : vector<1x32x8xf32> to vector<32x8xf32>
    %357 = tpu.transpose %356, [1, 0] : vector<32x8xf32> -> vector<8x32xf32>
    %358 = vector.broadcast %1 : vector<1x32xf32> to vector<8x32xf32>
    %359 = arith.addf %357, %358 : vector<8x32xf32>
    %c0_157 = arith.constant 0 : index
    %c0_158 = arith.constant 0 : index
    %c0_159 = arith.constant 0 : index
    %360 = vector.load %arg16[%c0_157, %c0_158, %c0_159] : memref<2x32x96xbf16, #tpu.memory_space<vmem>>, vector<1x32x96xbf16>
    %361 = vector.shape_cast %360 : vector<1x32x96xbf16> to vector<32x96xbf16>
    %c0_160 = arith.constant 0 : index
    %c0_161 = arith.constant 0 : index
    %c0_162 = arith.constant 0 : index
    %362 = vector.load %arg17[%c0_160, %c0_161, %c0_162] : memref<2x1x96xf32, #tpu.memory_space<vmem>>, vector<1x1x96xf32>
    %363 = vector.shape_cast %362 : vector<1x1x96xf32> to vector<1x96xf32>
    %364 = arith.truncf %359 : vector<8x32xf32> to vector<8x32xbf16>
    %cst_163 = arith.constant dense<0.000000e+00> : vector<8x96xf32>
    %365 = tpu.matmul %364, %361, %cst_163 {dimension_numbers = #tpu.dot_dimension_numbers<[1], [0], [0], [1], [0, 0, 1, 1], [], []>} : vector<8x32xbf16>, vector<32x96xbf16>, vector<8x96xf32> -> vector<8x96xf32>
    %366 = vector.broadcast %363 : vector<1x96xf32> to vector<8x96xf32>
    %367 = arith.addf %365, %366 : vector<8x96xf32>
    %368 = vector.extract_strided_slice %367 {offsets = [0, 0], sizes = [8, 32], strides = [1, 1]} : vector<8x96xf32> to vector<8x32xf32>
    %369 = vector.extract_strided_slice %367 {offsets = [0, 32], sizes = [8, 32], strides = [1, 1]} : vector<8x96xf32> to vector<8x32xf32>
    %370 = vector.extract_strided_slice %367 {offsets = [0, 64], sizes = [8, 32], strides = [1, 1]} : vector<8x96xf32> to vector<8x32xf32>
    %c0_164 = arith.constant 0 : index
    %c0_165 = arith.constant 0 : index
    %c0_166 = arith.constant 0 : index
    %371 = vector.load %arg18[%c0_164, %c0_165, %c0_166] : memref<2x32x32xbf16, #tpu.memory_space<vmem>>, vector<1x32x32xbf16>
    %372 = vector.shape_cast %371 : vector<1x32x32xbf16> to vector<32x32xbf16>
    %c0_167 = arith.constant 0 : index
    %c0_168 = arith.constant 0 : index
    %c0_169 = arith.constant 0 : index
    %373 = vector.load %arg19[%c0_167, %c0_168, %c0_169] : memref<2x1x32xf32, #tpu.memory_space<vmem>>, vector<1x1x32xf32>
    %374 = vector.shape_cast %373 : vector<1x1x32xf32> to vector<1x32xf32>
    %375 = arith.truncf %368 : vector<8x32xf32> to vector<8x32xbf16>
    %376 = arith.truncf %369 : vector<8x32xf32> to vector<8x32xbf16>
    %377 = arith.truncf %370 : vector<8x32xf32> to vector<8x32xbf16>
    %378 = vector.extract_strided_slice %375 {offsets = [0, 0], sizes = [8, 8], strides = [1, 1]} : vector<8x32xbf16> to vector<8x8xbf16>
    %379 = vector.extract_strided_slice %376 {offsets = [0, 0], sizes = [8, 8], strides = [1, 1]} : vector<8x32xbf16> to vector<8x8xbf16>
    %cst_170 = arith.constant dense<0.000000e+00> : vector<8x8xf32>
    %380 = tpu.matmul %378, %379, %cst_170 {dimension_numbers = #tpu.dot_dimension_numbers<[1], [1], [0], [0], [0, 0, 1, 0], [], []>} : vector<8x8xbf16>, vector<8x8xbf16>, vector<8x8xf32> -> vector<8x8xf32>
    %cst_171 = arith.constant 0.353553385 : f32
    %381 = vector.broadcast %cst_171 : f32 to vector<8x8xf32>
    %382 = arith.mulf %380, %381 : vector<8x8xf32>
    %cst_172 = arith.constant dense<0xFF800000> : vector<8xf32>
    %383 = vector.multi_reduction <maximumf>, %382, %cst_172 [1] : vector<8x8xf32> to vector<8xf32>
    %384 = vector.shape_cast %383 : vector<8xf32> to vector<8x1xf32>
    %385 = vector.broadcast %384 : vector<8x1xf32> to vector<8x8xf32>
    %386 = arith.subf %382, %385 : vector<8x8xf32>
    %387 = math.exp %386 : vector<8x8xf32>
    %cst_173 = arith.constant dense<0.000000e+00> : vector<8xf32>
    %388 = vector.multi_reduction <add>, %387, %cst_173 [1] : vector<8x8xf32> to vector<8xf32>
    %389 = vector.shape_cast %388 : vector<8xf32> to vector<8x1xf32>
    %390 = tpu.reciprocal %389 {approx = true} : vector<8x1xf32> -> vector<8x1xf32>
    %391 = vector.broadcast %390 : vector<8x1xf32> to vector<8x8xf32>
    %392 = arith.mulf %387, %391 : vector<8x8xf32>
    %393 = arith.truncf %392 : vector<8x8xf32> to vector<8x8xbf16>
    %394 = vector.extract_strided_slice %377 {offsets = [0, 0], sizes = [8, 8], strides = [1, 1]} : vector<8x32xbf16> to vector<8x8xbf16>
    %cst_174 = arith.constant dense<0.000000e+00> : vector<8x8xf32>
    %395 = tpu.matmul %393, %394, %cst_174 {dimension_numbers = #tpu.dot_dimension_numbers<[1], [0], [0], [1], [0, 0, 1, 1], [], []>} : vector<8x8xbf16>, vector<8x8xbf16>, vector<8x8xf32> -> vector<8x8xf32>
    %396 = vector.extract_strided_slice %375 {offsets = [0, 8], sizes = [8, 8], strides = [1, 1]} : vector<8x32xbf16> to vector<8x8xbf16>
    %397 = vector.extract_strided_slice %376 {offsets = [0, 8], sizes = [8, 8], strides = [1, 1]} : vector<8x32xbf16> to vector<8x8xbf16>
    %cst_175 = arith.constant dense<0.000000e+00> : vector<8x8xf32>
    %398 = tpu.matmul %396, %397, %cst_175 {dimension_numbers = #tpu.dot_dimension_numbers<[1], [1], [0], [0], [0, 0, 1, 0], [], []>} : vector<8x8xbf16>, vector<8x8xbf16>, vector<8x8xf32> -> vector<8x8xf32>
    %cst_176 = arith.constant 0.353553385 : f32
    %399 = vector.broadcast %cst_176 : f32 to vector<8x8xf32>
    %400 = arith.mulf %398, %399 : vector<8x8xf32>
    %cst_177 = arith.constant dense<0xFF800000> : vector<8xf32>
    %401 = vector.multi_reduction <maximumf>, %400, %cst_177 [1] : vector<8x8xf32> to vector<8xf32>
    %402 = vector.shape_cast %401 : vector<8xf32> to vector<8x1xf32>
    %403 = vector.broadcast %402 : vector<8x1xf32> to vector<8x8xf32>
    %404 = arith.subf %400, %403 : vector<8x8xf32>
    %405 = math.exp %404 : vector<8x8xf32>
    %cst_178 = arith.constant dense<0.000000e+00> : vector<8xf32>
    %406 = vector.multi_reduction <add>, %405, %cst_178 [1] : vector<8x8xf32> to vector<8xf32>
    %407 = vector.shape_cast %406 : vector<8xf32> to vector<8x1xf32>
    %408 = tpu.reciprocal %407 {approx = true} : vector<8x1xf32> -> vector<8x1xf32>
    %409 = vector.broadcast %408 : vector<8x1xf32> to vector<8x8xf32>
    %410 = arith.mulf %405, %409 : vector<8x8xf32>
    %411 = arith.truncf %410 : vector<8x8xf32> to vector<8x8xbf16>
    %412 = vector.extract_strided_slice %377 {offsets = [0, 8], sizes = [8, 8], strides = [1, 1]} : vector<8x32xbf16> to vector<8x8xbf16>
    %cst_179 = arith.constant dense<0.000000e+00> : vector<8x8xf32>
    %413 = tpu.matmul %411, %412, %cst_179 {dimension_numbers = #tpu.dot_dimension_numbers<[1], [0], [0], [1], [0, 0, 1, 1], [], []>} : vector<8x8xbf16>, vector<8x8xbf16>, vector<8x8xf32> -> vector<8x8xf32>
    %414 = vector.extract_strided_slice %375 {offsets = [0, 16], sizes = [8, 8], strides = [1, 1]} : vector<8x32xbf16> to vector<8x8xbf16>
    %415 = vector.extract_strided_slice %376 {offsets = [0, 16], sizes = [8, 8], strides = [1, 1]} : vector<8x32xbf16> to vector<8x8xbf16>
    %cst_180 = arith.constant dense<0.000000e+00> : vector<8x8xf32>
    %416 = tpu.matmul %414, %415, %cst_180 {dimension_numbers = #tpu.dot_dimension_numbers<[1], [1], [0], [0], [0, 0, 1, 0], [], []>} : vector<8x8xbf16>, vector<8x8xbf16>, vector<8x8xf32> -> vector<8x8xf32>
    %cst_181 = arith.constant 0.353553385 : f32
    %417 = vector.broadcast %cst_181 : f32 to vector<8x8xf32>
    %418 = arith.mulf %416, %417 : vector<8x8xf32>
    %cst_182 = arith.constant dense<0xFF800000> : vector<8xf32>
    %419 = vector.multi_reduction <maximumf>, %418, %cst_182 [1] : vector<8x8xf32> to vector<8xf32>
    %420 = vector.shape_cast %419 : vector<8xf32> to vector<8x1xf32>
    %421 = vector.broadcast %420 : vector<8x1xf32> to vector<8x8xf32>
    %422 = arith.subf %418, %421 : vector<8x8xf32>
    %423 = math.exp %422 : vector<8x8xf32>
    %cst_183 = arith.constant dense<0.000000e+00> : vector<8xf32>
    %424 = vector.multi_reduction <add>, %423, %cst_183 [1] : vector<8x8xf32> to vector<8xf32>
    %425 = vector.shape_cast %424 : vector<8xf32> to vector<8x1xf32>
    %426 = tpu.reciprocal %425 {approx = true} : vector<8x1xf32> -> vector<8x1xf32>
    %427 = vector.broadcast %426 : vector<8x1xf32> to vector<8x8xf32>
    %428 = arith.mulf %423, %427 : vector<8x8xf32>
    %429 = arith.truncf %428 : vector<8x8xf32> to vector<8x8xbf16>
    %430 = vector.extract_strided_slice %377 {offsets = [0, 16], sizes = [8, 8], strides = [1, 1]} : vector<8x32xbf16> to vector<8x8xbf16>
    %cst_184 = arith.constant dense<0.000000e+00> : vector<8x8xf32>
    %431 = tpu.matmul %429, %430, %cst_184 {dimension_numbers = #tpu.dot_dimension_numbers<[1], [0], [0], [1], [0, 0, 1, 1], [], []>} : vector<8x8xbf16>, vector<8x8xbf16>, vector<8x8xf32> -> vector<8x8xf32>
    %432 = vector.extract_strided_slice %375 {offsets = [0, 24], sizes = [8, 8], strides = [1, 1]} : vector<8x32xbf16> to vector<8x8xbf16>
    %433 = vector.extract_strided_slice %376 {offsets = [0, 24], sizes = [8, 8], strides = [1, 1]} : vector<8x32xbf16> to vector<8x8xbf16>
    %cst_185 = arith.constant dense<0.000000e+00> : vector<8x8xf32>
    %434 = tpu.matmul %432, %433, %cst_185 {dimension_numbers = #tpu.dot_dimension_numbers<[1], [1], [0], [0], [0, 0, 1, 0], [], []>} : vector<8x8xbf16>, vector<8x8xbf16>, vector<8x8xf32> -> vector<8x8xf32>
    %cst_186 = arith.constant 0.353553385 : f32
    %435 = vector.broadcast %cst_186 : f32 to vector<8x8xf32>
    %436 = arith.mulf %434, %435 : vector<8x8xf32>
    %cst_187 = arith.constant dense<0xFF800000> : vector<8xf32>
    %437 = vector.multi_reduction <maximumf>, %436, %cst_187 [1] : vector<8x8xf32> to vector<8xf32>
    %438 = vector.shape_cast %437 : vector<8xf32> to vector<8x1xf32>
    %439 = vector.broadcast %438 : vector<8x1xf32> to vector<8x8xf32>
    %440 = arith.subf %436, %439 : vector<8x8xf32>
    %441 = math.exp %440 : vector<8x8xf32>
    %cst_188 = arith.constant dense<0.000000e+00> : vector<8xf32>
    %442 = vector.multi_reduction <add>, %441, %cst_188 [1] : vector<8x8xf32> to vector<8xf32>
    %443 = vector.shape_cast %442 : vector<8xf32> to vector<8x1xf32>
    %444 = tpu.reciprocal %443 {approx = true} : vector<8x1xf32> -> vector<8x1xf32>
    %445 = vector.broadcast %444 : vector<8x1xf32> to vector<8x8xf32>
    %446 = arith.mulf %441, %445 : vector<8x8xf32>
    %447 = arith.truncf %446 : vector<8x8xf32> to vector<8x8xbf16>
    %448 = vector.extract_strided_slice %377 {offsets = [0, 24], sizes = [8, 8], strides = [1, 1]} : vector<8x32xbf16> to vector<8x8xbf16>
    %cst_189 = arith.constant dense<0.000000e+00> : vector<8x8xf32>
    %449 = tpu.matmul %447, %448, %cst_189 {dimension_numbers = #tpu.dot_dimension_numbers<[1], [0], [0], [1], [0, 0, 1, 1], [], []>} : vector<8x8xbf16>, vector<8x8xbf16>, vector<8x8xf32> -> vector<8x8xf32>
    %450 = tpu.concatenate %395, %413, %431, %449 in 1 : vector<8x8xf32>, vector<8x8xf32>, vector<8x8xf32>, vector<8x8xf32> -> vector<8x32xf32>
    %451 = arith.truncf %450 : vector<8x32xf32> to vector<8x32xbf16>
    %cst_190 = arith.constant dense<0.000000e+00> : vector<8x32xf32>
    %452 = tpu.matmul %451, %372, %cst_190 {dimension_numbers = #tpu.dot_dimension_numbers<[1], [0], [0], [1], [0, 0, 1, 1], [], []>} : vector<8x32xbf16>, vector<32x32xbf16>, vector<8x32xf32> -> vector<8x32xf32>
    %453 = vector.broadcast %374 : vector<1x32xf32> to vector<8x32xf32>
    %454 = arith.addf %452, %453 : vector<8x32xf32>
    %455 = arith.addf %359, %454 : vector<8x32xf32>
    %c0_191 = arith.constant 0 : index
    %c0_192 = arith.constant 0 : index
    %c0_193 = arith.constant 0 : index
    %456 = vector.load %arg30[%c0_191, %c0_192, %c0_193] : memref<2x1x32xf32, #tpu.memory_space<vmem>>, vector<1x1x32xf32>
    %457 = vector.shape_cast %456 : vector<1x1x32xf32> to vector<1x32xf32>
    %c0_194 = arith.constant 0 : index
    %c0_195 = arith.constant 0 : index
    %c0_196 = arith.constant 0 : index
    %458 = vector.load %arg31[%c0_194, %c0_195, %c0_196] : memref<2x1x32xf32, #tpu.memory_space<vmem>>, vector<1x1x32xf32>
    %459 = vector.shape_cast %458 : vector<1x1x32xf32> to vector<1x32xf32>
    %cst_197 = arith.constant dense<0.000000e+00> : vector<8xf32>
    %460 = vector.multi_reduction <add>, %455, %cst_197 [1] : vector<8x32xf32> to vector<8xf32>
    %461 = vector.shape_cast %460 : vector<8xf32> to vector<8x1xf32>
    %cst_198 = arith.constant 3.200000e+01 : f32
    %462 = vector.broadcast %cst_198 : f32 to vector<8x1xf32>
    %463 = arith.divf %461, %462 : vector<8x1xf32>
    %464 = vector.broadcast %463 : vector<8x1xf32> to vector<8x32xf32>
    %465 = arith.subf %455, %464 : vector<8x32xf32>
    %466 = arith.mulf %465, %465 : vector<8x32xf32>
    %cst_199 = arith.constant dense<0.000000e+00> : vector<8xf32>
    %467 = vector.multi_reduction <add>, %466, %cst_199 [1] : vector<8x32xf32> to vector<8xf32>
    %468 = vector.shape_cast %467 : vector<8xf32> to vector<8x1xf32>
    %cst_200 = arith.constant 3.200000e+01 : f32
    %469 = vector.broadcast %cst_200 : f32 to vector<8x1xf32>
    %470 = arith.divf %468, %469 : vector<8x1xf32>
    %cst_201 = arith.constant 9.99999974E-6 : f32
    %471 = vector.broadcast %cst_201 : f32 to vector<8x1xf32>
    %472 = arith.addf %470, %471 : vector<8x1xf32>
    %473 = math.rsqrt %472 : vector<8x1xf32>
    %474 = vector.broadcast %473 : vector<8x1xf32> to vector<8x32xf32>
    %475 = arith.mulf %465, %474 : vector<8x32xf32>
    %476 = vector.broadcast %457 : vector<1x32xf32> to vector<8x32xf32>
    %477 = arith.mulf %475, %476 : vector<8x32xf32>
    %478 = vector.broadcast %459 : vector<1x32xf32> to vector<8x32xf32>
    %479 = arith.addf %477, %478 : vector<8x32xf32>
    %c0_202 = arith.constant 0 : index
    %c0_203 = arith.constant 0 : index
    %c0_204 = arith.constant 0 : index
    %480 = vector.load %arg20[%c0_202, %c0_203, %c0_204] : memref<2x32x32xbf16, #tpu.memory_space<vmem>>, vector<1x32x32xbf16>
    %481 = vector.shape_cast %480 : vector<1x32x32xbf16> to vector<32x32xbf16>
    %c0_205 = arith.constant 0 : index
    %c0_206 = arith.constant 0 : index
    %c0_207 = arith.constant 0 : index
    %482 = vector.load %arg21[%c0_205, %c0_206, %c0_207] : memref<2x1x32xf32, #tpu.memory_space<vmem>>, vector<1x1x32xf32>
    %483 = vector.shape_cast %482 : vector<1x1x32xf32> to vector<1x32xf32>
    %484 = arith.truncf %479 : vector<8x32xf32> to vector<8x32xbf16>
    %cst_208 = arith.constant dense<0.000000e+00> : vector<8x32xf32>
    %485 = tpu.matmul %484, %481, %cst_208 {dimension_numbers = #tpu.dot_dimension_numbers<[1], [0], [0], [1], [0, 0, 1, 1], [], []>} : vector<8x32xbf16>, vector<32x32xbf16>, vector<8x32xf32> -> vector<8x32xf32>
    %486 = vector.broadcast %483 : vector<1x32xf32> to vector<8x32xf32>
    %487 = arith.addf %485, %486 : vector<8x32xf32>
    %c0_209 = arith.constant 0 : index
    %c0_210 = arith.constant 0 : index
    %c0_211 = arith.constant 0 : index
    %488 = vector.load %arg22[%c0_209, %c0_210, %c0_211] : memref<2x32x64xbf16, #tpu.memory_space<vmem>>, vector<1x32x64xbf16>
    %489 = vector.shape_cast %488 : vector<1x32x64xbf16> to vector<32x64xbf16>
    %c0_212 = arith.constant 0 : index
    %c0_213 = arith.constant 0 : index
    %c0_214 = arith.constant 0 : index
    %490 = vector.load %arg23[%c0_212, %c0_213, %c0_214] : memref<2x1x64xf32, #tpu.memory_space<vmem>>, vector<1x1x64xf32>
    %491 = vector.shape_cast %490 : vector<1x1x64xf32> to vector<1x64xf32>
    %492 = arith.truncf %354 : vector<8x32xf32> to vector<8x32xbf16>
    %cst_215 = arith.constant dense<0.000000e+00> : vector<8x64xf32>
    %493 = tpu.matmul %492, %489, %cst_215 {dimension_numbers = #tpu.dot_dimension_numbers<[1], [0], [0], [1], [0, 0, 1, 1], [], []>} : vector<8x32xbf16>, vector<32x64xbf16>, vector<8x64xf32> -> vector<8x64xf32>
    %494 = vector.broadcast %491 : vector<1x64xf32> to vector<8x64xf32>
    %495 = arith.addf %493, %494 : vector<8x64xf32>
    %496 = vector.extract_strided_slice %495 {offsets = [0, 0], sizes = [8, 32], strides = [1, 1]} : vector<8x64xf32> to vector<8x32xf32>
    %497 = vector.extract_strided_slice %495 {offsets = [0, 32], sizes = [8, 32], strides = [1, 1]} : vector<8x64xf32> to vector<8x32xf32>
    %c0_216 = arith.constant 0 : index
    %c0_217 = arith.constant 0 : index
    %c0_218 = arith.constant 0 : index
    %498 = vector.load %arg24[%c0_216, %c0_217, %c0_218] : memref<2x32x32xbf16, #tpu.memory_space<vmem>>, vector<1x32x32xbf16>
    %499 = vector.shape_cast %498 : vector<1x32x32xbf16> to vector<32x32xbf16>
    %c0_219 = arith.constant 0 : index
    %c0_220 = arith.constant 0 : index
    %c0_221 = arith.constant 0 : index
    %500 = vector.load %arg25[%c0_219, %c0_220, %c0_221] : memref<2x1x32xf32, #tpu.memory_space<vmem>>, vector<1x1x32xf32>
    %501 = vector.shape_cast %500 : vector<1x1x32xf32> to vector<1x32xf32>
    %502 = arith.truncf %487 : vector<8x32xf32> to vector<8x32xbf16>
    %503 = arith.truncf %496 : vector<8x32xf32> to vector<8x32xbf16>
    %504 = arith.truncf %497 : vector<8x32xf32> to vector<8x32xbf16>
    %505 = vector.extract_strided_slice %502 {offsets = [0, 0], sizes = [8, 8], strides = [1, 1]} : vector<8x32xbf16> to vector<8x8xbf16>
    %506 = vector.extract_strided_slice %503 {offsets = [0, 0], sizes = [8, 8], strides = [1, 1]} : vector<8x32xbf16> to vector<8x8xbf16>
    %cst_222 = arith.constant dense<0.000000e+00> : vector<8x8xf32>
    %507 = tpu.matmul %505, %506, %cst_222 {dimension_numbers = #tpu.dot_dimension_numbers<[1], [1], [0], [0], [0, 0, 1, 0], [], []>} : vector<8x8xbf16>, vector<8x8xbf16>, vector<8x8xf32> -> vector<8x8xf32>
    %cst_223 = arith.constant 0.353553385 : f32
    %508 = vector.broadcast %cst_223 : f32 to vector<8x8xf32>
    %509 = arith.mulf %507, %508 : vector<8x8xf32>
    %cst_224 = arith.constant dense<0xFF800000> : vector<8xf32>
    %510 = vector.multi_reduction <maximumf>, %509, %cst_224 [1] : vector<8x8xf32> to vector<8xf32>
    %511 = vector.shape_cast %510 : vector<8xf32> to vector<8x1xf32>
    %512 = vector.broadcast %511 : vector<8x1xf32> to vector<8x8xf32>
    %513 = arith.subf %509, %512 : vector<8x8xf32>
    %514 = math.exp %513 : vector<8x8xf32>
    %cst_225 = arith.constant dense<0.000000e+00> : vector<8xf32>
    %515 = vector.multi_reduction <add>, %514, %cst_225 [1] : vector<8x8xf32> to vector<8xf32>
    %516 = vector.shape_cast %515 : vector<8xf32> to vector<8x1xf32>
    %517 = tpu.reciprocal %516 {approx = true} : vector<8x1xf32> -> vector<8x1xf32>
    %518 = vector.broadcast %517 : vector<8x1xf32> to vector<8x8xf32>
    %519 = arith.mulf %514, %518 : vector<8x8xf32>
    %520 = arith.truncf %519 : vector<8x8xf32> to vector<8x8xbf16>
    %521 = vector.extract_strided_slice %504 {offsets = [0, 0], sizes = [8, 8], strides = [1, 1]} : vector<8x32xbf16> to vector<8x8xbf16>
    %cst_226 = arith.constant dense<0.000000e+00> : vector<8x8xf32>
    %522 = tpu.matmul %520, %521, %cst_226 {dimension_numbers = #tpu.dot_dimension_numbers<[1], [0], [0], [1], [0, 0, 1, 1], [], []>} : vector<8x8xbf16>, vector<8x8xbf16>, vector<8x8xf32> -> vector<8x8xf32>
    %523 = vector.extract_strided_slice %502 {offsets = [0, 8], sizes = [8, 8], strides = [1, 1]} : vector<8x32xbf16> to vector<8x8xbf16>
    %524 = vector.extract_strided_slice %503 {offsets = [0, 8], sizes = [8, 8], strides = [1, 1]} : vector<8x32xbf16> to vector<8x8xbf16>
    %cst_227 = arith.constant dense<0.000000e+00> : vector<8x8xf32>
    %525 = tpu.matmul %523, %524, %cst_227 {dimension_numbers = #tpu.dot_dimension_numbers<[1], [1], [0], [0], [0, 0, 1, 0], [], []>} : vector<8x8xbf16>, vector<8x8xbf16>, vector<8x8xf32> -> vector<8x8xf32>
    %cst_228 = arith.constant 0.353553385 : f32
    %526 = vector.broadcast %cst_228 : f32 to vector<8x8xf32>
    %527 = arith.mulf %525, %526 : vector<8x8xf32>
    %cst_229 = arith.constant dense<0xFF800000> : vector<8xf32>
    %528 = vector.multi_reduction <maximumf>, %527, %cst_229 [1] : vector<8x8xf32> to vector<8xf32>
    %529 = vector.shape_cast %528 : vector<8xf32> to vector<8x1xf32>
    %530 = vector.broadcast %529 : vector<8x1xf32> to vector<8x8xf32>
    %531 = arith.subf %527, %530 : vector<8x8xf32>
    %532 = math.exp %531 : vector<8x8xf32>
    %cst_230 = arith.constant dense<0.000000e+00> : vector<8xf32>
    %533 = vector.multi_reduction <add>, %532, %cst_230 [1] : vector<8x8xf32> to vector<8xf32>
    %534 = vector.shape_cast %533 : vector<8xf32> to vector<8x1xf32>
    %535 = tpu.reciprocal %534 {approx = true} : vector<8x1xf32> -> vector<8x1xf32>
    %536 = vector.broadcast %535 : vector<8x1xf32> to vector<8x8xf32>
    %537 = arith.mulf %532, %536 : vector<8x8xf32>
    %538 = arith.truncf %537 : vector<8x8xf32> to vector<8x8xbf16>
    %539 = vector.extract_strided_slice %504 {offsets = [0, 8], sizes = [8, 8], strides = [1, 1]} : vector<8x32xbf16> to vector<8x8xbf16>
    %cst_231 = arith.constant dense<0.000000e+00> : vector<8x8xf32>
    %540 = tpu.matmul %538, %539, %cst_231 {dimension_numbers = #tpu.dot_dimension_numbers<[1], [0], [0], [1], [0, 0, 1, 1], [], []>} : vector<8x8xbf16>, vector<8x8xbf16>, vector<8x8xf32> -> vector<8x8xf32>
    %541 = vector.extract_strided_slice %502 {offsets = [0, 16], sizes = [8, 8], strides = [1, 1]} : vector<8x32xbf16> to vector<8x8xbf16>
    %542 = vector.extract_strided_slice %503 {offsets = [0, 16], sizes = [8, 8], strides = [1, 1]} : vector<8x32xbf16> to vector<8x8xbf16>
    %cst_232 = arith.constant dense<0.000000e+00> : vector<8x8xf32>
    %543 = tpu.matmul %541, %542, %cst_232 {dimension_numbers = #tpu.dot_dimension_numbers<[1], [1], [0], [0], [0, 0, 1, 0], [], []>} : vector<8x8xbf16>, vector<8x8xbf16>, vector<8x8xf32> -> vector<8x8xf32>
    %cst_233 = arith.constant 0.353553385 : f32
    %544 = vector.broadcast %cst_233 : f32 to vector<8x8xf32>
    %545 = arith.mulf %543, %544 : vector<8x8xf32>
    %cst_234 = arith.constant dense<0xFF800000> : vector<8xf32>
    %546 = vector.multi_reduction <maximumf>, %545, %cst_234 [1] : vector<8x8xf32> to vector<8xf32>
    %547 = vector.shape_cast %546 : vector<8xf32> to vector<8x1xf32>
    %548 = vector.broadcast %547 : vector<8x1xf32> to vector<8x8xf32>
    %549 = arith.subf %545, %548 : vector<8x8xf32>
    %550 = math.exp %549 : vector<8x8xf32>
    %cst_235 = arith.constant dense<0.000000e+00> : vector<8xf32>
    %551 = vector.multi_reduction <add>, %550, %cst_235 [1] : vector<8x8xf32> to vector<8xf32>
    %552 = vector.shape_cast %551 : vector<8xf32> to vector<8x1xf32>
    %553 = tpu.reciprocal %552 {approx = true} : vector<8x1xf32> -> vector<8x1xf32>
    %554 = vector.broadcast %553 : vector<8x1xf32> to vector<8x8xf32>
    %555 = arith.mulf %550, %554 : vector<8x8xf32>
    %556 = arith.truncf %555 : vector<8x8xf32> to vector<8x8xbf16>
    %557 = vector.extract_strided_slice %504 {offsets = [0, 16], sizes = [8, 8], strides = [1, 1]} : vector<8x32xbf16> to vector<8x8xbf16>
    %cst_236 = arith.constant dense<0.000000e+00> : vector<8x8xf32>
    %558 = tpu.matmul %556, %557, %cst_236 {dimension_numbers = #tpu.dot_dimension_numbers<[1], [0], [0], [1], [0, 0, 1, 1], [], []>} : vector<8x8xbf16>, vector<8x8xbf16>, vector<8x8xf32> -> vector<8x8xf32>
    %559 = vector.extract_strided_slice %502 {offsets = [0, 24], sizes = [8, 8], strides = [1, 1]} : vector<8x32xbf16> to vector<8x8xbf16>
    %560 = vector.extract_strided_slice %503 {offsets = [0, 24], sizes = [8, 8], strides = [1, 1]} : vector<8x32xbf16> to vector<8x8xbf16>
    %cst_237 = arith.constant dense<0.000000e+00> : vector<8x8xf32>
    %561 = tpu.matmul %559, %560, %cst_237 {dimension_numbers = #tpu.dot_dimension_numbers<[1], [1], [0], [0], [0, 0, 1, 0], [], []>} : vector<8x8xbf16>, vector<8x8xbf16>, vector<8x8xf32> -> vector<8x8xf32>
    %cst_238 = arith.constant 0.353553385 : f32
    %562 = vector.broadcast %cst_238 : f32 to vector<8x8xf32>
    %563 = arith.mulf %561, %562 : vector<8x8xf32>
    %cst_239 = arith.constant dense<0xFF800000> : vector<8xf32>
    %564 = vector.multi_reduction <maximumf>, %563, %cst_239 [1] : vector<8x8xf32> to vector<8xf32>
    %565 = vector.shape_cast %564 : vector<8xf32> to vector<8x1xf32>
    %566 = vector.broadcast %565 : vector<8x1xf32> to vector<8x8xf32>
    %567 = arith.subf %563, %566 : vector<8x8xf32>
    %568 = math.exp %567 : vector<8x8xf32>
    %cst_240 = arith.constant dense<0.000000e+00> : vector<8xf32>
    %569 = vector.multi_reduction <add>, %568, %cst_240 [1] : vector<8x8xf32> to vector<8xf32>
    %570 = vector.shape_cast %569 : vector<8xf32> to vector<8x1xf32>
    %571 = tpu.reciprocal %570 {approx = true} : vector<8x1xf32> -> vector<8x1xf32>
    %572 = vector.broadcast %571 : vector<8x1xf32> to vector<8x8xf32>
    %573 = arith.mulf %568, %572 : vector<8x8xf32>
    %574 = arith.truncf %573 : vector<8x8xf32> to vector<8x8xbf16>
    %575 = vector.extract_strided_slice %504 {offsets = [0, 24], sizes = [8, 8], strides = [1, 1]} : vector<8x32xbf16> to vector<8x8xbf16>
    %cst_241 = arith.constant dense<0.000000e+00> : vector<8x8xf32>
    %576 = tpu.matmul %574, %575, %cst_241 {dimension_numbers = #tpu.dot_dimension_numbers<[1], [0], [0], [1], [0, 0, 1, 1], [], []>} : vector<8x8xbf16>, vector<8x8xbf16>, vector<8x8xf32> -> vector<8x8xf32>
    %577 = tpu.concatenate %522, %540, %558, %576 in 1 : vector<8x8xf32>, vector<8x8xf32>, vector<8x8xf32>, vector<8x8xf32> -> vector<8x32xf32>
    %578 = arith.truncf %577 : vector<8x32xf32> to vector<8x32xbf16>
    %cst_242 = arith.constant dense<0.000000e+00> : vector<8x32xf32>
    %579 = tpu.matmul %578, %499, %cst_242 {dimension_numbers = #tpu.dot_dimension_numbers<[1], [0], [0], [1], [0, 0, 1, 1], [], []>} : vector<8x32xbf16>, vector<32x32xbf16>, vector<8x32xf32> -> vector<8x32xf32>
    %580 = vector.broadcast %501 : vector<1x32xf32> to vector<8x32xf32>
    %581 = arith.addf %579, %580 : vector<8x32xf32>
    %582 = arith.addf %479, %581 : vector<8x32xf32>
    %c0_243 = arith.constant 0 : index
    %c0_244 = arith.constant 0 : index
    %c0_245 = arith.constant 0 : index
    %583 = vector.load %arg32[%c0_243, %c0_244, %c0_245] : memref<2x1x32xf32, #tpu.memory_space<vmem>>, vector<1x1x32xf32>
    %584 = vector.shape_cast %583 : vector<1x1x32xf32> to vector<1x32xf32>
    %c0_246 = arith.constant 0 : index
    %c0_247 = arith.constant 0 : index
    %c0_248 = arith.constant 0 : index
    %585 = vector.load %arg33[%c0_246, %c0_247, %c0_248] : memref<2x1x32xf32, #tpu.memory_space<vmem>>, vector<1x1x32xf32>
    %586 = vector.shape_cast %585 : vector<1x1x32xf32> to vector<1x32xf32>
    %cst_249 = arith.constant dense<0.000000e+00> : vector<8xf32>
    %587 = vector.multi_reduction <add>, %582, %cst_249 [1] : vector<8x32xf32> to vector<8xf32>
    %588 = vector.shape_cast %587 : vector<8xf32> to vector<8x1xf32>
    %cst_250 = arith.constant 3.200000e+01 : f32
    %589 = vector.broadcast %cst_250 : f32 to vector<8x1xf32>
    %590 = arith.divf %588, %589 : vector<8x1xf32>
    %591 = vector.broadcast %590 : vector<8x1xf32> to vector<8x32xf32>
    %592 = arith.subf %582, %591 : vector<8x32xf32>
    %593 = arith.mulf %592, %592 : vector<8x32xf32>
    %cst_251 = arith.constant dense<0.000000e+00> : vector<8xf32>
    %594 = vector.multi_reduction <add>, %593, %cst_251 [1] : vector<8x32xf32> to vector<8xf32>
    %595 = vector.shape_cast %594 : vector<8xf32> to vector<8x1xf32>
    %cst_252 = arith.constant 3.200000e+01 : f32
    %596 = vector.broadcast %cst_252 : f32 to vector<8x1xf32>
    %597 = arith.divf %595, %596 : vector<8x1xf32>
    %cst_253 = arith.constant 9.99999974E-6 : f32
    %598 = vector.broadcast %cst_253 : f32 to vector<8x1xf32>
    %599 = arith.addf %597, %598 : vector<8x1xf32>
    %600 = math.rsqrt %599 : vector<8x1xf32>
    %601 = vector.broadcast %600 : vector<8x1xf32> to vector<8x32xf32>
    %602 = arith.mulf %592, %601 : vector<8x32xf32>
    %603 = vector.broadcast %584 : vector<1x32xf32> to vector<8x32xf32>
    %604 = arith.mulf %602, %603 : vector<8x32xf32>
    %605 = vector.broadcast %586 : vector<1x32xf32> to vector<8x32xf32>
    %606 = arith.addf %604, %605 : vector<8x32xf32>
    %c0_254 = arith.constant 0 : index
    %c0_255 = arith.constant 0 : index
    %c0_256 = arith.constant 0 : index
    %607 = vector.load %arg26[%c0_254, %c0_255, %c0_256] : memref<2x32x64xbf16, #tpu.memory_space<vmem>>, vector<1x32x64xbf16>
    %608 = vector.shape_cast %607 : vector<1x32x64xbf16> to vector<32x64xbf16>
    %c0_257 = arith.constant 0 : index
    %c0_258 = arith.constant 0 : index
    %c0_259 = arith.constant 0 : index
    %609 = vector.load %arg27[%c0_257, %c0_258, %c0_259] : memref<2x1x64xf32, #tpu.memory_space<vmem>>, vector<1x1x64xf32>
    %610 = vector.shape_cast %609 : vector<1x1x64xf32> to vector<1x64xf32>
    %611 = arith.truncf %606 : vector<8x32xf32> to vector<8x32xbf16>
    %cst_260 = arith.constant dense<0.000000e+00> : vector<8x64xf32>
    %612 = tpu.matmul %611, %608, %cst_260 {dimension_numbers = #tpu.dot_dimension_numbers<[1], [0], [0], [1], [0, 0, 1, 1], [], []>} : vector<8x32xbf16>, vector<32x64xbf16>, vector<8x64xf32> -> vector<8x64xf32>
    %613 = vector.broadcast %610 : vector<1x64xf32> to vector<8x64xf32>
    %614 = arith.addf %612, %613 : vector<8x64xf32>
    %cst_261 = arith.constant 0.000000e+00 : f32
    %615 = vector.broadcast %cst_261 : f32 to vector<8x64xf32>
    %616 = arith.maximumf %614, %615 : vector<8x64xf32>
    %c0_262 = arith.constant 0 : index
    %c0_263 = arith.constant 0 : index
    %c0_264 = arith.constant 0 : index
    %617 = vector.load %arg28[%c0_262, %c0_263, %c0_264] : memref<2x64x32xbf16, #tpu.memory_space<vmem>>, vector<1x64x32xbf16>
    %618 = vector.shape_cast %617 : vector<1x64x32xbf16> to vector<64x32xbf16>
    %c0_265 = arith.constant 0 : index
    %c0_266 = arith.constant 0 : index
    %c0_267 = arith.constant 0 : index
    %619 = vector.load %arg29[%c0_265, %c0_266, %c0_267] : memref<2x1x32xf32, #tpu.memory_space<vmem>>, vector<1x1x32xf32>
    %620 = vector.shape_cast %619 : vector<1x1x32xf32> to vector<1x32xf32>
    %621 = arith.truncf %616 : vector<8x64xf32> to vector<8x64xbf16>
    %cst_268 = arith.constant dense<0.000000e+00> : vector<8x32xf32>
    %622 = tpu.matmul %621, %618, %cst_268 {dimension_numbers = #tpu.dot_dimension_numbers<[1], [0], [0], [1], [0, 0, 1, 1], [], []>} : vector<8x64xbf16>, vector<64x32xbf16>, vector<8x32xf32> -> vector<8x32xf32>
    %623 = vector.broadcast %620 : vector<1x32xf32> to vector<8x32xf32>
    %624 = arith.addf %622, %623 : vector<8x32xf32>
    %625 = arith.addf %606, %624 : vector<8x32xf32>
    %c0_269 = arith.constant 0 : index
    %c0_270 = arith.constant 0 : index
    %c0_271 = arith.constant 0 : index
    %626 = vector.load %arg34[%c0_269, %c0_270, %c0_271] : memref<2x1x32xf32, #tpu.memory_space<vmem>>, vector<1x1x32xf32>
    %627 = vector.shape_cast %626 : vector<1x1x32xf32> to vector<1x32xf32>
    %c0_272 = arith.constant 0 : index
    %c0_273 = arith.constant 0 : index
    %c0_274 = arith.constant 0 : index
    %628 = vector.load %arg35[%c0_272, %c0_273, %c0_274] : memref<2x1x32xf32, #tpu.memory_space<vmem>>, vector<1x1x32xf32>
    %629 = vector.shape_cast %628 : vector<1x1x32xf32> to vector<1x32xf32>
    %cst_275 = arith.constant dense<0.000000e+00> : vector<8xf32>
    %630 = vector.multi_reduction <add>, %625, %cst_275 [1] : vector<8x32xf32> to vector<8xf32>
    %631 = vector.shape_cast %630 : vector<8xf32> to vector<8x1xf32>
    %cst_276 = arith.constant 3.200000e+01 : f32
    %632 = vector.broadcast %cst_276 : f32 to vector<8x1xf32>
    %633 = arith.divf %631, %632 : vector<8x1xf32>
    %634 = vector.broadcast %633 : vector<8x1xf32> to vector<8x32xf32>
    %635 = arith.subf %625, %634 : vector<8x32xf32>
    %636 = arith.mulf %635, %635 : vector<8x32xf32>
    %cst_277 = arith.constant dense<0.000000e+00> : vector<8xf32>
    %637 = vector.multi_reduction <add>, %636, %cst_277 [1] : vector<8x32xf32> to vector<8xf32>
    %638 = vector.shape_cast %637 : vector<8xf32> to vector<8x1xf32>
    %cst_278 = arith.constant 3.200000e+01 : f32
    %639 = vector.broadcast %cst_278 : f32 to vector<8x1xf32>
    %640 = arith.divf %638, %639 : vector<8x1xf32>
    %cst_279 = arith.constant 9.99999974E-6 : f32
    %641 = vector.broadcast %cst_279 : f32 to vector<8x1xf32>
    %642 = arith.addf %640, %641 : vector<8x1xf32>
    %643 = math.rsqrt %642 : vector<8x1xf32>
    %644 = vector.broadcast %643 : vector<8x1xf32> to vector<8x32xf32>
    %645 = arith.mulf %635, %644 : vector<8x32xf32>
    %646 = vector.broadcast %627 : vector<1x32xf32> to vector<8x32xf32>
    %647 = arith.mulf %645, %646 : vector<8x32xf32>
    %648 = vector.broadcast %629 : vector<1x32xf32> to vector<8x32xf32>
    %649 = arith.addf %647, %648 : vector<8x32xf32>
    %c1_280 = arith.constant 1 : index
    %c0_281 = arith.constant 0 : index
    %c0_282 = arith.constant 0 : index
    %650 = vector.load %arg16[%c1_280, %c0_281, %c0_282] : memref<2x32x96xbf16, #tpu.memory_space<vmem>>, vector<1x32x96xbf16>
    %651 = vector.shape_cast %650 : vector<1x32x96xbf16> to vector<32x96xbf16>
    %c1_283 = arith.constant 1 : index
    %c0_284 = arith.constant 0 : index
    %c0_285 = arith.constant 0 : index
    %652 = vector.load %arg17[%c1_283, %c0_284, %c0_285] : memref<2x1x96xf32, #tpu.memory_space<vmem>>, vector<1x1x96xf32>
    %653 = vector.shape_cast %652 : vector<1x1x96xf32> to vector<1x96xf32>
    %654 = arith.truncf %649 : vector<8x32xf32> to vector<8x32xbf16>
    %cst_286 = arith.constant dense<0.000000e+00> : vector<8x96xf32>
    %655 = tpu.matmul %654, %651, %cst_286 {dimension_numbers = #tpu.dot_dimension_numbers<[1], [0], [0], [1], [0, 0, 1, 1], [], []>} : vector<8x32xbf16>, vector<32x96xbf16>, vector<8x96xf32> -> vector<8x96xf32>
    %656 = vector.broadcast %653 : vector<1x96xf32> to vector<8x96xf32>
    %657 = arith.addf %655, %656 : vector<8x96xf32>
    %658 = vector.extract_strided_slice %657 {offsets = [0, 0], sizes = [8, 32], strides = [1, 1]} : vector<8x96xf32> to vector<8x32xf32>
    %659 = vector.extract_strided_slice %657 {offsets = [0, 32], sizes = [8, 32], strides = [1, 1]} : vector<8x96xf32> to vector<8x32xf32>
    %660 = vector.extract_strided_slice %657 {offsets = [0, 64], sizes = [8, 32], strides = [1, 1]} : vector<8x96xf32> to vector<8x32xf32>
    %c1_287 = arith.constant 1 : index
    %c0_288 = arith.constant 0 : index
    %c0_289 = arith.constant 0 : index
    %661 = vector.load %arg18[%c1_287, %c0_288, %c0_289] : memref<2x32x32xbf16, #tpu.memory_space<vmem>>, vector<1x32x32xbf16>
    %662 = vector.shape_cast %661 : vector<1x32x32xbf16> to vector<32x32xbf16>
    %c1_290 = arith.constant 1 : index
    %c0_291 = arith.constant 0 : index
    %c0_292 = arith.constant 0 : index
    %663 = vector.load %arg19[%c1_290, %c0_291, %c0_292] : memref<2x1x32xf32, #tpu.memory_space<vmem>>, vector<1x1x32xf32>
    %664 = vector.shape_cast %663 : vector<1x1x32xf32> to vector<1x32xf32>
    %665 = arith.truncf %658 : vector<8x32xf32> to vector<8x32xbf16>
    %666 = arith.truncf %659 : vector<8x32xf32> to vector<8x32xbf16>
    %667 = arith.truncf %660 : vector<8x32xf32> to vector<8x32xbf16>
    %668 = vector.extract_strided_slice %665 {offsets = [0, 0], sizes = [8, 8], strides = [1, 1]} : vector<8x32xbf16> to vector<8x8xbf16>
    %669 = vector.extract_strided_slice %666 {offsets = [0, 0], sizes = [8, 8], strides = [1, 1]} : vector<8x32xbf16> to vector<8x8xbf16>
    %cst_293 = arith.constant dense<0.000000e+00> : vector<8x8xf32>
    %670 = tpu.matmul %668, %669, %cst_293 {dimension_numbers = #tpu.dot_dimension_numbers<[1], [1], [0], [0], [0, 0, 1, 0], [], []>} : vector<8x8xbf16>, vector<8x8xbf16>, vector<8x8xf32> -> vector<8x8xf32>
    %cst_294 = arith.constant 0.353553385 : f32
    %671 = vector.broadcast %cst_294 : f32 to vector<8x8xf32>
    %672 = arith.mulf %670, %671 : vector<8x8xf32>
    %cst_295 = arith.constant dense<0xFF800000> : vector<8xf32>
    %673 = vector.multi_reduction <maximumf>, %672, %cst_295 [1] : vector<8x8xf32> to vector<8xf32>
    %674 = vector.shape_cast %673 : vector<8xf32> to vector<8x1xf32>
    %675 = vector.broadcast %674 : vector<8x1xf32> to vector<8x8xf32>
    %676 = arith.subf %672, %675 : vector<8x8xf32>
    %677 = math.exp %676 : vector<8x8xf32>
    %cst_296 = arith.constant dense<0.000000e+00> : vector<8xf32>
    %678 = vector.multi_reduction <add>, %677, %cst_296 [1] : vector<8x8xf32> to vector<8xf32>
    %679 = vector.shape_cast %678 : vector<8xf32> to vector<8x1xf32>
    %680 = tpu.reciprocal %679 {approx = true} : vector<8x1xf32> -> vector<8x1xf32>
    %681 = vector.broadcast %680 : vector<8x1xf32> to vector<8x8xf32>
    %682 = arith.mulf %677, %681 : vector<8x8xf32>
    %683 = arith.truncf %682 : vector<8x8xf32> to vector<8x8xbf16>
    %684 = vector.extract_strided_slice %667 {offsets = [0, 0], sizes = [8, 8], strides = [1, 1]} : vector<8x32xbf16> to vector<8x8xbf16>
    %cst_297 = arith.constant dense<0.000000e+00> : vector<8x8xf32>
    %685 = tpu.matmul %683, %684, %cst_297 {dimension_numbers = #tpu.dot_dimension_numbers<[1], [0], [0], [1], [0, 0, 1, 1], [], []>} : vector<8x8xbf16>, vector<8x8xbf16>, vector<8x8xf32> -> vector<8x8xf32>
    %686 = vector.extract_strided_slice %665 {offsets = [0, 8], sizes = [8, 8], strides = [1, 1]} : vector<8x32xbf16> to vector<8x8xbf16>
    %687 = vector.extract_strided_slice %666 {offsets = [0, 8], sizes = [8, 8], strides = [1, 1]} : vector<8x32xbf16> to vector<8x8xbf16>
    %cst_298 = arith.constant dense<0.000000e+00> : vector<8x8xf32>
    %688 = tpu.matmul %686, %687, %cst_298 {dimension_numbers = #tpu.dot_dimension_numbers<[1], [1], [0], [0], [0, 0, 1, 0], [], []>} : vector<8x8xbf16>, vector<8x8xbf16>, vector<8x8xf32> -> vector<8x8xf32>
    %cst_299 = arith.constant 0.353553385 : f32
    %689 = vector.broadcast %cst_299 : f32 to vector<8x8xf32>
    %690 = arith.mulf %688, %689 : vector<8x8xf32>
    %cst_300 = arith.constant dense<0xFF800000> : vector<8xf32>
    %691 = vector.multi_reduction <maximumf>, %690, %cst_300 [1] : vector<8x8xf32> to vector<8xf32>
    %692 = vector.shape_cast %691 : vector<8xf32> to vector<8x1xf32>
    %693 = vector.broadcast %692 : vector<8x1xf32> to vector<8x8xf32>
    %694 = arith.subf %690, %693 : vector<8x8xf32>
    %695 = math.exp %694 : vector<8x8xf32>
    %cst_301 = arith.constant dense<0.000000e+00> : vector<8xf32>
    %696 = vector.multi_reduction <add>, %695, %cst_301 [1] : vector<8x8xf32> to vector<8xf32>
    %697 = vector.shape_cast %696 : vector<8xf32> to vector<8x1xf32>
    %698 = tpu.reciprocal %697 {approx = true} : vector<8x1xf32> -> vector<8x1xf32>
    %699 = vector.broadcast %698 : vector<8x1xf32> to vector<8x8xf32>
    %700 = arith.mulf %695, %699 : vector<8x8xf32>
    %701 = arith.truncf %700 : vector<8x8xf32> to vector<8x8xbf16>
    %702 = vector.extract_strided_slice %667 {offsets = [0, 8], sizes = [8, 8], strides = [1, 1]} : vector<8x32xbf16> to vector<8x8xbf16>
    %cst_302 = arith.constant dense<0.000000e+00> : vector<8x8xf32>
    %703 = tpu.matmul %701, %702, %cst_302 {dimension_numbers = #tpu.dot_dimension_numbers<[1], [0], [0], [1], [0, 0, 1, 1], [], []>} : vector<8x8xbf16>, vector<8x8xbf16>, vector<8x8xf32> -> vector<8x8xf32>
    %704 = vector.extract_strided_slice %665 {offsets = [0, 16], sizes = [8, 8], strides = [1, 1]} : vector<8x32xbf16> to vector<8x8xbf16>
    %705 = vector.extract_strided_slice %666 {offsets = [0, 16], sizes = [8, 8], strides = [1, 1]} : vector<8x32xbf16> to vector<8x8xbf16>
    %cst_303 = arith.constant dense<0.000000e+00> : vector<8x8xf32>
    %706 = tpu.matmul %704, %705, %cst_303 {dimension_numbers = #tpu.dot_dimension_numbers<[1], [1], [0], [0], [0, 0, 1, 0], [], []>} : vector<8x8xbf16>, vector<8x8xbf16>, vector<8x8xf32> -> vector<8x8xf32>
    %cst_304 = arith.constant 0.353553385 : f32
    %707 = vector.broadcast %cst_304 : f32 to vector<8x8xf32>
    %708 = arith.mulf %706, %707 : vector<8x8xf32>
    %cst_305 = arith.constant dense<0xFF800000> : vector<8xf32>
    %709 = vector.multi_reduction <maximumf>, %708, %cst_305 [1] : vector<8x8xf32> to vector<8xf32>
    %710 = vector.shape_cast %709 : vector<8xf32> to vector<8x1xf32>
    %711 = vector.broadcast %710 : vector<8x1xf32> to vector<8x8xf32>
    %712 = arith.subf %708, %711 : vector<8x8xf32>
    %713 = math.exp %712 : vector<8x8xf32>
    %cst_306 = arith.constant dense<0.000000e+00> : vector<8xf32>
    %714 = vector.multi_reduction <add>, %713, %cst_306 [1] : vector<8x8xf32> to vector<8xf32>
    %715 = vector.shape_cast %714 : vector<8xf32> to vector<8x1xf32>
    %716 = tpu.reciprocal %715 {approx = true} : vector<8x1xf32> -> vector<8x1xf32>
    %717 = vector.broadcast %716 : vector<8x1xf32> to vector<8x8xf32>
    %718 = arith.mulf %713, %717 : vector<8x8xf32>
    %719 = arith.truncf %718 : vector<8x8xf32> to vector<8x8xbf16>
    %720 = vector.extract_strided_slice %667 {offsets = [0, 16], sizes = [8, 8], strides = [1, 1]} : vector<8x32xbf16> to vector<8x8xbf16>
    %cst_307 = arith.constant dense<0.000000e+00> : vector<8x8xf32>
    %721 = tpu.matmul %719, %720, %cst_307 {dimension_numbers = #tpu.dot_dimension_numbers<[1], [0], [0], [1], [0, 0, 1, 1], [], []>} : vector<8x8xbf16>, vector<8x8xbf16>, vector<8x8xf32> -> vector<8x8xf32>
    %722 = vector.extract_strided_slice %665 {offsets = [0, 24], sizes = [8, 8], strides = [1, 1]} : vector<8x32xbf16> to vector<8x8xbf16>
    %723 = vector.extract_strided_slice %666 {offsets = [0, 24], sizes = [8, 8], strides = [1, 1]} : vector<8x32xbf16> to vector<8x8xbf16>
    %cst_308 = arith.constant dense<0.000000e+00> : vector<8x8xf32>
    %724 = tpu.matmul %722, %723, %cst_308 {dimension_numbers = #tpu.dot_dimension_numbers<[1], [1], [0], [0], [0, 0, 1, 0], [], []>} : vector<8x8xbf16>, vector<8x8xbf16>, vector<8x8xf32> -> vector<8x8xf32>
    %cst_309 = arith.constant 0.353553385 : f32
    %725 = vector.broadcast %cst_309 : f32 to vector<8x8xf32>
    %726 = arith.mulf %724, %725 : vector<8x8xf32>
    %cst_310 = arith.constant dense<0xFF800000> : vector<8xf32>
    %727 = vector.multi_reduction <maximumf>, %726, %cst_310 [1] : vector<8x8xf32> to vector<8xf32>
    %728 = vector.shape_cast %727 : vector<8xf32> to vector<8x1xf32>
    %729 = vector.broadcast %728 : vector<8x1xf32> to vector<8x8xf32>
    %730 = arith.subf %726, %729 : vector<8x8xf32>
    %731 = math.exp %730 : vector<8x8xf32>
    %cst_311 = arith.constant dense<0.000000e+00> : vector<8xf32>
    %732 = vector.multi_reduction <add>, %731, %cst_311 [1] : vector<8x8xf32> to vector<8xf32>
    %733 = vector.shape_cast %732 : vector<8xf32> to vector<8x1xf32>
    %734 = tpu.reciprocal %733 {approx = true} : vector<8x1xf32> -> vector<8x1xf32>
    %735 = vector.broadcast %734 : vector<8x1xf32> to vector<8x8xf32>
    %736 = arith.mulf %731, %735 : vector<8x8xf32>
    %737 = arith.truncf %736 : vector<8x8xf32> to vector<8x8xbf16>
    %738 = vector.extract_strided_slice %667 {offsets = [0, 24], sizes = [8, 8], strides = [1, 1]} : vector<8x32xbf16> to vector<8x8xbf16>
    %cst_312 = arith.constant dense<0.000000e+00> : vector<8x8xf32>
    %739 = tpu.matmul %737, %738, %cst_312 {dimension_numbers = #tpu.dot_dimension_numbers<[1], [0], [0], [1], [0, 0, 1, 1], [], []>} : vector<8x8xbf16>, vector<8x8xbf16>, vector<8x8xf32> -> vector<8x8xf32>
    %740 = tpu.concatenate %685, %703, %721, %739 in 1 : vector<8x8xf32>, vector<8x8xf32>, vector<8x8xf32>, vector<8x8xf32> -> vector<8x32xf32>
    %741 = arith.truncf %740 : vector<8x32xf32> to vector<8x32xbf16>
    %cst_313 = arith.constant dense<0.000000e+00> : vector<8x32xf32>
    %742 = tpu.matmul %741, %662, %cst_313 {dimension_numbers = #tpu.dot_dimension_numbers<[1], [0], [0], [1], [0, 0, 1, 1], [], []>} : vector<8x32xbf16>, vector<32x32xbf16>, vector<8x32xf32> -> vector<8x32xf32>
    %743 = vector.broadcast %664 : vector<1x32xf32> to vector<8x32xf32>
    %744 = arith.addf %742, %743 : vector<8x32xf32>
    %745 = arith.addf %649, %744 : vector<8x32xf32>
    %c1_314 = arith.constant 1 : index
    %c0_315 = arith.constant 0 : index
    %c0_316 = arith.constant 0 : index
    %746 = vector.load %arg30[%c1_314, %c0_315, %c0_316] : memref<2x1x32xf32, #tpu.memory_space<vmem>>, vector<1x1x32xf32>
    %747 = vector.shape_cast %746 : vector<1x1x32xf32> to vector<1x32xf32>
    %c1_317 = arith.constant 1 : index
    %c0_318 = arith.constant 0 : index
    %c0_319 = arith.constant 0 : index
    %748 = vector.load %arg31[%c1_317, %c0_318, %c0_319] : memref<2x1x32xf32, #tpu.memory_space<vmem>>, vector<1x1x32xf32>
    %749 = vector.shape_cast %748 : vector<1x1x32xf32> to vector<1x32xf32>
    %cst_320 = arith.constant dense<0.000000e+00> : vector<8xf32>
    %750 = vector.multi_reduction <add>, %745, %cst_320 [1] : vector<8x32xf32> to vector<8xf32>
    %751 = vector.shape_cast %750 : vector<8xf32> to vector<8x1xf32>
    %cst_321 = arith.constant 3.200000e+01 : f32
    %752 = vector.broadcast %cst_321 : f32 to vector<8x1xf32>
    %753 = arith.divf %751, %752 : vector<8x1xf32>
    %754 = vector.broadcast %753 : vector<8x1xf32> to vector<8x32xf32>
    %755 = arith.subf %745, %754 : vector<8x32xf32>
    %756 = arith.mulf %755, %755 : vector<8x32xf32>
    %cst_322 = arith.constant dense<0.000000e+00> : vector<8xf32>
    %757 = vector.multi_reduction <add>, %756, %cst_322 [1] : vector<8x32xf32> to vector<8xf32>
    %758 = vector.shape_cast %757 : vector<8xf32> to vector<8x1xf32>
    %cst_323 = arith.constant 3.200000e+01 : f32
    %759 = vector.broadcast %cst_323 : f32 to vector<8x1xf32>
    %760 = arith.divf %758, %759 : vector<8x1xf32>
    %cst_324 = arith.constant 9.99999974E-6 : f32
    %761 = vector.broadcast %cst_324 : f32 to vector<8x1xf32>
    %762 = arith.addf %760, %761 : vector<8x1xf32>
    %763 = math.rsqrt %762 : vector<8x1xf32>
    %764 = vector.broadcast %763 : vector<8x1xf32> to vector<8x32xf32>
    %765 = arith.mulf %755, %764 : vector<8x32xf32>
    %766 = vector.broadcast %747 : vector<1x32xf32> to vector<8x32xf32>
    %767 = arith.mulf %765, %766 : vector<8x32xf32>
    %768 = vector.broadcast %749 : vector<1x32xf32> to vector<8x32xf32>
    %769 = arith.addf %767, %768 : vector<8x32xf32>
    %c1_325 = arith.constant 1 : index
    %c0_326 = arith.constant 0 : index
    %c0_327 = arith.constant 0 : index
    %770 = vector.load %arg20[%c1_325, %c0_326, %c0_327] : memref<2x32x32xbf16, #tpu.memory_space<vmem>>, vector<1x32x32xbf16>
    %771 = vector.shape_cast %770 : vector<1x32x32xbf16> to vector<32x32xbf16>
    %c1_328 = arith.constant 1 : index
    %c0_329 = arith.constant 0 : index
    %c0_330 = arith.constant 0 : index
    %772 = vector.load %arg21[%c1_328, %c0_329, %c0_330] : memref<2x1x32xf32, #tpu.memory_space<vmem>>, vector<1x1x32xf32>
    %773 = vector.shape_cast %772 : vector<1x1x32xf32> to vector<1x32xf32>
    %774 = arith.truncf %769 : vector<8x32xf32> to vector<8x32xbf16>
    %cst_331 = arith.constant dense<0.000000e+00> : vector<8x32xf32>
    %775 = tpu.matmul %774, %771, %cst_331 {dimension_numbers = #tpu.dot_dimension_numbers<[1], [0], [0], [1], [0, 0, 1, 1], [], []>} : vector<8x32xbf16>, vector<32x32xbf16>, vector<8x32xf32> -> vector<8x32xf32>
    %776 = vector.broadcast %773 : vector<1x32xf32> to vector<8x32xf32>
    %777 = arith.addf %775, %776 : vector<8x32xf32>
    %c1_332 = arith.constant 1 : index
    %c0_333 = arith.constant 0 : index
    %c0_334 = arith.constant 0 : index
    %778 = vector.load %arg22[%c1_332, %c0_333, %c0_334] : memref<2x32x64xbf16, #tpu.memory_space<vmem>>, vector<1x32x64xbf16>
    %779 = vector.shape_cast %778 : vector<1x32x64xbf16> to vector<32x64xbf16>
    %c1_335 = arith.constant 1 : index
    %c0_336 = arith.constant 0 : index
    %c0_337 = arith.constant 0 : index
    %780 = vector.load %arg23[%c1_335, %c0_336, %c0_337] : memref<2x1x64xf32, #tpu.memory_space<vmem>>, vector<1x1x64xf32>
    %781 = vector.shape_cast %780 : vector<1x1x64xf32> to vector<1x64xf32>
    %782 = arith.truncf %354 : vector<8x32xf32> to vector<8x32xbf16>
    %cst_338 = arith.constant dense<0.000000e+00> : vector<8x64xf32>
    %783 = tpu.matmul %782, %779, %cst_338 {dimension_numbers = #tpu.dot_dimension_numbers<[1], [0], [0], [1], [0, 0, 1, 1], [], []>} : vector<8x32xbf16>, vector<32x64xbf16>, vector<8x64xf32> -> vector<8x64xf32>
    %784 = vector.broadcast %781 : vector<1x64xf32> to vector<8x64xf32>
    %785 = arith.addf %783, %784 : vector<8x64xf32>
    %786 = vector.extract_strided_slice %785 {offsets = [0, 0], sizes = [8, 32], strides = [1, 1]} : vector<8x64xf32> to vector<8x32xf32>
    %787 = vector.extract_strided_slice %785 {offsets = [0, 32], sizes = [8, 32], strides = [1, 1]} : vector<8x64xf32> to vector<8x32xf32>
    %c1_339 = arith.constant 1 : index
    %c0_340 = arith.constant 0 : index
    %c0_341 = arith.constant 0 : index
    %788 = vector.load %arg24[%c1_339, %c0_340, %c0_341] : memref<2x32x32xbf16, #tpu.memory_space<vmem>>, vector<1x32x32xbf16>
    %789 = vector.shape_cast %788 : vector<1x32x32xbf16> to vector<32x32xbf16>
    %c1_342 = arith.constant 1 : index
    %c0_343 = arith.constant 0 : index
    %c0_344 = arith.constant 0 : index
    %790 = vector.load %arg25[%c1_342, %c0_343, %c0_344] : memref<2x1x32xf32, #tpu.memory_space<vmem>>, vector<1x1x32xf32>
    %791 = vector.shape_cast %790 : vector<1x1x32xf32> to vector<1x32xf32>
    %792 = arith.truncf %777 : vector<8x32xf32> to vector<8x32xbf16>
    %793 = arith.truncf %786 : vector<8x32xf32> to vector<8x32xbf16>
    %794 = arith.truncf %787 : vector<8x32xf32> to vector<8x32xbf16>
    %795 = vector.extract_strided_slice %792 {offsets = [0, 0], sizes = [8, 8], strides = [1, 1]} : vector<8x32xbf16> to vector<8x8xbf16>
    %796 = vector.extract_strided_slice %793 {offsets = [0, 0], sizes = [8, 8], strides = [1, 1]} : vector<8x32xbf16> to vector<8x8xbf16>
    %cst_345 = arith.constant dense<0.000000e+00> : vector<8x8xf32>
    %797 = tpu.matmul %795, %796, %cst_345 {dimension_numbers = #tpu.dot_dimension_numbers<[1], [1], [0], [0], [0, 0, 1, 0], [], []>} : vector<8x8xbf16>, vector<8x8xbf16>, vector<8x8xf32> -> vector<8x8xf32>
    %cst_346 = arith.constant 0.353553385 : f32
    %798 = vector.broadcast %cst_346 : f32 to vector<8x8xf32>
    %799 = arith.mulf %797, %798 : vector<8x8xf32>
    %cst_347 = arith.constant dense<0xFF800000> : vector<8xf32>
    %800 = vector.multi_reduction <maximumf>, %799, %cst_347 [1] : vector<8x8xf32> to vector<8xf32>
    %801 = vector.shape_cast %800 : vector<8xf32> to vector<8x1xf32>
    %802 = vector.broadcast %801 : vector<8x1xf32> to vector<8x8xf32>
    %803 = arith.subf %799, %802 : vector<8x8xf32>
    %804 = math.exp %803 : vector<8x8xf32>
    %cst_348 = arith.constant dense<0.000000e+00> : vector<8xf32>
    %805 = vector.multi_reduction <add>, %804, %cst_348 [1] : vector<8x8xf32> to vector<8xf32>
    %806 = vector.shape_cast %805 : vector<8xf32> to vector<8x1xf32>
    %807 = tpu.reciprocal %806 {approx = true} : vector<8x1xf32> -> vector<8x1xf32>
    %808 = vector.broadcast %807 : vector<8x1xf32> to vector<8x8xf32>
    %809 = arith.mulf %804, %808 : vector<8x8xf32>
    %810 = arith.truncf %809 : vector<8x8xf32> to vector<8x8xbf16>
    %811 = vector.extract_strided_slice %794 {offsets = [0, 0], sizes = [8, 8], strides = [1, 1]} : vector<8x32xbf16> to vector<8x8xbf16>
    %cst_349 = arith.constant dense<0.000000e+00> : vector<8x8xf32>
    %812 = tpu.matmul %810, %811, %cst_349 {dimension_numbers = #tpu.dot_dimension_numbers<[1], [0], [0], [1], [0, 0, 1, 1], [], []>} : vector<8x8xbf16>, vector<8x8xbf16>, vector<8x8xf32> -> vector<8x8xf32>
    %813 = vector.extract_strided_slice %792 {offsets = [0, 8], sizes = [8, 8], strides = [1, 1]} : vector<8x32xbf16> to vector<8x8xbf16>
    %814 = vector.extract_strided_slice %793 {offsets = [0, 8], sizes = [8, 8], strides = [1, 1]} : vector<8x32xbf16> to vector<8x8xbf16>
    %cst_350 = arith.constant dense<0.000000e+00> : vector<8x8xf32>
    %815 = tpu.matmul %813, %814, %cst_350 {dimension_numbers = #tpu.dot_dimension_numbers<[1], [1], [0], [0], [0, 0, 1, 0], [], []>} : vector<8x8xbf16>, vector<8x8xbf16>, vector<8x8xf32> -> vector<8x8xf32>
    %cst_351 = arith.constant 0.353553385 : f32
    %816 = vector.broadcast %cst_351 : f32 to vector<8x8xf32>
    %817 = arith.mulf %815, %816 : vector<8x8xf32>
    %cst_352 = arith.constant dense<0xFF800000> : vector<8xf32>
    %818 = vector.multi_reduction <maximumf>, %817, %cst_352 [1] : vector<8x8xf32> to vector<8xf32>
    %819 = vector.shape_cast %818 : vector<8xf32> to vector<8x1xf32>
    %820 = vector.broadcast %819 : vector<8x1xf32> to vector<8x8xf32>
    %821 = arith.subf %817, %820 : vector<8x8xf32>
    %822 = math.exp %821 : vector<8x8xf32>
    %cst_353 = arith.constant dense<0.000000e+00> : vector<8xf32>
    %823 = vector.multi_reduction <add>, %822, %cst_353 [1] : vector<8x8xf32> to vector<8xf32>
    %824 = vector.shape_cast %823 : vector<8xf32> to vector<8x1xf32>
    %825 = tpu.reciprocal %824 {approx = true} : vector<8x1xf32> -> vector<8x1xf32>
    %826 = vector.broadcast %825 : vector<8x1xf32> to vector<8x8xf32>
    %827 = arith.mulf %822, %826 : vector<8x8xf32>
    %828 = arith.truncf %827 : vector<8x8xf32> to vector<8x8xbf16>
    %829 = vector.extract_strided_slice %794 {offsets = [0, 8], sizes = [8, 8], strides = [1, 1]} : vector<8x32xbf16> to vector<8x8xbf16>
    %cst_354 = arith.constant dense<0.000000e+00> : vector<8x8xf32>
    %830 = tpu.matmul %828, %829, %cst_354 {dimension_numbers = #tpu.dot_dimension_numbers<[1], [0], [0], [1], [0, 0, 1, 1], [], []>} : vector<8x8xbf16>, vector<8x8xbf16>, vector<8x8xf32> -> vector<8x8xf32>
    %831 = vector.extract_strided_slice %792 {offsets = [0, 16], sizes = [8, 8], strides = [1, 1]} : vector<8x32xbf16> to vector<8x8xbf16>
    %832 = vector.extract_strided_slice %793 {offsets = [0, 16], sizes = [8, 8], strides = [1, 1]} : vector<8x32xbf16> to vector<8x8xbf16>
    %cst_355 = arith.constant dense<0.000000e+00> : vector<8x8xf32>
    %833 = tpu.matmul %831, %832, %cst_355 {dimension_numbers = #tpu.dot_dimension_numbers<[1], [1], [0], [0], [0, 0, 1, 0], [], []>} : vector<8x8xbf16>, vector<8x8xbf16>, vector<8x8xf32> -> vector<8x8xf32>
    %cst_356 = arith.constant 0.353553385 : f32
    %834 = vector.broadcast %cst_356 : f32 to vector<8x8xf32>
    %835 = arith.mulf %833, %834 : vector<8x8xf32>
    %cst_357 = arith.constant dense<0xFF800000> : vector<8xf32>
    %836 = vector.multi_reduction <maximumf>, %835, %cst_357 [1] : vector<8x8xf32> to vector<8xf32>
    %837 = vector.shape_cast %836 : vector<8xf32> to vector<8x1xf32>
    %838 = vector.broadcast %837 : vector<8x1xf32> to vector<8x8xf32>
    %839 = arith.subf %835, %838 : vector<8x8xf32>
    %840 = math.exp %839 : vector<8x8xf32>
    %cst_358 = arith.constant dense<0.000000e+00> : vector<8xf32>
    %841 = vector.multi_reduction <add>, %840, %cst_358 [1] : vector<8x8xf32> to vector<8xf32>
    %842 = vector.shape_cast %841 : vector<8xf32> to vector<8x1xf32>
    %843 = tpu.reciprocal %842 {approx = true} : vector<8x1xf32> -> vector<8x1xf32>
    %844 = vector.broadcast %843 : vector<8x1xf32> to vector<8x8xf32>
    %845 = arith.mulf %840, %844 : vector<8x8xf32>
    %846 = arith.truncf %845 : vector<8x8xf32> to vector<8x8xbf16>
    %847 = vector.extract_strided_slice %794 {offsets = [0, 16], sizes = [8, 8], strides = [1, 1]} : vector<8x32xbf16> to vector<8x8xbf16>
    %cst_359 = arith.constant dense<0.000000e+00> : vector<8x8xf32>
    %848 = tpu.matmul %846, %847, %cst_359 {dimension_numbers = #tpu.dot_dimension_numbers<[1], [0], [0], [1], [0, 0, 1, 1], [], []>} : vector<8x8xbf16>, vector<8x8xbf16>, vector<8x8xf32> -> vector<8x8xf32>
    %849 = vector.extract_strided_slice %792 {offsets = [0, 24], sizes = [8, 8], strides = [1, 1]} : vector<8x32xbf16> to vector<8x8xbf16>
    %850 = vector.extract_strided_slice %793 {offsets = [0, 24], sizes = [8, 8], strides = [1, 1]} : vector<8x32xbf16> to vector<8x8xbf16>
    %cst_360 = arith.constant dense<0.000000e+00> : vector<8x8xf32>
    %851 = tpu.matmul %849, %850, %cst_360 {dimension_numbers = #tpu.dot_dimension_numbers<[1], [1], [0], [0], [0, 0, 1, 0], [], []>} : vector<8x8xbf16>, vector<8x8xbf16>, vector<8x8xf32> -> vector<8x8xf32>
    %cst_361 = arith.constant 0.353553385 : f32
    %852 = vector.broadcast %cst_361 : f32 to vector<8x8xf32>
    %853 = arith.mulf %851, %852 : vector<8x8xf32>
    %cst_362 = arith.constant dense<0xFF800000> : vector<8xf32>
    %854 = vector.multi_reduction <maximumf>, %853, %cst_362 [1] : vector<8x8xf32> to vector<8xf32>
    %855 = vector.shape_cast %854 : vector<8xf32> to vector<8x1xf32>
    %856 = vector.broadcast %855 : vector<8x1xf32> to vector<8x8xf32>
    %857 = arith.subf %853, %856 : vector<8x8xf32>
    %858 = math.exp %857 : vector<8x8xf32>
    %cst_363 = arith.constant dense<0.000000e+00> : vector<8xf32>
    %859 = vector.multi_reduction <add>, %858, %cst_363 [1] : vector<8x8xf32> to vector<8xf32>
    %860 = vector.shape_cast %859 : vector<8xf32> to vector<8x1xf32>
    %861 = tpu.reciprocal %860 {approx = true} : vector<8x1xf32> -> vector<8x1xf32>
    %862 = vector.broadcast %861 : vector<8x1xf32> to vector<8x8xf32>
    %863 = arith.mulf %858, %862 : vector<8x8xf32>
    %864 = arith.truncf %863 : vector<8x8xf32> to vector<8x8xbf16>
    %865 = vector.extract_strided_slice %794 {offsets = [0, 24], sizes = [8, 8], strides = [1, 1]} : vector<8x32xbf16> to vector<8x8xbf16>
    %cst_364 = arith.constant dense<0.000000e+00> : vector<8x8xf32>
    %866 = tpu.matmul %864, %865, %cst_364 {dimension_numbers = #tpu.dot_dimension_numbers<[1], [0], [0], [1], [0, 0, 1, 1], [], []>} : vector<8x8xbf16>, vector<8x8xbf16>, vector<8x8xf32> -> vector<8x8xf32>
    %867 = tpu.concatenate %812, %830, %848, %866 in 1 : vector<8x8xf32>, vector<8x8xf32>, vector<8x8xf32>, vector<8x8xf32> -> vector<8x32xf32>
    %868 = arith.truncf %867 : vector<8x32xf32> to vector<8x32xbf16>
    %cst_365 = arith.constant dense<0.000000e+00> : vector<8x32xf32>
    %869 = tpu.matmul %868, %789, %cst_365 {dimension_numbers = #tpu.dot_dimension_numbers<[1], [0], [0], [1], [0, 0, 1, 1], [], []>} : vector<8x32xbf16>, vector<32x32xbf16>, vector<8x32xf32> -> vector<8x32xf32>
    %870 = vector.broadcast %791 : vector<1x32xf32> to vector<8x32xf32>
    %871 = arith.addf %869, %870 : vector<8x32xf32>
    %872 = arith.addf %769, %871 : vector<8x32xf32>
    %c1_366 = arith.constant 1 : index
    %c0_367 = arith.constant 0 : index
    %c0_368 = arith.constant 0 : index
    %873 = vector.load %arg32[%c1_366, %c0_367, %c0_368] : memref<2x1x32xf32, #tpu.memory_space<vmem>>, vector<1x1x32xf32>
    %874 = vector.shape_cast %873 : vector<1x1x32xf32> to vector<1x32xf32>
    %c1_369 = arith.constant 1 : index
    %c0_370 = arith.constant 0 : index
    %c0_371 = arith.constant 0 : index
    %875 = vector.load %arg33[%c1_369, %c0_370, %c0_371] : memref<2x1x32xf32, #tpu.memory_space<vmem>>, vector<1x1x32xf32>
    %876 = vector.shape_cast %875 : vector<1x1x32xf32> to vector<1x32xf32>
    %cst_372 = arith.constant dense<0.000000e+00> : vector<8xf32>
    %877 = vector.multi_reduction <add>, %872, %cst_372 [1] : vector<8x32xf32> to vector<8xf32>
    %878 = vector.shape_cast %877 : vector<8xf32> to vector<8x1xf32>
    %cst_373 = arith.constant 3.200000e+01 : f32
    %879 = vector.broadcast %cst_373 : f32 to vector<8x1xf32>
    %880 = arith.divf %878, %879 : vector<8x1xf32>
    %881 = vector.broadcast %880 : vector<8x1xf32> to vector<8x32xf32>
    %882 = arith.subf %872, %881 : vector<8x32xf32>
    %883 = arith.mulf %882, %882 : vector<8x32xf32>
    %cst_374 = arith.constant dense<0.000000e+00> : vector<8xf32>
    %884 = vector.multi_reduction <add>, %883, %cst_374 [1] : vector<8x32xf32> to vector<8xf32>
    %885 = vector.shape_cast %884 : vector<8xf32> to vector<8x1xf32>
    %cst_375 = arith.constant 3.200000e+01 : f32
    %886 = vector.broadcast %cst_375 : f32 to vector<8x1xf32>
    %887 = arith.divf %885, %886 : vector<8x1xf32>
    %cst_376 = arith.constant 9.99999974E-6 : f32
    %888 = vector.broadcast %cst_376 : f32 to vector<8x1xf32>
    %889 = arith.addf %887, %888 : vector<8x1xf32>
    %890 = math.rsqrt %889 : vector<8x1xf32>
    %891 = vector.broadcast %890 : vector<8x1xf32> to vector<8x32xf32>
    %892 = arith.mulf %882, %891 : vector<8x32xf32>
    %893 = vector.broadcast %874 : vector<1x32xf32> to vector<8x32xf32>
    %894 = arith.mulf %892, %893 : vector<8x32xf32>
    %895 = vector.broadcast %876 : vector<1x32xf32> to vector<8x32xf32>
    %896 = arith.addf %894, %895 : vector<8x32xf32>
    %c1_377 = arith.constant 1 : index
    %c0_378 = arith.constant 0 : index
    %c0_379 = arith.constant 0 : index
    %897 = vector.load %arg26[%c1_377, %c0_378, %c0_379] : memref<2x32x64xbf16, #tpu.memory_space<vmem>>, vector<1x32x64xbf16>
    %898 = vector.shape_cast %897 : vector<1x32x64xbf16> to vector<32x64xbf16>
    %c1_380 = arith.constant 1 : index
    %c0_381 = arith.constant 0 : index
    %c0_382 = arith.constant 0 : index
    %899 = vector.load %arg27[%c1_380, %c0_381, %c0_382] : memref<2x1x64xf32, #tpu.memory_space<vmem>>, vector<1x1x64xf32>
    %900 = vector.shape_cast %899 : vector<1x1x64xf32> to vector<1x64xf32>
    %901 = arith.truncf %896 : vector<8x32xf32> to vector<8x32xbf16>
    %cst_383 = arith.constant dense<0.000000e+00> : vector<8x64xf32>
    %902 = tpu.matmul %901, %898, %cst_383 {dimension_numbers = #tpu.dot_dimension_numbers<[1], [0], [0], [1], [0, 0, 1, 1], [], []>} : vector<8x32xbf16>, vector<32x64xbf16>, vector<8x64xf32> -> vector<8x64xf32>
    %903 = vector.broadcast %900 : vector<1x64xf32> to vector<8x64xf32>
    %904 = arith.addf %902, %903 : vector<8x64xf32>
    %cst_384 = arith.constant 0.000000e+00 : f32
    %905 = vector.broadcast %cst_384 : f32 to vector<8x64xf32>
    %906 = arith.maximumf %904, %905 : vector<8x64xf32>
    %c1_385 = arith.constant 1 : index
    %c0_386 = arith.constant 0 : index
    %c0_387 = arith.constant 0 : index
    %907 = vector.load %arg28[%c1_385, %c0_386, %c0_387] : memref<2x64x32xbf16, #tpu.memory_space<vmem>>, vector<1x64x32xbf16>
    %908 = vector.shape_cast %907 : vector<1x64x32xbf16> to vector<64x32xbf16>
    %c1_388 = arith.constant 1 : index
    %c0_389 = arith.constant 0 : index
    %c0_390 = arith.constant 0 : index
    %909 = vector.load %arg29[%c1_388, %c0_389, %c0_390] : memref<2x1x32xf32, #tpu.memory_space<vmem>>, vector<1x1x32xf32>
    %910 = vector.shape_cast %909 : vector<1x1x32xf32> to vector<1x32xf32>
    %911 = arith.truncf %906 : vector<8x64xf32> to vector<8x64xbf16>
    %cst_391 = arith.constant dense<0.000000e+00> : vector<8x32xf32>
    %912 = tpu.matmul %911, %908, %cst_391 {dimension_numbers = #tpu.dot_dimension_numbers<[1], [0], [0], [1], [0, 0, 1, 1], [], []>} : vector<8x64xbf16>, vector<64x32xbf16>, vector<8x32xf32> -> vector<8x32xf32>
    %913 = vector.broadcast %910 : vector<1x32xf32> to vector<8x32xf32>
    %914 = arith.addf %912, %913 : vector<8x32xf32>
    %915 = arith.addf %896, %914 : vector<8x32xf32>
    %c1_392 = arith.constant 1 : index
    %c0_393 = arith.constant 0 : index
    %c0_394 = arith.constant 0 : index
    %916 = vector.load %arg34[%c1_392, %c0_393, %c0_394] : memref<2x1x32xf32, #tpu.memory_space<vmem>>, vector<1x1x32xf32>
    %917 = vector.shape_cast %916 : vector<1x1x32xf32> to vector<1x32xf32>
    %c1_395 = arith.constant 1 : index
    %c0_396 = arith.constant 0 : index
    %c0_397 = arith.constant 0 : index
    %918 = vector.load %arg35[%c1_395, %c0_396, %c0_397] : memref<2x1x32xf32, #tpu.memory_space<vmem>>, vector<1x1x32xf32>
    %919 = vector.shape_cast %918 : vector<1x1x32xf32> to vector<1x32xf32>
    %cst_398 = arith.constant dense<0.000000e+00> : vector<8xf32>
    %920 = vector.multi_reduction <add>, %915, %cst_398 [1] : vector<8x32xf32> to vector<8xf32>
    %921 = vector.shape_cast %920 : vector<8xf32> to vector<8x1xf32>
    %cst_399 = arith.constant 3.200000e+01 : f32
    %922 = vector.broadcast %cst_399 : f32 to vector<8x1xf32>
    %923 = arith.divf %921, %922 : vector<8x1xf32>
    %924 = vector.broadcast %923 : vector<8x1xf32> to vector<8x32xf32>
    %925 = arith.subf %915, %924 : vector<8x32xf32>
    %926 = arith.mulf %925, %925 : vector<8x32xf32>
    %cst_400 = arith.constant dense<0.000000e+00> : vector<8xf32>
    %927 = vector.multi_reduction <add>, %926, %cst_400 [1] : vector<8x32xf32> to vector<8xf32>
    %928 = vector.shape_cast %927 : vector<8xf32> to vector<8x1xf32>
    %cst_401 = arith.constant 3.200000e+01 : f32
    %929 = vector.broadcast %cst_401 : f32 to vector<8x1xf32>
    %930 = arith.divf %928, %929 : vector<8x1xf32>
    %cst_402 = arith.constant 9.99999974E-6 : f32
    %931 = vector.broadcast %cst_402 : f32 to vector<8x1xf32>
    %932 = arith.addf %930, %931 : vector<8x1xf32>
    %933 = math.rsqrt %932 : vector<8x1xf32>
    %934 = vector.broadcast %933 : vector<8x1xf32> to vector<8x32xf32>
    %935 = arith.mulf %925, %934 : vector<8x32xf32>
    %936 = vector.broadcast %917 : vector<1x32xf32> to vector<8x32xf32>
    %937 = arith.mulf %935, %936 : vector<8x32xf32>
    %938 = vector.broadcast %919 : vector<1x32xf32> to vector<8x32xf32>
    %939 = arith.addf %937, %938 : vector<8x32xf32>
    %c0_403 = arith.constant 0 : index
    %c0_404 = arith.constant 0 : index
    %940 = vector.load %arg38[%c0_403, %c0_404] : memref<1x32xf32, #tpu.memory_space<vmem>>, vector<1x32xf32>
    %c0_405 = arith.constant 0 : index
    %c0_406 = arith.constant 0 : index
    %941 = vector.load %arg39[%c0_405, %c0_406] : memref<1x32xf32, #tpu.memory_space<vmem>>, vector<1x32xf32>
    %cst_407 = arith.constant dense<0.000000e+00> : vector<8xf32>
    %942 = vector.multi_reduction <add>, %939, %cst_407 [1] : vector<8x32xf32> to vector<8xf32>
    %943 = vector.shape_cast %942 : vector<8xf32> to vector<8x1xf32>
    %cst_408 = arith.constant 3.200000e+01 : f32
    %944 = vector.broadcast %cst_408 : f32 to vector<8x1xf32>
    %945 = arith.divf %943, %944 : vector<8x1xf32>
    %946 = vector.broadcast %945 : vector<8x1xf32> to vector<8x32xf32>
    %947 = arith.subf %939, %946 : vector<8x32xf32>
    %948 = arith.mulf %947, %947 : vector<8x32xf32>
    %cst_409 = arith.constant dense<0.000000e+00> : vector<8xf32>
    %949 = vector.multi_reduction <add>, %948, %cst_409 [1] : vector<8x32xf32> to vector<8xf32>
    %950 = vector.shape_cast %949 : vector<8xf32> to vector<8x1xf32>
    %cst_410 = arith.constant 3.200000e+01 : f32
    %951 = vector.broadcast %cst_410 : f32 to vector<8x1xf32>
    %952 = arith.divf %950, %951 : vector<8x1xf32>
    %cst_411 = arith.constant 9.99999974E-6 : f32
    %953 = vector.broadcast %cst_411 : f32 to vector<8x1xf32>
    %954 = arith.addf %952, %953 : vector<8x1xf32>
    %955 = math.rsqrt %954 : vector<8x1xf32>
    %956 = vector.broadcast %955 : vector<8x1xf32> to vector<8x32xf32>
    %957 = arith.mulf %947, %956 : vector<8x32xf32>
    %958 = vector.broadcast %940 : vector<1x32xf32> to vector<8x32xf32>
    %959 = arith.mulf %957, %958 : vector<8x32xf32>
    %960 = vector.broadcast %941 : vector<1x32xf32> to vector<8x32xf32>
    %961 = arith.addf %959, %960 : vector<8x32xf32>
    %c0_412 = arith.constant 0 : index
    %c0_413 = arith.constant 0 : index
    %962 = vector.load %arg40[%c0_412, %c0_413] : memref<32x32xbf16, #tpu.memory_space<vmem>>, vector<32x32xbf16>
    %c0_414 = arith.constant 0 : index
    %c0_415 = arith.constant 0 : index
    %963 = vector.load %arg41[%c0_414, %c0_415] : memref<1x32xf32, #tpu.memory_space<vmem>>, vector<1x32xf32>
    %964 = arith.truncf %961 : vector<8x32xf32> to vector<8x32xbf16>
    %cst_416 = arith.constant dense<0.000000e+00> : vector<8x32xf32>
    %965 = tpu.matmul %964, %962, %cst_416 {dimension_numbers = #tpu.dot_dimension_numbers<[1], [0], [0], [1], [0, 0, 1, 1], [], []>} : vector<8x32xbf16>, vector<32x32xbf16>, vector<8x32xf32> -> vector<8x32xf32>
    %966 = vector.broadcast %963 : vector<1x32xf32> to vector<8x32xf32>
    %967 = arith.addf %965, %966 : vector<8x32xf32>
    %968 = tpu.transpose %967, [1, 0] : vector<8x32xf32> -> vector<32x8xf32>
    %c0_417 = arith.constant 0 : index
    %c0_418 = arith.constant 0 : index
    %c0_419 = arith.constant 0 : index
    %969 = vector.load %arg42[%c0_417, %c0_418, %c0_419] : memref<1x32x8xf32, #tpu.memory_space<vmem>>, vector<1x32x8xf32>
    %970 = vector.shape_cast %969 : vector<1x32x8xf32> to vector<32x8xf32>
    %971 = vector.shape_cast %968 : vector<32x8xf32> to vector<1x32x8xf32>
    tpu.vector_store %arg42[%c0_417, %c0_418, %c0_419], %971 {strides = array<i32>} : memref<1x32x8xf32, #tpu.memory_space<vmem>>, vector<1x32x8xf32>,
    return
  }
  func.func @transform_0(%arg0: i32) -> (i32, i32, i32) {
    %c0_i32 = arith.constant 0 : i32
    %c0_i32_0 = arith.constant 0 : i32
    %c0_i32_1 = arith.constant 0 : i32
    return %arg0, %c0_i32, %c0_i32_0 : i32, i32, i32
  }
  func.func @transform_1(%arg0: i32) -> (i32, i32, i32) {
    %c0_i32 = arith.constant 0 : i32
    %c0_i32_0 = arith.constant 0 : i32
    %c0_i32_1 = arith.constant 0 : i32
    return %arg0, %c0_i32, %c0_i32_0 : i32, i32, i32
  }
  func.func @transform_2(%arg0: i32) -> (i32, i32, i32) {
    %c0_i32 = arith.constant 0 : i32
    %c0_i32_0 = arith.constant 0 : i32
    %c0_i32_1 = arith.constant 0 : i32
    return %arg0, %c0_i32, %c0_i32_0 : i32, i32, i32
  }
  func.func @transform_3(%arg0: i32) -> (i32, i32, i32) {
    %c0_i32 = arith.constant 0 : i32
    %c0_i32_0 = arith.constant 0 : i32
    %c0_i32_1 = arith.constant 0 : i32
    %c0_i32_2 = arith.constant 0 : i32
    return %c0_i32, %c0_i32_0, %c0_i32_1 : i32, i32, i32
  }
  func.func @transform_4(%arg0: i32) -> (i32, i32, i32) {
    %c0_i32 = arith.constant 0 : i32
    %c0_i32_0 = arith.constant 0 : i32
    %c0_i32_1 = arith.constant 0 : i32
    %c0_i32_2 = arith.constant 0 : i32
    return %c0_i32, %c0_i32_0, %c0_i32_1 : i32, i32, i32
  }
  func.func @transform_5(%arg0: i32) -> (i32, i32, i32) {
    %c0_i32 = arith.constant 0 : i32
    %c0_i32_0 = arith.constant 0 : i32
    %c0_i32_1 = arith.constant 0 : i32
    %c0_i32_2 = arith.constant 0 : i32
    return %c0_i32, %c0_i32_0, %c0_i32_1 : i32, i32, i32
  }
  func.func @transform_6(%arg0: i32) -> (i32, i32, i32) {
    %c0_i32 = arith.constant 0 : i32
    %c0_i32_0 = arith.constant 0 : i32
    %c0_i32_1 = arith.constant 0 : i32
    %c0_i32_2 = arith.constant 0 : i32
    return %c0_i32, %c0_i32_0, %c0_i32_1 : i32, i32, i32
  }
  func.func @transform_7(%arg0: i32) -> (i32, i32, i32) {
    %c0_i32 = arith.constant 0 : i32
    %c0_i32_0 = arith.constant 0 : i32
    %c0_i32_1 = arith.constant 0 : i32
    %c0_i32_2 = arith.constant 0 : i32
    return %c0_i32, %c0_i32_0, %c0_i32_1 : i32, i32, i32
  }
  func.func @transform_8(%arg0: i32) -> (i32, i32, i32) {
    %c0_i32 = arith.constant 0 : i32
    %c0_i32_0 = arith.constant 0 : i32
    %c0_i32_1 = arith.constant 0 : i32
    %c0_i32_2 = arith.constant 0 : i32
    return %c0_i32, %c0_i32_0, %c0_i32_1 : i32, i32, i32
  }
  func.func @transform_9(%arg0: i32) -> (i32, i32, i32) {
    %c0_i32 = arith.constant 0 : i32
    %c0_i32_0 = arith.constant 0 : i32
    %c0_i32_1 = arith.constant 0 : i32
    %c0_i32_2 = arith.constant 0 : i32
    return %c0_i32, %c0_i32_0, %c0_i32_1 : i32, i32, i32
  }
  func.func @transform_10(%arg0: i32) -> (i32, i32, i32) {
    %c0_i32 = arith.constant 0 : i32
    %c0_i32_0 = arith.constant 0 : i32
    %c0_i32_1 = arith.constant 0 : i32
    %c0_i32_2 = arith.constant 0 : i32
    return %c0_i32, %c0_i32_0, %c0_i32_1 : i32, i32, i32
  }
  func.func @transform_11(%arg0: i32) -> (i32, i32, i32) {
    %c0_i32 = arith.constant 0 : i32
    %c0_i32_0 = arith.constant 0 : i32
    %c0_i32_1 = arith.constant 0 : i32
    %c0_i32_2 = arith.constant 0 : i32
    return %c0_i32, %c0_i32_0, %c0_i32_1 : i32, i32, i32
  }
  func.func @transform_12(%arg0: i32) -> (i32, i32, i32) {
    %c0_i32 = arith.constant 0 : i32
    %c0_i32_0 = arith.constant 0 : i32
    %c0_i32_1 = arith.constant 0 : i32
    %c0_i32_2 = arith.constant 0 : i32
    return %c0_i32, %c0_i32_0, %c0_i32_1 : i32, i32, i32
  }
  func.func @transform_13(%arg0: i32) -> (i32, i32, i32) {
    %c0_i32 = arith.constant 0 : i32
    %c0_i32_0 = arith.constant 0 : i32
    %c0_i32_1 = arith.constant 0 : i32
    %c0_i32_2 = arith.constant 0 : i32
    return %c0_i32, %c0_i32_0, %c0_i32_1 : i32, i32, i32
  }
  func.func @transform_14(%arg0: i32) -> (i32, i32, i32) {
    %c0_i32 = arith.constant 0 : i32
    %c0_i32_0 = arith.constant 0 : i32
    %c0_i32_1 = arith.constant 0 : i32
    %c0_i32_2 = arith.constant 0 : i32
    return %c0_i32, %c0_i32_0, %c0_i32_1 : i32, i32, i32
  }
  func.func @transform_15(%arg0: i32) -> (i32, i32, i32) {
    %c0_i32 = arith.constant 0 : i32
    %c0_i32_0 = arith.constant 0 : i32
    %c0_i32_1 = arith.constant 0 : i32
    %c0_i32_2 = arith.constant 0 : i32
    return %c0_i32, %c0_i32_0, %c0_i32_1 : i32, i32, i32
  }
  func.func @transform_16(%arg0: i32) -> (i32, i32, i32) {
    %c0_i32 = arith.constant 0 : i32
    %c0_i32_0 = arith.constant 0 : i32
    %c0_i32_1 = arith.constant 0 : i32
    %c0_i32_2 = arith.constant 0 : i32
    return %c0_i32, %c0_i32_0, %c0_i32_1 : i32, i32, i32
  }
  func.func @transform_17(%arg0: i32) -> (i32, i32, i32) {
    %c0_i32 = arith.constant 0 : i32
    %c0_i32_0 = arith.constant 0 : i32
    %c0_i32_1 = arith.constant 0 : i32
    %c0_i32_2 = arith.constant 0 : i32
    return %c0_i32, %c0_i32_0, %c0_i32_1 : i32, i32, i32
  }
  func.func @transform_18(%arg0: i32) -> (i32, i32, i32) {
    %c0_i32 = arith.constant 0 : i32
    %c0_i32_0 = arith.constant 0 : i32
    %c0_i32_1 = arith.constant 0 : i32
    %c0_i32_2 = arith.constant 0 : i32
    return %c0_i32, %c0_i32_0, %c0_i32_1 : i32, i32, i32
  }
  func.func @transform_19(%arg0: i32) -> (i32, i32, i32) {
    %c0_i32 = arith.constant 0 : i32
    %c0_i32_0 = arith.constant 0 : i32
    %c0_i32_1 = arith.constant 0 : i32
    %c0_i32_2 = arith.constant 0 : i32
    return %c0_i32, %c0_i32_0, %c0_i32_1 : i32, i32, i32
  }
  func.func @transform_20(%arg0: i32) -> (i32, i32, i32) {
    %c0_i32 = arith.constant 0 : i32
    %c0_i32_0 = arith.constant 0 : i32
    %c0_i32_1 = arith.constant 0 : i32
    %c0_i32_2 = arith.constant 0 : i32
    return %c0_i32, %c0_i32_0, %c0_i32_1 : i32, i32, i32
  }
  func.func @transform_21(%arg0: i32) -> (i32, i32, i32) {
    %c0_i32 = arith.constant 0 : i32
    %c0_i32_0 = arith.constant 0 : i32
    %c0_i32_1 = arith.constant 0 : i32
    %c0_i32_2 = arith.constant 0 : i32
    return %c0_i32, %c0_i32_0, %c0_i32_1 : i32, i32, i32
  }
  func.func @transform_22(%arg0: i32) -> (i32, i32, i32) {
    %c0_i32 = arith.constant 0 : i32
    %c0_i32_0 = arith.constant 0 : i32
    %c0_i32_1 = arith.constant 0 : i32
    %c0_i32_2 = arith.constant 0 : i32
    return %c0_i32, %c0_i32_0, %c0_i32_1 : i32, i32, i32
  }
  func.func @transform_23(%arg0: i32) -> (i32, i32, i32) {
    %c0_i32 = arith.constant 0 : i32
    %c0_i32_0 = arith.constant 0 : i32
    %c0_i32_1 = arith.constant 0 : i32
    %c0_i32_2 = arith.constant 0 : i32
    return %c0_i32, %c0_i32_0, %c0_i32_1 : i32, i32, i32
  }
  func.func @transform_24(%arg0: i32) -> (i32, i32, i32) {
    %c0_i32 = arith.constant 0 : i32
    %c0_i32_0 = arith.constant 0 : i32
    %c0_i32_1 = arith.constant 0 : i32
    %c0_i32_2 = arith.constant 0 : i32
    return %c0_i32, %c0_i32_0, %c0_i32_1 : i32, i32, i32
  }
  func.func @transform_25(%arg0: i32) -> (i32, i32, i32) {
    %c0_i32 = arith.constant 0 : i32
    %c0_i32_0 = arith.constant 0 : i32
    %c0_i32_1 = arith.constant 0 : i32
    %c0_i32_2 = arith.constant 0 : i32
    return %c0_i32, %c0_i32_0, %c0_i32_1 : i32, i32, i32
  }
  func.func @transform_26(%arg0: i32) -> (i32, i32, i32) {
    %c0_i32 = arith.constant 0 : i32
    %c0_i32_0 = arith.constant 0 : i32
    %c0_i32_1 = arith.constant 0 : i32
    %c0_i32_2 = arith.constant 0 : i32
    return %c0_i32, %c0_i32_0, %c0_i32_1 : i32, i32, i32
  }
  func.func @transform_27(%arg0: i32) -> (i32, i32, i32) {
    %c0_i32 = arith.constant 0 : i32
    %c0_i32_0 = arith.constant 0 : i32
    %c0_i32_1 = arith.constant 0 : i32
    %c0_i32_2 = arith.constant 0 : i32
    return %c0_i32, %c0_i32_0, %c0_i32_1 : i32, i32, i32
  }
  func.func @transform_28(%arg0: i32) -> (i32, i32, i32) {
    %c0_i32 = arith.constant 0 : i32
    %c0_i32_0 = arith.constant 0 : i32
    %c0_i32_1 = arith.constant 0 : i32
    %c0_i32_2 = arith.constant 0 : i32
    return %c0_i32, %c0_i32_0, %c0_i32_1 : i32, i32, i32
  }
  func.func @transform_29(%arg0: i32) -> (i32, i32, i32) {
    %c0_i32 = arith.constant 0 : i32
    %c0_i32_0 = arith.constant 0 : i32
    %c0_i32_1 = arith.constant 0 : i32
    %c0_i32_2 = arith.constant 0 : i32
    return %c0_i32, %c0_i32_0, %c0_i32_1 : i32, i32, i32
  }
  func.func @transform_30(%arg0: i32) -> (i32, i32, i32) {
    %c0_i32 = arith.constant 0 : i32
    %c0_i32_0 = arith.constant 0 : i32
    %c0_i32_1 = arith.constant 0 : i32
    %c0_i32_2 = arith.constant 0 : i32
    return %c0_i32, %c0_i32_0, %c0_i32_1 : i32, i32, i32
  }
  func.func @transform_31(%arg0: i32) -> (i32, i32, i32) {
    %c0_i32 = arith.constant 0 : i32
    %c0_i32_0 = arith.constant 0 : i32
    %c0_i32_1 = arith.constant 0 : i32
    %c0_i32_2 = arith.constant 0 : i32
    return %c0_i32, %c0_i32_0, %c0_i32_1 : i32, i32, i32
  }
  func.func @transform_32(%arg0: i32) -> (i32, i32, i32) {
    %c0_i32 = arith.constant 0 : i32
    %c0_i32_0 = arith.constant 0 : i32
    %c0_i32_1 = arith.constant 0 : i32
    %c0_i32_2 = arith.constant 0 : i32
    return %c0_i32, %c0_i32_0, %c0_i32_1 : i32, i32, i32
  }
  func.func @transform_33(%arg0: i32) -> (i32, i32, i32) {
    %c0_i32 = arith.constant 0 : i32
    %c0_i32_0 = arith.constant 0 : i32
    %c0_i32_1 = arith.constant 0 : i32
    %c0_i32_2 = arith.constant 0 : i32
    return %c0_i32, %c0_i32_0, %c0_i32_1 : i32, i32, i32
  }
  func.func @transform_34(%arg0: i32) -> (i32, i32, i32) {
    %c0_i32 = arith.constant 0 : i32
    %c0_i32_0 = arith.constant 0 : i32
    %c0_i32_1 = arith.constant 0 : i32
    %c0_i32_2 = arith.constant 0 : i32
    return %c0_i32, %c0_i32_0, %c0_i32_1 : i32, i32, i32
  }
  func.func @transform_35(%arg0: i32) -> (i32, i32) {
    %c0_i32 = arith.constant 0 : i32
    %c0_i32_0 = arith.constant 0 : i32
    %c0_i32_1 = arith.constant 0 : i32
    return %c0_i32, %c0_i32_0 : i32, i32
  }
  func.func @transform_36(%arg0: i32) -> (i32, i32) {
    %c0_i32 = arith.constant 0 : i32
    %c0_i32_0 = arith.constant 0 : i32
    %c0_i32_1 = arith.constant 0 : i32
    return %c0_i32, %c0_i32_0 : i32, i32
  }
  func.func @transform_37(%arg0: i32) -> (i32, i32) {
    %c0_i32 = arith.constant 0 : i32
    %c0_i32_0 = arith.constant 0 : i32
    %c0_i32_1 = arith.constant 0 : i32
    return %c0_i32, %c0_i32_0 : i32, i32
  }
  func.func @transform_38(%arg0: i32) -> (i32, i32) {
    %c0_i32 = arith.constant 0 : i32
    %c0_i32_0 = arith.constant 0 : i32
    %c0_i32_1 = arith.constant 0 : i32
    return %c0_i32, %c0_i32_0 : i32, i32
  }
  func.func @transform_39(%arg0: i32) -> (i32, i32) {
    %c0_i32 = arith.constant 0 : i32
    %c0_i32_0 = arith.constant 0 : i32
    %c0_i32_1 = arith.constant 0 : i32
    return %c0_i32, %c0_i32_0 : i32, i32
  }
  func.func @transform_40(%arg0: i32) -> (i32, i32) {
    %c0_i32 = arith.constant 0 : i32
    %c0_i32_0 = arith.constant 0 : i32
    %c0_i32_1 = arith.constant 0 : i32
    return %c0_i32, %c0_i32_0 : i32, i32
  }
  func.func @transform_41(%arg0: i32) -> (i32, i32, i32) {
    %c0_i32 = arith.constant 0 : i32
    %c0_i32_0 = arith.constant 0 : i32
    %c0_i32_1 = arith.constant 0 : i32
    return %arg0, %c0_i32, %c0_i32_0 : i32, i32, i32
  }
}

</mosaic_0001>

<llo_original>
// kernel: transformer_forward.1
$region0: #{transformer_forward.1}
  #allocation0 [shape = 'u32[]', space=smem, size = 0x4, offset = 0x4, fixed_abs, tag = 'smem constant byte address 0x4 - core index']
  #allocation1 [shape = 'u32[144,128]{1,0:T(1,128)}', space=vmem, size = 0x12000, scoped, tag = 'internal scratch']
  %s0 = inlined_call_operand.smem [shape: u32[42], index: -1, kind: input, shape index: {}]
  %s1 = sld [smem:[%s0]]
  %s2 = scalar_lea.smem %s0, 1
  %s3 = sld [smem:[%s2]]
  %s4 = scalar_lea.smem %s0, 2
  %s5 = sld [smem:[%s4]]
  %s6 = scalar_lea.smem %s0, 3
  %s7 = sld [smem:[%s6]]
  %s8 = scalar_lea.smem %s0, 4
  %s9 = sld [smem:[%s8]]
  %s10 = scalar_lea.smem %s0, 5
  %s11 = sld [smem:[%s10]]
  %s12 = scalar_lea.smem %s0, 6
  %s13 = sld [smem:[%s12]]
  %s14 = scalar_lea.smem %s0, 7
  %s15 = sld [smem:[%s14]]
  %s16 = scalar_lea.smem %s0, 8
  %s17 = sld [smem:[%s16]]
  %s18 = scalar_lea.smem %s0, 9
  %s19 = sld [smem:[%s18]]
  %s20 = scalar_lea.smem %s0, 10
  %s21 = sld [smem:[%s20]]
  %s22 = scalar_lea.smem %s0, 11
  %s23 = sld [smem:[%s22]]
  %s24 = scalar_lea.smem %s0, 12
  %s25 = sld [smem:[%s24]]
  %s26 = scalar_lea.smem %s0, 13
  %s27 = sld [smem:[%s26]]
  %s28 = scalar_lea.smem %s0, 14
  %s29 = sld [smem:[%s28]]
  %s30 = scalar_lea.smem %s0, 15
  %s31 = sld [smem:[%s30]]
  %s32 = scalar_lea.smem %s0, 16
  %s33 = sld [smem:[%s32]]
  %s34 = scalar_lea.smem %s0, 17
  %s35 = sld [smem:[%s34]]
  %s36 = scalar_lea.smem %s0, 18
  %s37 = sld [smem:[%s36]]
  %s38 = scalar_lea.smem %s0, 19
  %s39 = sld [smem:[%s38]]
  %s40 = scalar_lea.smem %s0, 20
  %s41 = sld [smem:[%s40]]
  %s42 = scalar_lea.smem %s0, 21
  %s43 = sld [smem:[%s42]]
  %s44 = scalar_lea.smem %s0, 22
  %s45 = sld [smem:[%s44]]
  %s46 = scalar_lea.smem %s0, 23
  %s47 = sld [smem:[%s46]]
  %s48 = scalar_lea.smem %s0, 24
  %s49 = sld [smem:[%s48]]
  %s50 = scalar_lea.smem %s0, 25
  %s51 = sld [smem:[%s50]]
  %s52 = scalar_lea.smem %s0, 26
  %s53 = sld [smem:[%s52]]
  %s54 = scalar_lea.smem %s0, 27
  %s55 = sld [smem:[%s54]]
  %s56 = scalar_lea.smem %s0, 28
  %s57 = sld [smem:[%s56]]
  %s58 = scalar_lea.smem %s0, 29
  %s59 = sld [smem:[%s58]]
  %s60 = scalar_lea.smem %s0, 30
  %s61 = sld [smem:[%s60]]
  %s62 = scalar_lea.smem %s0, 31
  %s63 = sld [smem:[%s62]]
  %s64 = scalar_lea.smem %s0, 32
  %s65 = sld [smem:[%s64]]
  %s66 = scalar_lea.smem %s0, 33
  %s67 = sld [smem:[%s66]]
  %s68 = scalar_lea.smem %s0, 34
  %s69 = sld [smem:[%s68]]
  %s70 = scalar_lea.smem %s0, 35
  %s71 = sld [smem:[%s70]]
  %s72 = scalar_lea.smem %s0, 36
  %s73 = sld [smem:[%s72]]
  %s74 = scalar_lea.smem %s0, 37
  %s75 = sld [smem:[%s74]]
  %s76 = scalar_lea.smem %s0, 38
  %s77 = sld [smem:[%s76]]
  %s78 = scalar_lea.smem %s0, 39
  %s79 = sld [smem:[%s78]]
  %s80 = scalar_lea.smem %s0, 40
  %s81 = sld [smem:[%s80]]
  %s82 = scalar_lea.smem %s0, 41
  %s83 = sld [smem:[%s82]]
  %s84 = sld [smem:[#allocation0]]
  $region197: #{transformer_forward.1} parent=0
    _
  %s86 = ssub.s32 1, %s84
  %s87 = scalar_select 0, %s86, %s84
  loop: start=0, step=1, limit=4
  $region2: #{transformer_forward.1} parent=0 // loop_pre_header
    _
  $region3: #{transformer_forward.1} parent=0 // loop_header
    %s89 = sphi 0, %s93
    %p90 = scmp.ge.s32.totalorder %s89, 4
    %s99 = sphi 0, %s101
    %s102 = sphi 0, %s99
    %s103 = sphi 0, %s102
    %s119 = sphi 0, %s103
    %s125 = sphi 0, %s127
    %s128 = sphi 0, %s125
    %s129 = sphi 0, %s128
    %s145 = sphi 0, %s129
    %s151 = sphi 0, %s153
    %s154 = sphi 0, %s151
    %s155 = sphi 0, %s154
    %s171 = sphi 0, %s155
    %s175 = sphi 0, %s175
    %s177 = sphi 0, %s175
    %s178 = sphi 0, %s177
    %s192 = sphi 0, %s178
    %s196 = sphi 0, %s196
    %s198 = sphi 0, %s196
    %s199 = sphi 0, %s198
    %s213 = sphi 0, %s199
    %s217 = sphi 0, %s217
    %s219 = sphi 0, %s217
    %s220 = sphi 0, %s219
    %s234 = sphi 0, %s220
    %s238 = sphi 0, %s238
    %s240 = sphi 0, %s238
    %s241 = sphi 0, %s240
    %s255 = sphi 0, %s241
    %s259 = sphi 0, %s259
    %s261 = sphi 0, %s259
    %s262 = sphi 0, %s261
    %s276 = sphi 0, %s262
    %s280 = sphi 0, %s280
    %s282 = sphi 0, %s280
    %s283 = sphi 0, %s282
    %s297 = sphi 0, %s283
    %s301 = sphi 0, %s301
    %s303 = sphi 0, %s301
    %s304 = sphi 0, %s303
    %s318 = sphi 0, %s304
    %s322 = sphi 0, %s322
    %s324 = sphi 0, %s322
    %s325 = sphi 0, %s324
    %s339 = sphi 0, %s325
    %s343 = sphi 0, %s343
    %s345 = sphi 0, %s343
    %s346 = sphi 0, %s345
    %s360 = sphi 0, %s346
    %s364 = sphi 0, %s364
    %s366 = sphi 0, %s364
    %s367 = sphi 0, %s366
    %s381 = sphi 0, %s367
    %s385 = sphi 0, %s385
    %s387 = sphi 0, %s385
    %s388 = sphi 0, %s387
    %s402 = sphi 0, %s388
    %s406 = sphi 0, %s406
    %s408 = sphi 0, %s406
    %s409 = sphi 0, %s408
    %s423 = sphi 0, %s409
    %s427 = sphi 0, %s427
    %s429 = sphi 0, %s427
    %s430 = sphi 0, %s429
    %s444 = sphi 0, %s430
    %s448 = sphi 0, %s448
    %s450 = sphi 0, %s448
    %s451 = sphi 0, %s450
    %s465 = sphi 0, %s451
    %s469 = sphi 0, %s469
    %s471 = sphi 0, %s469
    %s472 = sphi 0, %s471
    %s486 = sphi 0, %s472
    %s490 = sphi 0, %s490
    %s492 = sphi 0, %s490
    %s493 = sphi 0, %s492
    %s507 = sphi 0, %s493
    %s511 = sphi 0, %s511
    %s513 = sphi 0, %s511
    %s514 = sphi 0, %s513
    %s528 = sphi 0, %s514
    %s532 = sphi 0, %s532
    %s534 = sphi 0, %s532
    %s535 = sphi 0, %s534
    %s549 = sphi 0, %s535
    %s553 = sphi 0, %s553
    %s555 = sphi 0, %s553
    %s556 = sphi 0, %s555
    %s570 = sphi 0, %s556
    %s574 = sphi 0, %s574
    %s576 = sphi 0, %s574
    %s577 = sphi 0, %s576
    %s591 = sphi 0, %s577
    %s595 = sphi 0, %s595
    %s597 = sphi 0, %s595
    %s598 = sphi 0, %s597
    %s612 = sphi 0, %s598
    %s616 = sphi 0, %s616
    %s618 = sphi 0, %s616
    %s619 = sphi 0, %s618
    %s633 = sphi 0, %s619
    %s637 = sphi 0, %s637
    %s639 = sphi 0, %s637
    %s640 = sphi 0, %s639
    %s654 = sphi 0, %s640
    %s658 = sphi 0, %s658
    %s660 = sphi 0, %s658
    %s661 = sphi 0, %s660
    %s675 = sphi 0, %s661
    %s679 = sphi 0, %s679
    %s681 = sphi 0, %s679
    %s682 = sphi 0, %s681
    %s696 = sphi 0, %s682
    %s700 = sphi 0, %s700
    %s702 = sphi 0, %s700
    %s703 = sphi 0, %s702
    %s717 = sphi 0, %s703
    %s721 = sphi 0, %s721
    %s723 = sphi 0, %s721
    %s724 = sphi 0, %s723
    %s738 = sphi 0, %s724
    %s742 = sphi 0, %s742
    %s744 = sphi 0, %s742
    %s745 = sphi 0, %s744
    %s759 = sphi 0, %s745
    %s763 = sphi 0, %s763
    %s765 = sphi 0, %s763
    %s766 = sphi 0, %s765
    %s780 = sphi 0, %s766
    %s784 = sphi 0, %s784
    %s786 = sphi 0, %s784
    %s787 = sphi 0, %s786
    %s801 = sphi 0, %s787
    %s805 = sphi 0, %s805
    %s807 = sphi 0, %s805
    %s808 = sphi 0, %s807
    %s822 = sphi 0, %s808
    %s826 = sphi 0, %s826
    %s828 = sphi 0, %s826
    %s829 = sphi 0, %s828
    %s843 = sphi 0, %s829
    %s847 = sphi 0, %s847
    %s849 = sphi 0, %s847
    %s850 = sphi 0, %s849
    %s864 = sphi 0, %s850
    %s868 = sphi 0, %s868
    %s870 = sphi 0, %s868
    %s871 = sphi 0, %s870
    %s885 = sphi 0, %s871
    %s889 = sphi 0, %s889
    %s891 = sphi 0, %s889
    %s892 = sphi 0, %s891
    %s906 = sphi 0, %s892
    %s910 = sphi 0, %s910
    %s912 = sphi 0, %s910
    %s913 = sphi 0, %s912
    %s927 = sphi 0, %s913
    %s931 = sphi 0, %s931
    %s933 = sphi 0, %s931
    %s934 = sphi 0, %s933
    %s948 = sphi 0, %s934
    %s952 = sphi 0, %s952
    %s954 = sphi 0, %s952
    %s955 = sphi 0, %s954
    %s969 = sphi 0, %s955
    %s975 = sphi 0, %s977
    %s978 = sphi 0, %s975
    %s979 = sphi 0, %s978
    %s995 = sphi 0, %s979
  $region4: #{transformer_forward.1} parent=0 // loop_header_branch
    %92 = sbr.rel (%p90) target = $region8
  $region5: #{transformer_forward.1} parent=0 // loop_body
    %s94 = ssub.s32 %s89, 1
    %s95 = ssub.s32 %s89, 2
    %s96 = sadd.s32 %s89, 1
    %s97 = ssub.s32 %s89, %s96
    %p98 = scmp.eq.s32.totalorder %s97, 0
    %s100 = sadd.s32 %s99, 1
    %s101 = scalar_select %p98, %s99, %s100
    %p104 = pneg %p98
    %p105 = scmp.eq.s32.totalorder %s89, 1
    %p106 = por %p104, %p105
    %p107 = scmp.ne.s32.totalorder %s99, %s102
    %p108 = scmp.eq.s32.totalorder %s89, 0
    %p109 = por %p107, %p108
    %p110 = scmp.ne.s32.totalorder %s99, %s102
    %p111 = scmp.eq.s32.totalorder %s94, 1
    %p112 = por %p110, %p111
    %p113 = scmp.ne.s32.totalorder %s102, %s103
    %p114 = scmp.eq.s32.totalorder %s94, 0
    %p115 = por %p113, %p114
    %p116 = scmp.ne.s32.totalorder %s102, %s103
    %p117 = scmp.eq.s32.totalorder %s95, 1
    %p118 = por %p116, %p117
    %p120 = scmp.ne.s32.totalorder %s103, %s119
    %p121 = scmp.eq.s32.totalorder %s95, 0
    %p122 = por %p120, %p121
    %s123 = ssub.s32 %s89, %s96
    %p124 = scmp.eq.s32.totalorder %s123, 0
    %s126 = sadd.s32 %s125, 1
    %s127 = scalar_select %p124, %s125, %s126
    %p130 = pneg %p124
    %p131 = scmp.eq.s32.totalorder %s89, 1
    %p132 = por %p130, %p131
    %p133 = scmp.ne.s32.totalorder %s125, %s128
    %p134 = scmp.eq.s32.totalorder %s89, 0
    %p135 = por %p133, %p134
    %p136 = scmp.ne.s32.totalorder %s125, %s128
    %p137 = scmp.eq.s32.totalorder %s94, 1
    %p138 = por %p136, %p137
    %p139 = scmp.ne.s32.totalorder %s128, %s129
    %p140 = scmp.eq.s32.totalorder %s94, 0
    %p141 = por %p139, %p140
    %p142 = scmp.ne.s32.totalorder %s128, %s129
    %p143 = scmp.eq.s32.totalorder %s95, 1
    %p144 = por %p142, %p143
    %p146 = scmp.ne.s32.totalorder %s129, %s145
    %p147 = scmp.eq.s32.totalorder %s95, 0
    %p148 = por %p146, %p147
    %s149 = ssub.s32 %s89, %s96
    %p150 = scmp.eq.s32.totalorder %s149, 0
    %s152 = sadd.s32 %s151, 1
    %s153 = scalar_select %p150, %s151, %s152
    %p156 = pneg %p150
    %p157 = scmp.eq.s32.totalorder %s89, 1
    %p158 = por %p156, %p157
    %p159 = scmp.ne.s32.totalorder %s151, %s154
    %p160 = scmp.eq.s32.totalorder %s89, 0
    %p161 = por %p159, %p160
    %p162 = scmp.ne.s32.totalorder %s151, %s154
    %p163 = scmp.eq.s32.totalorder %s94, 1
    %p164 = por %p162, %p163
    %p165 = scmp.ne.s32.totalorder %s154, %s155
    %p166 = scmp.eq.s32.totalorder %s94, 0
    %p167 = por %p165, %p166
    %p168 = scmp.ne.s32.totalorder %s154, %s155
    %p169 = scmp.eq.s32.totalorder %s95, 1
    %p170 = por %p168, %p169
    %p172 = scmp.ne.s32.totalorder %s155, %s171
    %p173 = scmp.eq.s32.totalorder %s95, 0
    %p174 = por %p172, %p173
    %s176 = sadd.s32 %s175, 1
    %p179 = scmp.eq.s32.totalorder %s89, 1
    %p180 = scmp.ne.s32.totalorder %s175, %s177
    %p181 = scmp.eq.s32.totalorder %s89, 0
    %p182 = por %p180, %p181
    %p183 = scmp.ne.s32.totalorder %s175, %s177
    %p184 = scmp.eq.s32.totalorder %s94, 1
    %p185 = por %p183, %p184
    %p186 = scmp.ne.s32.totalorder %s177, %s178
    %p187 = scmp.eq.s32.totalorder %s94, 0
    %p188 = por %p186, %p187
    %p189 = scmp.ne.s32.totalorder %s177, %s178
    %p190 = scmp.eq.s32.totalorder %s95, 1
    %p191 = por %p189, %p190
    %p193 = scmp.ne.s32.totalorder %s178, %s192
    %p194 = scmp.eq.s32.totalorder %s95, 0
    %p195 = por %p193, %p194
    %s197 = sadd.s32 %s196, 1
    %p200 = scmp.eq.s32.totalorder %s89, 1
    %p201 = scmp.ne.s32.totalorder %s196, %s198
    %p202 = scmp.eq.s32.totalorder %s89, 0
    %p203 = por %p201, %p202
    %p204 = scmp.ne.s32.totalorder %s196, %s198
    %p205 = scmp.eq.s32.totalorder %s94, 1
    %p206 = por %p204, %p205
    %p207 = scmp.ne.s32.totalorder %s198, %s199
    %p208 = scmp.eq.s32.totalorder %s94, 0
    %p209 = por %p207, %p208
    %p210 = scmp.ne.s32.totalorder %s198, %s199
    %p211 = scmp.eq.s32.totalorder %s95, 1
    %p212 = por %p210, %p211
    %p214 = scmp.ne.s32.totalorder %s199, %s213
    %p215 = scmp.eq.s32.totalorder %s95, 0
    %p216 = por %p214, %p215
    %s218 = sadd.s32 %s217, 1
    %p221 = scmp.eq.s32.totalorder %s89, 1
    %p222 = scmp.ne.s32.totalorder %s217, %s219
    %p223 = scmp.eq.s32.totalorder %s89, 0
    %p224 = por %p222, %p223
    %p225 = scmp.ne.s32.totalorder %s217, %s219
    %p226 = scmp.eq.s32.totalorder %s94, 1
    %p227 = por %p225, %p226
    %p228 = scmp.ne.s32.totalorder %s219, %s220
    %p229 = scmp.eq.s32.totalorder %s94, 0
    %p230 = por %p228, %p229
    %p231 = scmp.ne.s32.totalorder %s219, %s220
    %p232 = scmp.eq.s32.totalorder %s95, 1
    %p233 = por %p231, %p232
    %p235 = scmp.ne.s32.totalorder %s220, %s234
    %p236 = scmp.eq.s32.totalorder %s95, 0
    %p237 = por %p235, %p236
    %s239 = sadd.s32 %s238, 1
    %p242 = scmp.eq.s32.totalorder %s89, 1
    %p243 = scmp.ne.s32.totalorder %s238, %s240
    %p244 = scmp.eq.s32.totalorder %s89, 0
    %p245 = por %p243, %p244
    %p246 = scmp.ne.s32.totalorder %s238, %s240
    %p247 = scmp.eq.s32.totalorder %s94, 1
    %p248 = por %p246, %p247
    %p249 = scmp.ne.s32.totalorder %s240, %s241
    %p250 = scmp.eq.s32.totalorder %s94, 0
    %p251 = por %p249, %p250
    %p252 = scmp.ne.s32.totalorder %s240, %s241
    %p253 = scmp.eq.s32.totalorder %s95, 1
    %p254 = por %p252, %p253
    %p256 = scmp.ne.s32.totalorder %s241, %s255
    %p257 = scmp.eq.s32.totalorder %s95, 0
    %p258 = por %p256, %p257
    %s260 = sadd.s32 %s259, 1
    %p263 = scmp.eq.s32.totalorder %s89, 1
    %p264 = scmp.ne.s32.totalorder %s259, %s261
    %p265 = scmp.eq.s32.totalorder %s89, 0
    %p266 = por %p264, %p265
    %p267 = scmp.ne.s32.totalorder %s259, %s261
    %p268 = scmp.eq.s32.totalorder %s94, 1
    %p269 = por %p267, %p268
    %p270 = scmp.ne.s32.totalorder %s261, %s262
    %p271 = scmp.eq.s32.totalorder %s94, 0
    %p272 = por %p270, %p271
    %p273 = scmp.ne.s32.totalorder %s261, %s262
    %p274 = scmp.eq.s32.totalorder %s95, 1
    %p275 = por %p273, %p274
    %p277 = scmp.ne.s32.totalorder %s262, %s276
    %p278 = scmp.eq.s32.totalorder %s95, 0
    %p279 = por %p277, %p278
    %s281 = sadd.s32 %s280, 1
    %p284 = scmp.eq.s32.totalorder %s89, 1
    %p285 = scmp.ne.s32.totalorder %s280, %s282
    %p286 = scmp.eq.s32.totalorder %s89, 0
    %p287 = por %p285, %p286
    %p288 = scmp.ne.s32.totalorder %s280, %s282
    %p289 = scmp.eq.s32.totalorder %s94, 1
    %p290 = por %p288, %p289
    %p291 = scmp.ne.s32.totalorder %s282, %s283
    %p292 = scmp.eq.s32.totalorder %s94, 0
    %p293 = por %p291, %p292
    %p294 = scmp.ne.s32.totalorder %s282, %s283
    %p295 = scmp.eq.s32.totalorder %s95, 1
    %p296 = por %p294, %p295
    %p298 = scmp.ne.s32.totalorder %s283, %s297
    %p299 = scmp.eq.s32.totalorder %s95, 0
    %p300 = por %p298, %p299
    %s302 = sadd.s32 %s301, 1
    %p305 = scmp.eq.s32.totalorder %s89, 1
    %p306 = scmp.ne.s32.totalorder %s301, %s303
    %p307 = scmp.eq.s32.totalorder %s89, 0
    %p308 = por %p306, %p307
    %p309 = scmp.ne.s32.totalorder %s301, %s303
    %p310 = scmp.eq.s32.totalorder %s94, 1
    %p311 = por %p309, %p310
    %p312 = scmp.ne.s32.totalorder %s303, %s304
    %p313 = scmp.eq.s32.totalorder %s94, 0
    %p314 = por %p312, %p313
    %p315 = scmp.ne.s32.totalorder %s303, %s304
    %p316 = scmp.eq.s32.totalorder %s95, 1
    %p317 = por %p315, %p316
    %p319 = scmp.ne.s32.totalorder %s304, %s318
    %p320 = scmp.eq.s32.totalorder %s95, 0
    %p321 = por %p319, %p320
    %s323 = sadd.s32 %s322, 1
    %p326 = scmp.eq.s32.totalorder %s89, 1
    %p327 = scmp.ne.s32.totalorder %s322, %s324
    %p328 = scmp.eq.s32.totalorder %s89, 0
    %p329 = por %p327, %p328
    %p330 = scmp.ne.s32.totalorder %s322, %s324
    %p331 = scmp.eq.s32.totalorder %s94, 1
    %p332 = por %p330, %p331
    %p333 = scmp.ne.s32.totalorder %s324, %s325
    %p334 = scmp.eq.s32.totalorder %s94, 0
    %p335 = por %p333, %p334
    %p336 = scmp.ne.s32.totalorder %s324, %s325
    %p337 = scmp.eq.s32.totalorder %s95, 1
    %p338 = por %p336, %p337
    %p340 = scmp.ne.s32.totalorder %s325, %s339
    %p341 = scmp.eq.s32.totalorder %s95, 0
    %p342 = por %p340, %p341
    %s344 = sadd.s32 %s343, 1
    %p347 = scmp.eq.s32.totalorder %s89, 1
    %p348 = scmp.ne.s32.totalorder %s343, %s345
    %p349 = scmp.eq.s32.totalorder %s89, 0
    %p350 = por %p348, %p349
    %p351 = scmp.ne.s32.totalorder %s343, %s345
    %p352 = scmp.eq.s32.totalorder %s94, 1
    %p353 = por %p351, %p352
    %p354 = scmp.ne.s32.totalorder %s345, %s346
    %p355 = scmp.eq.s32.totalorder %s94, 0
    %p356 = por %p354, %p355
    %p357 = scmp.ne.s32.totalorder %s345, %s346
    %p358 = scmp.eq.s32.totalorder %s95, 1
    %p359 = por %p357, %p358
    %p361 = scmp.ne.s32.totalorder %s346, %s360
    %p362 = scmp.eq.s32.totalorder %s95, 0
    %p363 = por %p361, %p362
    %s365 = sadd.s32 %s364, 1
    %p368 = scmp.eq.s32.totalorder %s89, 1
    %p369 = scmp.ne.s32.totalorder %s364, %s366
    %p370 = scmp.eq.s32.totalorder %s89, 0
    %p371 = por %p369, %p370
    %p372 = scmp.ne.s32.totalorder %s364, %s366
    %p373 = scmp.eq.s32.totalorder %s94, 1
    %p374 = por %p372, %p373
    %p375 = scmp.ne.s32.totalorder %s366, %s367
    %p376 = scmp.eq.s32.totalorder %s94, 0
    %p377 = por %p375, %p376
    %p378 = scmp.ne.s32.totalorder %s366, %s367
    %p379 = scmp.eq.s32.totalorder %s95, 1
    %p380 = por %p378, %p379
    %p382 = scmp.ne.s32.totalorder %s367, %s381
    %p383 = scmp.eq.s32.totalorder %s95, 0
    %p384 = por %p382, %p383
    %s386 = sadd.s32 %s385, 1
    %p389 = scmp.eq.s32.totalorder %s89, 1
    %p390 = scmp.ne.s32.totalorder %s385, %s387
    %p391 = scmp.eq.s32.totalorder %s89, 0
    %p392 = por %p390, %p391
    %p393 = scmp.ne.s32.totalorder %s385, %s387
    %p394 = scmp.eq.s32.totalorder %s94, 1
    %p395 = por %p393, %p394
    %p396 = scmp.ne.s32.totalorder %s387, %s388
    %p397 = scmp.eq.s32.totalorder %s94, 0
    %p398 = por %p396, %p397
    %p399 = scmp.ne.s32.totalorder %s387, %s388
    %p400 = scmp.eq.s32.totalorder %s95, 1
    %p401 = por %p399, %p400
    %p403 = scmp.ne.s32.totalorder %s388, %s402
    %p404 = scmp.eq.s32.totalorder %s95, 0
    %p405 = por %p403, %p404
    %s407 = sadd.s32 %s406, 1
    %p410 = scmp.eq.s32.totalorder %s89, 1
    %p411 = scmp.ne.s32.totalorder %s406, %s408
    %p412 = scmp.eq.s32.totalorder %s89, 0
    %p413 = por %p411, %p412
    %p414 = scmp.ne.s32.totalorder %s406, %s408
    %p415 = scmp.eq.s32.totalorder %s94, 1
    %p416 = por %p414, %p415
    %p417 = scmp.ne.s32.totalorder %s408, %s409
    %p418 = scmp.eq.s32.totalorder %s94, 0
    %p419 = por %p417, %p418
    %p420 = scmp.ne.s32.totalorder %s408, %s409
    %p421 = scmp.eq.s32.totalorder %s95, 1
    %p422 = por %p420, %p421
    %p424 = scmp.ne.s32.totalorder %s409, %s423
    %p425 = scmp.eq.s32.totalorder %s95, 0
    %p426 = por %p424, %p425
    %s428 = sadd.s32 %s427, 1
    %p431 = scmp.eq.s32.totalorder %s89, 1
    %p432 = scmp.ne.s32.totalorder %s427, %s429
    %p433 = scmp.eq.s32.totalorder %s89, 0
    %p434 = por %p432, %p433
    %p435 = scmp.ne.s32.totalorder %s427, %s429
    %p436 = scmp.eq.s32.totalorder %s94, 1
    %p437 = por %p435, %p436
    %p438 = scmp.ne.s32.totalorder %s429, %s430
    %p439 = scmp.eq.s32.totalorder %s94, 0
    %p440 = por %p438, %p439
    %p441 = scmp.ne.s32.totalorder %s429, %s430
    %p442 = scmp.eq.s32.totalorder %s95, 1
    %p443 = por %p441, %p442
    %p445 = scmp.ne.s32.totalorder %s430, %s444
    %p446 = scmp.eq.s32.totalorder %s95, 0
    %p447 = por %p445, %p446
    %s449 = sadd.s32 %s448, 1
    %p452 = scmp.eq.s32.totalorder %s89, 1
    %p453 = scmp.ne.s32.totalorder %s448, %s450
    %p454 = scmp.eq.s32.totalorder %s89, 0
    %p455 = por %p453, %p454
    %p456 = scmp.ne.s32.totalorder %s448, %s450
    %p457 = scmp.eq.s32.totalorder %s94, 1
    %p458 = por %p456, %p457
    %p459 = scmp.ne.s32.totalorder %s450, %s451
    %p460 = scmp.eq.s32.totalorder %s94, 0
    %p461 = por %p459, %p460
    %p462 = scmp.ne.s32.totalorder %s450, %s451
    %p463 = scmp.eq.s32.totalorder %s95, 1
    %p464 = por %p462, %p463
    %p466 = scmp.ne.s32.totalorder %s451, %s465
    %p467 = scmp.eq.s32.totalorder %s95, 0
    %p468 = por %p466, %p467
    %s470 = sadd.s32 %s469, 1
    %p473 = scmp.eq.s32.totalorder %s89, 1
    %p474 = scmp.ne.s32.totalorder %s469, %s471
    %p475 = scmp.eq.s32.totalorder %s89, 0
    %p476 = por %p474, %p475
    %p477 = scmp.ne.s32.totalorder %s469, %s471
    %p478 = scmp.eq.s32.totalorder %s94, 1
    %p479 = por %p477, %p478
    %p480 = scmp.ne.s32.totalorder %s471, %s472
    %p481 = scmp.eq.s32.totalorder %s94, 0
    %p482 = por %p480, %p481
    %p483 = scmp.ne.s32.totalorder %s471, %s472
    %p484 = scmp.eq.s32.totalorder %s95, 1
    %p485 = por %p483, %p484
    %p487 = scmp.ne.s32.totalorder %s472, %s486
    %p488 = scmp.eq.s32.totalorder %s95, 0
    %p489 = por %p487, %p488
    %s491 = sadd.s32 %s490, 1
    %p494 = scmp.eq.s32.totalorder %s89, 1
    %p495 = scmp.ne.s32.totalorder %s490, %s492
    %p496 = scmp.eq.s32.totalorder %s89, 0
    %p497 = por %p495, %p496
    %p498 = scmp.ne.s32.totalorder %s490, %s492
    %p499 = scmp.eq.s32.totalorder %s94, 1
    %p500 = por %p498, %p499
    %p501 = scmp.ne.s32.totalorder %s492, %s493
    %p502 = scmp.eq.s32.totalorder %s94, 0
    %p503 = por %p501, %p502
    %p504 = scmp.ne.s32.totalorder %s492, %s493
    %p505 = scmp.eq.s32.totalorder %s95, 1
    %p506 = por %p504, %p505
    %p508 = scmp.ne.s32.totalorder %s493, %s507
    %p509 = scmp.eq.s32.totalorder %s95, 0
    %p510 = por %p508, %p509
    %s512 = sadd.s32 %s511, 1
    %p515 = scmp.eq.s32.totalorder %s89, 1
    %p516 = scmp.ne.s32.totalorder %s511, %s513
    %p517 = scmp.eq.s32.totalorder %s89, 0
    %p518 = por %p516, %p517
    %p519 = scmp.ne.s32.totalorder %s511, %s513
    %p520 = scmp.eq.s32.totalorder %s94, 1
    %p521 = por %p519, %p520
    %p522 = scmp.ne.s32.totalorder %s513, %s514
    %p523 = scmp.eq.s32.totalorder %s94, 0
    %p524 = por %p522, %p523
    %p525 = scmp.ne.s32.totalorder %s513, %s514
    %p526 = scmp.eq.s32.totalorder %s95, 1
    %p527 = por %p525, %p526
    %p529 = scmp.ne.s32.totalorder %s514, %s528
    %p530 = scmp.eq.s32.totalorder %s95, 0
    %p531 = por %p529, %p530
    %s533 = sadd.s32 %s532, 1
    %p536 = scmp.eq.s32.totalorder %s89, 1
    %p537 = scmp.ne.s32.totalorder %s532, %s534
    %p538 = scmp.eq.s32.totalorder %s89, 0
    %p539 = por %p537, %p538
    %p540 = scmp.ne.s32.totalorder %s532, %s534
    %p541 = scmp.eq.s32.totalorder %s94, 1
    %p542 = por %p540, %p541
    %p543 = scmp.ne.s32.totalorder %s534, %s535
    %p544 = scmp.eq.s32.totalorder %s94, 0
    %p545 = por %p543, %p544
    %p546 = scmp.ne.s32.totalorder %s534, %s535
    %p547 = scmp.eq.s32.totalorder %s95, 1
    %p548 = por %p546, %p547
    %p550 = scmp.ne.s32.totalorder %s535, %s549
    %p551 = scmp.eq.s32.totalorder %s95, 0
    %p552 = por %p550, %p551
    %s554 = sadd.s32 %s553, 1
    %p557 = scmp.eq.s32.totalorder %s89, 1
    %p558 = scmp.ne.s32.totalorder %s553, %s555
    %p559 = scmp.eq.s32.totalorder %s89, 0
    %p560 = por %p558, %p559
    %p561 = scmp.ne.s32.totalorder %s553, %s555
    %p562 = scmp.eq.s32.totalorder %s94, 1
    %p563 = por %p561, %p562
    %p564 = scmp.ne.s32.totalorder %s555, %s556
    %p565 = scmp.eq.s32.totalorder %s94, 0
    %p566 = por %p564, %p565
    %p567 = scmp.ne.s32.totalorder %s555, %s556
    %p568 = scmp.eq.s32.totalorder %s95, 1
    %p569 = por %p567, %p568
    %p571 = scmp.ne.s32.totalorder %s556, %s570
    %p572 = scmp.eq.s32.totalorder %s95, 0
    %p573 = por %p571, %p572
    %s575 = sadd.s32 %s574, 1
    %p578 = scmp.eq.s32.totalorder %s89, 1
    %p579 = scmp.ne.s32.totalorder %s574, %s576
    %p580 = scmp.eq.s32.totalorder %s89, 0
    %p581 = por %p579, %p580
    %p582 = scmp.ne.s32.totalorder %s574, %s576
    %p583 = scmp.eq.s32.totalorder %s94, 1
    %p584 = por %p582, %p583
    %p585 = scmp.ne.s32.totalorder %s576, %s577
    %p586 = scmp.eq.s32.totalorder %s94, 0
    %p587 = por %p585, %p586
    %p588 = scmp.ne.s32.totalorder %s576, %s577
    %p589 = scmp.eq.s32.totalorder %s95, 1
    %p590 = por %p588, %p589
    %p592 = scmp.ne.s32.totalorder %s577, %s591
    %p593 = scmp.eq.s32.totalorder %s95, 0
    %p594 = por %p592, %p593
    %s596 = sadd.s32 %s595, 1
    %p599 = scmp.eq.s32.totalorder %s89, 1
    %p600 = scmp.ne.s32.totalorder %s595, %s597
    %p601 = scmp.eq.s32.totalorder %s89, 0
    %p602 = por %p600, %p601
    %p603 = scmp.ne.s32.totalorder %s595, %s597
    %p604 = scmp.eq.s32.totalorder %s94, 1
    %p605 = por %p603, %p604
    %p606 = scmp.ne.s32.totalorder %s597, %s598
    %p607 = scmp.eq.s32.totalorder %s94, 0
    %p608 = por %p606, %p607
    %p609 = scmp.ne.s32.totalorder %s597, %s598
    %p610 = scmp.eq.s32.totalorder %s95, 1
    %p611 = por %p609, %p610
    %p613 = scmp.ne.s32.totalorder %s598, %s612
    %p614 = scmp.eq.s32.totalorder %s95, 0
    %p615 = por %p613, %p614
    %s617 = sadd.s32 %s616, 1
    %p620 = scmp.eq.s32.totalorder %s89, 1
    %p621 = scmp.ne.s32.totalorder %s616, %s618
    %p622 = scmp.eq.s32.totalorder %s89, 0
    %p623 = por %p621, %p622
    %p624 = scmp.ne.s32.totalorder %s616, %s618
    %p625 = scmp.eq.s32.totalorder %s94, 1
    %p626 = por %p624, %p625
    %p627 = scmp.ne.s32.totalorder %s618, %s619
    %p628 = scmp.eq.s32.totalorder %s94, 0
    %p629 = por %p627, %p628
    %p630 = scmp.ne.s32.totalorder %s618, %s619
    %p631 = scmp.eq.s32.totalorder %s95, 1
    %p632 = por %p630, %p631
    %p634 = scmp.ne.s32.totalorder %s619, %s633
    %p635 = scmp.eq.s32.totalorder %s95, 0
    %p636 = por %p634, %p635
    %s638 = sadd.s32 %s637, 1
    %p641 = scmp.eq.s32.totalorder %s89, 1
    %p642 = scmp.ne.s32.totalorder %s637, %s639
    %p643 = scmp.eq.s32.totalorder %s89, 0
    %p644 = por %p642, %p643
    %p645 = scmp.ne.s32.totalorder %s637, %s639
    %p646 = scmp.eq.s32.totalorder %s94, 1
    %p647 = por %p645, %p646
    %p648 = scmp.ne.s32.totalorder %s639, %s640
    %p649 = scmp.eq.s32.totalorder %s94, 0
    %p650 = por %p648, %p649
    %p651 = scmp.ne.s32.totalorder %s639, %s640
    %p652 = scmp.eq.s32.totalorder %s95, 1
    %p653 = por %p651, %p652
    %p655 = scmp.ne.s32.totalorder %s640, %s654
    %p656 = scmp.eq.s32.totalorder %s95, 0
    %p657 = por %p655, %p656
    %s659 = sadd.s32 %s658, 1
    %p662 = scmp.eq.s32.totalorder %s89, 1
    %p663 = scmp.ne.s32.totalorder %s658, %s660
    %p664 = scmp.eq.s32.totalorder %s89, 0
    %p665 = por %p663, %p664
    %p666 = scmp.ne.s32.totalorder %s658, %s660
    %p667 = scmp.eq.s32.totalorder %s94, 1
    %p668 = por %p666, %p667
    %p669 = scmp.ne.s32.totalorder %s660, %s661
    %p670 = scmp.eq.s32.totalorder %s94, 0
    %p671 = por %p669, %p670
    %p672 = scmp.ne.s32.totalorder %s660, %s661
    %p673 = scmp.eq.s32.totalorder %s95, 1
    %p674 = por %p672, %p673
    %p676 = scmp.ne.s32.totalorder %s661, %s675
    %p677 = scmp.eq.s32.totalorder %s95, 0
    %p678 = por %p676, %p677
    %s680 = sadd.s32 %s679, 1
    %p683 = scmp.eq.s32.totalorder %s89, 1
    %p684 = scmp.ne.s32.totalorder %s679, %s681
    %p685 = scmp.eq.s32.totalorder %s89, 0
    %p686 = por %p684, %p685
    %p687 = scmp.ne.s32.totalorder %s679, %s681
    %p688 = scmp.eq.s32.totalorder %s94, 1
    %p689 = por %p687, %p688
    %p690 = scmp.ne.s32.totalorder %s681, %s682
    %p691 = scmp.eq.s32.totalorder %s94, 0
    %p692 = por %p690, %p691
    %p693 = scmp.ne.s32.totalorder %s681, %s682
    %p694 = scmp.eq.s32.totalorder %s95, 1
    %p695 = por %p693, %p694
    %p697 = scmp.ne.s32.totalorder %s682, %s696
    %p698 = scmp.eq.s32.totalorder %s95, 0
    %p699 = por %p697, %p698
    %s701 = sadd.s32 %s700, 1
    %p704 = scmp.eq.s32.totalorder %s89, 1
    %p705 = scmp.ne.s32.totalorder %s700, %s702
    %p706 = scmp.eq.s32.totalorder %s89, 0
    %p707 = por %p705, %p706
    %p708 = scmp.ne.s32.totalorder %s700, %s702
    %p709 = scmp.eq.s32.totalorder %s94, 1
    %p710 = por %p708, %p709
    %p711 = scmp.ne.s32.totalorder %s702, %s703
    %p712 = scmp.eq.s32.totalorder %s94, 0
    %p713 = por %p711, %p712
    %p714 = scmp.ne.s32.totalorder %s702, %s703
    %p715 = scmp.eq.s32.totalorder %s95, 1
    %p716 = por %p714, %p715
    %p718 = scmp.ne.s32.totalorder %s703, %s717
    %p719 = scmp.eq.s32.totalorder %s95, 0
    %p720 = por %p718, %p719
    %s722 = sadd.s32 %s721, 1
    %p725 = scmp.eq.s32.totalorder %s89, 1
    %p726 = scmp.ne.s32.totalorder %s721, %s723
    %p727 = scmp.eq.s32.totalorder %s89, 0
    %p728 = por %p726, %p727
    %p729 = scmp.ne.s32.totalorder %s721, %s723
    %p730 = scmp.eq.s32.totalorder %s94, 1
    %p731 = por %p729, %p730
    %p732 = scmp.ne.s32.totalorder %s723, %s724
    %p733 = scmp.eq.s32.totalorder %s94, 0
    %p734 = por %p732, %p733
    %p735 = scmp.ne.s32.totalorder %s723, %s724
    %p736 = scmp.eq.s32.totalorder %s95, 1
    %p737 = por %p735, %p736
    %p739 = scmp.ne.s32.totalorder %s724, %s738
    %p740 = scmp.eq.s32.totalorder %s95, 0
    %p741 = por %p739, %p740
    %s743 = sadd.s32 %s742, 1
    %p746 = scmp.eq.s32.totalorder %s89, 1
    %p747 = scmp.ne.s32.totalorder %s742, %s744
    %p748 = scmp.eq.s32.totalorder %s89, 0
    %p749 = por %p747, %p748
    %p750 = scmp.ne.s32.totalorder %s742, %s744
    %p751 = scmp.eq.s32.totalorder %s94, 1
    %p752 = por %p750, %p751
    %p753 = scmp.ne.s32.totalorder %s744, %s745
    %p754 = scmp.eq.s32.totalorder %s94, 0
    %p755 = por %p753, %p754
    %p756 = scmp.ne.s32.totalorder %s744, %s745
    %p757 = scmp.eq.s32.totalorder %s95, 1
    %p758 = por %p756, %p757
    %p760 = scmp.ne.s32.totalorder %s745, %s759
    %p761 = scmp.eq.s32.totalorder %s95, 0
    %p762 = por %p760, %p761
    %s764 = sadd.s32 %s763, 1
    %p767 = scmp.eq.s32.totalorder %s89, 1
    %p768 = scmp.ne.s32.totalorder %s763, %s765
    %p769 = scmp.eq.s32.totalorder %s89, 0
    %p770 = por %p768, %p769
    %p771 = scmp.ne.s32.totalorder %s763, %s765
    %p772 = scmp.eq.s32.totalorder %s94, 1
    %p773 = por %p771, %p772
    %p774 = scmp.ne.s32.totalorder %s765, %s766
    %p775 = scmp.eq.s32.totalorder %s94, 0
    %p776 = por %p774, %p775
    %p777 = scmp.ne.s32.totalorder %s765, %s766
    %p778 = scmp.eq.s32.totalorder %s95, 1
    %p779 = por %p777, %p778
    %p781 = scmp.ne.s32.totalorder %s766, %s780
    %p782 = scmp.eq.s32.totalorder %s95, 0
    %p783 = por %p781, %p782
    %s785 = sadd.s32 %s784, 1
    %p788 = scmp.eq.s32.totalorder %s89, 1
    %p789 = scmp.ne.s32.totalorder %s784, %s786
    %p790 = scmp.eq.s32.totalorder %s89, 0
    %p791 = por %p789, %p790
    %p792 = scmp.ne.s32.totalorder %s784, %s786
    %p793 = scmp.eq.s32.totalorder %s94, 1
    %p794 = por %p792, %p793
    %p795 = scmp.ne.s32.totalorder %s786, %s787
    %p796 = scmp.eq.s32.totalorder %s94, 0
    %p797 = por %p795, %p796
    %p798 = scmp.ne.s32.totalorder %s786, %s787
    %p799 = scmp.eq.s32.totalorder %s95, 1
    %p800 = por %p798, %p799
    %p802 = scmp.ne.s32.totalorder %s787, %s801
    %p803 = scmp.eq.s32.totalorder %s95, 0
    %p804 = por %p802, %p803
    %s806 = sadd.s32 %s805, 1
    %p809 = scmp.eq.s32.totalorder %s89, 1
    %p810 = scmp.ne.s32.totalorder %s805, %s807
    %p811 = scmp.eq.s32.totalorder %s89, 0
    %p812 = por %p810, %p811
    %p813 = scmp.ne.s32.totalorder %s805, %s807
    %p814 = scmp.eq.s32.totalorder %s94, 1
    %p815 = por %p813, %p814
    %p816 = scmp.ne.s32.totalorder %s807, %s808
    %p817 = scmp.eq.s32.totalorder %s94, 0
    %p818 = por %p816, %p817
    %p819 = scmp.ne.s32.totalorder %s807, %s808
    %p820 = scmp.eq.s32.totalorder %s95, 1
    %p821 = por %p819, %p820
    %p823 = scmp.ne.s32.totalorder %s808, %s822
    %p824 = scmp.eq.s32.totalorder %s95, 0
    %p825 = por %p823, %p824
    %s827 = sadd.s32 %s826, 1
    %p830 = scmp.eq.s32.totalorder %s89, 1
    %p831 = scmp.ne.s32.totalorder %s826, %s828
    %p832 = scmp.eq.s32.totalorder %s89, 0
    %p833 = por %p831, %p832
    %p834 = scmp.ne.s32.totalorder %s826, %s828
    %p835 = scmp.eq.s32.totalorder %s94, 1
    %p836 = por %p834, %p835
    %p837 = scmp.ne.s32.totalorder %s828, %s829
    %p838 = scmp.eq.s32.totalorder %s94, 0
    %p839 = por %p837, %p838
    %p840 = scmp.ne.s32.totalorder %s828, %s829
    %p841 = scmp.eq.s32.totalorder %s95, 1
    %p842 = por %p840, %p841
    %p844 = scmp.ne.s32.totalorder %s829, %s843
    %p845 = scmp.eq.s32.totalorder %s95, 0
    %p846 = por %p844, %p845
    %s848 = sadd.s32 %s847, 1
    %p851 = scmp.eq.s32.totalorder %s89, 1
    %p852 = scmp.ne.s32.totalorder %s847, %s849
    %p853 = scmp.eq.s32.totalorder %s89, 0
    %p854 = por %p852, %p853
    %p855 = scmp.ne.s32.totalorder %s847, %s849
    %p856 = scmp.eq.s32.totalorder %s94, 1
    %p857 = por %p855, %p856
    %p858 = scmp.ne.s32.totalorder %s849, %s850
    %p859 = scmp.eq.s32.totalorder %s94, 0
    %p860 = por %p858, %p859
    %p861 = scmp.ne.s32.totalorder %s849, %s850
    %p862 = scmp.eq.s32.totalorder %s95, 1
    %p863 = por %p861, %p862
    %p865 = scmp.ne.s32.totalorder %s850, %s864
    %p866 = scmp.eq.s32.totalorder %s95, 0
    %p867 = por %p865, %p866
    %s869 = sadd.s32 %s868, 1
    %p872 = scmp.eq.s32.totalorder %s89, 1
    %p873 = scmp.ne.s32.totalorder %s868, %s870
    %p874 = scmp.eq.s32.totalorder %s89, 0
    %p875 = por %p873, %p874
    %p876 = scmp.ne.s32.totalorder %s868, %s870
    %p877 = scmp.eq.s32.totalorder %s94, 1
    %p878 = por %p876, %p877
    %p879 = scmp.ne.s32.totalorder %s870, %s871
    %p880 = scmp.eq.s32.totalorder %s94, 0
    %p881 = por %p879, %p880
    %p882 = scmp.ne.s32.totalorder %s870, %s871
    %p883 = scmp.eq.s32.totalorder %s95, 1
    %p884 = por %p882, %p883
    %p886 = scmp.ne.s32.totalorder %s871, %s885
    %p887 = scmp.eq.s32.totalorder %s95, 0
    %p888 = por %p886, %p887
    %s890 = sadd.s32 %s889, 1
    %p893 = scmp.eq.s32.totalorder %s89, 1
    %p894 = scmp.ne.s32.totalorder %s889, %s891
    %p895 = scmp.eq.s32.totalorder %s89, 0
    %p896 = por %p894, %p895
    %p897 = scmp.ne.s32.totalorder %s889, %s891
    %p898 = scmp.eq.s32.totalorder %s94, 1
    %p899 = por %p897, %p898
    %p900 = scmp.ne.s32.totalorder %s891, %s892
    %p901 = scmp.eq.s32.totalorder %s94, 0
    %p902 = por %p900, %p901
    %p903 = scmp.ne.s32.totalorder %s891, %s892
    %p904 = scmp.eq.s32.totalorder %s95, 1
    %p905 = por %p903, %p904
    %p907 = scmp.ne.s32.totalorder %s892, %s906
    %p908 = scmp.eq.s32.totalorder %s95, 0
    %p909 = por %p907, %p908
    %s911 = sadd.s32 %s910, 1
    %p914 = scmp.eq.s32.totalorder %s89, 1
    %p915 = scmp.ne.s32.totalorder %s910, %s912
    %p916 = scmp.eq.s32.totalorder %s89, 0
    %p917 = por %p915, %p916
    %p918 = scmp.ne.s32.totalorder %s910, %s912
    %p919 = scmp.eq.s32.totalorder %s94, 1
    %p920 = por %p918, %p919
    %p921 = scmp.ne.s32.totalorder %s912, %s913
    %p922 = scmp.eq.s32.totalorder %s94, 0
    %p923 = por %p921, %p922
    %p924 = scmp.ne.s32.totalorder %s912, %s913
    %p925 = scmp.eq.s32.totalorder %s95, 1
    %p926 = por %p924, %p925
    %p928 = scmp.ne.s32.totalorder %s913, %s927
    %p929 = scmp.eq.s32.totalorder %s95, 0
    %p930 = por %p928, %p929
    %s932 = sadd.s32 %s931, 1
    %p935 = scmp.eq.s32.totalorder %s89, 1
    %p936 = scmp.ne.s32.totalorder %s931, %s933
    %p937 = scmp.eq.s32.totalorder %s89, 0
    %p938 = por %p936, %p937
    %p939 = scmp.ne.s32.totalorder %s931, %s933
    %p940 = scmp.eq.s32.totalorder %s94, 1
    %p941 = por %p939, %p940
    %p942 = scmp.ne.s32.totalorder %s933, %s934
    %p943 = scmp.eq.s32.totalorder %s94, 0
    %p944 = por %p942, %p943
    %p945 = scmp.ne.s32.totalorder %s933, %s934
    %p946 = scmp.eq.s32.totalorder %s95, 1
    %p947 = por %p945, %p946
    %p949 = scmp.ne.s32.totalorder %s934, %s948
    %p950 = scmp.eq.s32.totalorder %s95, 0
    %p951 = por %p949, %p950
    %s953 = sadd.s32 %s952, 1
    %p956 = scmp.eq.s32.totalorder %s89, 1
    %p957 = scmp.ne.s32.totalorder %s952, %s954
    %p958 = scmp.eq.s32.totalorder %s89, 0
    %p959 = por %p957, %p958
    %p960 = scmp.ne.s32.totalorder %s952, %s954
    %p961 = scmp.eq.s32.totalorder %s94, 1
    %p962 = por %p960, %p961
    %p963 = scmp.ne.s32.totalorder %s954, %s955
    %p964 = scmp.eq.s32.totalorder %s94, 0
    %p965 = por %p963, %p964
    %p966 = scmp.ne.s32.totalorder %s954, %s955
    %p967 = scmp.eq.s32.totalorder %s95, 1
    %p968 = por %p966, %p967
    %p970 = scmp.ne.s32.totalorder %s955, %s969
    %p971 = scmp.eq.s32.totalorder %s95, 0
    %p972 = por %p970, %p971
    %s973 = ssub.s32 %s89, %s96
    %p974 = scmp.eq.s32.totalorder %s973, 0
    %s976 = sadd.s32 %s975, 1
    %s977 = scalar_select %p974, %s975, %s976
    %p980 = pneg %p974
    %p981 = scmp.eq.s32.totalorder %s89, 1
    %p982 = por %p980, %p981
    %p983 = scmp.ne.s32.totalorder %s975, %s978
    %p984 = scmp.eq.s32.totalorder %s89, 0
    %p985 = por %p983, %p984
    %p986 = scmp.ne.s32.totalorder %s975, %s978
    %p987 = scmp.eq.s32.totalorder %s94, 1
    %p988 = por %p986, %p987
    %p989 = scmp.ne.s32.totalorder %s978, %s979
    %p990 = scmp.eq.s32.totalorder %s94, 0
    %p991 = por %p989, %p990
    %p992 = scmp.ne.s32.totalorder %s978, %s979
    %p993 = scmp.eq.s32.totalorder %s95, 1
    %p994 = por %p992, %p993
    %p996 = scmp.ne.s32.totalorder %s979, %s995
    %p997 = scmp.eq.s32.totalorder %s95, 0
    %p998 = por %p996, %p997
    %p999 = scmp.le.s32.totalorder 1, %s89
    %p1000 = scmp.lt.s32.totalorder %s89, 3
    %p1001 = pnand %p999, %p1000
    %p1002 = pneg %p1001
    // Predicated region
    $region9: #{transformer_forward.1} parent=5 // pred_check
      _
    $region10: #{transformer_forward.1} parent=5 // pred_check_branch
      %1004 = sbr.rel (%p1001) target = $region12
    $region11: #{transformer_forward.1} parent=5 // pred_region
      %s1005 = ssub.s32 %s89, 1
      // Predicated region
      $region13: #{transformer_forward.1} parent=11 // pred_check
        %p1006 = pneg %p188
      $region14: #{transformer_forward.1} parent=11 // pred_check_branch
        %1008 = sbr.rel (%p1006) target = $region16
      $region15: #{transformer_forward.1} parent=11 // pred_region
        _
      $region16: #{transformer_forward.1} parent=11 // pred_fallthru
        _
      // Predicated region
      $region17: #{transformer_forward.1} parent=11 // pred_check
        %p1009 = pneg %p209
      $region18: #{transformer_forward.1} parent=11 // pred_check_branch
        %1011 = sbr.rel (%p1009) target = $region20
      $region19: #{transformer_forward.1} parent=11 // pred_region
        _
      $region20: #{transformer_forward.1} parent=11 // pred_fallthru
        _
      // Predicated region
      $region21: #{transformer_forward.1} parent=11 // pred_check
        %p1012 = pneg %p230
      $region22: #{transformer_forward.1} parent=11 // pred_check_branch
        %1014 = sbr.rel (%p1012) target = $region24
      $region23: #{transformer_forward.1} parent=11 // pred_region
        _
      $region24: #{transformer_forward.1} parent=11 // pred_fallthru
        _
      // Predicated region
      $region25: #{transformer_forward.1} parent=11 // pred_check
        %p1015 = pneg %p251
      $region26: #{transformer_forward.1} parent=11 // pred_check_branch
        %1017 = sbr.rel (%p1015) target = $region28
      $region27: #{transformer_forward.1} parent=11 // pred_region
        _
      $region28: #{transformer_forward.1} parent=11 // pred_fallthru
        _
      // Predicated region
      $region29: #{transformer_forward.1} parent=11 // pred_check
        %p1018 = pneg %p272
      $region30: #{transformer_forward.1} parent=11 // pred_check_branch
        %1020 = sbr.rel (%p1018) target = $region32
      $region31: #{transformer_forward.1} parent=11 // pred_region
        _
      $region32: #{transformer_forward.1} parent=11 // pred_fallthru
        _
      // Predicated region
      $region33: #{transformer_forward.1} parent=11 // pred_check
        %p1021 = pneg %p293
      $region34: #{transformer_forward.1} parent=11 // pred_check_branch
        %1023 = sbr.rel (%p1021) target = $region36
      $region35: #{transformer_forward.1} parent=11 // pred_region
        _
      $region36: #{transformer_forward.1} parent=11 // pred_fallthru
        _
      // Predicated region
      $region37: #{transformer_forward.1} parent=11 // pred_check
        %p1024 = pneg %p314
      $region38: #{transformer_forward.1} parent=11 // pred_check_branch
        %1026 = sbr.rel (%p1024) target = $region40
      $region39: #{transformer_forward.1} parent=11 // pred_region
        _
      $region40: #{transformer_forward.1} parent=11 // pred_fallthru
        _
      // Predicated region
      $region41: #{transformer_forward.1} parent=11 // pred_check
        %p1027 = pneg %p335
      $region42: #{transformer_forward.1} parent=11 // pred_check_branch
        %1029 = sbr.rel (%p1027) target = $region44
      $region43: #{transformer_forward.1} parent=11 // pred_region
        _
      $region44: #{transformer_forward.1} parent=11 // pred_fallthru
        _
      // Predicated region
      $region45: #{transformer_forward.1} parent=11 // pred_check
        %p1030 = pneg %p356
      $region46: #{transformer_forward.1} parent=11 // pred_check_branch
        %1032 = sbr.rel (%p1030) target = $region48
      $region47: #{transformer_forward.1} parent=11 // pred_region
        _
      $region48: #{transformer_forward.1} parent=11 // pred_fallthru
        _
      // Predicated region
      $region49: #{transformer_forward.1} parent=11 // pred_check
        %p1033 = pneg %p377
      $region50: #{transformer_forward.1} parent=11 // pred_check_branch
        %1035 = sbr.rel (%p1033) target = $region52
      $region51: #{transformer_forward.1} parent=11 // pred_region
        _
      $region52: #{transformer_forward.1} parent=11 // pred_fallthru
        _
      // Predicated region
      $region53: #{transformer_forward.1} parent=11 // pred_check
        %p1036 = pneg %p398
      $region54: #{transformer_forward.1} parent=11 // pred_check_branch
        %1038 = sbr.rel (%p1036) target = $region56
      $region55: #{transformer_forward.1} parent=11 // pred_region
        _
      $region56: #{transformer_forward.1} parent=11 // pred_fallthru
        _
      // Predicated region
      $region57: #{transformer_forward.1} parent=11 // pred_check
        %p1039 = pneg %p419
      $region58: #{transformer_forward.1} parent=11 // pred_check_branch
        %1041 = sbr.rel (%p1039) target = $region60
      $region59: #{transformer_forward.1} parent=11 // pred_region
        _
      $region60: #{transformer_forward.1} parent=11 // pred_fallthru
        _
      // Predicated region
      $region61: #{transformer_forward.1} parent=11 // pred_check
        %p1042 = pneg %p440
      $region62: #{transformer_forward.1} parent=11 // pred_check_branch
        %1044 = sbr.rel (%p1042) target = $region64
      $region63: #{transformer_forward.1} parent=11 // pred_region
        _
      $region64: #{transformer_forward.1} parent=11 // pred_fallthru
        _
      // Predicated region
      $region65: #{transformer_forward.1} parent=11 // pred_check
        %p1045 = pneg %p461
      $region66: #{transformer_forward.1} parent=11 // pred_check_branch
        %1047 = sbr.rel (%p1045) target = $region68
      $region67: #{transformer_forward.1} parent=11 // pred_region
        _
      $region68: #{transformer_forward.1} parent=11 // pred_fallthru
        _
      // Predicated region
      $region69: #{transformer_forward.1} parent=11 // pred_check
        %p1048 = pneg %p482
      $region70: #{transformer_forward.1} parent=11 // pred_check_branch
        %1050 = sbr.rel (%p1048) target = $region72
      $region71: #{transformer_forward.1} parent=11 // pred_region
        _
      $region72: #{transformer_forward.1} parent=11 // pred_fallthru
        _
      // Predicated region
      $region73: #{transformer_forward.1} parent=11 // pred_check
        %p1051 = pneg %p503
      $region74: #{transformer_forward.1} parent=11 // pred_check_branch
        %1053 = sbr.rel (%p1051) target = $region76
      $region75: #{transformer_forward.1} parent=11 // pred_region
        _
      $region76: #{transformer_forward.1} parent=11 // pred_fallthru
        _
      // Predicated region
      $region77: #{transformer_forward.1} parent=11 // pred_check
        %p1054 = pneg %p524
      $region78: #{transformer_forward.1} parent=11 // pred_check_branch
        %1056 = sbr.rel (%p1054) target = $region80
      $region79: #{transformer_forward.1} parent=11 // pred_region
        _
      $region80: #{transformer_forward.1} parent=11 // pred_fallthru
        _
      // Predicated region
      $region81: #{transformer_forward.1} parent=11 // pred_check
        %p1057 = pneg %p545
      $region82: #{transformer_forward.1} parent=11 // pred_check_branch
        %1059 = sbr.rel (%p1057) target = $region84
      $region83: #{transformer_forward.1} parent=11 // pred_region
        _
      $region84: #{transformer_forward.1} parent=11 // pred_fallthru
        _
      // Predicated region
      $region85: #{transformer_forward.1} parent=11 // pred_check
        %p1060 = pneg %p566
      $region86: #{transformer_forward.1} parent=11 // pred_check_branch
        %1062 = sbr.rel (%p1060) target = $region88
      $region87: #{transformer_forward.1} parent=11 // pred_region
        _
      $region88: #{transformer_forward.1} parent=11 // pred_fallthru
        _
      // Predicated region
      $region89: #{transformer_forward.1} parent=11 // pred_check
        %p1063 = pneg %p587
      $region90: #{transformer_forward.1} parent=11 // pred_check_branch
        %1065 = sbr.rel (%p1063) target = $region92
      $region91: #{transformer_forward.1} parent=11 // pred_region
        _
      $region92: #{transformer_forward.1} parent=11 // pred_fallthru
        _
      // Predicated region
      $region93: #{transformer_forward.1} parent=11 // pred_check
        %p1066 = pneg %p608
      $region94: #{transformer_forward.1} parent=11 // pred_check_branch
        %1068 = sbr.rel (%p1066) target = $region96
      $region95: #{transformer_forward.1} parent=11 // pred_region
        _
      $region96: #{transformer_forward.1} parent=11 // pred_fallthru
        _
      // Predicated region
      $region97: #{transformer_forward.1} parent=11 // pred_check
        %p1069 = pneg %p629
      $region98: #{transformer_forward.1} parent=11 // pred_check_branch
        %1071 = sbr.rel (%p1069) target = $region100
      $region99: #{transformer_forward.1} parent=11 // pred_region
        _
      $region100: #{transformer_forward.1} parent=11 // pred_fallthru
        _
      // Predicated region
      $region101: #{transformer_forward.1} parent=11 // pred_check
        %p1072 = pneg %p650
      $region102: #{transformer_forward.1} parent=11 // pred_check_branch
        %1074 = sbr.rel (%p1072) target = $region104
      $region103: #{transformer_forward.1} parent=11 // pred_region
        _
      $region104: #{transformer_forward.1} parent=11 // pred_fallthru
        _
      // Predicated region
      $region105: #{transformer_forward.1} parent=11 // pred_check
        %p1075 = pneg %p671
      $region106: #{transformer_forward.1} parent=11 // pred_check_branch
        %1077 = sbr.rel (%p1075) target = $region108
      $region107: #{transformer_forward.1} parent=11 // pred_region
        _
      $region108: #{transformer_forward.1} parent=11 // pred_fallthru
        _
      // Predicated region
      $region109: #{transformer_forward.1} parent=11 // pred_check
        %p1078 = pneg %p692
      $region110: #{transformer_forward.1} parent=11 // pred_check_branch
        %1080 = sbr.rel (%p1078) target = $region112
      $region111: #{transformer_forward.1} parent=11 // pred_region
        _
      $region112: #{transformer_forward.1} parent=11 // pred_fallthru
        _
      // Predicated region
      $region113: #{transformer_forward.1} parent=11 // pred_check
        %p1081 = pneg %p713
      $region114: #{transformer_forward.1} parent=11 // pred_check_branch
        %1083 = sbr.rel (%p1081) target = $region116
      $region115: #{transformer_forward.1} parent=11 // pred_region
        _
      $region116: #{transformer_forward.1} parent=11 // pred_fallthru
        _
      // Predicated region
      $region117: #{transformer_forward.1} parent=11 // pred_check
        %p1084 = pneg %p734
      $region118: #{transformer_forward.1} parent=11 // pred_check_branch
        %1086 = sbr.rel (%p1084) target = $region120
      $region119: #{transformer_forward.1} parent=11 // pred_region
        _
      $region120: #{transformer_forward.1} parent=11 // pred_fallthru
        _
      // Predicated region
      $region121: #{transformer_forward.1} parent=11 // pred_check
        %p1087 = pneg %p755
      $region122: #{transformer_forward.1} parent=11 // pred_check_branch
        %1089 = sbr.rel (%p1087) target = $region124
      $region123: #{transformer_forward.1} parent=11 // pred_region
        _
      $region124: #{transformer_forward.1} parent=11 // pred_fallthru
        _
      // Predicated region
      $region125: #{transformer_forward.1} parent=11 // pred_check
        %p1090 = pneg %p776
      $region126: #{transformer_forward.1} parent=11 // pred_check_branch
        %1092 = sbr.rel (%p1090) target = $region128
      $region127: #{transformer_forward.1} parent=11 // pred_region
        _
      $region128: #{transformer_forward.1} parent=11 // pred_fallthru
        _
      // Predicated region
      $region129: #{transformer_forward.1} parent=11 // pred_check
        %p1093 = pneg %p797
      $region130: #{transformer_forward.1} parent=11 // pred_check_branch
        %1095 = sbr.rel (%p1093) target = $region132
      $region131: #{transformer_forward.1} parent=11 // pred_region
        _
      $region132: #{transformer_forward.1} parent=11 // pred_fallthru
        _
      // Predicated region
      $region133: #{transformer_forward.1} parent=11 // pred_check
        %p1096 = pneg %p818
      $region134: #{transformer_forward.1} parent=11 // pred_check_branch
        %1098 = sbr.rel (%p1096) target = $region136
      $region135: #{transformer_forward.1} parent=11 // pred_region
        _
      $region136: #{transformer_forward.1} parent=11 // pred_fallthru
        _
      // Predicated region
      $region137: #{transformer_forward.1} parent=11 // pred_check
        %p1099 = pneg %p839
      $region138: #{transformer_forward.1} parent=11 // pred_check_branch
        %1101 = sbr.rel (%p1099) target = $region140
      $region139: #{transformer_forward.1} parent=11 // pred_region
        _
      $region140: #{transformer_forward.1} parent=11 // pred_fallthru
        _
      // Predicated region
      $region141: #{transformer_forward.1} parent=11 // pred_check
        %p1102 = pneg %p860
      $region142: #{transformer_forward.1} parent=11 // pred_check_branch
        %1104 = sbr.rel (%p1102) target = $region144
      $region143: #{transformer_forward.1} parent=11 // pred_region
        _
      $region144: #{transformer_forward.1} parent=11 // pred_fallthru
        _
      // Predicated region
      $region145: #{transformer_forward.1} parent=11 // pred_check
        %p1105 = pneg %p881
      $region146: #{transformer_forward.1} parent=11 // pred_check_branch
        %1107 = sbr.rel (%p1105) target = $region148
      $region147: #{transformer_forward.1} parent=11 // pred_region
        _
      $region148: #{transformer_forward.1} parent=11 // pred_fallthru
        _
      // Predicated region
      $region149: #{transformer_forward.1} parent=11 // pred_check
        %p1108 = pneg %p902
      $region150: #{transformer_forward.1} parent=11 // pred_check_branch
        %1110 = sbr.rel (%p1108) target = $region152
      $region151: #{transformer_forward.1} parent=11 // pred_region
        _
      $region152: #{transformer_forward.1} parent=11 // pred_fallthru
        _
      // Predicated region
      $region153: #{transformer_forward.1} parent=11 // pred_check
        %p1111 = pneg %p923
      $region154: #{transformer_forward.1} parent=11 // pred_check_branch
        %1113 = sbr.rel (%p1111) target = $region156
      $region155: #{transformer_forward.1} parent=11 // pred_region
        _
      $region156: #{transformer_forward.1} parent=11 // pred_fallthru
        _
      // Predicated region
      $region157: #{transformer_forward.1} parent=11 // pred_check
        %p1114 = pneg %p944
      $region158: #{transformer_forward.1} parent=11 // pred_check_branch
        %1116 = sbr.rel (%p1114) target = $region160
      $region159: #{transformer_forward.1} parent=11 // pred_region
        _
      $region160: #{transformer_forward.1} parent=11 // pred_fallthru
        _
      // Predicated region
      $region161: #{transformer_forward.1} parent=11 // pred_check
        %p1117 = pneg %p965
      $region162: #{transformer_forward.1} parent=11 // pred_check_branch
        %1119 = sbr.rel (%p1117) target = $region164
      $region163: #{transformer_forward.1} parent=11 // pred_region
        _
      $region164: #{transformer_forward.1} parent=11 // pred_fallthru
        _
    $region12: #{transformer_forward.1} parent=5 // pred_fallthru
      _
    %p1120 = scmp.lt.s32.totalorder %s89, 2
    // Predicated region
    $region165: #{transformer_forward.1} parent=5 // pred_check
      %p1121 = pneg %p1120
    $region166: #{transformer_forward.1} parent=5 // pred_check_branch
      %1123 = sbr.rel (%p1121) target = $region168
    $region167: #{transformer_forward.1} parent=5 // pred_region
      // Predicated region
      $region169: #{transformer_forward.1} parent=167 // pred_check
        %p1124 = pneg %p109
      $region170: #{transformer_forward.1} parent=167 // pred_check_branch
        %1126 = sbr.rel (%p1124) target = $region172
      $region171: #{transformer_forward.1} parent=167 // pred_region
        %p1127 = scmp.lt.s32.totalorder %s89, 1
        %s1128 = scalar_select %p1127, %s89, 1
        %s1129 = smul.addr %s1128, 4
        %s1130 = smul.addr %s1129, 8
        %s1131 = scalar_lea.vmem %s1, %s1130
      $region172: #{transformer_forward.1} parent=167 // pred_fallthru
        _
      // Predicated region
      $region173: #{transformer_forward.1} parent=167 // pred_check
        %p1132 = pneg %p135
      $region174: #{transformer_forward.1} parent=167 // pred_check_branch
        %1134 = sbr.rel (%p1132) target = $region176
      $region175: #{transformer_forward.1} parent=167 // pred_region
        %p1135 = scmp.lt.s32.totalorder %s89, 1
        %s1136 = scalar_select %p1135, %s89, 1
        %s1137 = smul.addr %s1136, 4
        %s1138 = smul.addr %s1137, 8
        %s1139 = scalar_lea.vmem %s3, %s1138
      $region176: #{transformer_forward.1} parent=167 // pred_fallthru
        _
      // Predicated region
      $region177: #{transformer_forward.1} parent=167 // pred_check
        %p1140 = pneg %p161
      $region178: #{transformer_forward.1} parent=167 // pred_check_branch
        %1142 = sbr.rel (%p1140) target = $region180
      $region179: #{transformer_forward.1} parent=167 // pred_region
        %p1143 = scmp.lt.s32.totalorder %s89, 63
        %s1144 = scalar_select %p1143, %s89, 63
        %s1145 = scalar_lea.vmem %s5, %s1144
      $region180: #{transformer_forward.1} parent=167 // pred_fallthru
        _
    $region168: #{transformer_forward.1} parent=5 // pred_fallthru
      _
    %p1146 = scmp.le.s32.totalorder 1, %s89
    %p1147 = scmp.lt.s32.totalorder %s89, 3
    %p1148 = pnand %p1146, %p1147
    %p1149 = pneg %p1148
    // Predicated region
    $region181: #{transformer_forward.1} parent=5 // pred_check
      _
    $region182: #{transformer_forward.1} parent=5 // pred_check_branch
      %1151 = sbr.rel (%p1148) target = $region184
    $region183: #{transformer_forward.1} parent=5 // pred_region
      %s1152 = ssub.s32 %s89, 1
      %p1153 = scmp.lt.s32.totalorder %s94, 1
      %s1154 = scalar_select %p1153, %s94, 1
      %s1155 = smul.addr %s1154, 4
      %s1156 = smul.addr %s1155, 8
      %s1157 = scalar_lea.vmem %s1, %s1156
      %p1158 = pneg %p115
      %p1159 = pneg %p112
      %p1160 = scmp.lt.s32.totalorder %s94, 1
      %s1161 = scalar_select %p1160, %s94, 1
      %s1162 = smul.addr %s1161, 4
      %s1163 = smul.addr %s1162, 8
      %s1164 = scalar_lea.vmem %s3, %s1163
      %p1165 = pneg %p141
      %p1166 = pneg %p138
      %p1167 = scmp.lt.s32.totalorder %s94, 63
      %s1168 = scalar_select %p1167, %s94, 63
      %s1169 = scalar_lea.vmem %s5, %s1168
      %p1170 = pneg %p167
      %p1171 = pneg %p164
      %p1172 = pneg %p188
      %p1173 = pneg %p185
      %p1174 = pneg %p209
      %p1175 = pneg %p206
      %p1176 = pneg %p230
      %p1177 = pneg %p227
      %p1178 = pneg %p251
      %p1179 = pneg %p248
      %p1180 = pneg %p272
      %p1181 = pneg %p269
      %p1182 = pneg %p293
      %p1183 = pneg %p290
      %p1184 = pneg %p314
      %p1185 = pneg %p311
      %p1186 = pneg %p335
      %p1187 = pneg %p332
      %p1188 = pneg %p356
      %p1189 = pneg %p353
      %p1190 = pneg %p377
      %p1191 = pneg %p374
      %p1192 = pneg %p398
      %p1193 = pneg %p395
      %p1194 = pneg %p419
      %p1195 = pneg %p416
      %p1196 = pneg %p440
      %p1197 = pneg %p437
      %p1198 = pneg %p461
      %p1199 = pneg %p458
      %p1200 = pneg %p482
      %p1201 = pneg %p479
      %p1202 = pneg %p503
      %p1203 = pneg %p500
      %p1204 = pneg %p524
      %p1205 = pneg %p521
      %p1206 = pneg %p545
      %p1207 = pneg %p542
      %p1208 = pneg %p566
      %p1209 = pneg %p563
      %p1210 = pneg %p587
      %p1211 = pneg %p584
      %p1212 = pneg %p608
      %p1213 = pneg %p605
      %p1214 = pneg %p629
      %p1215 = pneg %p626
      %p1216 = pneg %p650
      %p1217 = pneg %p647
      %p1218 = pneg %p671
      %p1219 = pneg %p668
      %p1220 = pneg %p692
      %p1221 = pneg %p689
      %p1222 = pneg %p713
      %p1223 = pneg %p710
      %p1224 = pneg %p734
      %p1225 = pneg %p731
      %p1226 = pneg %p755
      %p1227 = pneg %p752
      %p1228 = pneg %p776
      %p1229 = pneg %p773
      %p1230 = pneg %p797
      %p1231 = pneg %p794
      %p1232 = pneg %p818
      %p1233 = pneg %p815
      %p1234 = pneg %p839
      %p1235 = pneg %p836
      %p1236 = pneg %p860
      %p1237 = pneg %p857
      %p1238 = pneg %p881
      %p1239 = pneg %p878
      %p1240 = pneg %p902
      %p1241 = pneg %p899
      %p1242 = pneg %p923
      %p1243 = pneg %p920
      %p1244 = pneg %p944
      %p1245 = pneg %p941
      %p1246 = pneg %p965
      %p1247 = pneg %p962
      %p1248 = pneg %p991
      %p1249 = pneg %p988
      %p1250 = scmp.lt.s32.totalorder %s94, 1
      %s1251 = scalar_select %p1250, %s94, 1
      %s1252 = smul.addr %s1251, 4
      %s1253 = smul.addr %s1252, 8
      %s1254 = scalar_lea.vmem %s83, %s1253
      %p1255 = scmp.lt.s32.totalorder %s94, 1
      %s1256 = scalar_select %p1255, %s94, 1
      %s1257 = smul.addr %s1256, 4
      %s1258 = smul.addr %s1257, 8
      %s1259 = scalar_lea.vmem %s1, %s1258
      %p1260 = scmp.lt.s32.totalorder %s94, 1
      %s1261 = scalar_select %p1260, %s94, 1
      %s1262 = smul.addr %s1261, 4
      %s1263 = smul.addr %s1262, 8
      %s1264 = scalar_lea.vmem %s3, %s1263
      %p1265 = scmp.lt.s32.totalorder %s94, 63
      %s1266 = scalar_select %p1265, %s94, 63
      %s1267 = scalar_lea.vmem %s5, %s1266
      %p1268 = scmp.lt.s32.totalorder %s94, 1
      %s1269 = scalar_select %p1268, %s94, 1
      %s1270 = smul.addr %s1269, 4
      %s1271 = smul.addr %s1270, 8
      %s1272 = scalar_lea.vmem %s83, %s1271
      %v1274 = vld [vmem:[%s1267] sm:$0x1]
      %v1275 = vld [vmem:[%s1259] sm:$0xff]
      %v1276 = vld [vmem:[%s1259 + $0x8] sm:$0xff]
      %v1277 = vld [vmem:[%s1259 + $0x10] sm:$0xff]
      %v1278 = vld [vmem:[%s1259 + $0x18] sm:$0xff]
      %1279 = vxpose.xlu0.b32.start [1/16] %v1275, 128
      %1280 = vxpose.xlu0.b32.cont [2/16] %v1276, 128
      %1281 = vxpose.xlu0.b32.cont [3/16] %v1277, 128
      %1282 = vxpose.xlu0.b32.cont [4/16] %v1278, 128
      %1283 = vxpose.xlu0.b32.cont [5/16] 0.0, 128
      %1284 = vxpose.xlu0.b32.cont [6/16] 0.0, 128
      %1285 = vxpose.xlu0.b32.cont [7/16] 0.0, 128
      %1286 = vxpose.xlu0.b32.cont [8/16] 0.0, 128
      %1287 = vxpose.xlu0.b32.cont [9/16] 0.0, 128
      %1288 = vxpose.xlu0.b32.cont [10/16] 0.0, 128
      %1289 = vxpose.xlu0.b32.cont [11/16] 0.0, 128
      %1290 = vxpose.xlu0.b32.cont [12/16] 0.0, 128
      %1291 = vxpose.xlu0.b32.cont [13/16] 0.0, 128
      %1292 = vxpose.xlu0.b32.cont [14/16] 0.0, 128
      %1293 = vxpose.xlu0.b32.cont [15/16] 0.0, 128
      %1294 = vxpose.xlu0.b32.end [16/16] 0.0, 128
      %v1295 = vpop.trf.xlu0
      %v1296 = vpop.trf.xlu0
      %v1297 = vpop.trf.xlu0
      %v1298 = vpop.trf.xlu0
      %v1299 = vpop.trf.xlu0
      %v1300 = vpop.trf.xlu0
      %v1301 = vpop.trf.xlu0
      %v1302 = vpop.trf.xlu0
      %v1303 = vpop.trf.xlu0
      %v1304 = vpop.trf.xlu0
      %v1305 = vpop.trf.xlu0
      %v1306 = vpop.trf.xlu0
      %v1307 = vpop.trf.xlu0
      %v1308 = vpop.trf.xlu0
      %v1309 = vpop.trf.xlu0
      %v1310 = vpop.trf.xlu0
      %v1312 = vlaneseq
      %v1313 = vshrl.u32 %v1312, 7
      %v1314 = vsub.s32 0, %v1313
      %v1315 = vrot.slane %v1274, %v1314
      %v1317 = vadd.f32 %v1295, %v1315
      %v1318 = vld [vmem:[%s7] sm:$0xf]
      %v1319 = vld [vmem:[%s7 + $0x4] sm:$0xf]
      %v1320 = vld [vmem:[%s7 + $0x8] sm:$0xf]
      %v1321 = vld [vmem:[%s7 + $0xc] sm:$0xf]
      %v1322 = vld [vmem:[%s9] sm:$0x1]
      %v1323 = vpack.c.bf16 %v1317, %v1317
      %v1325 = vlaneseq
      %v1326 = vshrl.u32 %v1325, 7
      %v1327 = vsub.s32 0, %v1326
      %v1328 = vrot.slane %v1322, %v1327
      %v1334 = vunpack.c.l.b16 %v1318
      %v1335 = vunpack.c.l.b16 %v1319
      %v1336 = vunpack.c.l.b16 %v1320
      %v1337 = vunpack.c.l.b16 %v1321
      %v1338 = vpack.c.b16 %v1335, %v1334
      %v1339 = vpack.c.b16 %v1337, %v1336
      %vm1342 = vcmask 261120
      %v1344 = vsel %vm1342, %v1323, 0
      %1346 = vmatprep.subr.bf16.mxu0 0
      %1347 = vmatpush1.bf16.msra.mxu0 %v1338
      %1348 = vmatprep.subr.bf16.mxu0 0
      %1349 = vmatpush1.bf16.msra.mxu0 %v1339
      %1350 = vmatprep.subr.bf16.mxu0 0
      %1351 = vmatpush1.bf16.msra.mxu0 0
      %1352 = vmatprep.subr.bf16.mxu0 0
      %1353 = vmatpush1.bf16.msra.mxu0 0
      %1354 = vmatprep.subr.bf16.mxu0 0
      %1355 = vmatpush1.bf16.msra.mxu0 0
      %1356 = vmatprep.subr.bf16.mxu0 0
      %1357 = vmatpush1.bf16.msra.mxu0 0
      %1358 = vmatprep.subr.bf16.mxu0 0
      %1359 = vmatpush1.bf16.msra.mxu0 0
      %1360 = vmatprep.subr.bf16.mxu0 0
      %1361 = vmatpush1.bf16.msra.mxu0 0
      %1362 = vmatprep.subr.bf16.mxu0 0
      %1363 = vmatpush1.bf16.msra.mxu0 0
      %1364 = vmatprep.subr.bf16.mxu0 0
      %1365 = vmatpush1.bf16.msra.mxu0 0
      %1366 = vmatprep.subr.bf16.mxu0 0
      %1367 = vmatpush1.bf16.msra.mxu0 0
      %1368 = vmatprep.subr.bf16.mxu0 0
      %1369 = vmatpush1.bf16.msra.mxu0 0
      %1370 = vmatprep.subr.bf16.mxu0 0
      %1371 = vmatpush1.bf16.msra.mxu0 0
      %1372 = vmatprep.subr.bf16.mxu0 0
      %1373 = vmatpush1.bf16.msra.mxu0 0
      %1374 = vmatprep.subr.bf16.mxu0 0
      %1375 = vmatpush1.bf16.msra.mxu0 0
      %1376 = vmatprep.subr.bf16.mxu0 0
      %1377 = vmatpush1.bf16.msra.mxu0 0
      %1378 = vmatprep.mubr.bf16.mxu0 0
      %1379 = vmatmul.mubr.bf16.gmra.mrb[0].mxu0 %v1344
      %v1380 = vpop.f32.mrb[0].mxu0
      %v1381 = vadd.f32 %v1328, %v1380
      %v1382 = vpop.f32.mrb[0].mxu0
      %v1383 = vpop.f32.mrb[0].mxu0
      %v1384 = vpop.f32.mrb[0].mxu0
      %1385 = vdwg.mxu0
      %v1386 = vld [vmem:[%s11] sm:$0xf]
      %v1387 = vld [vmem:[%s11 + $0x4] sm:$0xf]
      %v1388 = vld [vmem:[%s11 + $0x8] sm:$0xf]
      %v1389 = vld [vmem:[%s11 + $0xc] sm:$0xf]
      %v1390 = vld [vmem:[%s13] sm:$0x1]
      %v1391 = vpack.c.bf16 %v1381, %v1381
      %1393 = vrot.lane.b32.xlu0 %v1391, 96
      %v1394 = vpop.permute.xlu0 %1393
      %vm1395 = vcmask 64512
      %v1397 = vsel %vm1395, %v1391, 0
      %v1400 = vsel %vm1395, %v1394, 0
      %1402 = vmatprep.subr.bf16.mxu0 0
      %1403 = vmatpush1.bf16.xpose.msra.mxu0 %v1400
      %1404 = vmatprep.subr.bf16.mxu0 0
      %1405 = vmatpush1.bf16.xpose.msra.mxu0 0
      %1406 = vmatprep.subr.bf16.mxu0 0
      %1407 = vmatpush1.bf16.xpose.msra.mxu0 0
      %1408 = vmatprep.subr.bf16.mxu0 0
      %1409 = vmatpush1.bf16.xpose.msra.mxu0 0
      %1410 = vmatprep.subr.bf16.mxu0 0
      %1411 = vmatpush1.bf16.xpose.msra.mxu0 0
      %1412 = vmatprep.subr.bf16.mxu0 0
      %1413 = vmatpush1.bf16.xpose.msra.mxu0 0
      %1414 = vmatprep.subr.bf16.mxu0 0
      %1415 = vmatpush1.bf16.xpose.msra.mxu0 0
      %1416 = vmatprep.subr.bf16.mxu0 0
      %1417 = vmatpush1.bf16.xpose.msra.mxu0 0
      %1418 = vmatprep.subr.bf16.mxu0 0
      %1419 = vmatpush1.bf16.xpose.msra.mxu0 0
      %1420 = vmatprep.subr.bf16.mxu0 0
      %1421 = vmatpush1.bf16.xpose.msra.mxu0 0
      %1422 = vmatprep.subr.bf16.mxu0 0
      %1423 = vmatpush1.bf16.xpose.msra.mxu0 0
      %1424 = vmatprep.subr.bf16.mxu0 0
      %1425 = vmatpush1.bf16.xpose.msra.mxu0 0
      %1426 = vmatprep.subr.bf16.mxu0 0
      %1427 = vmatpush1.bf16.xpose.msra.mxu0 0
      %1428 = vmatprep.subr.bf16.mxu0 0
      %1429 = vmatpush1.bf16.xpose.msra.mxu0 0
      %1430 = vmatprep.subr.bf16.mxu0 0
      %1431 = vmatpush1.bf16.xpose.msra.mxu0 0
      %1432 = vmatprep.subr.bf16.mxu0 0
      %1433 = vmatpush1.bf16.xpose.msra.mxu0 0
      %1434 = vmatprep.mubr.bf16.mxu0 0
      %1435 = vmatmul.mubr.bf16.gmra.mrb[0].mxu0 %v1397
      %v1436 = vpop.f32.mrb[0].mxu0
      %v1437 = vadd.f32 0.0, %v1436
      %v1438 = vpop.f32.mrb[0].mxu0
      %v1439 = vpop.f32.mrb[0].mxu0
      %v1440 = vpop.f32.mrb[0].mxu0
      %1441 = vdwg.mxu0
      %v1442 = vmul.f32 %v1437, 0.35355338
      %v1443 = vsel %vm1395, %v1442, -inf
      %1444 = vmax.xlane.f32.xlu0 %v1443
      %v1445 = vpop.xlane.xlu0 %1444
      %v1446 = vsub.f32 %v1442, %v1445
      %v1447 = vmul.f32 %v1446, 1.442695
      %v1448 = vpow.pop %v1447
      %v1449 = vsel %vm1395, %v1448, 0.0
      %1450 = vadd.xlane.f32.xlu0 %v1449
      %v1451 = vpop.xlane.xlu0 %1450
      %v1452 = vrcp.pop %v1451
      %v1453 = vmul.f32 %v1448, %v1452
      %v1454 = vpack.c.bf16 %v1453, %v1453
      %1455 = vrot.lane.b32.xlu0 %v1391, 64
      %v1456 = vpop.permute.xlu0 %1455
      %v1458 = vsel %vm1395, %v1454, 0
      %vm1460 = vcmask 1043456
      %v1462 = vsel %vm1460, %v1456, 0
      %1464 = vmatprep.subr.bf16.mxu0 0
      %1465 = vmatpush1.bf16.msra.mxu0 %v1462
      %1466 = vmatprep.subr.bf16.mxu0 0
      %1467 = vmatpush1.bf16.msra.mxu0 0
      %1468 = vmatprep.subr.bf16.mxu0 0
      %1469 = vmatpush1.bf16.msra.mxu0 0
      %1470 = vmatprep.subr.bf16.mxu0 0
      %1471 = vmatpush1.bf16.msra.mxu0 0
      %1472 = vmatprep.subr.bf16.mxu0 0
      %1473 = vmatpush1.bf16.msra.mxu0 0
      %1474 = vmatprep.subr.bf16.mxu0 0
      %1475 = vmatpush1.bf16.msra.mxu0 0
      %1476 = vmatprep.subr.bf16.mxu0 0
      %1477 = vmatpush1.bf16.msra.mxu0 0
      %1478 = vmatprep.subr.bf16.mxu0 0
      %1479 = vmatpush1.bf16.msra.mxu0 0
      %1480 = vmatprep.subr.bf16.mxu0 0
      %1481 = vmatpush1.bf16.msra.mxu0 0
      %1482 = vmatprep.subr.bf16.mxu0 0
      %1483 = vmatpush1.bf16.msra.mxu0 0
      %1484 = vmatprep.subr.bf16.mxu0 0
      %1485 = vmatpush1.bf16.msra.mxu0 0
      %1486 = vmatprep.subr.bf16.mxu0 0
      %1487 = vmatpush1.bf16.msra.mxu0 0
      %1488 = vmatprep.subr.bf16.mxu0 0
      %1489 = vmatpush1.bf16.msra.mxu0 0
      %1490 = vmatprep.subr.bf16.mxu0 0
      %1491 = vmatpush1.bf16.msra.mxu0 0
      %1492 = vmatprep.subr.bf16.mxu0 0
      %1493 = vmatpush1.bf16.msra.mxu0 0
      %1494 = vmatprep.subr.bf16.mxu0 0
      %1495 = vmatpush1.bf16.msra.mxu0 0
      %1496 = vmatprep.mubr.bf16.mxu0 0
      %1497 = vmatmul.mubr.bf16.gmra.mrb[0].mxu0 %v1458
      %v1498 = vpop.f32.mrb[0].mxu0
      %v1499 = vadd.f32 0.0, %v1498
      %v1500 = vpop.f32.mrb[0].mxu0
      %v1501 = vpop.f32.mrb[0].mxu0
      %v1502 = vpop.f32.mrb[0].mxu0
      %1503 = vdwg.mxu0
      %1504 = vrot.lane.b32.xlu0 %v1391, 120
      %v1505 = vpop.permute.xlu0 %1504
      %1506 = vrot.lane.b32.xlu0 %v1391, 88
      %v1507 = vpop.permute.xlu0 %1506
      %v1509 = vsel %vm1395, %v1505, 0
      %v1512 = vsel %vm1395, %v1507, 0
      %1514 = vmatprep.subr.bf16.mxu0 0
      %1515 = vmatpush1.bf16.xpose.msra.mxu0 %v1512
      %1516 = vmatprep.subr.bf16.mxu0 0
      %1517 = vmatpush1.bf16.xpose.msra.mxu0 0
      %1518 = vmatprep.subr.bf16.mxu0 0
      %1519 = vmatpush1.bf16.xpose.msra.mxu0 0
      %1520 = vmatprep.subr.bf16.mxu0 0
      %1521 = vmatpush1.bf16.xpose.msra.mxu0 0
      %1522 = vmatprep.subr.bf16.mxu0 0
      %1523 = vmatpush1.bf16.xpose.msra.mxu0 0
      %1524 = vmatprep.subr.bf16.mxu0 0
      %1525 = vmatpush1.bf16.xpose.msra.mxu0 0
      %1526 = vmatprep.subr.bf16.mxu0 0
      %1527 = vmatpush1.bf16.xpose.msra.mxu0 0
      %1528 = vmatprep.subr.bf16.mxu0 0
      %1529 = vmatpush1.bf16.xpose.msra.mxu0 0
      %1530 = vmatprep.subr.bf16.mxu0 0
      %1531 = vmatpush1.bf16.xpose.msra.mxu0 0
      %1532 = vmatprep.subr.bf16.mxu0 0
      %1533 = vmatpush1.bf16.xpose.msra.mxu0 0
      %1534 = vmatprep.subr.bf16.mxu0 0
      %1535 = vmatpush1.bf16.xpose.msra.mxu0 0
      %1536 = vmatprep.subr.bf16.mxu0 0
      %1537 = vmatpush1.bf16.xpose.msra.mxu0 0
      %1538 = vmatprep.subr.bf16.mxu0 0
      %1539 = vmatpush1.bf16.xpose.msra.mxu0 0
      %1540 = vmatprep.subr.bf16.mxu0 0
      %1541 = vmatpush1.bf16.xpose.msra.mxu0 0
      %1542 = vmatprep.subr.bf16.mxu0 0
      %1543 = vmatpush1.bf16.xpose.msra.mxu0 0
      %1544 = vmatprep.subr.bf16.mxu0 0
      %1545 = vmatpush1.bf16.xpose.msra.mxu0 0
      %1546 = vmatprep.mubr.bf16.mxu0 0
      %1547 = vmatmul.mubr.bf16.gmra.mrb[0].mxu0 %v1509
      %v1548 = vpop.f32.mrb[0].mxu0
      %v1549 = vadd.f32 0.0, %v1548
      %v1550 = vpop.f32.mrb[0].mxu0
      %v1551 = vpop.f32.mrb[0].mxu0
      %v1552 = vpop.f32.mrb[0].mxu0
      %1553 = vdwg.mxu0
      %v1554 = vmul.f32 %v1549, 0.35355338
      %v1555 = vsel %vm1395, %v1554, -inf
      %1556 = vmax.xlane.f32.xlu0 %v1555
      %v1557 = vpop.xlane.xlu0 %1556
      %v1558 = vsub.f32 %v1554, %v1557
      %v1559 = vmul.f32 %v1558, 1.442695
      %v1560 = vpow.pop %v1559
      %v1561 = vsel %vm1395, %v1560, 0.0
      %1562 = vadd.xlane.f32.xlu0 %v1561
      %v1563 = vpop.xlane.xlu0 %1562
      %v1564 = vrcp.pop %v1563
      %v1565 = vmul.f32 %v1560, %v1564
      %v1566 = vpack.c.bf16 %v1565, %v1565
      %1567 = vrot.lane.b32.xlu0 %v1391, 56
      %v1568 = vpop.permute.xlu0 %1567
      %v1570 = vsel %vm1395, %v1566, 0
      %v1573 = vsel %vm1460, %v1568, 0
      %1575 = vmatprep.subr.bf16.mxu0 0
      %1576 = vmatpush1.bf16.msra.mxu0 %v1573
      %1577 = vmatprep.subr.bf16.mxu0 0
      %1578 = vmatpush1.bf16.msra.mxu0 0
      %1579 = vmatprep.subr.bf16.mxu0 0
      %1580 = vmatpush1.bf16.msra.mxu0 0
      %1581 = vmatprep.subr.bf16.mxu0 0
      %1582 = vmatpush1.bf16.msra.mxu0 0
      %1583 = vmatprep.subr.bf16.mxu0 0
      %1584 = vmatpush1.bf16.msra.mxu0 0
      %1585 = vmatprep.subr.bf16.mxu0 0
      %1586 = vmatpush1.bf16.msra.mxu0 0
      %1587 = vmatprep.subr.bf16.mxu0 0
      %1588 = vmatpush1.bf16.msra.mxu0 0
      %1589 = vmatprep.subr.bf16.mxu0 0
      %1590 = vmatpush1.bf16.msra.mxu0 0
      %1591 = vmatprep.subr.bf16.mxu0 0
      %1592 = vmatpush1.bf16.msra.mxu0 0
      %1593 = vmatprep.subr.bf16.mxu0 0
      %1594 = vmatpush1.bf16.msra.mxu0 0
      %1595 = vmatprep.subr.bf16.mxu0 0
      %1596 = vmatpush1.bf16.msra.mxu0 0
      %1597 = vmatprep.subr.bf16.mxu0 0
      %1598 = vmatpush1.bf16.msra.mxu0 0
      %1599 = vmatprep.subr.bf16.mxu0 0
      %1600 = vmatpush1.bf16.msra.mxu0 0
      %1601 = vmatprep.subr.bf16.mxu0 0
      %1602 = vmatpush1.bf16.msra.mxu0 0
      %1603 = vmatprep.subr.bf16.mxu0 0
      %1604 = vmatpush1.bf16.msra.mxu0 0
      %1605 = vmatprep.subr.bf16.mxu0 0
      %1606 = vmatpush1.bf16.msra.mxu0 0
      %1607 = vmatprep.mubr.bf16.mxu0 0
      %1608 = vmatmul.mubr.bf16.gmra.mrb[0].mxu0 %v1570
      %v1609 = vpop.f32.mrb[0].mxu0
      %v1610 = vadd.f32 0.0, %v1609
      %v1611 = vpop.f32.mrb[0].mxu0
      %v1612 = vpop.f32.mrb[0].mxu0
      %v1613 = vpop.f32.mrb[0].mxu0
      %1614 = vdwg.mxu0
      %1615 = vrot.lane.b32.xlu0 %v1391, 112
      %v1616 = vpop.permute.xlu0 %1615
      %1617 = vrot.lane.b32.xlu0 %v1391, 80
      %v1618 = vpop.permute.xlu0 %1617
      %v1620 = vsel %vm1395, %v1616, 0
      %v1623 = vsel %vm1395, %v1618, 0
      %1625 = vmatprep.subr.bf16.mxu0 0
      %1626 = vmatpush1.bf16.xpose.msra.mxu0 %v1623
      %1627 = vmatprep.subr.bf16.mxu0 0
      %1628 = vmatpush1.bf16.xpose.msra.mxu0 0
      %1629 = vmatprep.subr.bf16.mxu0 0
      %1630 = vmatpush1.bf16.xpose.msra.mxu0 0
      %1631 = vmatprep.subr.bf16.mxu0 0
      %1632 = vmatpush1.bf16.xpose.msra.mxu0 0
      %1633 = vmatprep.subr.bf16.mxu0 0
      %1634 = vmatpush1.bf16.xpose.msra.mxu0 0
      %1635 = vmatprep.subr.bf16.mxu0 0
      %1636 = vmatpush1.bf16.xpose.msra.mxu0 0
      %1637 = vmatprep.subr.bf16.mxu0 0
      %1638 = vmatpush1.bf16.xpose.msra.mxu0 0
      %1639 = vmatprep.subr.bf16.mxu0 0
      %1640 = vmatpush1.bf16.xpose.msra.mxu0 0
      %1641 = vmatprep.subr.bf16.mxu0 0
      %1642 = vmatpush1.bf16.xpose.msra.mxu0 0
      %1643 = vmatprep.subr.bf16.mxu0 0
      %1644 = vmatpush1.bf16.xpose.msra.mxu0 0
      %1645 = vmatprep.subr.bf16.mxu0 0
      %1646 = vmatpush1.bf16.xpose.msra.mxu0 0
      %1647 = vmatprep.subr.bf16.mxu0 0
      %1648 = vmatpush1.bf16.xpose.msra.mxu0 0
      %1649 = vmatprep.subr.bf16.mxu0 0
      %1650 = vmatpush1.bf16.xpose.msra.mxu0 0
      %1651 = vmatprep.subr.bf16.mxu0 0
      %1652 = vmatpush1.bf16.xpose.msra.mxu0 0
      %1653 = vmatprep.subr.bf16.mxu0 0
      %1654 = vmatpush1.bf16.xpose.msra.mxu0 0
      %1655 = vmatprep.subr.bf16.mxu0 0
      %1656 = vmatpush1.bf16.xpose.msra.mxu0 0
      %1657 = vmatprep.mubr.bf16.mxu0 0
      %1658 = vmatmul.mubr.bf16.gmra.mrb[0].mxu0 %v1620
      %v1659 = vpop.f32.mrb[0].mxu0
      %v1660 = vadd.f32 0.0, %v1659
      %v1661 = vpop.f32.mrb[0].mxu0
      %v1662 = vpop.f32.mrb[0].mxu0
      %v1663 = vpop.f32.mrb[0].mxu0
      %1664 = vdwg.mxu0
      %v1665 = vmul.f32 %v1660, 0.35355338
      %v1666 = vsel %vm1395, %v1665, -inf
      %1667 = vmax.xlane.f32.xlu0 %v1666
      %v1668 = vpop.xlane.xlu0 %1667
      %v1669 = vsub.f32 %v1665, %v1668
      %v1670 = vmul.f32 %v1669, 1.442695
      %v1671 = vpow.pop %v1670
      %v1672 = vsel %vm1395, %v1671, 0.0
      %1673 = vadd.xlane.f32.xlu0 %v1672
      %v1674 = vpop.xlane.xlu0 %1673
      %v1675 = vrcp.pop %v1674
      %v1676 = vmul.f32 %v1671, %v1675
      %v1677 = vpack.c.bf16 %v1676, %v1676
      %1678 = vrot.lane.b32.xlu0 %v1391, 48
      %v1679 = vpop.permute.xlu0 %1678
      %v1681 = vsel %vm1395, %v1677, 0
      %v1684 = vsel %vm1460, %v1679, 0
      %1686 = vmatprep.subr.bf16.mxu0 0
      %1687 = vmatpush1.bf16.msra.mxu0 %v1684
      %1688 = vmatprep.subr.bf16.mxu0 0
      %1689 = vmatpush1.bf16.msra.mxu0 0
      %1690 = vmatprep.subr.bf16.mxu0 0
      %1691 = vmatpush1.bf16.msra.mxu0 0
      %1692 = vmatprep.subr.bf16.mxu0 0
      %1693 = vmatpush1.bf16.msra.mxu0 0
      %1694 = vmatprep.subr.bf16.mxu0 0
      %1695 = vmatpush1.bf16.msra.mxu0 0
      %1696 = vmatprep.subr.bf16.mxu0 0
      %1697 = vmatpush1.bf16.msra.mxu0 0
      %1698 = vmatprep.subr.bf16.mxu0 0
      %1699 = vmatpush1.bf16.msra.mxu0 0
      %1700 = vmatprep.subr.bf16.mxu0 0
      %1701 = vmatpush1.bf16.msra.mxu0 0
      %1702 = vmatprep.subr.bf16.mxu0 0
      %1703 = vmatpush1.bf16.msra.mxu0 0
      %1704 = vmatprep.subr.bf16.mxu0 0
      %1705 = vmatpush1.bf16.msra.mxu0 0
      %1706 = vmatprep.subr.bf16.mxu0 0
      %1707 = vmatpush1.bf16.msra.mxu0 0
      %1708 = vmatprep.subr.bf16.mxu0 0
      %1709 = vmatpush1.bf16.msra.mxu0 0
      %1710 = vmatprep.subr.bf16.mxu0 0
      %1711 = vmatpush1.bf16.msra.mxu0 0
      %1712 = vmatprep.subr.bf16.mxu0 0
      %1713 = vmatpush1.bf16.msra.mxu0 0
      %1714 = vmatprep.subr.bf16.mxu0 0
      %1715 = vmatpush1.bf16.msra.mxu0 0
      %1716 = vmatprep.subr.bf16.mxu0 0
      %1717 = vmatpush1.bf16.msra.mxu0 0
      %1718 = vmatprep.mubr.bf16.mxu0 0
      %1719 = vmatmul.mubr.bf16.gmra.mrb[0].mxu0 %v1681
      %v1720 = vpop.f32.mrb[0].mxu0
      %v1721 = vadd.f32 0.0, %v1720
      %v1722 = vpop.f32.mrb[0].mxu0
      %v1723 = vpop.f32.mrb[0].mxu0
      %v1724 = vpop.f32.mrb[0].mxu0
      %1725 = vdwg.mxu0
      %1726 = vrot.lane.b32.xlu0 %v1391, 104
      %v1727 = vpop.permute.xlu0 %1726
      %1728 = vrot.lane.b32.xlu0 %v1391, 72
      %v1729 = vpop.permute.xlu0 %1728
      %v1731 = vsel %vm1395, %v1727, 0
      %v1734 = vsel %vm1395, %v1729, 0
      %1736 = vmatprep.subr.bf16.mxu0 0
      %1737 = vmatpush1.bf16.xpose.msra.mxu0 %v1734
      %1738 = vmatprep.subr.bf16.mxu0 0
      %1739 = vmatpush1.bf16.xpose.msra.mxu0 0
      %1740 = vmatprep.subr.bf16.mxu0 0
      %1741 = vmatpush1.bf16.xpose.msra.mxu0 0
      %1742 = vmatprep.subr.bf16.mxu0 0
      %1743 = vmatpush1.bf16.xpose.msra.mxu0 0
      %1744 = vmatprep.subr.bf16.mxu0 0
      %1745 = vmatpush1.bf16.xpose.msra.mxu0 0
      %1746 = vmatprep.subr.bf16.mxu0 0
      %1747 = vmatpush1.bf16.xpose.msra.mxu0 0
      %1748 = vmatprep.subr.bf16.mxu0 0
      %1749 = vmatpush1.bf16.xpose.msra.mxu0 0
      %1750 = vmatprep.subr.bf16.mxu0 0
      %1751 = vmatpush1.bf16.xpose.msra.mxu0 0
      %1752 = vmatprep.subr.bf16.mxu0 0
      %1753 = vmatpush1.bf16.xpose.msra.mxu0 0
      %1754 = vmatprep.subr.bf16.mxu0 0
      %1755 = vmatpush1.bf16.xpose.msra.mxu0 0
      %1756 = vmatprep.subr.bf16.mxu0 0
      %1757 = vmatpush1.bf16.xpose.msra.mxu0 0
      %1758 = vmatprep.subr.bf16.mxu0 0
      %1759 = vmatpush1.bf16.xpose.msra.mxu0 0
      %1760 = vmatprep.subr.bf16.mxu0 0
      %1761 = vmatpush1.bf16.xpose.msra.mxu0 0
      %1762 = vmatprep.subr.bf16.mxu0 0
      %1763 = vmatpush1.bf16.xpose.msra.mxu0 0
      %1764 = vmatprep.subr.bf16.mxu0 0
      %1765 = vmatpush1.bf16.xpose.msra.mxu0 0
      %1766 = vmatprep.subr.bf16.mxu0 0
      %1767 = vmatpush1.bf16.xpose.msra.mxu0 0
      %1768 = vmatprep.mubr.bf16.mxu0 0
      %1769 = vmatmul.mubr.bf16.gmra.mrb[0].mxu0 %v1731
      %v1770 = vpop.f32.mrb[0].mxu0
      %v1771 = vadd.f32 0.0, %v1770
      %v1772 = vpop.f32.mrb[0].mxu0
      %v1773 = vpop.f32.mrb[0].mxu0
      %v1774 = vpop.f32.mrb[0].mxu0
      %1775 = vdwg.mxu0
      %v1776 = vmul.f32 %v1771, 0.35355338
      %v1777 = vsel %vm1395, %v1776, -inf
      %1778 = vmax.xlane.f32.xlu0 %v1777
      %v1779 = vpop.xlane.xlu0 %1778
      %v1780 = vsub.f32 %v1776, %v1779
      %v1781 = vmul.f32 %v1780, 1.442695
      %v1782 = vpow.pop %v1781
      %v1783 = vsel %vm1395, %v1782, 0.0
      %1784 = vadd.xlane.f32.xlu0 %v1783
      %v1785 = vpop.xlane.xlu0 %1784
      %v1786 = vrcp.pop %v1785
      %v1787 = vmul.f32 %v1782, %v1786
      %v1788 = vpack.c.bf16 %v1787, %v1787
      %1789 = vrot.lane.b32.xlu0 %v1391, 40
      %v1790 = vpop.permute.xlu0 %1789
      %v1792 = vsel %vm1395, %v1788, 0
      %v1795 = vsel %vm1460, %v1790, 0
      %1797 = vmatprep.subr.bf16.mxu0 0
      %1798 = vmatpush1.bf16.msra.mxu0 %v1795
      %1799 = vmatprep.subr.bf16.mxu0 0
      %1800 = vmatpush1.bf16.msra.mxu0 0
      %1801 = vmatprep.subr.bf16.mxu0 0
      %1802 = vmatpush1.bf16.msra.mxu0 0
      %1803 = vmatprep.subr.bf16.mxu0 0
      %1804 = vmatpush1.bf16.msra.mxu0 0
      %1805 = vmatprep.subr.bf16.mxu0 0
      %1806 = vmatpush1.bf16.msra.mxu0 0
      %1807 = vmatprep.subr.bf16.mxu0 0
      %1808 = vmatpush1.bf16.msra.mxu0 0
      %1809 = vmatprep.subr.bf16.mxu0 0
      %1810 = vmatpush1.bf16.msra.mxu0 0
      %1811 = vmatprep.subr.bf16.mxu0 0
      %1812 = vmatpush1.bf16.msra.mxu0 0
      %1813 = vmatprep.subr.bf16.mxu0 0
      %1814 = vmatpush1.bf16.msra.mxu0 0
      %1815 = vmatprep.subr.bf16.mxu0 0
      %1816 = vmatpush1.bf16.msra.mxu0 0
      %1817 = vmatprep.subr.bf16.mxu0 0
      %1818 = vmatpush1.bf16.msra.mxu0 0
      %1819 = vmatprep.subr.bf16.mxu0 0
      %1820 = vmatpush1.bf16.msra.mxu0 0
      %1821 = vmatprep.subr.bf16.mxu0 0
      %1822 = vmatpush1.bf16.msra.mxu0 0
      %1823 = vmatprep.subr.bf16.mxu0 0
      %1824 = vmatpush1.bf16.msra.mxu0 0
      %1825 = vmatprep.subr.bf16.mxu0 0
      %1826 = vmatpush1.bf16.msra.mxu0 0
      %1827 = vmatprep.subr.bf16.mxu0 0
      %1828 = vmatpush1.bf16.msra.mxu0 0
      %1829 = vmatprep.mubr.bf16.mxu0 0
      %1830 = vmatmul.mubr.bf16.gmra.mrb[0].mxu0 %v1792
      %v1831 = vpop.f32.mrb[0].mxu0
      %v1832 = vadd.f32 0.0, %v1831
      %v1833 = vpop.f32.mrb[0].mxu0
      %v1834 = vpop.f32.mrb[0].mxu0
      %v1835 = vpop.f32.mrb[0].mxu0
      %1836 = vdwg.mxu0
      %1838 = vrot.lane.b32.xlu0 %v1610, 8
      %v1839 = vpop.permute.xlu0 %1838
      %1842 = vrot.lane.b32.xlu0 %v1721, 16
      %v1843 = vpop.permute.xlu0 %1842
      %1846 = vrot.lane.b32.xlu0 %v1832, 24
      %v1847 = vpop.permute.xlu0 %1846
      %v1849 = vsel %vm1395, %v1499, %v1839
      %vm1850 = vcmask 130048
      %v1851 = vsel %vm1850, %v1849, %v1843
      %vm1852 = vcmask 195584
      %v1853 = vsel %vm1852, %v1851, %v1847
      %v1854 = vpack.c.bf16 %v1853, %v1853
      %v1856 = vlaneseq
      %v1857 = vshrl.u32 %v1856, 7
      %v1858 = vsub.s32 0, %v1857
      %v1859 = vrot.slane %v1390, %v1858
      %v1865 = vunpack.c.l.b16 %v1386
      %v1866 = vunpack.c.l.b16 %v1387
      %v1867 = vunpack.c.l.b16 %v1388
      %v1868 = vunpack.c.l.b16 %v1389
      %v1869 = vpack.c.b16 %v1866, %v1865
      %v1870 = vpack.c.b16 %v1868, %v1867
      %v1874 = vsel %vm1342, %v1854, 0
      %1876 = vmatprep.subr.bf16.mxu0 0
      %1877 = vmatpush1.bf16.msra.mxu0 %v1869
      %1878 = vmatprep.subr.bf16.mxu0 0
      %1879 = vmatpush1.bf16.msra.mxu0 %v1870
      %1880 = vmatprep.subr.bf16.mxu0 0
      %1881 = vmatpush1.bf16.msra.mxu0 0
      %1882 = vmatprep.subr.bf16.mxu0 0
      %1883 = vmatpush1.bf16.msra.mxu0 0
      %1884 = vmatprep.subr.bf16.mxu0 0
      %1885 = vmatpush1.bf16.msra.mxu0 0
      %1886 = vmatprep.subr.bf16.mxu0 0
      %1887 = vmatpush1.bf16.msra.mxu0 0
      %1888 = vmatprep.subr.bf16.mxu0 0
      %1889 = vmatpush1.bf16.msra.mxu0 0
      %1890 = vmatprep.subr.bf16.mxu0 0
      %1891 = vmatpush1.bf16.msra.mxu0 0
      %1892 = vmatprep.subr.bf16.mxu0 0
      %1893 = vmatpush1.bf16.msra.mxu0 0
      %1894 = vmatprep.subr.bf16.mxu0 0
      %1895 = vmatpush1.bf16.msra.mxu0 0
      %1896 = vmatprep.subr.bf16.mxu0 0
      %1897 = vmatpush1.bf16.msra.mxu0 0
      %1898 = vmatprep.subr.bf16.mxu0 0
      %1899 = vmatpush1.bf16.msra.mxu0 0
      %1900 = vmatprep.subr.bf16.mxu0 0
      %1901 = vmatpush1.bf16.msra.mxu0 0
      %1902 = vmatprep.subr.bf16.mxu0 0
      %1903 = vmatpush1.bf16.msra.mxu0 0
      %1904 = vmatprep.subr.bf16.mxu0 0
      %1905 = vmatpush1.bf16.msra.mxu0 0
      %1906 = vmatprep.subr.bf16.mxu0 0
      %1907 = vmatpush1.bf16.msra.mxu0 0
      %1908 = vmatprep.mubr.bf16.mxu0 0
      %1909 = vmatmul.mubr.bf16.gmra.mrb[0].mxu0 %v1874
      %v1910 = vpop.f32.mrb[0].mxu0
      %v1911 = vadd.f32 %v1859, %v1910
      %v1912 = vpop.f32.mrb[0].mxu0
      %v1913 = vpop.f32.mrb[0].mxu0
      %v1914 = vpop.f32.mrb[0].mxu0
      %1915 = vdwg.mxu0
      %v1916 = vadd.f32 %v1317, %v1911
      %v1917 = vld [vmem:[%s23] sm:$0x1]
      %v1918 = vld [vmem:[%s25] sm:$0x1]
      %v1919 = vsel %vm1342, %v1916, 0.0
      %1920 = vadd.xlane.f32.xlu0 %v1919
      %v1921 = vpop.xlane.xlu0 %1920
      %v1922 = vrcp.pop 32.0
      %v1923 = vmul.f32 %v1921, %v1922
      %v1924 = vsub.f32 %v1916, %v1923
      %v1925 = vmul.f32 %v1924, %v1924
      %v1926 = vsel %vm1342, %v1925, 0.0
      %1927 = vadd.xlane.f32.xlu0 %v1926
      %v1928 = vpop.xlane.xlu0 %1927
      %v1929 = vmul.f32 %v1928, %v1922
      %v1930 = vadd.f32 %v1929, 1e-05
      %v1931 = vrsqrt.pop %v1930
      %v1932 = vmul.f32 %v1924, %v1931
      %v1934 = vlaneseq
      %v1935 = vshrl.u32 %v1934, 7
      %v1936 = vsub.s32 0, %v1935
      %v1937 = vrot.slane %v1917, %v1936
      %v1939 = vmul.f32 %v1932, %v1937
      %v1941 = vlaneseq
      %v1942 = vshrl.u32 %v1941, 7
      %v1943 = vsub.s32 0, %v1942
      %v1944 = vrot.slane %v1918, %v1943
      %v1946 = vadd.f32 %v1939, %v1944
      %v1947 = vld [vmem:[%s15] sm:$0xf]
      %v1948 = vld [vmem:[%s15 + $0x4] sm:$0xf]
      %v1949 = vld [vmem:[%s15 + $0x8] sm:$0xf]
      %v1950 = vld [vmem:[%s15 + $0xc] sm:$0xf]
      %v1951 = vld [vmem:[%s17] sm:$0x1]
      %v1952 = vpack.c.bf16 %v1946, %v1946
      %v1954 = vlaneseq
      %v1955 = vshrl.u32 %v1954, 7
      %v1956 = vsub.s32 0, %v1955
      %v1957 = vrot.slane %v1951, %v1956
      %v1963 = vunpack.c.l.b16 %v1947
      %v1964 = vunpack.c.l.b16 %v1948
      %v1965 = vunpack.c.l.b16 %v1949
      %v1966 = vunpack.c.l.b16 %v1950
      %v1967 = vpack.c.b16 %v1964, %v1963
      %v1968 = vpack.c.b16 %v1966, %v1965
      %v1972 = vsel %vm1342, %v1952, 0
      %1974 = vmatprep.subr.bf16.mxu0 0
      %1975 = vmatpush1.bf16.msra.mxu0 %v1967
      %1976 = vmatprep.subr.bf16.mxu0 0
      %1977 = vmatpush1.bf16.msra.mxu0 %v1968
      %1978 = vmatprep.subr.bf16.mxu0 0
      %1979 = vmatpush1.bf16.msra.mxu0 0
      %1980 = vmatprep.subr.bf16.mxu0 0
      %1981 = vmatpush1.bf16.msra.mxu0 0
      %1982 = vmatprep.subr.bf16.mxu0 0
      %1983 = vmatpush1.bf16.msra.mxu0 0
      %1984 = vmatprep.subr.bf16.mxu0 0
      %1985 = vmatpush1.bf16.msra.mxu0 0
      %1986 = vmatprep.subr.bf16.mxu0 0
      %1987 = vmatpush1.bf16.msra.mxu0 0
      %1988 = vmatprep.subr.bf16.mxu0 0
      %1989 = vmatpush1.bf16.msra.mxu0 0
      %1990 = vmatprep.subr.bf16.mxu0 0
      %1991 = vmatpush1.bf16.msra.mxu0 0
      %1992 = vmatprep.subr.bf16.mxu0 0
      %1993 = vmatpush1.bf16.msra.mxu0 0
      %1994 = vmatprep.subr.bf16.mxu0 0
      %1995 = vmatpush1.bf16.msra.mxu0 0
      %1996 = vmatprep.subr.bf16.mxu0 0
      %1997 = vmatpush1.bf16.msra.mxu0 0
      %1998 = vmatprep.subr.bf16.mxu0 0
      %1999 = vmatpush1.bf16.msra.mxu0 0
      %2000 = vmatprep.subr.bf16.mxu0 0
      %2001 = vmatpush1.bf16.msra.mxu0 0
      %2002 = vmatprep.subr.bf16.mxu0 0
      %2003 = vmatpush1.bf16.msra.mxu0 0
      %2004 = vmatprep.subr.bf16.mxu0 0
      %2005 = vmatpush1.bf16.msra.mxu0 0
      %2006 = vmatprep.mubr.bf16.mxu0 0
      %2007 = vmatmul.mubr.bf16.gmra.mrb[0].mxu0 %v1972
      %v2008 = vpop.f32.mrb[0].mxu0
      %v2009 = vadd.f32 %v1957, %v2008
      %v2010 = vpop.f32.mrb[0].mxu0
      %v2011 = vpop.f32.mrb[0].mxu0
      %v2012 = vpop.f32.mrb[0].mxu0
      %2013 = vdwg.mxu0
      %v2014 = vmax.f32 %v2009, 0.0
      %v2015 = vld [vmem:[%s19] sm:$0xf]
      %v2016 = vld [vmem:[%s19 + $0x4] sm:$0xf]
      %v2017 = vld [vmem:[%s19 + $0x8] sm:$0xf]
      %v2018 = vld [vmem:[%s19 + $0xc] sm:$0xf]
      %v2019 = vld [vmem:[%s19 + $0x10] sm:$0xf]
      %v2020 = vld [vmem:[%s19 + $0x14] sm:$0xf]
      %v2021 = vld [vmem:[%s19 + $0x18] sm:$0xf]
      %v2022 = vld [vmem:[%s19 + $0x1c] sm:$0xf]
      %v2023 = vld [vmem:[%s21] sm:$0x1]
      %v2024 = vpack.c.bf16 %v2014, %v2014
      %v2026 = vlaneseq
      %v2027 = vshrl.u32 %v2026, 7
      %v2028 = vsub.s32 0, %v2027
      %v2029 = vrot.slane %v2023, %v2028
      %v2039 = vunpack.c.l.b16 %v2015
      %v2040 = vunpack.c.l.b16 %v2016
      %v2041 = vunpack.c.l.b16 %v2017
      %v2042 = vunpack.c.l.b16 %v2018
      %v2043 = vunpack.c.l.b16 %v2019
      %v2044 = vunpack.c.l.b16 %v2020
      %v2045 = vunpack.c.l.b16 %v2021
      %v2046 = vunpack.c.l.b16 %v2022
      %v2047 = vpack.c.b16 %v2040, %v2039
      %v2048 = vpack.c.b16 %v2042, %v2041
      %v2049 = vpack.c.b16 %v2044, %v2043
      %v2050 = vpack.c.b16 %v2046, %v2045
      %vm2055 = vcmask 523264
      %v2057 = vsel %vm2055, %v2024, 0
      %2059 = vmatprep.subr.bf16.mxu0 0
      %2060 = vmatpush1.bf16.msra.mxu0 %v2047
      %2061 = vmatprep.subr.bf16.mxu0 0
      %2062 = vmatpush1.bf16.msra.mxu0 %v2048
      %2063 = vmatprep.subr.bf16.mxu0 0
      %2064 = vmatpush1.bf16.msra.mxu0 %v2049
      %2065 = vmatprep.subr.bf16.mxu0 0
      %2066 = vmatpush1.bf16.msra.mxu0 %v2050
      %2067 = vmatprep.subr.bf16.mxu0 0
      %2068 = vmatpush1.bf16.msra.mxu0 0
      %2069 = vmatprep.subr.bf16.mxu0 0
      %2070 = vmatpush1.bf16.msra.mxu0 0
      %2071 = vmatprep.subr.bf16.mxu0 0
      %2072 = vmatpush1.bf16.msra.mxu0 0
      %2073 = vmatprep.subr.bf16.mxu0 0
      %2074 = vmatpush1.bf16.msra.mxu0 0
      %2075 = vmatprep.subr.bf16.mxu0 0
      %2076 = vmatpush1.bf16.msra.mxu0 0
      %2077 = vmatprep.subr.bf16.mxu0 0
      %2078 = vmatpush1.bf16.msra.mxu0 0
      %2079 = vmatprep.subr.bf16.mxu0 0
      %2080 = vmatpush1.bf16.msra.mxu0 0
      %2081 = vmatprep.subr.bf16.mxu0 0
      %2082 = vmatpush1.bf16.msra.mxu0 0
      %2083 = vmatprep.subr.bf16.mxu0 0
      %2084 = vmatpush1.bf16.msra.mxu0 0
      %2085 = vmatprep.subr.bf16.mxu0 0
      %2086 = vmatpush1.bf16.msra.mxu0 0
      %2087 = vmatprep.subr.bf16.mxu0 0
      %2088 = vmatpush1.bf16.msra.mxu0 0
      %2089 = vmatprep.subr.bf16.mxu0 0
      %2090 = vmatpush1.bf16.msra.mxu0 0
      %2091 = vmatprep.mubr.bf16.mxu0 0
      %2092 = vmatmul.mubr.bf16.gmra.mrb[0].mxu0 %v2057
      %v2093 = vpop.f32.mrb[0].mxu0
      %v2094 = vadd.f32 %v2029, %v2093
      %v2095 = vpop.f32.mrb[0].mxu0
      %v2096 = vpop.f32.mrb[0].mxu0
      %v2097 = vpop.f32.mrb[0].mxu0
      %2098 = vdwg.mxu0
      %v2099 = vadd.f32 %v1946, %v2094
      %v2100 = vld [vmem:[%s27] sm:$0x1]
      %v2101 = vld [vmem:[%s29] sm:$0x1]
      %v2102 = vsel %vm1342, %v2099, 0.0
      %2103 = vadd.xlane.f32.xlu0 %v2102
      %v2104 = vpop.xlane.xlu0 %2103
      %v2105 = vmul.f32 %v2104, %v1922
      %v2106 = vsub.f32 %v2099, %v2105
      %v2107 = vmul.f32 %v2106, %v2106
      %v2108 = vsel %vm1342, %v2107, 0.0
      %2109 = vadd.xlane.f32.xlu0 %v2108
      %v2110 = vpop.xlane.xlu0 %2109
      %v2111 = vmul.f32 %v2110, %v1922
      %v2112 = vadd.f32 %v2111, 1e-05
      %v2113 = vrsqrt.pop %v2112
      %v2114 = vmul.f32 %v2106, %v2113
      %v2116 = vlaneseq
      %v2117 = vshrl.u32 %v2116, 7
      %v2118 = vsub.s32 0, %v2117
      %v2119 = vrot.slane %v2100, %v2118
      %v2121 = vmul.f32 %v2114, %v2119
      %v2123 = vlaneseq
      %v2124 = vshrl.u32 %v2123, 7
      %v2125 = vsub.s32 0, %v2124
      %v2126 = vrot.slane %v2101, %v2125
      %v2128 = vadd.f32 %v2121, %v2126
      %s2129 = scalar_lea.vmem %s7, 16
      %v2130 = vld [vmem:[%s2129] sm:$0xf]
      %v2131 = vld [vmem:[%s2129 + $0x4] sm:$0xf]
      %v2132 = vld [vmem:[%s2129 + $0x8] sm:$0xf]
      %v2133 = vld [vmem:[%s2129 + $0xc] sm:$0xf]
      %s2134 = scalar_lea.vmem %s9, 1
      %v2135 = vld [vmem:[%s2134] sm:$0x1]
      %v2136 = vpack.c.bf16 %v2128, %v2128
      %v2138 = vlaneseq
      %v2139 = vshrl.u32 %v2138, 7
      %v2140 = vsub.s32 0, %v2139
      %v2141 = vrot.slane %v2135, %v2140
      %v2147 = vunpack.c.l.b16 %v2130
      %v2148 = vunpack.c.l.b16 %v2131
      %v2149 = vunpack.c.l.b16 %v2132
      %v2150 = vunpack.c.l.b16 %v2133
      %v2151 = vpack.c.b16 %v2148, %v2147
      %v2152 = vpack.c.b16 %v2150, %v2149
      %v2156 = vsel %vm1342, %v2136, 0
      %2158 = vmatprep.subr.bf16.mxu0 0
      %2159 = vmatpush1.bf16.msra.mxu0 %v2151
      %2160 = vmatprep.subr.bf16.mxu0 0
      %2161 = vmatpush1.bf16.msra.mxu0 %v2152
      %2162 = vmatprep.subr.bf16.mxu0 0
      %2163 = vmatpush1.bf16.msra.mxu0 0
      %2164 = vmatprep.subr.bf16.mxu0 0
      %2165 = vmatpush1.bf16.msra.mxu0 0
      %2166 = vmatprep.subr.bf16.mxu0 0
      %2167 = vmatpush1.bf16.msra.mxu0 0
      %2168 = vmatprep.subr.bf16.mxu0 0
      %2169 = vmatpush1.bf16.msra.mxu0 0
      %2170 = vmatprep.subr.bf16.mxu0 0
      %2171 = vmatpush1.bf16.msra.mxu0 0
      %2172 = vmatprep.subr.bf16.mxu0 0
      %2173 = vmatpush1.bf16.msra.mxu0 0
      %2174 = vmatprep.subr.bf16.mxu0 0
      %2175 = vmatpush1.bf16.msra.mxu0 0
      %2176 = vmatprep.subr.bf16.mxu0 0
      %2177 = vmatpush1.bf16.msra.mxu0 0
      %2178 = vmatprep.subr.bf16.mxu0 0
      %2179 = vmatpush1.bf16.msra.mxu0 0
      %2180 = vmatprep.subr.bf16.mxu0 0
      %2181 = vmatpush1.bf16.msra.mxu0 0
      %2182 = vmatprep.subr.bf16.mxu0 0
      %2183 = vmatpush1.bf16.msra.mxu0 0
      %2184 = vmatprep.subr.bf16.mxu0 0
      %2185 = vmatpush1.bf16.msra.mxu0 0
      %2186 = vmatprep.subr.bf16.mxu0 0
      %2187 = vmatpush1.bf16.msra.mxu0 0
      %2188 = vmatprep.subr.bf16.mxu0 0
      %2189 = vmatpush1.bf16.msra.mxu0 0
      %2190 = vmatprep.mubr.bf16.mxu0 0
      %2191 = vmatmul.mubr.bf16.gmra.mrb[0].mxu0 %v2156
      %v2192 = vpop.f32.mrb[0].mxu0
      %v2193 = vadd.f32 %v2141, %v2192
      %v2194 = vpop.f32.mrb[0].mxu0
      %v2195 = vpop.f32.mrb[0].mxu0
      %v2196 = vpop.f32.mrb[0].mxu0
      %2197 = vdwg.mxu0
      %s2198 = scalar_lea.vmem %s11, 16
      %v2199 = vld [vmem:[%s2198] sm:$0xf]
      %v2200 = vld [vmem:[%s2198 + $0x4] sm:$0xf]
      %v2201 = vld [vmem:[%s2198 + $0x8] sm:$0xf]
      %v2202 = vld [vmem:[%s2198 + $0xc] sm:$0xf]
      %s2203 = scalar_lea.vmem %s13, 1
      %v2204 = vld [vmem:[%s2203] sm:$0x1]
      %v2205 = vpack.c.bf16 %v2193, %v2193
      %2207 = vrot.lane.b32.xlu0 %v2205, 96
      %v2208 = vpop.permute.xlu0 %2207
      %v2210 = vsel %vm1395, %v2205, 0
      %v2213 = vsel %vm1395, %v2208, 0
      %2215 = vmatprep.subr.bf16.mxu0 0
      %2216 = vmatpush1.bf16.xpose.msra.mxu0 %v2213
      %2217 = vmatprep.subr.bf16.mxu0 0
      %2218 = vmatpush1.bf16.xpose.msra.mxu0 0
      %2219 = vmatprep.subr.bf16.mxu0 0
      %2220 = vmatpush1.bf16.xpose.msra.mxu0 0
      %2221 = vmatprep.subr.bf16.mxu0 0
      %2222 = vmatpush1.bf16.xpose.msra.mxu0 0
      %2223 = vmatprep.subr.bf16.mxu0 0
      %2224 = vmatpush1.bf16.xpose.msra.mxu0 0
      %2225 = vmatprep.subr.bf16.mxu0 0
      %2226 = vmatpush1.bf16.xpose.msra.mxu0 0
      %2227 = vmatprep.subr.bf16.mxu0 0
      %2228 = vmatpush1.bf16.xpose.msra.mxu0 0
      %2229 = vmatprep.subr.bf16.mxu0 0
      %2230 = vmatpush1.bf16.xpose.msra.mxu0 0
      %2231 = vmatprep.subr.bf16.mxu0 0
      %2232 = vmatpush1.bf16.xpose.msra.mxu0 0
      %2233 = vmatprep.subr.bf16.mxu0 0
      %2234 = vmatpush1.bf16.xpose.msra.mxu0 0
      %2235 = vmatprep.subr.bf16.mxu0 0
      %2236 = vmatpush1.bf16.xpose.msra.mxu0 0
      %2237 = vmatprep.subr.bf16.mxu0 0
      %2238 = vmatpush1.bf16.xpose.msra.mxu0 0
      %2239 = vmatprep.subr.bf16.mxu0 0
      %2240 = vmatpush1.bf16.xpose.msra.mxu0 0
      %2241 = vmatprep.subr.bf16.mxu0 0
      %2242 = vmatpush1.bf16.xpose.msra.mxu0 0
      %2243 = vmatprep.subr.bf16.mxu0 0
      %2244 = vmatpush1.bf16.xpose.msra.mxu0 0
      %2245 = vmatprep.subr.bf16.mxu0 0
      %2246 = vmatpush1.bf16.xpose.msra.mxu0 0
      %2247 = vmatprep.mubr.bf16.mxu0 0
      %2248 = vmatmul.mubr.bf16.gmra.mrb[0].mxu0 %v2210
      %v2249 = vpop.f32.mrb[0].mxu0
      %v2250 = vadd.f32 0.0, %v2249
      %v2251 = vpop.f32.mrb[0].mxu0
      %v2252 = vpop.f32.mrb[0].mxu0
      %v2253 = vpop.f32.mrb[0].mxu0
      %2254 = vdwg.mxu0
      %v2255 = vmul.f32 %v2250, 0.35355338
      %v2256 = vsel %vm1395, %v2255, -inf
      %2257 = vmax.xlane.f32.xlu0 %v2256
      %v2258 = vpop.xlane.xlu0 %2257
      %v2259 = vsub.f32 %v2255, %v2258
      %v2260 = vmul.f32 %v2259, 1.442695
      %v2261 = vpow.pop %v2260
      %v2262 = vsel %vm1395, %v2261, 0.0
      %2263 = vadd.xlane.f32.xlu0 %v2262
      %v2264 = vpop.xlane.xlu0 %2263
      %v2265 = vrcp.pop %v2264
      %v2266 = vmul.f32 %v2261, %v2265
      %v2267 = vpack.c.bf16 %v2266, %v2266
      %2268 = vrot.lane.b32.xlu0 %v2205, 64
      %v2269 = vpop.permute.xlu0 %2268
      %v2271 = vsel %vm1395, %v2267, 0
      %v2274 = vsel %vm1460, %v2269, 0
      %2276 = vmatprep.subr.bf16.mxu0 0
      %2277 = vmatpush1.bf16.msra.mxu0 %v2274
      %2278 = vmatprep.subr.bf16.mxu0 0
      %2279 = vmatpush1.bf16.msra.mxu0 0
      %2280 = vmatprep.subr.bf16.mxu0 0
      %2281 = vmatpush1.bf16.msra.mxu0 0
      %2282 = vmatprep.subr.bf16.mxu0 0
      %2283 = vmatpush1.bf16.msra.mxu0 0
      %2284 = vmatprep.subr.bf16.mxu0 0
      %2285 = vmatpush1.bf16.msra.mxu0 0
      %2286 = vmatprep.subr.bf16.mxu0 0
      %2287 = vmatpush1.bf16.msra.mxu0 0
      %2288 = vmatprep.subr.bf16.mxu0 0
      %2289 = vmatpush1.bf16.msra.mxu0 0
      %2290 = vmatprep.subr.bf16.mxu0 0
      %2291 = vmatpush1.bf16.msra.mxu0 0
      %2292 = vmatprep.subr.bf16.mxu0 0
      %2293 = vmatpush1.bf16.msra.mxu0 0
      %2294 = vmatprep.subr.bf16.mxu0 0
      %2295 = vmatpush1.bf16.msra.mxu0 0
      %2296 = vmatprep.subr.bf16.mxu0 0
      %2297 = vmatpush1.bf16.msra.mxu0 0
      %2298 = vmatprep.subr.bf16.mxu0 0
      %2299 = vmatpush1.bf16.msra.mxu0 0
      %2300 = vmatprep.subr.bf16.mxu0 0
      %2301 = vmatpush1.bf16.msra.mxu0 0
      %2302 = vmatprep.subr.bf16.mxu0 0
      %2303 = vmatpush1.bf16.msra.mxu0 0
      %2304 = vmatprep.subr.bf16.mxu0 0
      %2305 = vmatpush1.bf16.msra.mxu0 0
      %2306 = vmatprep.subr.bf16.mxu0 0
      %2307 = vmatpush1.bf16.msra.mxu0 0
      %2308 = vmatprep.mubr.bf16.mxu0 0
      %2309 = vmatmul.mubr.bf16.gmra.mrb[0].mxu0 %v2271
      %v2310 = vpop.f32.mrb[0].mxu0
      %v2311 = vadd.f32 0.0, %v2310
      %v2312 = vpop.f32.mrb[0].mxu0
      %v2313 = vpop.f32.mrb[0].mxu0
      %v2314 = vpop.f32.mrb[0].mxu0
      %2315 = vdwg.mxu0
      %2316 = vrot.lane.b32.xlu0 %v2205, 120
      %v2317 = vpop.permute.xlu0 %2316
      %2318 = vrot.lane.b32.xlu0 %v2205, 88
      %v2319 = vpop.permute.xlu0 %2318
      %v2321 = vsel %vm1395, %v2317, 0
      %v2324 = vsel %vm1395, %v2319, 0
      %2326 = vmatprep.subr.bf16.mxu0 0
      %2327 = vmatpush1.bf16.xpose.msra.mxu0 %v2324
      %2328 = vmatprep.subr.bf16.mxu0 0
      %2329 = vmatpush1.bf16.xpose.msra.mxu0 0
      %2330 = vmatprep.subr.bf16.mxu0 0
      %2331 = vmatpush1.bf16.xpose.msra.mxu0 0
      %2332 = vmatprep.subr.bf16.mxu0 0
      %2333 = vmatpush1.bf16.xpose.msra.mxu0 0
      %2334 = vmatprep.subr.bf16.mxu0 0
      %2335 = vmatpush1.bf16.xpose.msra.mxu0 0
      %2336 = vmatprep.subr.bf16.mxu0 0
      %2337 = vmatpush1.bf16.xpose.msra.mxu0 0
      %2338 = vmatprep.subr.bf16.mxu0 0
      %2339 = vmatpush1.bf16.xpose.msra.mxu0 0
      %2340 = vmatprep.subr.bf16.mxu0 0
      %2341 = vmatpush1.bf16.xpose.msra.mxu0 0
      %2342 = vmatprep.subr.bf16.mxu0 0
      %2343 = vmatpush1.bf16.xpose.msra.mxu0 0
      %2344 = vmatprep.subr.bf16.mxu0 0
      %2345 = vmatpush1.bf16.xpose.msra.mxu0 0
      %2346 = vmatprep.subr.bf16.mxu0 0
      %2347 = vmatpush1.bf16.xpose.msra.mxu0 0
      %2348 = vmatprep.subr.bf16.mxu0 0
      %2349 = vmatpush1.bf16.xpose.msra.mxu0 0
      %2350 = vmatprep.subr.bf16.mxu0 0
      %2351 = vmatpush1.bf16.xpose.msra.mxu0 0
      %2352 = vmatprep.subr.bf16.mxu0 0
      %2353 = vmatpush1.bf16.xpose.msra.mxu0 0
      %2354 = vmatprep.subr.bf16.mxu0 0
      %2355 = vmatpush1.bf16.xpose.msra.mxu0 0
      %2356 = vmatprep.subr.bf16.mxu0 0
      %2357 = vmatpush1.bf16.xpose.msra.mxu0 0
      %2358 = vmatprep.mubr.bf16.mxu0 0
      %2359 = vmatmul.mubr.bf16.gmra.mrb[0].mxu0 %v2321
      %v2360 = vpop.f32.mrb[0].mxu0
      %v2361 = vadd.f32 0.0, %v2360
      %v2362 = vpop.f32.mrb[0].mxu0
      %v2363 = vpop.f32.mrb[0].mxu0
      %v2364 = vpop.f32.mrb[0].mxu0
      %2365 = vdwg.mxu0
      %v2366 = vmul.f32 %v2361, 0.35355338
      %v2367 = vsel %vm1395, %v2366, -inf
      %2368 = vmax.xlane.f32.xlu0 %v2367
      %v2369 = vpop.xlane.xlu0 %2368
      %v2370 = vsub.f32 %v2366, %v2369
      %v2371 = vmul.f32 %v2370, 1.442695
      %v2372 = vpow.pop %v2371
      %v2373 = vsel %vm1395, %v2372, 0.0
      %2374 = vadd.xlane.f32.xlu0 %v2373
      %v2375 = vpop.xlane.xlu0 %2374
      %v2376 = vrcp.pop %v2375
      %v2377 = vmul.f32 %v2372, %v2376
      %v2378 = vpack.c.bf16 %v2377, %v2377
      %2379 = vrot.lane.b32.xlu0 %v2205, 56
      %v2380 = vpop.permute.xlu0 %2379
      %v2382 = vsel %vm1395, %v2378, 0
      %v2385 = vsel %vm1460, %v2380, 0
      %2387 = vmatprep.subr.bf16.mxu0 0
      %2388 = vmatpush1.bf16.msra.mxu0 %v2385
      %2389 = vmatprep.subr.bf16.mxu0 0
      %2390 = vmatpush1.bf16.msra.mxu0 0
      %2391 = vmatprep.subr.bf16.mxu0 0
      %2392 = vmatpush1.bf16.msra.mxu0 0
      %2393 = vmatprep.subr.bf16.mxu0 0
      %2394 = vmatpush1.bf16.msra.mxu0 0
      %2395 = vmatprep.subr.bf16.mxu0 0
      %2396 = vmatpush1.bf16.msra.mxu0 0
      %2397 = vmatprep.subr.bf16.mxu0 0
      %2398 = vmatpush1.bf16.msra.mxu0 0
      %2399 = vmatprep.subr.bf16.mxu0 0
      %2400 = vmatpush1.bf16.msra.mxu0 0
      %2401 = vmatprep.subr.bf16.mxu0 0
      %2402 = vmatpush1.bf16.msra.mxu0 0
      %2403 = vmatprep.subr.bf16.mxu0 0
      %2404 = vmatpush1.bf16.msra.mxu0 0
      %2405 = vmatprep.subr.bf16.mxu0 0
      %2406 = vmatpush1.bf16.msra.mxu0 0
      %2407 = vmatprep.subr.bf16.mxu0 0
      %2408 = vmatpush1.bf16.msra.mxu0 0
      %2409 = vmatprep.subr.bf16.mxu0 0
      %2410 = vmatpush1.bf16.msra.mxu0 0
      %2411 = vmatprep.subr.bf16.mxu0 0
      %2412 = vmatpush1.bf16.msra.mxu0 0
      %2413 = vmatprep.subr.bf16.mxu0 0
      %2414 = vmatpush1.bf16.msra.mxu0 0
      %2415 = vmatprep.subr.bf16.mxu0 0
      %2416 = vmatpush1.bf16.msra.mxu0 0
      %2417 = vmatprep.subr.bf16.mxu0 0
      %2418 = vmatpush1.bf16.msra.mxu0 0
      %2419 = vmatprep.mubr.bf16.mxu0 0
      %2420 = vmatmul.mubr.bf16.gmra.mrb[0].mxu0 %v2382
      %v2421 = vpop.f32.mrb[0].mxu0
      %v2422 = vadd.f32 0.0, %v2421
      %v2423 = vpop.f32.mrb[0].mxu0
      %v2424 = vpop.f32.mrb[0].mxu0
      %v2425 = vpop.f32.mrb[0].mxu0
      %2426 = vdwg.mxu0
      %2427 = vrot.lane.b32.xlu0 %v2205, 112
      %v2428 = vpop.permute.xlu0 %2427
      %2429 = vrot.lane.b32.xlu0 %v2205, 80
      %v2430 = vpop.permute.xlu0 %2429
      %v2432 = vsel %vm1395, %v2428, 0
      %v2435 = vsel %vm1395, %v2430, 0
      %2437 = vmatprep.subr.bf16.mxu0 0
      %2438 = vmatpush1.bf16.xpose.msra.mxu0 %v2435
      %2439 = vmatprep.subr.bf16.mxu0 0
      %2440 = vmatpush1.bf16.xpose.msra.mxu0 0
      %2441 = vmatprep.subr.bf16.mxu0 0
      %2442 = vmatpush1.bf16.xpose.msra.mxu0 0
      %2443 = vmatprep.subr.bf16.mxu0 0
      %2444 = vmatpush1.bf16.xpose.msra.mxu0 0
      %2445 = vmatprep.subr.bf16.mxu0 0
      %2446 = vmatpush1.bf16.xpose.msra.mxu0 0
      %2447 = vmatprep.subr.bf16.mxu0 0
      %2448 = vmatpush1.bf16.xpose.msra.mxu0 0
      %2449 = vmatprep.subr.bf16.mxu0 0
      %2450 = vmatpush1.bf16.xpose.msra.mxu0 0
      %2451 = vmatprep.subr.bf16.mxu0 0
      %2452 = vmatpush1.bf16.xpose.msra.mxu0 0
      %2453 = vmatprep.subr.bf16.mxu0 0
      %2454 = vmatpush1.bf16.xpose.msra.mxu0 0
      %2455 = vmatprep.subr.bf16.mxu0 0
      %2456 = vmatpush1.bf16.xpose.msra.mxu0 0
      %2457 = vmatprep.subr.bf16.mxu0 0
      %2458 = vmatpush1.bf16.xpose.msra.mxu0 0
      %2459 = vmatprep.subr.bf16.mxu0 0
      %2460 = vmatpush1.bf16.xpose.msra.mxu0 0
      %2461 = vmatprep.subr.bf16.mxu0 0
      %2462 = vmatpush1.bf16.xpose.msra.mxu0 0
      %2463 = vmatprep.subr.bf16.mxu0 0
      %2464 = vmatpush1.bf16.xpose.msra.mxu0 0
      %2465 = vmatprep.subr.bf16.mxu0 0
      %2466 = vmatpush1.bf16.xpose.msra.mxu0 0
      %2467 = vmatprep.subr.bf16.mxu0 0
      %2468 = vmatpush1.bf16.xpose.msra.mxu0 0
      %2469 = vmatprep.mubr.bf16.mxu0 0
      %2470 = vmatmul.mubr.bf16.gmra.mrb[0].mxu0 %v2432
      %v2471 = vpop.f32.mrb[0].mxu0
      %v2472 = vadd.f32 0.0, %v2471
      %v2473 = vpop.f32.mrb[0].mxu0
      %v2474 = vpop.f32.mrb[0].mxu0
      %v2475 = vpop.f32.mrb[0].mxu0
      %2476 = vdwg.mxu0
      %v2477 = vmul.f32 %v2472, 0.35355338
      %v2478 = vsel %vm1395, %v2477, -inf
      %2479 = vmax.xlane.f32.xlu0 %v2478
      %v2480 = vpop.xlane.xlu0 %2479
      %v2481 = vsub.f32 %v2477, %v2480
      %v2482 = vmul.f32 %v2481, 1.442695
      %v2483 = vpow.pop %v2482
      %v2484 = vsel %vm1395, %v2483, 0.0
      %2485 = vadd.xlane.f32.xlu0 %v2484
      %v2486 = vpop.xlane.xlu0 %2485
      %v2487 = vrcp.pop %v2486
      %v2488 = vmul.f32 %v2483, %v2487
      %v2489 = vpack.c.bf16 %v2488, %v2488
      %2490 = vrot.lane.b32.xlu0 %v2205, 48
      %v2491 = vpop.permute.xlu0 %2490
      %v2493 = vsel %vm1395, %v2489, 0
      %v2496 = vsel %vm1460, %v2491, 0
      %2498 = vmatprep.subr.bf16.mxu0 0
      %2499 = vmatpush1.bf16.msra.mxu0 %v2496
      %2500 = vmatprep.subr.bf16.mxu0 0
      %2501 = vmatpush1.bf16.msra.mxu0 0
      %2502 = vmatprep.subr.bf16.mxu0 0
      %2503 = vmatpush1.bf16.msra.mxu0 0
      %2504 = vmatprep.subr.bf16.mxu0 0
      %2505 = vmatpush1.bf16.msra.mxu0 0
      %2506 = vmatprep.subr.bf16.mxu0 0
      %2507 = vmatpush1.bf16.msra.mxu0 0
      %2508 = vmatprep.subr.bf16.mxu0 0
      %2509 = vmatpush1.bf16.msra.mxu0 0
      %2510 = vmatprep.subr.bf16.mxu0 0
      %2511 = vmatpush1.bf16.msra.mxu0 0
      %2512 = vmatprep.subr.bf16.mxu0 0
      %2513 = vmatpush1.bf16.msra.mxu0 0
      %2514 = vmatprep.subr.bf16.mxu0 0
      %2515 = vmatpush1.bf16.msra.mxu0 0
      %2516 = vmatprep.subr.bf16.mxu0 0
      %2517 = vmatpush1.bf16.msra.mxu0 0
      %2518 = vmatprep.subr.bf16.mxu0 0
      %2519 = vmatpush1.bf16.msra.mxu0 0
      %2520 = vmatprep.subr.bf16.mxu0 0
      %2521 = vmatpush1.bf16.msra.mxu0 0
      %2522 = vmatprep.subr.bf16.mxu0 0
      %2523 = vmatpush1.bf16.msra.mxu0 0
      %2524 = vmatprep.subr.bf16.mxu0 0
      %2525 = vmatpush1.bf16.msra.mxu0 0
      %2526 = vmatprep.subr.bf16.mxu0 0
      %2527 = vmatpush1.bf16.msra.mxu0 0
      %2528 = vmatprep.subr.bf16.mxu0 0
      %2529 = vmatpush1.bf16.msra.mxu0 0
      %2530 = vmatprep.mubr.bf16.mxu0 0
      %2531 = vmatmul.mubr.bf16.gmra.mrb[0].mxu0 %v2493
      %v2532 = vpop.f32.mrb[0].mxu0
      %v2533 = vadd.f32 0.0, %v2532
      %v2534 = vpop.f32.mrb[0].mxu0
      %v2535 = vpop.f32.mrb[0].mxu0
      %v2536 = vpop.f32.mrb[0].mxu0
      %2537 = vdwg.mxu0
      %2538 = vrot.lane.b32.xlu0 %v2205, 104
      %v2539 = vpop.permute.xlu0 %2538
      %2540 = vrot.lane.b32.xlu0 %v2205, 72
      %v2541 = vpop.permute.xlu0 %2540
      %v2543 = vsel %vm1395, %v2539, 0
      %v2546 = vsel %vm1395, %v2541, 0
      %2548 = vmatprep.subr.bf16.mxu0 0
      %2549 = vmatpush1.bf16.xpose.msra.mxu0 %v2546
      %2550 = vmatprep.subr.bf16.mxu0 0
      %2551 = vmatpush1.bf16.xpose.msra.mxu0 0
      %2552 = vmatprep.subr.bf16.mxu0 0
      %2553 = vmatpush1.bf16.xpose.msra.mxu0 0
      %2554 = vmatprep.subr.bf16.mxu0 0
      %2555 = vmatpush1.bf16.xpose.msra.mxu0 0
      %2556 = vmatprep.subr.bf16.mxu0 0
      %2557 = vmatpush1.bf16.xpose.msra.mxu0 0
      %2558 = vmatprep.subr.bf16.mxu0 0
      %2559 = vmatpush1.bf16.xpose.msra.mxu0 0
      %2560 = vmatprep.subr.bf16.mxu0 0
      %2561 = vmatpush1.bf16.xpose.msra.mxu0 0
      %2562 = vmatprep.subr.bf16.mxu0 0
      %2563 = vmatpush1.bf16.xpose.msra.mxu0 0
      %2564 = vmatprep.subr.bf16.mxu0 0
      %2565 = vmatpush1.bf16.xpose.msra.mxu0 0
      %2566 = vmatprep.subr.bf16.mxu0 0
      %2567 = vmatpush1.bf16.xpose.msra.mxu0 0
      %2568 = vmatprep.subr.bf16.mxu0 0
      %2569 = vmatpush1.bf16.xpose.msra.mxu0 0
      %2570 = vmatprep.subr.bf16.mxu0 0
      %2571 = vmatpush1.bf16.xpose.msra.mxu0 0
      %2572 = vmatprep.subr.bf16.mxu0 0
      %2573 = vmatpush1.bf16.xpose.msra.mxu0 0
      %2574 = vmatprep.subr.bf16.mxu0 0
      %2575 = vmatpush1.bf16.xpose.msra.mxu0 0
      %2576 = vmatprep.subr.bf16.mxu0 0
      %2577 = vmatpush1.bf16.xpose.msra.mxu0 0
      %2578 = vmatprep.subr.bf16.mxu0 0
      %2579 = vmatpush1.bf16.xpose.msra.mxu0 0
      %2580 = vmatprep.mubr.bf16.mxu0 0
      %2581 = vmatmul.mubr.bf16.gmra.mrb[0].mxu0 %v2543
      %v2582 = vpop.f32.mrb[0].mxu0
      %v2583 = vadd.f32 0.0, %v2582
      %v2584 = vpop.f32.mrb[0].mxu0
      %v2585 = vpop.f32.mrb[0].mxu0
      %v2586 = vpop.f32.mrb[0].mxu0
      %2587 = vdwg.mxu0
      %v2588 = vmul.f32 %v2583, 0.35355338
      %v2589 = vsel %vm1395, %v2588, -inf
      %2590 = vmax.xlane.f32.xlu0 %v2589
      %v2591 = vpop.xlane.xlu0 %2590
      %v2592 = vsub.f32 %v2588, %v2591
      %v2593 = vmul.f32 %v2592, 1.442695
      %v2594 = vpow.pop %v2593
      %v2595 = vsel %vm1395, %v2594, 0.0
      %2596 = vadd.xlane.f32.xlu0 %v2595
      %v2597 = vpop.xlane.xlu0 %2596
      %v2598 = vrcp.pop %v2597
      %v2599 = vmul.f32 %v2594, %v2598
      %v2600 = vpack.c.bf16 %v2599, %v2599
      %2601 = vrot.lane.b32.xlu0 %v2205, 40
      %v2602 = vpop.permute.xlu0 %2601
      %v2604 = vsel %vm1395, %v2600, 0
      %v2607 = vsel %vm1460, %v2602, 0
      %2609 = vmatprep.subr.bf16.mxu0 0
      %2610 = vmatpush1.bf16.msra.mxu0 %v2607
      %2611 = vmatprep.subr.bf16.mxu0 0
      %2612 = vmatpush1.bf16.msra.mxu0 0
      %2613 = vmatprep.subr.bf16.mxu0 0
      %2614 = vmatpush1.bf16.msra.mxu0 0
      %2615 = vmatprep.subr.bf16.mxu0 0
      %2616 = vmatpush1.bf16.msra.mxu0 0
      %2617 = vmatprep.subr.bf16.mxu0 0
      %2618 = vmatpush1.bf16.msra.mxu0 0
      %2619 = vmatprep.subr.bf16.mxu0 0
      %2620 = vmatpush1.bf16.msra.mxu0 0
      %2621 = vmatprep.subr.bf16.mxu0 0
      %2622 = vmatpush1.bf16.msra.mxu0 0
      %2623 = vmatprep.subr.bf16.mxu0 0
      %2624 = vmatpush1.bf16.msra.mxu0 0
      %2625 = vmatprep.subr.bf16.mxu0 0
      %2626 = vmatpush1.bf16.msra.mxu0 0
      %2627 = vmatprep.subr.bf16.mxu0 0
      %2628 = vmatpush1.bf16.msra.mxu0 0
      %2629 = vmatprep.subr.bf16.mxu0 0
      %2630 = vmatpush1.bf16.msra.mxu0 0
      %2631 = vmatprep.subr.bf16.mxu0 0
      %2632 = vmatpush1.bf16.msra.mxu0 0
      %2633 = vmatprep.subr.bf16.mxu0 0
      %2634 = vmatpush1.bf16.msra.mxu0 0
      %2635 = vmatprep.subr.bf16.mxu0 0
      %2636 = vmatpush1.bf16.msra.mxu0 0
      %2637 = vmatprep.subr.bf16.mxu0 0
      %2638 = vmatpush1.bf16.msra.mxu0 0
      %2639 = vmatprep.subr.bf16.mxu0 0
      %2640 = vmatpush1.bf16.msra.mxu0 0
      %2641 = vmatprep.mubr.bf16.mxu0 0
      %2642 = vmatmul.mubr.bf16.gmra.mrb[0].mxu0 %v2604
      %v2643 = vpop.f32.mrb[0].mxu0
      %v2644 = vadd.f32 0.0, %v2643
      %v2645 = vpop.f32.mrb[0].mxu0
      %v2646 = vpop.f32.mrb[0].mxu0
      %v2647 = vpop.f32.mrb[0].mxu0
      %2648 = vdwg.mxu0
      %2650 = vrot.lane.b32.xlu0 %v2422, 8
      %v2651 = vpop.permute.xlu0 %2650
      %2654 = vrot.lane.b32.xlu0 %v2533, 16
      %v2655 = vpop.permute.xlu0 %2654
      %2658 = vrot.lane.b32.xlu0 %v2644, 24
      %v2659 = vpop.permute.xlu0 %2658
      %v2661 = vsel %vm1395, %v2311, %v2651
      %v2662 = vsel %vm1850, %v2661, %v2655
      %v2663 = vsel %vm1852, %v2662, %v2659
      %v2664 = vpack.c.bf16 %v2663, %v2663
      %v2666 = vlaneseq
      %v2667 = vshrl.u32 %v2666, 7
      %v2668 = vsub.s32 0, %v2667
      %v2669 = vrot.slane %v2204, %v2668
      %v2675 = vunpack.c.l.b16 %v2199
      %v2676 = vunpack.c.l.b16 %v2200
      %v2677 = vunpack.c.l.b16 %v2201
      %v2678 = vunpack.c.l.b16 %v2202
      %v2679 = vpack.c.b16 %v2676, %v2675
      %v2680 = vpack.c.b16 %v2678, %v2677
      %v2684 = vsel %vm1342, %v2664, 0
      %2686 = vmatprep.subr.bf16.mxu0 0
      %2687 = vmatpush1.bf16.msra.mxu0 %v2679
      %2688 = vmatprep.subr.bf16.mxu0 0
      %2689 = vmatpush1.bf16.msra.mxu0 %v2680
      %2690 = vmatprep.subr.bf16.mxu0 0
      %2691 = vmatpush1.bf16.msra.mxu0 0
      %2692 = vmatprep.subr.bf16.mxu0 0
      %2693 = vmatpush1.bf16.msra.mxu0 0
      %2694 = vmatprep.subr.bf16.mxu0 0
      %2695 = vmatpush1.bf16.msra.mxu0 0
      %2696 = vmatprep.subr.bf16.mxu0 0
      %2697 = vmatpush1.bf16.msra.mxu0 0
      %2698 = vmatprep.subr.bf16.mxu0 0
      %2699 = vmatpush1.bf16.msra.mxu0 0
      %2700 = vmatprep.subr.bf16.mxu0 0
      %2701 = vmatpush1.bf16.msra.mxu0 0
      %2702 = vmatprep.subr.bf16.mxu0 0
      %2703 = vmatpush1.bf16.msra.mxu0 0
      %2704 = vmatprep.subr.bf16.mxu0 0
      %2705 = vmatpush1.bf16.msra.mxu0 0
      %2706 = vmatprep.subr.bf16.mxu0 0
      %2707 = vmatpush1.bf16.msra.mxu0 0
      %2708 = vmatprep.subr.bf16.mxu0 0
      %2709 = vmatpush1.bf16.msra.mxu0 0
      %2710 = vmatprep.subr.bf16.mxu0 0
      %2711 = vmatpush1.bf16.msra.mxu0 0
      %2712 = vmatprep.subr.bf16.mxu0 0
      %2713 = vmatpush1.bf16.msra.mxu0 0
      %2714 = vmatprep.subr.bf16.mxu0 0
      %2715 = vmatpush1.bf16.msra.mxu0 0
      %2716 = vmatprep.subr.bf16.mxu0 0
      %2717 = vmatpush1.bf16.msra.mxu0 0
      %2718 = vmatprep.mubr.bf16.mxu0 0
      %2719 = vmatmul.mubr.bf16.gmra.mrb[0].mxu0 %v2684
      %v2720 = vpop.f32.mrb[0].mxu0
      %v2721 = vadd.f32 %v2669, %v2720
      %v2722 = vpop.f32.mrb[0].mxu0
      %v2723 = vpop.f32.mrb[0].mxu0
      %v2724 = vpop.f32.mrb[0].mxu0
      %2725 = vdwg.mxu0
      %v2726 = vadd.f32 %v2128, %v2721
      %s2727 = scalar_lea.vmem %s23, 1
      %v2728 = vld [vmem:[%s2727] sm:$0x1]
      %s2729 = scalar_lea.vmem %s25, 1
      %v2730 = vld [vmem:[%s2729] sm:$0x1]
      %v2731 = vsel %vm1342, %v2726, 0.0
      %2732 = vadd.xlane.f32.xlu0 %v2731
      %v2733 = vpop.xlane.xlu0 %2732
      %v2734 = vmul.f32 %v2733, %v1922
      %v2735 = vsub.f32 %v2726, %v2734
      %v2736 = vmul.f32 %v2735, %v2735
      %v2737 = vsel %vm1342, %v2736, 0.0
      %2738 = vadd.xlane.f32.xlu0 %v2737
      %v2739 = vpop.xlane.xlu0 %2738
      %v2740 = vmul.f32 %v2739, %v1922
      %v2741 = vadd.f32 %v2740, 1e-05
      %v2742 = vrsqrt.pop %v2741
      %v2743 = vmul.f32 %v2735, %v2742
      %v2745 = vlaneseq
      %v2746 = vshrl.u32 %v2745, 7
      %v2747 = vsub.s32 0, %v2746
      %v2748 = vrot.slane %v2728, %v2747
      %v2750 = vmul.f32 %v2743, %v2748
      %v2752 = vlaneseq
      %v2753 = vshrl.u32 %v2752, 7
      %v2754 = vsub.s32 0, %v2753
      %v2755 = vrot.slane %v2730, %v2754
      %v2757 = vadd.f32 %v2750, %v2755
      %s2758 = scalar_lea.vmem %s15, 16
      %v2759 = vld [vmem:[%s2758] sm:$0xf]
      %v2760 = vld [vmem:[%s2758 + $0x4] sm:$0xf]
      %v2761 = vld [vmem:[%s2758 + $0x8] sm:$0xf]
      %v2762 = vld [vmem:[%s2758 + $0xc] sm:$0xf]
      %s2763 = scalar_lea.vmem %s17, 1
      %v2764 = vld [vmem:[%s2763] sm:$0x1]
      %v2765 = vpack.c.bf16 %v2757, %v2757
      %v2767 = vlaneseq
      %v2768 = vshrl.u32 %v2767, 7
      %v2769 = vsub.s32 0, %v2768
      %v2770 = vrot.slane %v2764, %v2769
      %v2776 = vunpack.c.l.b16 %v2759
      %v2777 = vunpack.c.l.b16 %v2760
      %v2778 = vunpack.c.l.b16 %v2761
      %v2779 = vunpack.c.l.b16 %v2762
      %v2780 = vpack.c.b16 %v2777, %v2776
      %v2781 = vpack.c.b16 %v2779, %v2778
      %v2785 = vsel %vm1342, %v2765, 0
      %2787 = vmatprep.subr.bf16.mxu0 0
      %2788 = vmatpush1.bf16.msra.mxu0 %v2780
      %2789 = vmatprep.subr.bf16.mxu0 0
      %2790 = vmatpush1.bf16.msra.mxu0 %v2781
      %2791 = vmatprep.subr.bf16.mxu0 0
      %2792 = vmatpush1.bf16.msra.mxu0 0
      %2793 = vmatprep.subr.bf16.mxu0 0
      %2794 = vmatpush1.bf16.msra.mxu0 0
      %2795 = vmatprep.subr.bf16.mxu0 0
      %2796 = vmatpush1.bf16.msra.mxu0 0
      %2797 = vmatprep.subr.bf16.mxu0 0
      %2798 = vmatpush1.bf16.msra.mxu0 0
      %2799 = vmatprep.subr.bf16.mxu0 0
      %2800 = vmatpush1.bf16.msra.mxu0 0
      %2801 = vmatprep.subr.bf16.mxu0 0
      %2802 = vmatpush1.bf16.msra.mxu0 0
      %2803 = vmatprep.subr.bf16.mxu0 0
      %2804 = vmatpush1.bf16.msra.mxu0 0
      %2805 = vmatprep.subr.bf16.mxu0 0
      %2806 = vmatpush1.bf16.msra.mxu0 0
      %2807 = vmatprep.subr.bf16.mxu0 0
      %2808 = vmatpush1.bf16.msra.mxu0 0
      %2809 = vmatprep.subr.bf16.mxu0 0
      %2810 = vmatpush1.bf16.msra.mxu0 0
      %2811 = vmatprep.subr.bf16.mxu0 0
      %2812 = vmatpush1.bf16.msra.mxu0 0
      %2813 = vmatprep.subr.bf16.mxu0 0
      %2814 = vmatpush1.bf16.msra.mxu0 0
      %2815 = vmatprep.subr.bf16.mxu0 0
      %2816 = vmatpush1.bf16.msra.mxu0 0
      %2817 = vmatprep.subr.bf16.mxu0 0
      %2818 = vmatpush1.bf16.msra.mxu0 0
      %2819 = vmatprep.mubr.bf16.mxu0 0
      %2820 = vmatmul.mubr.bf16.gmra.mrb[0].mxu0 %v2785
      %v2821 = vpop.f32.mrb[0].mxu0
      %v2822 = vadd.f32 %v2770, %v2821
      %v2823 = vpop.f32.mrb[0].mxu0
      %v2824 = vpop.f32.mrb[0].mxu0
      %v2825 = vpop.f32.mrb[0].mxu0
      %2826 = vdwg.mxu0
      %v2827 = vmax.f32 %v2822, 0.0
      %s2828 = scalar_lea.vmem %s19, 32
      %v2829 = vld [vmem:[%s2828] sm:$0xf]
      %v2830 = vld [vmem:[%s2828 + $0x4] sm:$0xf]
      %v2831 = vld [vmem:[%s2828 + $0x8] sm:$0xf]
      %v2832 = vld [vmem:[%s2828 + $0xc] sm:$0xf]
      %v2833 = vld [vmem:[%s2828 + $0x10] sm:$0xf]
      %v2834 = vld [vmem:[%s2828 + $0x14] sm:$0xf]
      %v2835 = vld [vmem:[%s2828 + $0x18] sm:$0xf]
      %v2836 = vld [vmem:[%s2828 + $0x1c] sm:$0xf]
      %s2837 = scalar_lea.vmem %s21, 1
      %v2838 = vld [vmem:[%s2837] sm:$0x1]
      %v2839 = vpack.c.bf16 %v2827, %v2827
      %v2841 = vlaneseq
      %v2842 = vshrl.u32 %v2841, 7
      %v2843 = vsub.s32 0, %v2842
      %v2844 = vrot.slane %v2838, %v2843
      %v2854 = vunpack.c.l.b16 %v2829
      %v2855 = vunpack.c.l.b16 %v2830
      %v2856 = vunpack.c.l.b16 %v2831
      %v2857 = vunpack.c.l.b16 %v2832
      %v2858 = vunpack.c.l.b16 %v2833
      %v2859 = vunpack.c.l.b16 %v2834
      %v2860 = vunpack.c.l.b16 %v2835
      %v2861 = vunpack.c.l.b16 %v2836
      %v2862 = vpack.c.b16 %v2855, %v2854
      %v2863 = vpack.c.b16 %v2857, %v2856
      %v2864 = vpack.c.b16 %v2859, %v2858
      %v2865 = vpack.c.b16 %v2861, %v2860
      %v2871 = vsel %vm2055, %v2839, 0
      %2873 = vmatprep.subr.bf16.mxu0 0
      %2874 = vmatpush1.bf16.msra.mxu0 %v2862
      %2875 = vmatprep.subr.bf16.mxu0 0
      %2876 = vmatpush1.bf16.msra.mxu0 %v2863
      %2877 = vmatprep.subr.bf16.mxu0 0
      %2878 = vmatpush1.bf16.msra.mxu0 %v2864
      %2879 = vmatprep.subr.bf16.mxu0 0
      %2880 = vmatpush1.bf16.msra.mxu0 %v2865
      %2881 = vmatprep.subr.bf16.mxu0 0
      %2882 = vmatpush1.bf16.msra.mxu0 0
      %2883 = vmatprep.subr.bf16.mxu0 0
      %2884 = vmatpush1.bf16.msra.mxu0 0
      %2885 = vmatprep.subr.bf16.mxu0 0
      %2886 = vmatpush1.bf16.msra.mxu0 0
      %2887 = vmatprep.subr.bf16.mxu0 0
      %2888 = vmatpush1.bf16.msra.mxu0 0
      %2889 = vmatprep.subr.bf16.mxu0 0
      %2890 = vmatpush1.bf16.msra.mxu0 0
      %2891 = vmatprep.subr.bf16.mxu0 0
      %2892 = vmatpush1.bf16.msra.mxu0 0
      %2893 = vmatprep.subr.bf16.mxu0 0
      %2894 = vmatpush1.bf16.msra.mxu0 0
      %2895 = vmatprep.subr.bf16.mxu0 0
      %2896 = vmatpush1.bf16.msra.mxu0 0
      %2897 = vmatprep.subr.bf16.mxu0 0
      %2898 = vmatpush1.bf16.msra.mxu0 0
      %2899 = vmatprep.subr.bf16.mxu0 0
      %2900 = vmatpush1.bf16.msra.mxu0 0
      %2901 = vmatprep.subr.bf16.mxu0 0
      %2902 = vmatpush1.bf16.msra.mxu0 0
      %2903 = vmatprep.subr.bf16.mxu0 0
      %2904 = vmatpush1.bf16.msra.mxu0 0
      %2905 = vmatprep.mubr.bf16.mxu0 0
      %2906 = vmatmul.mubr.bf16.gmra.mrb[0].mxu0 %v2871
      %v2907 = vpop.f32.mrb[0].mxu0
      %v2908 = vadd.f32 %v2844, %v2907
      %v2909 = vpop.f32.mrb[0].mxu0
      %v2910 = vpop.f32.mrb[0].mxu0
      %v2911 = vpop.f32.mrb[0].mxu0
      %2912 = vdwg.mxu0
      %v2913 = vadd.f32 %v2757, %v2908
      %s2914 = scalar_lea.vmem %s27, 1
      %v2915 = vld [vmem:[%s2914] sm:$0x1]
      %s2916 = scalar_lea.vmem %s29, 1
      %v2917 = vld [vmem:[%s2916] sm:$0x1]
      %v2918 = vsel %vm1342, %v2913, 0.0
      %2919 = vadd.xlane.f32.xlu0 %v2918
      %v2920 = vpop.xlane.xlu0 %2919
      %v2921 = vmul.f32 %v2920, %v1922
      %v2922 = vsub.f32 %v2913, %v2921
      %v2923 = vmul.f32 %v2922, %v2922
      %v2924 = vsel %vm1342, %v2923, 0.0
      %2925 = vadd.xlane.f32.xlu0 %v2924
      %v2926 = vpop.xlane.xlu0 %2925
      %v2927 = vmul.f32 %v2926, %v1922
      %v2928 = vadd.f32 %v2927, 1e-05
      %v2929 = vrsqrt.pop %v2928
      %v2930 = vmul.f32 %v2922, %v2929
      %v2932 = vlaneseq
      %v2933 = vshrl.u32 %v2932, 7
      %v2934 = vsub.s32 0, %v2933
      %v2935 = vrot.slane %v2915, %v2934
      %v2937 = vmul.f32 %v2930, %v2935
      %v2939 = vlaneseq
      %v2940 = vshrl.u32 %v2939, 7
      %v2941 = vsub.s32 0, %v2940
      %v2942 = vrot.slane %v2917, %v2941
      %v2944 = vadd.f32 %v2937, %v2942
      %v2945 = vld [vmem:[%s71] sm:$0x1]
      %v2946 = vld [vmem:[%s73] sm:$0x1]
      %v2947 = vsel %vm1342, %v2944, 0.0
      %2948 = vadd.xlane.f32.xlu0 %v2947
      %v2949 = vpop.xlane.xlu0 %2948
      %v2950 = vmul.f32 %v2949, %v1922
      %v2951 = vsub.f32 %v2944, %v2950
      %v2952 = vmul.f32 %v2951, %v2951
      %v2953 = vsel %vm1342, %v2952, 0.0
      %2954 = vadd.xlane.f32.xlu0 %v2953
      %v2955 = vpop.xlane.xlu0 %2954
      %v2956 = vmul.f32 %v2955, %v1922
      %v2957 = vadd.f32 %v2956, 1e-05
      %v2958 = vrsqrt.pop %v2957
      %v2959 = vmul.f32 %v2951, %v2958
      %v2961 = vlaneseq
      %v2962 = vshrl.u32 %v2961, 7
      %v2963 = vsub.s32 0, %v2962
      %v2964 = vrot.slane %v2945, %v2963
      %v2966 = vmul.f32 %v2959, %v2964
      %v2968 = vlaneseq
      %v2969 = vshrl.u32 %v2968, 7
      %v2970 = vsub.s32 0, %v2969
      %v2971 = vrot.slane %v2946, %v2970
      %v2973 = vadd.f32 %v2966, %v2971
      %v2974 = vld [vmem:[%s1264] sm:$0xff]
      %v2975 = vld [vmem:[%s1264 + $0x8] sm:$0xff]
      %v2976 = vld [vmem:[%s1264 + $0x10] sm:$0xff]
      %v2977 = vld [vmem:[%s1264 + $0x18] sm:$0xff]
      %2978 = vxpose.xlu0.b32.start [1/16] %v2974, 128
      %2979 = vxpose.xlu0.b32.cont [2/16] %v2975, 128
      %2980 = vxpose.xlu0.b32.cont [3/16] %v2976, 128
      %2981 = vxpose.xlu0.b32.cont [4/16] %v2977, 128
      %2982 = vxpose.xlu0.b32.cont [5/16] 0.0, 128
      %2983 = vxpose.xlu0.b32.cont [6/16] 0.0, 128
      %2984 = vxpose.xlu0.b32.cont [7/16] 0.0, 128
      %2985 = vxpose.xlu0.b32.cont [8/16] 0.0, 128
      %2986 = vxpose.xlu0.b32.cont [9/16] 0.0, 128
      %2987 = vxpose.xlu0.b32.cont [10/16] 0.0, 128
      %2988 = vxpose.xlu0.b32.cont [11/16] 0.0, 128
      %2989 = vxpose.xlu0.b32.cont [12/16] 0.0, 128
      %2990 = vxpose.xlu0.b32.cont [13/16] 0.0, 128
      %2991 = vxpose.xlu0.b32.cont [14/16] 0.0, 128
      %2992 = vxpose.xlu0.b32.cont [15/16] 0.0, 128
      %2993 = vxpose.xlu0.b32.end [16/16] 0.0, 128
      %v2994 = vpop.trf.xlu0
      %v2995 = vpop.trf.xlu0
      %v2996 = vpop.trf.xlu0
      %v2997 = vpop.trf.xlu0
      %v2998 = vpop.trf.xlu0
      %v2999 = vpop.trf.xlu0
      %v3000 = vpop.trf.xlu0
      %v3001 = vpop.trf.xlu0
      %v3002 = vpop.trf.xlu0
      %v3003 = vpop.trf.xlu0
      %v3004 = vpop.trf.xlu0
      %v3005 = vpop.trf.xlu0
      %v3006 = vpop.trf.xlu0
      %v3007 = vpop.trf.xlu0
      %v3008 = vpop.trf.xlu0
      %v3009 = vpop.trf.xlu0
      %v3010 = vadd.f32 %v2994, %v1315
      %v3011 = vld [vmem:[%s31] sm:$0xf]
      %v3012 = vld [vmem:[%s31 + $0x4] sm:$0xf]
      %v3013 = vld [vmem:[%s31 + $0x8] sm:$0xf]
      %v3014 = vld [vmem:[%s31 + $0xc] sm:$0xf]
      %v3015 = vld [vmem:[%s33] sm:$0x1]
      %v3016 = vpack.c.bf16 %v3010, %v3010
      %v3018 = vlaneseq
      %v3019 = vshrl.u32 %v3018, 7
      %v3020 = vsub.s32 0, %v3019
      %v3021 = vrot.slane %v3015, %v3020
      %v3027 = vunpack.c.l.b16 %v3011
      %v3028 = vunpack.c.l.b16 %v3012
      %v3029 = vunpack.c.l.b16 %v3013
      %v3030 = vunpack.c.l.b16 %v3014
      %v3031 = vpack.c.b16 %v3028, %v3027
      %v3032 = vpack.c.b16 %v3030, %v3029
      %v3036 = vsel %vm1342, %v3016, 0
      %3038 = vmatprep.subr.bf16.mxu0 0
      %3039 = vmatpush1.bf16.msra.mxu0 %v3031
      %3040 = vmatprep.subr.bf16.mxu0 0
      %3041 = vmatpush1.bf16.msra.mxu0 %v3032
      %3042 = vmatprep.subr.bf16.mxu0 0
      %3043 = vmatpush1.bf16.msra.mxu0 0
      %3044 = vmatprep.subr.bf16.mxu0 0
      %3045 = vmatpush1.bf16.msra.mxu0 0
      %3046 = vmatprep.subr.bf16.mxu0 0
      %3047 = vmatpush1.bf16.msra.mxu0 0
      %3048 = vmatprep.subr.bf16.mxu0 0
      %3049 = vmatpush1.bf16.msra.mxu0 0
      %3050 = vmatprep.subr.bf16.mxu0 0
      %3051 = vmatpush1.bf16.msra.mxu0 0
      %3052 = vmatprep.subr.bf16.mxu0 0
      %3053 = vmatpush1.bf16.msra.mxu0 0
      %3054 = vmatprep.subr.bf16.mxu0 0
      %3055 = vmatpush1.bf16.msra.mxu0 0
      %3056 = vmatprep.subr.bf16.mxu0 0
      %3057 = vmatpush1.bf16.msra.mxu0 0
      %3058 = vmatprep.subr.bf16.mxu0 0
      %3059 = vmatpush1.bf16.msra.mxu0 0
      %3060 = vmatprep.subr.bf16.mxu0 0
      %3061 = vmatpush1.bf16.msra.mxu0 0
      %3062 = vmatprep.subr.bf16.mxu0 0
      %3063 = vmatpush1.bf16.msra.mxu0 0
      %3064 = vmatprep.subr.bf16.mxu0 0
      %3065 = vmatpush1.bf16.msra.mxu0 0
      %3066 = vmatprep.subr.bf16.mxu0 0
      %3067 = vmatpush1.bf16.msra.mxu0 0
      %3068 = vmatprep.subr.bf16.mxu0 0
      %3069 = vmatpush1.bf16.msra.mxu0 0
      %3070 = vmatprep.mubr.bf16.mxu0 0
      %3071 = vmatmul.mubr.bf16.gmra.mrb[0].mxu0 %v3036
      %v3072 = vpop.f32.mrb[0].mxu0
      %v3073 = vadd.f32 %v3021, %v3072
      %v3074 = vpop.f32.mrb[0].mxu0
      %v3075 = vpop.f32.mrb[0].mxu0
      %v3076 = vpop.f32.mrb[0].mxu0
      %3077 = vdwg.mxu0
      %v3078 = vld [vmem:[%s35] sm:$0xf]
      %v3079 = vld [vmem:[%s35 + $0x4] sm:$0xf]
      %v3080 = vld [vmem:[%s35 + $0x8] sm:$0xf]
      %v3081 = vld [vmem:[%s35 + $0xc] sm:$0xf]
      %v3082 = vld [vmem:[%s37] sm:$0x1]
      %v3083 = vpack.c.bf16 %v3073, %v3073
      %3085 = vrot.lane.b32.xlu0 %v3083, 96
      %v3086 = vpop.permute.xlu0 %3085
      %v3088 = vsel %vm1395, %v3083, 0
      %v3091 = vsel %vm1395, %v3086, 0
      %3093 = vmatprep.subr.bf16.mxu0 0
      %3094 = vmatpush1.bf16.xpose.msra.mxu0 %v3091
      %3095 = vmatprep.subr.bf16.mxu0 0
      %3096 = vmatpush1.bf16.xpose.msra.mxu0 0
      %3097 = vmatprep.subr.bf16.mxu0 0
      %3098 = vmatpush1.bf16.xpose.msra.mxu0 0
      %3099 = vmatprep.subr.bf16.mxu0 0
      %3100 = vmatpush1.bf16.xpose.msra.mxu0 0
      %3101 = vmatprep.subr.bf16.mxu0 0
      %3102 = vmatpush1.bf16.xpose.msra.mxu0 0
      %3103 = vmatprep.subr.bf16.mxu0 0
      %3104 = vmatpush1.bf16.xpose.msra.mxu0 0
      %3105 = vmatprep.subr.bf16.mxu0 0
      %3106 = vmatpush1.bf16.xpose.msra.mxu0 0
      %3107 = vmatprep.subr.bf16.mxu0 0
      %3108 = vmatpush1.bf16.xpose.msra.mxu0 0
      %3109 = vmatprep.subr.bf16.mxu0 0
      %3110 = vmatpush1.bf16.xpose.msra.mxu0 0
      %3111 = vmatprep.subr.bf16.mxu0 0
      %3112 = vmatpush1.bf16.xpose.msra.mxu0 0
      %3113 = vmatprep.subr.bf16.mxu0 0
      %3114 = vmatpush1.bf16.xpose.msra.mxu0 0
      %3115 = vmatprep.subr.bf16.mxu0 0
      %3116 = vmatpush1.bf16.xpose.msra.mxu0 0
      %3117 = vmatprep.subr.bf16.mxu0 0
      %3118 = vmatpush1.bf16.xpose.msra.mxu0 0
      %3119 = vmatprep.subr.bf16.mxu0 0
      %3120 = vmatpush1.bf16.xpose.msra.mxu0 0
      %3121 = vmatprep.subr.bf16.mxu0 0
      %3122 = vmatpush1.bf16.xpose.msra.mxu0 0
      %3123 = vmatprep.subr.bf16.mxu0 0
      %3124 = vmatpush1.bf16.xpose.msra.mxu0 0
      %3125 = vmatprep.mubr.bf16.mxu0 0
      %3126 = vmatmul.mubr.bf16.gmra.mrb[0].mxu0 %v3088
      %v3127 = vpop.f32.mrb[0].mxu0
      %v3128 = vadd.f32 0.0, %v3127
      %v3129 = vpop.f32.mrb[0].mxu0
      %v3130 = vpop.f32.mrb[0].mxu0
      %v3131 = vpop.f32.mrb[0].mxu0
      %3132 = vdwg.mxu0
      %v3133 = vmul.f32 %v3128, 0.35355338
      %v3134 = vsel %vm1395, %v3133, -inf
      %3135 = vmax.xlane.f32.xlu0 %v3134
      %v3136 = vpop.xlane.xlu0 %3135
      %v3137 = vsub.f32 %v3133, %v3136
      %v3138 = vmul.f32 %v3137, 1.442695
      %v3139 = vpow.pop %v3138
      %v3140 = vsel %vm1395, %v3139, 0.0
      %3141 = vadd.xlane.f32.xlu0 %v3140
      %v3142 = vpop.xlane.xlu0 %3141
      %v3143 = vrcp.pop %v3142
      %v3144 = vmul.f32 %v3139, %v3143
      %v3145 = vpack.c.bf16 %v3144, %v3144
      %3146 = vrot.lane.b32.xlu0 %v3083, 64
      %v3147 = vpop.permute.xlu0 %3146
      %v3149 = vsel %vm1395, %v3145, 0
      %v3152 = vsel %vm1460, %v3147, 0
      %3154 = vmatprep.subr.bf16.mxu0 0
      %3155 = vmatpush1.bf16.msra.mxu0 %v3152
      %3156 = vmatprep.subr.bf16.mxu0 0
      %3157 = vmatpush1.bf16.msra.mxu0 0
      %3158 = vmatprep.subr.bf16.mxu0 0
      %3159 = vmatpush1.bf16.msra.mxu0 0
      %3160 = vmatprep.subr.bf16.mxu0 0
      %3161 = vmatpush1.bf16.msra.mxu0 0
      %3162 = vmatprep.subr.bf16.mxu0 0
      %3163 = vmatpush1.bf16.msra.mxu0 0
      %3164 = vmatprep.subr.bf16.mxu0 0
      %3165 = vmatpush1.bf16.msra.mxu0 0
      %3166 = vmatprep.subr.bf16.mxu0 0
      %3167 = vmatpush1.bf16.msra.mxu0 0
      %3168 = vmatprep.subr.bf16.mxu0 0
      %3169 = vmatpush1.bf16.msra.mxu0 0
      %3170 = vmatprep.subr.bf16.mxu0 0
      %3171 = vmatpush1.bf16.msra.mxu0 0
      %3172 = vmatprep.subr.bf16.mxu0 0
      %3173 = vmatpush1.bf16.msra.mxu0 0
      %3174 = vmatprep.subr.bf16.mxu0 0
      %3175 = vmatpush1.bf16.msra.mxu0 0
      %3176 = vmatprep.subr.bf16.mxu0 0
      %3177 = vmatpush1.bf16.msra.mxu0 0
      %3178 = vmatprep.subr.bf16.mxu0 0
      %3179 = vmatpush1.bf16.msra.mxu0 0
      %3180 = vmatprep.subr.bf16.mxu0 0
      %3181 = vmatpush1.bf16.msra.mxu0 0
      %3182 = vmatprep.subr.bf16.mxu0 0
      %3183 = vmatpush1.bf16.msra.mxu0 0
      %3184 = vmatprep.subr.bf16.mxu0 0
      %3185 = vmatpush1.bf16.msra.mxu0 0
      %3186 = vmatprep.mubr.bf16.mxu0 0
      %3187 = vmatmul.mubr.bf16.gmra.mrb[0].mxu0 %v3149
      %v3188 = vpop.f32.mrb[0].mxu0
      %v3189 = vadd.f32 0.0, %v3188
      %v3190 = vpop.f32.mrb[0].mxu0
      %v3191 = vpop.f32.mrb[0].mxu0
      %v3192 = vpop.f32.mrb[0].mxu0
      %3193 = vdwg.mxu0
      %3194 = vrot.lane.b32.xlu0 %v3083, 120
      %v3195 = vpop.permute.xlu0 %3194
      %3196 = vrot.lane.b32.xlu0 %v3083, 88
      %v3197 = vpop.permute.xlu0 %3196
      %v3199 = vsel %vm1395, %v3195, 0
      %v3202 = vsel %vm1395, %v3197, 0
      %3204 = vmatprep.subr.bf16.mxu0 0
      %3205 = vmatpush1.bf16.xpose.msra.mxu0 %v3202
      %3206 = vmatprep.subr.bf16.mxu0 0
      %3207 = vmatpush1.bf16.xpose.msra.mxu0 0
      %3208 = vmatprep.subr.bf16.mxu0 0
      %3209 = vmatpush1.bf16.xpose.msra.mxu0 0
      %3210 = vmatprep.subr.bf16.mxu0 0
      %3211 = vmatpush1.bf16.xpose.msra.mxu0 0
      %3212 = vmatprep.subr.bf16.mxu0 0
      %3213 = vmatpush1.bf16.xpose.msra.mxu0 0
      %3214 = vmatprep.subr.bf16.mxu0 0
      %3215 = vmatpush1.bf16.xpose.msra.mxu0 0
      %3216 = vmatprep.subr.bf16.mxu0 0
      %3217 = vmatpush1.bf16.xpose.msra.mxu0 0
      %3218 = vmatprep.subr.bf16.mxu0 0
      %3219 = vmatpush1.bf16.xpose.msra.mxu0 0
      %3220 = vmatprep.subr.bf16.mxu0 0
      %3221 = vmatpush1.bf16.xpose.msra.mxu0 0
      %3222 = vmatprep.subr.bf16.mxu0 0
      %3223 = vmatpush1.bf16.xpose.msra.mxu0 0
      %3224 = vmatprep.subr.bf16.mxu0 0
      %3225 = vmatpush1.bf16.xpose.msra.mxu0 0
      %3226 = vmatprep.subr.bf16.mxu0 0
      %3227 = vmatpush1.bf16.xpose.msra.mxu0 0
      %3228 = vmatprep.subr.bf16.mxu0 0
      %3229 = vmatpush1.bf16.xpose.msra.mxu0 0
      %3230 = vmatprep.subr.bf16.mxu0 0
      %3231 = vmatpush1.bf16.xpose.msra.mxu0 0
      %3232 = vmatprep.subr.bf16.mxu0 0
      %3233 = vmatpush1.bf16.xpose.msra.mxu0 0
      %3234 = vmatprep.subr.bf16.mxu0 0
      %3235 = vmatpush1.bf16.xpose.msra.mxu0 0
      %3236 = vmatprep.mubr.bf16.mxu0 0
      %3237 = vmatmul.mubr.bf16.gmra.mrb[0].mxu0 %v3199
      %v3238 = vpop.f32.mrb[0].mxu0
      %v3239 = vadd.f32 0.0, %v3238
      %v3240 = vpop.f32.mrb[0].mxu0
      %v3241 = vpop.f32.mrb[0].mxu0
      %v3242 = vpop.f32.mrb[0].mxu0
      %3243 = vdwg.mxu0
      %v3244 = vmul.f32 %v3239, 0.35355338
      %v3245 = vsel %vm1395, %v3244, -inf
      %3246 = vmax.xlane.f32.xlu0 %v3245
      %v3247 = vpop.xlane.xlu0 %3246
      %v3248 = vsub.f32 %v3244, %v3247
      %v3249 = vmul.f32 %v3248, 1.442695
      %v3250 = vpow.pop %v3249
      %v3251 = vsel %vm1395, %v3250, 0.0
      %3252 = vadd.xlane.f32.xlu0 %v3251
      %v3253 = vpop.xlane.xlu0 %3252
      %v3254 = vrcp.pop %v3253
      %v3255 = vmul.f32 %v3250, %v3254
      %v3256 = vpack.c.bf16 %v3255, %v3255
      %3257 = vrot.lane.b32.xlu0 %v3083, 56
      %v3258 = vpop.permute.xlu0 %3257
      %v3260 = vsel %vm1395, %v3256, 0
      %v3263 = vsel %vm1460, %v3258, 0
      %3265 = vmatprep.subr.bf16.mxu0 0
      %3266 = vmatpush1.bf16.msra.mxu0 %v3263
      %3267 = vmatprep.subr.bf16.mxu0 0
      %3268 = vmatpush1.bf16.msra.mxu0 0
      %3269 = vmatprep.subr.bf16.mxu0 0
      %3270 = vmatpush1.bf16.msra.mxu0 0
      %3271 = vmatprep.subr.bf16.mxu0 0
      %3272 = vmatpush1.bf16.msra.mxu0 0
      %3273 = vmatprep.subr.bf16.mxu0 0
      %3274 = vmatpush1.bf16.msra.mxu0 0
      %3275 = vmatprep.subr.bf16.mxu0 0
      %3276 = vmatpush1.bf16.msra.mxu0 0
      %3277 = vmatprep.subr.bf16.mxu0 0
      %3278 = vmatpush1.bf16.msra.mxu0 0
      %3279 = vmatprep.subr.bf16.mxu0 0
      %3280 = vmatpush1.bf16.msra.mxu0 0
      %3281 = vmatprep.subr.bf16.mxu0 0
      %3282 = vmatpush1.bf16.msra.mxu0 0
      %3283 = vmatprep.subr.bf16.mxu0 0
      %3284 = vmatpush1.bf16.msra.mxu0 0
      %3285 = vmatprep.subr.bf16.mxu0 0
      %3286 = vmatpush1.bf16.msra.mxu0 0
      %3287 = vmatprep.subr.bf16.mxu0 0
      %3288 = vmatpush1.bf16.msra.mxu0 0
      %3289 = vmatprep.subr.bf16.mxu0 0
      %3290 = vmatpush1.bf16.msra.mxu0 0
      %3291 = vmatprep.subr.bf16.mxu0 0
      %3292 = vmatpush1.bf16.msra.mxu0 0
      %3293 = vmatprep.subr.bf16.mxu0 0
      %3294 = vmatpush1.bf16.msra.mxu0 0
      %3295 = vmatprep.subr.bf16.mxu0 0
      %3296 = vmatpush1.bf16.msra.mxu0 0
      %3297 = vmatprep.mubr.bf16.mxu0 0
      %3298 = vmatmul.mubr.bf16.gmra.mrb[0].mxu0 %v3260
      %v3299 = vpop.f32.mrb[0].mxu0
      %v3300 = vadd.f32 0.0, %v3299
      %v3301 = vpop.f32.mrb[0].mxu0
      %v3302 = vpop.f32.mrb[0].mxu0
      %v3303 = vpop.f32.mrb[0].mxu0
      %3304 = vdwg.mxu0
      %3305 = vrot.lane.b32.xlu0 %v3083, 112
      %v3306 = vpop.permute.xlu0 %3305
      %3307 = vrot.lane.b32.xlu0 %v3083, 80
      %v3308 = vpop.permute.xlu0 %3307
      %v3310 = vsel %vm1395, %v3306, 0
      %v3313 = vsel %vm1395, %v3308, 0
      %3315 = vmatprep.subr.bf16.mxu0 0
      %3316 = vmatpush1.bf16.xpose.msra.mxu0 %v3313
      %3317 = vmatprep.subr.bf16.mxu0 0
      %3318 = vmatpush1.bf16.xpose.msra.mxu0 0
      %3319 = vmatprep.subr.bf16.mxu0 0
      %3320 = vmatpush1.bf16.xpose.msra.mxu0 0
      %3321 = vmatprep.subr.bf16.mxu0 0
      %3322 = vmatpush1.bf16.xpose.msra.mxu0 0
      %3323 = vmatprep.subr.bf16.mxu0 0
      %3324 = vmatpush1.bf16.xpose.msra.mxu0 0
      %3325 = vmatprep.subr.bf16.mxu0 0
      %3326 = vmatpush1.bf16.xpose.msra.mxu0 0
      %3327 = vmatprep.subr.bf16.mxu0 0
      %3328 = vmatpush1.bf16.xpose.msra.mxu0 0
      %3329 = vmatprep.subr.bf16.mxu0 0
      %3330 = vmatpush1.bf16.xpose.msra.mxu0 0
      %3331 = vmatprep.subr.bf16.mxu0 0
      %3332 = vmatpush1.bf16.xpose.msra.mxu0 0
      %3333 = vmatprep.subr.bf16.mxu0 0
      %3334 = vmatpush1.bf16.xpose.msra.mxu0 0
      %3335 = vmatprep.subr.bf16.mxu0 0
      %3336 = vmatpush1.bf16.xpose.msra.mxu0 0
      %3337 = vmatprep.subr.bf16.mxu0 0
      %3338 = vmatpush1.bf16.xpose.msra.mxu0 0
      %3339 = vmatprep.subr.bf16.mxu0 0
      %3340 = vmatpush1.bf16.xpose.msra.mxu0 0
      %3341 = vmatprep.subr.bf16.mxu0 0
      %3342 = vmatpush1.bf16.xpose.msra.mxu0 0
      %3343 = vmatprep.subr.bf16.mxu0 0
      %3344 = vmatpush1.bf16.xpose.msra.mxu0 0
      %3345 = vmatprep.subr.bf16.mxu0 0
      %3346 = vmatpush1.bf16.xpose.msra.mxu0 0
      %3347 = vmatprep.mubr.bf16.mxu0 0
      %3348 = vmatmul.mubr.bf16.gmra.mrb[0].mxu0 %v3310
      %v3349 = vpop.f32.mrb[0].mxu0
      %v3350 = vadd.f32 0.0, %v3349
      %v3351 = vpop.f32.mrb[0].mxu0
      %v3352 = vpop.f32.mrb[0].mxu0
      %v3353 = vpop.f32.mrb[0].mxu0
      %3354 = vdwg.mxu0
      %v3355 = vmul.f32 %v3350, 0.35355338
      %v3356 = vsel %vm1395, %v3355, -inf
      %3357 = vmax.xlane.f32.xlu0 %v3356
      %v3358 = vpop.xlane.xlu0 %3357
      %v3359 = vsub.f32 %v3355, %v3358
      %v3360 = vmul.f32 %v3359, 1.442695
      %v3361 = vpow.pop %v3360
      %v3362 = vsel %vm1395, %v3361, 0.0
      %3363 = vadd.xlane.f32.xlu0 %v3362
      %v3364 = vpop.xlane.xlu0 %3363
      %v3365 = vrcp.pop %v3364
      %v3366 = vmul.f32 %v3361, %v3365
      %v3367 = vpack.c.bf16 %v3366, %v3366
      %3368 = vrot.lane.b32.xlu0 %v3083, 48
      %v3369 = vpop.permute.xlu0 %3368
      %v3371 = vsel %vm1395, %v3367, 0
      %v3374 = vsel %vm1460, %v3369, 0
      %3376 = vmatprep.subr.bf16.mxu0 0
      %3377 = vmatpush1.bf16.msra.mxu0 %v3374
      %3378 = vmatprep.subr.bf16.mxu0 0
      %3379 = vmatpush1.bf16.msra.mxu0 0
      %3380 = vmatprep.subr.bf16.mxu0 0
      %3381 = vmatpush1.bf16.msra.mxu0 0
      %3382 = vmatprep.subr.bf16.mxu0 0
      %3383 = vmatpush1.bf16.msra.mxu0 0
      %3384 = vmatprep.subr.bf16.mxu0 0
      %3385 = vmatpush1.bf16.msra.mxu0 0
      %3386 = vmatprep.subr.bf16.mxu0 0
      %3387 = vmatpush1.bf16.msra.mxu0 0
      %3388 = vmatprep.subr.bf16.mxu0 0
      %3389 = vmatpush1.bf16.msra.mxu0 0
      %3390 = vmatprep.subr.bf16.mxu0 0
      %3391 = vmatpush1.bf16.msra.mxu0 0
      %3392 = vmatprep.subr.bf16.mxu0 0
      %3393 = vmatpush1.bf16.msra.mxu0 0
      %3394 = vmatprep.subr.bf16.mxu0 0
      %3395 = vmatpush1.bf16.msra.mxu0 0
      %3396 = vmatprep.subr.bf16.mxu0 0
      %3397 = vmatpush1.bf16.msra.mxu0 0
      %3398 = vmatprep.subr.bf16.mxu0 0
      %3399 = vmatpush1.bf16.msra.mxu0 0
      %3400 = vmatprep.subr.bf16.mxu0 0
      %3401 = vmatpush1.bf16.msra.mxu0 0
      %3402 = vmatprep.subr.bf16.mxu0 0
      %3403 = vmatpush1.bf16.msra.mxu0 0
      %3404 = vmatprep.subr.bf16.mxu0 0
      %3405 = vmatpush1.bf16.msra.mxu0 0
      %3406 = vmatprep.subr.bf16.mxu0 0
      %3407 = vmatpush1.bf16.msra.mxu0 0
      %3408 = vmatprep.mubr.bf16.mxu0 0
      %3409 = vmatmul.mubr.bf16.gmra.mrb[0].mxu0 %v3371
      %v3410 = vpop.f32.mrb[0].mxu0
      %v3411 = vadd.f32 0.0, %v3410
      %v3412 = vpop.f32.mrb[0].mxu0
      %v3413 = vpop.f32.mrb[0].mxu0
      %v3414 = vpop.f32.mrb[0].mxu0
      %3415 = vdwg.mxu0
      %3416 = vrot.lane.b32.xlu0 %v3083, 104
      %v3417 = vpop.permute.xlu0 %3416
      %3418 = vrot.lane.b32.xlu0 %v3083, 72
      %v3419 = vpop.permute.xlu0 %3418
      %v3421 = vsel %vm1395, %v3417, 0
      %v3424 = vsel %vm1395, %v3419, 0
      %3426 = vmatprep.subr.bf16.mxu0 0
      %3427 = vmatpush1.bf16.xpose.msra.mxu0 %v3424
      %3428 = vmatprep.subr.bf16.mxu0 0
      %3429 = vmatpush1.bf16.xpose.msra.mxu0 0
      %3430 = vmatprep.subr.bf16.mxu0 0
      %3431 = vmatpush1.bf16.xpose.msra.mxu0 0
      %3432 = vmatprep.subr.bf16.mxu0 0
      %3433 = vmatpush1.bf16.xpose.msra.mxu0 0
      %3434 = vmatprep.subr.bf16.mxu0 0
      %3435 = vmatpush1.bf16.xpose.msra.mxu0 0
      %3436 = vmatprep.subr.bf16.mxu0 0
      %3437 = vmatpush1.bf16.xpose.msra.mxu0 0
      %3438 = vmatprep.subr.bf16.mxu0 0
      %3439 = vmatpush1.bf16.xpose.msra.mxu0 0
      %3440 = vmatprep.subr.bf16.mxu0 0
      %3441 = vmatpush1.bf16.xpose.msra.mxu0 0
      %3442 = vmatprep.subr.bf16.mxu0 0
      %3443 = vmatpush1.bf16.xpose.msra.mxu0 0
      %3444 = vmatprep.subr.bf16.mxu0 0
      %3445 = vmatpush1.bf16.xpose.msra.mxu0 0
      %3446 = vmatprep.subr.bf16.mxu0 0
      %3447 = vmatpush1.bf16.xpose.msra.mxu0 0
      %3448 = vmatprep.subr.bf16.mxu0 0
      %3449 = vmatpush1.bf16.xpose.msra.mxu0 0
      %3450 = vmatprep.subr.bf16.mxu0 0
      %3451 = vmatpush1.bf16.xpose.msra.mxu0 0
      %3452 = vmatprep.subr.bf16.mxu0 0
      %3453 = vmatpush1.bf16.xpose.msra.mxu0 0
      %3454 = vmatprep.subr.bf16.mxu0 0
      %3455 = vmatpush1.bf16.xpose.msra.mxu0 0
      %3456 = vmatprep.subr.bf16.mxu0 0
      %3457 = vmatpush1.bf16.xpose.msra.mxu0 0
      %3458 = vmatprep.mubr.bf16.mxu0 0
      %3459 = vmatmul.mubr.bf16.gmra.mrb[0].mxu0 %v3421
      %v3460 = vpop.f32.mrb[0].mxu0
      %v3461 = vadd.f32 0.0, %v3460
      %v3462 = vpop.f32.mrb[0].mxu0
      %v3463 = vpop.f32.mrb[0].mxu0
      %v3464 = vpop.f32.mrb[0].mxu0
      %3465 = vdwg.mxu0
      %v3466 = vmul.f32 %v3461, 0.35355338
      %v3467 = vsel %vm1395, %v3466, -inf
      %3468 = vmax.xlane.f32.xlu0 %v3467
      %v3469 = vpop.xlane.xlu0 %3468
      %v3470 = vsub.f32 %v3466, %v3469
      %v3471 = vmul.f32 %v3470, 1.442695
      %v3472 = vpow.pop %v3471
      %v3473 = vsel %vm1395, %v3472, 0.0
      %3474 = vadd.xlane.f32.xlu0 %v3473
      %v3475 = vpop.xlane.xlu0 %3474
      %v3476 = vrcp.pop %v3475
      %v3477 = vmul.f32 %v3472, %v3476
      %v3478 = vpack.c.bf16 %v3477, %v3477
      %3479 = vrot.lane.b32.xlu0 %v3083, 40
      %v3480 = vpop.permute.xlu0 %3479
      %v3482 = vsel %vm1395, %v3478, 0
      %v3485 = vsel %vm1460, %v3480, 0
      %3487 = vmatprep.subr.bf16.mxu0 0
      %3488 = vmatpush1.bf16.msra.mxu0 %v3485
      %3489 = vmatprep.subr.bf16.mxu0 0
      %3490 = vmatpush1.bf16.msra.mxu0 0
      %3491 = vmatprep.subr.bf16.mxu0 0
      %3492 = vmatpush1.bf16.msra.mxu0 0
      %3493 = vmatprep.subr.bf16.mxu0 0
      %3494 = vmatpush1.bf16.msra.mxu0 0
      %3495 = vmatprep.subr.bf16.mxu0 0
      %3496 = vmatpush1.bf16.msra.mxu0 0
      %3497 = vmatprep.subr.bf16.mxu0 0
      %3498 = vmatpush1.bf16.msra.mxu0 0
      %3499 = vmatprep.subr.bf16.mxu0 0
      %3500 = vmatpush1.bf16.msra.mxu0 0
      %3501 = vmatprep.subr.bf16.mxu0 0
      %3502 = vmatpush1.bf16.msra.mxu0 0
      %3503 = vmatprep.subr.bf16.mxu0 0
      %3504 = vmatpush1.bf16.msra.mxu0 0
      %3505 = vmatprep.subr.bf16.mxu0 0
      %3506 = vmatpush1.bf16.msra.mxu0 0
      %3507 = vmatprep.subr.bf16.mxu0 0
      %3508 = vmatpush1.bf16.msra.mxu0 0
      %3509 = vmatprep.subr.bf16.mxu0 0
      %3510 = vmatpush1.bf16.msra.mxu0 0
      %3511 = vmatprep.subr.bf16.mxu0 0
      %3512 = vmatpush1.bf16.msra.mxu0 0
      %3513 = vmatprep.subr.bf16.mxu0 0
      %3514 = vmatpush1.bf16.msra.mxu0 0
      %3515 = vmatprep.subr.bf16.mxu0 0
      %3516 = vmatpush1.bf16.msra.mxu0 0
      %3517 = vmatprep.subr.bf16.mxu0 0
      %3518 = vmatpush1.bf16.msra.mxu0 0
      %3519 = vmatprep.mubr.bf16.mxu0 0
      %3520 = vmatmul.mubr.bf16.gmra.mrb[0].mxu0 %v3482
      %v3521 = vpop.f32.mrb[0].mxu0
      %v3522 = vadd.f32 0.0, %v3521
      %v3523 = vpop.f32.mrb[0].mxu0
      %v3524 = vpop.f32.mrb[0].mxu0
      %v3525 = vpop.f32.mrb[0].mxu0
      %3526 = vdwg.mxu0
      %3528 = vrot.lane.b32.xlu0 %v3300, 8
      %v3529 = vpop.permute.xlu0 %3528
      %3532 = vrot.lane.b32.xlu0 %v3411, 16
      %v3533 = vpop.permute.xlu0 %3532
      %3536 = vrot.lane.b32.xlu0 %v3522, 24
      %v3537 = vpop.permute.xlu0 %3536
      %v3539 = vsel %vm1395, %v3189, %v3529
      %v3540 = vsel %vm1850, %v3539, %v3533
      %v3541 = vsel %vm1852, %v3540, %v3537
      %v3542 = vpack.c.bf16 %v3541, %v3541
      %v3544 = vlaneseq
      %v3545 = vshrl.u32 %v3544, 7
      %v3546 = vsub.s32 0, %v3545
      %v3547 = vrot.slane %v3082, %v3546
      %v3553 = vunpack.c.l.b16 %v3078
      %v3554 = vunpack.c.l.b16 %v3079
      %v3555 = vunpack.c.l.b16 %v3080
      %v3556 = vunpack.c.l.b16 %v3081
      %v3557 = vpack.c.b16 %v3554, %v3553
      %v3558 = vpack.c.b16 %v3556, %v3555
      %v3562 = vsel %vm1342, %v3542, 0
      %3564 = vmatprep.subr.bf16.mxu0 0
      %3565 = vmatpush1.bf16.msra.mxu0 %v3557
      %3566 = vmatprep.subr.bf16.mxu0 0
      %3567 = vmatpush1.bf16.msra.mxu0 %v3558
      %3568 = vmatprep.subr.bf16.mxu0 0
      %3569 = vmatpush1.bf16.msra.mxu0 0
      %3570 = vmatprep.subr.bf16.mxu0 0
      %3571 = vmatpush1.bf16.msra.mxu0 0
      %3572 = vmatprep.subr.bf16.mxu0 0
      %3573 = vmatpush1.bf16.msra.mxu0 0
      %3574 = vmatprep.subr.bf16.mxu0 0
      %3575 = vmatpush1.bf16.msra.mxu0 0
      %3576 = vmatprep.subr.bf16.mxu0 0
      %3577 = vmatpush1.bf16.msra.mxu0 0
      %3578 = vmatprep.subr.bf16.mxu0 0
      %3579 = vmatpush1.bf16.msra.mxu0 0
      %3580 = vmatprep.subr.bf16.mxu0 0
      %3581 = vmatpush1.bf16.msra.mxu0 0
      %3582 = vmatprep.subr.bf16.mxu0 0
      %3583 = vmatpush1.bf16.msra.mxu0 0
      %3584 = vmatprep.subr.bf16.mxu0 0
      %3585 = vmatpush1.bf16.msra.mxu0 0
      %3586 = vmatprep.subr.bf16.mxu0 0
      %3587 = vmatpush1.bf16.msra.mxu0 0
      %3588 = vmatprep.subr.bf16.mxu0 0
      %3589 = vmatpush1.bf16.msra.mxu0 0
      %3590 = vmatprep.subr.bf16.mxu0 0
      %3591 = vmatpush1.bf16.msra.mxu0 0
      %3592 = vmatprep.subr.bf16.mxu0 0
      %3593 = vmatpush1.bf16.msra.mxu0 0
      %3594 = vmatprep.subr.bf16.mxu0 0
      %3595 = vmatpush1.bf16.msra.mxu0 0
      %3596 = vmatprep.mubr.bf16.mxu0 0
      %3597 = vmatmul.mubr.bf16.gmra.mrb[0].mxu0 %v3562
      %v3598 = vpop.f32.mrb[0].mxu0
      %v3599 = vadd.f32 %v3547, %v3598
      %v3600 = vpop.f32.mrb[0].mxu0
      %v3601 = vpop.f32.mrb[0].mxu0
      %v3602 = vpop.f32.mrb[0].mxu0
      %3603 = vdwg.mxu0
      %v3604 = vadd.f32 %v3010, %v3599
      %v3605 = vld [vmem:[%s59] sm:$0x1]
      %v3606 = vld [vmem:[%s61] sm:$0x1]
      %v3607 = vsel %vm1342, %v3604, 0.0
      %3608 = vadd.xlane.f32.xlu0 %v3607
      %v3609 = vpop.xlane.xlu0 %3608
      %v3610 = vmul.f32 %v3609, %v1922
      %v3611 = vsub.f32 %v3604, %v3610
      %v3612 = vmul.f32 %v3611, %v3611
      %v3613 = vsel %vm1342, %v3612, 0.0
      %3614 = vadd.xlane.f32.xlu0 %v3613
      %v3615 = vpop.xlane.xlu0 %3614
      %v3616 = vmul.f32 %v3615, %v1922
      %v3617 = vadd.f32 %v3616, 1e-05
      %v3618 = vrsqrt.pop %v3617
      %v3619 = vmul.f32 %v3611, %v3618
      %v3621 = vlaneseq
      %v3622 = vshrl.u32 %v3621, 7
      %v3623 = vsub.s32 0, %v3622
      %v3624 = vrot.slane %v3605, %v3623
      %v3626 = vmul.f32 %v3619, %v3624
      %v3628 = vlaneseq
      %v3629 = vshrl.u32 %v3628, 7
      %v3630 = vsub.s32 0, %v3629
      %v3631 = vrot.slane %v3606, %v3630
      %v3633 = vadd.f32 %v3626, %v3631
      %v3634 = vld [vmem:[%s39] sm:$0xf]
      %v3635 = vld [vmem:[%s39 + $0x4] sm:$0xf]
      %v3636 = vld [vmem:[%s39 + $0x8] sm:$0xf]
      %v3637 = vld [vmem:[%s39 + $0xc] sm:$0xf]
      %v3638 = vld [vmem:[%s41] sm:$0x1]
      %v3639 = vpack.c.bf16 %v3633, %v3633
      %v3641 = vlaneseq
      %v3642 = vshrl.u32 %v3641, 7
      %v3643 = vsub.s32 0, %v3642
      %v3644 = vrot.slane %v3638, %v3643
      %v3650 = vunpack.c.l.b16 %v3634
      %v3651 = vunpack.c.l.b16 %v3635
      %v3652 = vunpack.c.l.b16 %v3636
      %v3653 = vunpack.c.l.b16 %v3637
      %v3654 = vpack.c.b16 %v3651, %v3650
      %v3655 = vpack.c.b16 %v3653, %v3652
      %v3659 = vsel %vm1342, %v3639, 0
      %3661 = vmatprep.subr.bf16.mxu0 0
      %3662 = vmatpush1.bf16.msra.mxu0 %v3654
      %3663 = vmatprep.subr.bf16.mxu0 0
      %3664 = vmatpush1.bf16.msra.mxu0 %v3655
      %3665 = vmatprep.subr.bf16.mxu0 0
      %3666 = vmatpush1.bf16.msra.mxu0 0
      %3667 = vmatprep.subr.bf16.mxu0 0
      %3668 = vmatpush1.bf16.msra.mxu0 0
      %3669 = vmatprep.subr.bf16.mxu0 0
      %3670 = vmatpush1.bf16.msra.mxu0 0
      %3671 = vmatprep.subr.bf16.mxu0 0
      %3672 = vmatpush1.bf16.msra.mxu0 0
      %3673 = vmatprep.subr.bf16.mxu0 0
      %3674 = vmatpush1.bf16.msra.mxu0 0
      %3675 = vmatprep.subr.bf16.mxu0 0
      %3676 = vmatpush1.bf16.msra.mxu0 0
      %3677 = vmatprep.subr.bf16.mxu0 0
      %3678 = vmatpush1.bf16.msra.mxu0 0
      %3679 = vmatprep.subr.bf16.mxu0 0
      %3680 = vmatpush1.bf16.msra.mxu0 0
      %3681 = vmatprep.subr.bf16.mxu0 0
      %3682 = vmatpush1.bf16.msra.mxu0 0
      %3683 = vmatprep.subr.bf16.mxu0 0
      %3684 = vmatpush1.bf16.msra.mxu0 0
      %3685 = vmatprep.subr.bf16.mxu0 0
      %3686 = vmatpush1.bf16.msra.mxu0 0
      %3687 = vmatprep.subr.bf16.mxu0 0
      %3688 = vmatpush1.bf16.msra.mxu0 0
      %3689 = vmatprep.subr.bf16.mxu0 0
      %3690 = vmatpush1.bf16.msra.mxu0 0
      %3691 = vmatprep.subr.bf16.mxu0 0
      %3692 = vmatpush1.bf16.msra.mxu0 0
      %3693 = vmatprep.mubr.bf16.mxu0 0
      %3694 = vmatmul.mubr.bf16.gmra.mrb[0].mxu0 %v3659
      %v3695 = vpop.f32.mrb[0].mxu0
      %v3696 = vadd.f32 %v3644, %v3695
      %v3697 = vpop.f32.mrb[0].mxu0
      %v3698 = vpop.f32.mrb[0].mxu0
      %v3699 = vpop.f32.mrb[0].mxu0
      %3700 = vdwg.mxu0
      %v3701 = vld [vmem:[%s43] sm:$0xf]
      %v3702 = vld [vmem:[%s43 + $0x4] sm:$0xf]
      %v3703 = vld [vmem:[%s43 + $0x8] sm:$0xf]
      %v3704 = vld [vmem:[%s43 + $0xc] sm:$0xf]
      %v3705 = vld [vmem:[%s45] sm:$0x1]
      %v3706 = vpack.c.bf16 %v2973, %v2973
      %v3708 = vlaneseq
      %v3709 = vshrl.u32 %v3708, 7
      %v3710 = vsub.s32 0, %v3709
      %v3711 = vrot.slane %v3705, %v3710
      %v3717 = vunpack.c.l.b16 %v3701
      %v3718 = vunpack.c.l.b16 %v3702
      %v3719 = vunpack.c.l.b16 %v3703
      %v3720 = vunpack.c.l.b16 %v3704
      %v3721 = vpack.c.b16 %v3718, %v3717
      %v3722 = vpack.c.b16 %v3720, %v3719
      %v3726 = vsel %vm1342, %v3706, 0
      %3728 = vmatprep.subr.bf16.mxu0 0
      %3729 = vmatpush1.bf16.msra.mxu0 %v3721
      %3730 = vmatprep.subr.bf16.mxu0 0
      %3731 = vmatpush1.bf16.msra.mxu0 %v3722
      %3732 = vmatprep.subr.bf16.mxu0 0
      %3733 = vmatpush1.bf16.msra.mxu0 0
      %3734 = vmatprep.subr.bf16.mxu0 0
      %3735 = vmatpush1.bf16.msra.mxu0 0
      %3736 = vmatprep.subr.bf16.mxu0 0
      %3737 = vmatpush1.bf16.msra.mxu0 0
      %3738 = vmatprep.subr.bf16.mxu0 0
      %3739 = vmatpush1.bf16.msra.mxu0 0
      %3740 = vmatprep.subr.bf16.mxu0 0
      %3741 = vmatpush1.bf16.msra.mxu0 0
      %3742 = vmatprep.subr.bf16.mxu0 0
      %3743 = vmatpush1.bf16.msra.mxu0 0
      %3744 = vmatprep.subr.bf16.mxu0 0
      %3745 = vmatpush1.bf16.msra.mxu0 0
      %3746 = vmatprep.subr.bf16.mxu0 0
      %3747 = vmatpush1.bf16.msra.mxu0 0
      %3748 = vmatprep.subr.bf16.mxu0 0
      %3749 = vmatpush1.bf16.msra.mxu0 0
      %3750 = vmatprep.subr.bf16.mxu0 0
      %3751 = vmatpush1.bf16.msra.mxu0 0
      %3752 = vmatprep.subr.bf16.mxu0 0
      %3753 = vmatpush1.bf16.msra.mxu0 0
      %3754 = vmatprep.subr.bf16.mxu0 0
      %3755 = vmatpush1.bf16.msra.mxu0 0
      %3756 = vmatprep.subr.bf16.mxu0 0
      %3757 = vmatpush1.bf16.msra.mxu0 0
      %3758 = vmatprep.subr.bf16.mxu0 0
      %3759 = vmatpush1.bf16.msra.mxu0 0
      %3760 = vmatprep.mubr.bf16.mxu0 0
      %3761 = vmatmul.mubr.bf16.gmra.mrb[0].mxu0 %v3726
      %v3762 = vpop.f32.mrb[0].mxu0
      %v3763 = vadd.f32 %v3711, %v3762
      %v3764 = vpop.f32.mrb[0].mxu0
      %v3765 = vpop.f32.mrb[0].mxu0
      %v3766 = vpop.f32.mrb[0].mxu0
      %3767 = vdwg.mxu0
      %v3768 = vld [vmem:[%s47] sm:$0xf]
      %v3769 = vld [vmem:[%s47 + $0x4] sm:$0xf]
      %v3770 = vld [vmem:[%s47 + $0x8] sm:$0xf]
      %v3771 = vld [vmem:[%s47 + $0xc] sm:$0xf]
      %v3772 = vld [vmem:[%s49] sm:$0x1]
      %v3773 = vpack.c.bf16 %v3696, %v3696
      %v3774 = vpack.c.bf16 %v3763, %v3763
      %v3776 = vsel %vm1395, %v3773, 0
      %v3779 = vsel %vm1395, %v3774, 0
      %3781 = vmatprep.subr.bf16.mxu0 0
      %3782 = vmatpush1.bf16.xpose.msra.mxu0 %v3779
      %3783 = vmatprep.subr.bf16.mxu0 0
      %3784 = vmatpush1.bf16.xpose.msra.mxu0 0
      %3785 = vmatprep.subr.bf16.mxu0 0
      %3786 = vmatpush1.bf16.xpose.msra.mxu0 0
      %3787 = vmatprep.subr.bf16.mxu0 0
      %3788 = vmatpush1.bf16.xpose.msra.mxu0 0
      %3789 = vmatprep.subr.bf16.mxu0 0
      %3790 = vmatpush1.bf16.xpose.msra.mxu0 0
      %3791 = vmatprep.subr.bf16.mxu0 0
      %3792 = vmatpush1.bf16.xpose.msra.mxu0 0
      %3793 = vmatprep.subr.bf16.mxu0 0
      %3794 = vmatpush1.bf16.xpose.msra.mxu0 0
      %3795 = vmatprep.subr.bf16.mxu0 0
      %3796 = vmatpush1.bf16.xpose.msra.mxu0 0
      %3797 = vmatprep.subr.bf16.mxu0 0
      %3798 = vmatpush1.bf16.xpose.msra.mxu0 0
      %3799 = vmatprep.subr.bf16.mxu0 0
      %3800 = vmatpush1.bf16.xpose.msra.mxu0 0
      %3801 = vmatprep.subr.bf16.mxu0 0
      %3802 = vmatpush1.bf16.xpose.msra.mxu0 0
      %3803 = vmatprep.subr.bf16.mxu0 0
      %3804 = vmatpush1.bf16.xpose.msra.mxu0 0
      %3805 = vmatprep.subr.bf16.mxu0 0
      %3806 = vmatpush1.bf16.xpose.msra.mxu0 0
      %3807 = vmatprep.subr.bf16.mxu0 0
      %3808 = vmatpush1.bf16.xpose.msra.mxu0 0
      %3809 = vmatprep.subr.bf16.mxu0 0
      %3810 = vmatpush1.bf16.xpose.msra.mxu0 0
      %3811 = vmatprep.subr.bf16.mxu0 0
      %3812 = vmatpush1.bf16.xpose.msra.mxu0 0
      %3813 = vmatprep.mubr.bf16.mxu0 0
      %3814 = vmatmul.mubr.bf16.gmra.mrb[0].mxu0 %v3776
      %v3815 = vpop.f32.mrb[0].mxu0
      %v3816 = vadd.f32 0.0, %v3815
      %v3817 = vpop.f32.mrb[0].mxu0
      %v3818 = vpop.f32.mrb[0].mxu0
      %v3819 = vpop.f32.mrb[0].mxu0
      %3820 = vdwg.mxu0
      %v3821 = vmul.f32 %v3816, 0.35355338
      %v3822 = vsel %vm1395, %v3821, -inf
      %3823 = vmax.xlane.f32.xlu0 %v3822
      %v3824 = vpop.xlane.xlu0 %3823
      %v3825 = vsub.f32 %v3821, %v3824
      %v3826 = vmul.f32 %v3825, 1.442695
      %v3827 = vpow.pop %v3826
      %v3828 = vsel %vm1395, %v3827, 0.0
      %3829 = vadd.xlane.f32.xlu0 %v3828
      %v3830 = vpop.xlane.xlu0 %3829
      %v3831 = vrcp.pop %v3830
      %v3832 = vmul.f32 %v3827, %v3831
      %v3833 = vpack.c.bf16 %v3832, %v3832
      %3835 = vrot.lane.b32.xlu0 %v3774, 96
      %v3836 = vpop.permute.xlu0 %3835
      %v3838 = vsel %vm1395, %v3833, 0
      %v3841 = vsel %vm1460, %v3836, 0
      %3843 = vmatprep.subr.bf16.mxu0 0
      %3844 = vmatpush1.bf16.msra.mxu0 %v3841
      %3845 = vmatprep.subr.bf16.mxu0 0
      %3846 = vmatpush1.bf16.msra.mxu0 0
      %3847 = vmatprep.subr.bf16.mxu0 0
      %3848 = vmatpush1.bf16.msra.mxu0 0
      %3849 = vmatprep.subr.bf16.mxu0 0
      %3850 = vmatpush1.bf16.msra.mxu0 0
      %3851 = vmatprep.subr.bf16.mxu0 0
      %3852 = vmatpush1.bf16.msra.mxu0 0
      %3853 = vmatprep.subr.bf16.mxu0 0
      %3854 = vmatpush1.bf16.msra.mxu0 0
      %3855 = vmatprep.subr.bf16.mxu0 0
      %3856 = vmatpush1.bf16.msra.mxu0 0
      %3857 = vmatprep.subr.bf16.mxu0 0
      %3858 = vmatpush1.bf16.msra.mxu0 0
      %3859 = vmatprep.subr.bf16.mxu0 0
      %3860 = vmatpush1.bf16.msra.mxu0 0
      %3861 = vmatprep.subr.bf16.mxu0 0
      %3862 = vmatpush1.bf16.msra.mxu0 0
      %3863 = vmatprep.subr.bf16.mxu0 0
      %3864 = vmatpush1.bf16.msra.mxu0 0
      %3865 = vmatprep.subr.bf16.mxu0 0
      %3866 = vmatpush1.bf16.msra.mxu0 0
      %3867 = vmatprep.subr.bf16.mxu0 0
      %3868 = vmatpush1.bf16.msra.mxu0 0
      %3869 = vmatprep.subr.bf16.mxu0 0
      %3870 = vmatpush1.bf16.msra.mxu0 0
      %3871 = vmatprep.subr.bf16.mxu0 0
      %3872 = vmatpush1.bf16.msra.mxu0 0
      %3873 = vmatprep.subr.bf16.mxu0 0
      %3874 = vmatpush1.bf16.msra.mxu0 0
      %3875 = vmatprep.mubr.bf16.mxu0 0
      %3876 = vmatmul.mubr.bf16.gmra.mrb[0].mxu0 %v3838
      %v3877 = vpop.f32.mrb[0].mxu0
      %v3878 = vadd.f32 0.0, %v3877
      %v3879 = vpop.f32.mrb[0].mxu0
      %v3880 = vpop.f32.mrb[0].mxu0
      %v3881 = vpop.f32.mrb[0].mxu0
      %3882 = vdwg.mxu0
      %3884 = vrot.lane.b32.xlu0 %v3773, 120
      %v3885 = vpop.permute.xlu0 %3884
      %3886 = vrot.lane.b32.xlu0 %v3774, 120
      %v3887 = vpop.permute.xlu0 %3886
      %v3889 = vsel %vm1395, %v3885, 0
      %v3892 = vsel %vm1395, %v3887, 0
      %3894 = vmatprep.subr.bf16.mxu0 0
      %3895 = vmatpush1.bf16.xpose.msra.mxu0 %v3892
      %3896 = vmatprep.subr.bf16.mxu0 0
      %3897 = vmatpush1.bf16.xpose.msra.mxu0 0
      %3898 = vmatprep.subr.bf16.mxu0 0
      %3899 = vmatpush1.bf16.xpose.msra.mxu0 0
      %3900 = vmatprep.subr.bf16.mxu0 0
      %3901 = vmatpush1.bf16.xpose.msra.mxu0 0
      %3902 = vmatprep.subr.bf16.mxu0 0
      %3903 = vmatpush1.bf16.xpose.msra.mxu0 0
      %3904 = vmatprep.subr.bf16.mxu0 0
      %3905 = vmatpush1.bf16.xpose.msra.mxu0 0
      %3906 = vmatprep.subr.bf16.mxu0 0
      %3907 = vmatpush1.bf16.xpose.msra.mxu0 0
      %3908 = vmatprep.subr.bf16.mxu0 0
      %3909 = vmatpush1.bf16.xpose.msra.mxu0 0
      %3910 = vmatprep.subr.bf16.mxu0 0
      %3911 = vmatpush1.bf16.xpose.msra.mxu0 0
      %3912 = vmatprep.subr.bf16.mxu0 0
      %3913 = vmatpush1.bf16.xpose.msra.mxu0 0
      %3914 = vmatprep.subr.bf16.mxu0 0
      %3915 = vmatpush1.bf16.xpose.msra.mxu0 0
      %3916 = vmatprep.subr.bf16.mxu0 0
      %3917 = vmatpush1.bf16.xpose.msra.mxu0 0
      %3918 = vmatprep.subr.bf16.mxu0 0
      %3919 = vmatpush1.bf16.xpose.msra.mxu0 0
      %3920 = vmatprep.subr.bf16.mxu0 0
      %3921 = vmatpush1.bf16.xpose.msra.mxu0 0
      %3922 = vmatprep.subr.bf16.mxu0 0
      %3923 = vmatpush1.bf16.xpose.msra.mxu0 0
      %3924 = vmatprep.subr.bf16.mxu0 0
      %3925 = vmatpush1.bf16.xpose.msra.mxu0 0
      %3926 = vmatprep.mubr.bf16.mxu0 0
      %3927 = vmatmul.mubr.bf16.gmra.mrb[0].mxu0 %v3889
      %v3928 = vpop.f32.mrb[0].mxu0
      %v3929 = vadd.f32 0.0, %v3928
      %v3930 = vpop.f32.mrb[0].mxu0
      %v3931 = vpop.f32.mrb[0].mxu0
      %v3932 = vpop.f32.mrb[0].mxu0
      %3933 = vdwg.mxu0
      %v3934 = vmul.f32 %v3929, 0.35355338
      %v3935 = vsel %vm1395, %v3934, -inf
      %3936 = vmax.xlane.f32.xlu0 %v3935
      %v3937 = vpop.xlane.xlu0 %3936
      %v3938 = vsub.f32 %v3934, %v3937
      %v3939 = vmul.f32 %v3938, 1.442695
      %v3940 = vpow.pop %v3939
      %v3941 = vsel %vm1395, %v3940, 0.0
      %3942 = vadd.xlane.f32.xlu0 %v3941
      %v3943 = vpop.xlane.xlu0 %3942
      %v3944 = vrcp.pop %v3943
      %v3945 = vmul.f32 %v3940, %v3944
      %v3946 = vpack.c.bf16 %v3945, %v3945
      %3947 = vrot.lane.b32.xlu0 %v3774, 88
      %v3948 = vpop.permute.xlu0 %3947
      %v3950 = vsel %vm1395, %v3946, 0
      %v3953 = vsel %vm1460, %v3948, 0
      %3955 = vmatprep.subr.bf16.mxu0 0
      %3956 = vmatpush1.bf16.msra.mxu0 %v3953
      %3957 = vmatprep.subr.bf16.mxu0 0
      %3958 = vmatpush1.bf16.msra.mxu0 0
      %3959 = vmatprep.subr.bf16.mxu0 0
      %3960 = vmatpush1.bf16.msra.mxu0 0
      %3961 = vmatprep.subr.bf16.mxu0 0
      %3962 = vmatpush1.bf16.msra.mxu0 0
      %3963 = vmatprep.subr.bf16.mxu0 0
      %3964 = vmatpush1.bf16.msra.mxu0 0
      %3965 = vmatprep.subr.bf16.mxu0 0
      %3966 = vmatpush1.bf16.msra.mxu0 0
      %3967 = vmatprep.subr.bf16.mxu0 0
      %3968 = vmatpush1.bf16.msra.mxu0 0
      %3969 = vmatprep.subr.bf16.mxu0 0
      %3970 = vmatpush1.bf16.msra.mxu0 0
      %3971 = vmatprep.subr.bf16.mxu0 0
      %3972 = vmatpush1.bf16.msra.mxu0 0
      %3973 = vmatprep.subr.bf16.mxu0 0
      %3974 = vmatpush1.bf16.msra.mxu0 0
      %3975 = vmatprep.subr.bf16.mxu0 0
      %3976 = vmatpush1.bf16.msra.mxu0 0
      %3977 = vmatprep.subr.bf16.mxu0 0
      %3978 = vmatpush1.bf16.msra.mxu0 0
      %3979 = vmatprep.subr.bf16.mxu0 0
      %3980 = vmatpush1.bf16.msra.mxu0 0
      %3981 = vmatprep.subr.bf16.mxu0 0
      %3982 = vmatpush1.bf16.msra.mxu0 0
      %3983 = vmatprep.subr.bf16.mxu0 0
      %3984 = vmatpush1.bf16.msra.mxu0 0
      %3985 = vmatprep.subr.bf16.mxu0 0
      %3986 = vmatpush1.bf16.msra.mxu0 0
      %3987 = vmatprep.mubr.bf16.mxu0 0
      %3988 = vmatmul.mubr.bf16.gmra.mrb[0].mxu0 %v3950
      %v3989 = vpop.f32.mrb[0].mxu0
      %v3990 = vadd.f32 0.0, %v3989
      %v3991 = vpop.f32.mrb[0].mxu0
      %v3992 = vpop.f32.mrb[0].mxu0
      %v3993 = vpop.f32.mrb[0].mxu0
      %3994 = vdwg.mxu0
      %3995 = vrot.lane.b32.xlu0 %v3773, 112
      %v3996 = vpop.permute.xlu0 %3995
      %3997 = vrot.lane.b32.xlu0 %v3774, 112
      %v3998 = vpop.permute.xlu0 %3997
      %v4000 = vsel %vm1395, %v3996, 0
      %v4003 = vsel %vm1395, %v3998, 0
      %4005 = vmatprep.subr.bf16.mxu0 0
      %4006 = vmatpush1.bf16.xpose.msra.mxu0 %v4003
      %4007 = vmatprep.subr.bf16.mxu0 0
      %4008 = vmatpush1.bf16.xpose.msra.mxu0 0
      %4009 = vmatprep.subr.bf16.mxu0 0
      %4010 = vmatpush1.bf16.xpose.msra.mxu0 0
      %4011 = vmatprep.subr.bf16.mxu0 0
      %4012 = vmatpush1.bf16.xpose.msra.mxu0 0
      %4013 = vmatprep.subr.bf16.mxu0 0
      %4014 = vmatpush1.bf16.xpose.msra.mxu0 0
      %4015 = vmatprep.subr.bf16.mxu0 0
      %4016 = vmatpush1.bf16.xpose.msra.mxu0 0
      %4017 = vmatprep.subr.bf16.mxu0 0
      %4018 = vmatpush1.bf16.xpose.msra.mxu0 0
      %4019 = vmatprep.subr.bf16.mxu0 0
      %4020 = vmatpush1.bf16.xpose.msra.mxu0 0
      %4021 = vmatprep.subr.bf16.mxu0 0
      %4022 = vmatpush1.bf16.xpose.msra.mxu0 0
      %4023 = vmatprep.subr.bf16.mxu0 0
      %4024 = vmatpush1.bf16.xpose.msra.mxu0 0
      %4025 = vmatprep.subr.bf16.mxu0 0
      %4026 = vmatpush1.bf16.xpose.msra.mxu0 0
      %4027 = vmatprep.subr.bf16.mxu0 0
      %4028 = vmatpush1.bf16.xpose.msra.mxu0 0
      %4029 = vmatprep.subr.bf16.mxu0 0
      %4030 = vmatpush1.bf16.xpose.msra.mxu0 0
      %4031 = vmatprep.subr.bf16.mxu0 0
      %4032 = vmatpush1.bf16.xpose.msra.mxu0 0
      %4033 = vmatprep.subr.bf16.mxu0 0
      %4034 = vmatpush1.bf16.xpose.msra.mxu0 0
      %4035 = vmatprep.subr.bf16.mxu0 0
      %4036 = vmatpush1.bf16.xpose.msra.mxu0 0
      %4037 = vmatprep.mubr.bf16.mxu0 0
      %4038 = vmatmul.mubr.bf16.gmra.mrb[0].mxu0 %v4000
      %v4039 = vpop.f32.mrb[0].mxu0
      %v4040 = vadd.f32 0.0, %v4039
      %v4041 = vpop.f32.mrb[0].mxu0
      %v4042 = vpop.f32.mrb[0].mxu0
      %v4043 = vpop.f32.mrb[0].mxu0
      %4044 = vdwg.mxu0
      %v4045 = vmul.f32 %v4040, 0.35355338
      %v4046 = vsel %vm1395, %v4045, -inf
      %4047 = vmax.xlane.f32.xlu0 %v4046
      %v4048 = vpop.xlane.xlu0 %4047
      %v4049 = vsub.f32 %v4045, %v4048
      %v4050 = vmul.f32 %v4049, 1.442695
      %v4051 = vpow.pop %v4050
      %v4052 = vsel %vm1395, %v4051, 0.0
      %4053 = vadd.xlane.f32.xlu0 %v4052
      %v4054 = vpop.xlane.xlu0 %4053
      %v4055 = vrcp.pop %v4054
      %v4056 = vmul.f32 %v4051, %v4055
      %v4057 = vpack.c.bf16 %v4056, %v4056
      %4058 = vrot.lane.b32.xlu0 %v3774, 80
      %v4059 = vpop.permute.xlu0 %4058
      %v4061 = vsel %vm1395, %v4057, 0
      %v4064 = vsel %vm1460, %v4059, 0
      %4066 = vmatprep.subr.bf16.mxu0 0
      %4067 = vmatpush1.bf16.msra.mxu0 %v4064
      %4068 = vmatprep.subr.bf16.mxu0 0
      %4069 = vmatpush1.bf16.msra.mxu0 0
      %4070 = vmatprep.subr.bf16.mxu0 0
      %4071 = vmatpush1.bf16.msra.mxu0 0
      %4072 = vmatprep.subr.bf16.mxu0 0
      %4073 = vmatpush1.bf16.msra.mxu0 0
      %4074 = vmatprep.subr.bf16.mxu0 0
      %4075 = vmatpush1.bf16.msra.mxu0 0
      %4076 = vmatprep.subr.bf16.mxu0 0
      %4077 = vmatpush1.bf16.msra.mxu0 0
      %4078 = vmatprep.subr.bf16.mxu0 0
      %4079 = vmatpush1.bf16.msra.mxu0 0
      %4080 = vmatprep.subr.bf16.mxu0 0
      %4081 = vmatpush1.bf16.msra.mxu0 0
      %4082 = vmatprep.subr.bf16.mxu0 0
      %4083 = vmatpush1.bf16.msra.mxu0 0
      %4084 = vmatprep.subr.bf16.mxu0 0
      %4085 = vmatpush1.bf16.msra.mxu0 0
      %4086 = vmatprep.subr.bf16.mxu0 0
      %4087 = vmatpush1.bf16.msra.mxu0 0
      %4088 = vmatprep.subr.bf16.mxu0 0
      %4089 = vmatpush1.bf16.msra.mxu0 0
      %4090 = vmatprep.subr.bf16.mxu0 0
      %4091 = vmatpush1.bf16.msra.mxu0 0
      %4092 = vmatprep.subr.bf16.mxu0 0
      %4093 = vmatpush1.bf16.msra.mxu0 0
      %4094 = vmatprep.subr.bf16.mxu0 0
      %4095 = vmatpush1.bf16.msra.mxu0 0
      %4096 = vmatprep.subr.bf16.mxu0 0
      %4097 = vmatpush1.bf16.msra.mxu0 0
      %4098 = vmatprep.mubr.bf16.mxu0 0
      %4099 = vmatmul.mubr.bf16.gmra.mrb[0].mxu0 %v4061
      %v4100 = vpop.f32.mrb[0].mxu0
      %v4101 = vadd.f32 0.0, %v4100
      %v4102 = vpop.f32.mrb[0].mxu0
      %v4103 = vpop.f32.mrb[0].mxu0
      %v4104 = vpop.f32.mrb[0].mxu0
      %4105 = vdwg.mxu0
      %4106 = vrot.lane.b32.xlu0 %v3773, 104
      %v4107 = vpop.permute.xlu0 %4106
      %4108 = vrot.lane.b32.xlu0 %v3774, 104
      %v4109 = vpop.permute.xlu0 %4108
      %v4111 = vsel %vm1395, %v4107, 0
      %v4114 = vsel %vm1395, %v4109, 0
      %4116 = vmatprep.subr.bf16.mxu0 0
      %4117 = vmatpush1.bf16.xpose.msra.mxu0 %v4114
      %4118 = vmatprep.subr.bf16.mxu0 0
      %4119 = vmatpush1.bf16.xpose.msra.mxu0 0
      %4120 = vmatprep.subr.bf16.mxu0 0
      %4121 = vmatpush1.bf16.xpose.msra.mxu0 0
      %4122 = vmatprep.subr.bf16.mxu0 0
      %4123 = vmatpush1.bf16.xpose.msra.mxu0 0
      %4124 = vmatprep.subr.bf16.mxu0 0
      %4125 = vmatpush1.bf16.xpose.msra.mxu0 0
      %4126 = vmatprep.subr.bf16.mxu0 0
      %4127 = vmatpush1.bf16.xpose.msra.mxu0 0
      %4128 = vmatprep.subr.bf16.mxu0 0
      %4129 = vmatpush1.bf16.xpose.msra.mxu0 0
      %4130 = vmatprep.subr.bf16.mxu0 0
      %4131 = vmatpush1.bf16.xpose.msra.mxu0 0
      %4132 = vmatprep.subr.bf16.mxu0 0
      %4133 = vmatpush1.bf16.xpose.msra.mxu0 0
      %4134 = vmatprep.subr.bf16.mxu0 0
      %4135 = vmatpush1.bf16.xpose.msra.mxu0 0
      %4136 = vmatprep.subr.bf16.mxu0 0
      %4137 = vmatpush1.bf16.xpose.msra.mxu0 0
      %4138 = vmatprep.subr.bf16.mxu0 0
      %4139 = vmatpush1.bf16.xpose.msra.mxu0 0
      %4140 = vmatprep.subr.bf16.mxu0 0
      %4141 = vmatpush1.bf16.xpose.msra.mxu0 0
      %4142 = vmatprep.subr.bf16.mxu0 0
      %4143 = vmatpush1.bf16.xpose.msra.mxu0 0
      %4144 = vmatprep.subr.bf16.mxu0 0
      %4145 = vmatpush1.bf16.xpose.msra.mxu0 0
      %4146 = vmatprep.subr.bf16.mxu0 0
      %4147 = vmatpush1.bf16.xpose.msra.mxu0 0
      %4148 = vmatprep.mubr.bf16.mxu0 0
      %4149 = vmatmul.mubr.bf16.gmra.mrb[0].mxu0 %v4111
      %v4150 = vpop.f32.mrb[0].mxu0
      %v4151 = vadd.f32 0.0, %v4150
      %v4152 = vpop.f32.mrb[0].mxu0
      %v4153 = vpop.f32.mrb[0].mxu0
      %v4154 = vpop.f32.mrb[0].mxu0
      %4155 = vdwg.mxu0
      %v4156 = vmul.f32 %v4151, 0.35355338
      %v4157 = vsel %vm1395, %v4156, -inf
      %4158 = vmax.xlane.f32.xlu0 %v4157
      %v4159 = vpop.xlane.xlu0 %4158
      %v4160 = vsub.f32 %v4156, %v4159
      %v4161 = vmul.f32 %v4160, 1.442695
      %v4162 = vpow.pop %v4161
      %v4163 = vsel %vm1395, %v4162, 0.0
      %4164 = vadd.xlane.f32.xlu0 %v4163
      %v4165 = vpop.xlane.xlu0 %4164
      %v4166 = vrcp.pop %v4165
      %v4167 = vmul.f32 %v4162, %v4166
      %v4168 = vpack.c.bf16 %v4167, %v4167
      %4169 = vrot.lane.b32.xlu0 %v3774, 72
      %v4170 = vpop.permute.xlu0 %4169
      %v4172 = vsel %vm1395, %v4168, 0
      %v4175 = vsel %vm1460, %v4170, 0
      %4177 = vmatprep.subr.bf16.mxu0 0
      %4178 = vmatpush1.bf16.msra.mxu0 %v4175
      %4179 = vmatprep.subr.bf16.mxu0 0
      %4180 = vmatpush1.bf16.msra.mxu0 0
      %4181 = vmatprep.subr.bf16.mxu0 0
      %4182 = vmatpush1.bf16.msra.mxu0 0
      %4183 = vmatprep.subr.bf16.mxu0 0
      %4184 = vmatpush1.bf16.msra.mxu0 0
      %4185 = vmatprep.subr.bf16.mxu0 0
      %4186 = vmatpush1.bf16.msra.mxu0 0
      %4187 = vmatprep.subr.bf16.mxu0 0
      %4188 = vmatpush1.bf16.msra.mxu0 0
      %4189 = vmatprep.subr.bf16.mxu0 0
      %4190 = vmatpush1.bf16.msra.mxu0 0
      %4191 = vmatprep.subr.bf16.mxu0 0
      %4192 = vmatpush1.bf16.msra.mxu0 0
      %4193 = vmatprep.subr.bf16.mxu0 0
      %4194 = vmatpush1.bf16.msra.mxu0 0
      %4195 = vmatprep.subr.bf16.mxu0 0
      %4196 = vmatpush1.bf16.msra.mxu0 0
      %4197 = vmatprep.subr.bf16.mxu0 0
      %4198 = vmatpush1.bf16.msra.mxu0 0
      %4199 = vmatprep.subr.bf16.mxu0 0
      %4200 = vmatpush1.bf16.msra.mxu0 0
      %4201 = vmatprep.subr.bf16.mxu0 0
      %4202 = vmatpush1.bf16.msra.mxu0 0
      %4203 = vmatprep.subr.bf16.mxu0 0
      %4204 = vmatpush1.bf16.msra.mxu0 0
      %4205 = vmatprep.subr.bf16.mxu0 0
      %4206 = vmatpush1.bf16.msra.mxu0 0
      %4207 = vmatprep.subr.bf16.mxu0 0
      %4208 = vmatpush1.bf16.msra.mxu0 0
      %4209 = vmatprep.mubr.bf16.mxu0 0
      %4210 = vmatmul.mubr.bf16.gmra.mrb[0].mxu0 %v4172
      %v4211 = vpop.f32.mrb[0].mxu0
      %v4212 = vadd.f32 0.0, %v4211
      %v4213 = vpop.f32.mrb[0].mxu0
      %v4214 = vpop.f32.mrb[0].mxu0
      %v4215 = vpop.f32.mrb[0].mxu0
      %4216 = vdwg.mxu0
      %4218 = vrot.lane.b32.xlu0 %v3990, 8
      %v4219 = vpop.permute.xlu0 %4218
      %4222 = vrot.lane.b32.xlu0 %v4101, 16
      %v4223 = vpop.permute.xlu0 %4222
      %4226 = vrot.lane.b32.xlu0 %v4212, 24
      %v4227 = vpop.permute.xlu0 %4226
      %v4229 = vsel %vm1395, %v3878, %v4219
      %v4230 = vsel %vm1850, %v4229, %v4223
      %v4231 = vsel %vm1852, %v4230, %v4227
      %v4232 = vpack.c.bf16 %v4231, %v4231
      %v4234 = vlaneseq
      %v4235 = vshrl.u32 %v4234, 7
      %v4236 = vsub.s32 0, %v4235
      %v4237 = vrot.slane %v3772, %v4236
      %v4243 = vunpack.c.l.b16 %v3768
      %v4244 = vunpack.c.l.b16 %v3769
      %v4245 = vunpack.c.l.b16 %v3770
      %v4246 = vunpack.c.l.b16 %v3771
      %v4247 = vpack.c.b16 %v4244, %v4243
      %v4248 = vpack.c.b16 %v4246, %v4245
      %v4252 = vsel %vm1342, %v4232, 0
      %4254 = vmatprep.subr.bf16.mxu0 0
      %4255 = vmatpush1.bf16.msra.mxu0 %v4247
      %4256 = vmatprep.subr.bf16.mxu0 0
      %4257 = vmatpush1.bf16.msra.mxu0 %v4248
      %4258 = vmatprep.subr.bf16.mxu0 0
      %4259 = vmatpush1.bf16.msra.mxu0 0
      %4260 = vmatprep.subr.bf16.mxu0 0
      %4261 = vmatpush1.bf16.msra.mxu0 0
      %4262 = vmatprep.subr.bf16.mxu0 0
      %4263 = vmatpush1.bf16.msra.mxu0 0
      %4264 = vmatprep.subr.bf16.mxu0 0
      %4265 = vmatpush1.bf16.msra.mxu0 0
      %4266 = vmatprep.subr.bf16.mxu0 0
      %4267 = vmatpush1.bf16.msra.mxu0 0
      %4268 = vmatprep.subr.bf16.mxu0 0
      %4269 = vmatpush1.bf16.msra.mxu0 0
      %4270 = vmatprep.subr.bf16.mxu0 0
      %4271 = vmatpush1.bf16.msra.mxu0 0
      %4272 = vmatprep.subr.bf16.mxu0 0
      %4273 = vmatpush1.bf16.msra.mxu0 0
      %4274 = vmatprep.subr.bf16.mxu0 0
      %4275 = vmatpush1.bf16.msra.mxu0 0
      %4276 = vmatprep.subr.bf16.mxu0 0
      %4277 = vmatpush1.bf16.msra.mxu0 0
      %4278 = vmatprep.subr.bf16.mxu0 0
      %4279 = vmatpush1.bf16.msra.mxu0 0
      %4280 = vmatprep.subr.bf16.mxu0 0
      %4281 = vmatpush1.bf16.msra.mxu0 0
      %4282 = vmatprep.subr.bf16.mxu0 0
      %4283 = vmatpush1.bf16.msra.mxu0 0
      %4284 = vmatprep.subr.bf16.mxu0 0
      %4285 = vmatpush1.bf16.msra.mxu0 0
      %4286 = vmatprep.mubr.bf16.mxu0 0
      %4287 = vmatmul.mubr.bf16.gmra.mrb[0].mxu0 %v4252
      %v4288 = vpop.f32.mrb[0].mxu0
      %v4289 = vadd.f32 %v4237, %v4288
      %v4290 = vpop.f32.mrb[0].mxu0
      %v4291 = vpop.f32.mrb[0].mxu0
      %v4292 = vpop.f32.mrb[0].mxu0
      %4293 = vdwg.mxu0
      %v4294 = vadd.f32 %v3633, %v4289
      %v4295 = vld [vmem:[%s63] sm:$0x1]
      %v4296 = vld [vmem:[%s65] sm:$0x1]
      %v4297 = vsel %vm1342, %v4294, 0.0
      %4298 = vadd.xlane.f32.xlu0 %v4297
      %v4299 = vpop.xlane.xlu0 %4298
      %v4300 = vmul.f32 %v4299, %v1922
      %v4301 = vsub.f32 %v4294, %v4300
      %v4302 = vmul.f32 %v4301, %v4301
      %v4303 = vsel %vm1342, %v4302, 0.0
      %4304 = vadd.xlane.f32.xlu0 %v4303
      %v4305 = vpop.xlane.xlu0 %4304
      %v4306 = vmul.f32 %v4305, %v1922
      %v4307 = vadd.f32 %v4306, 1e-05
      %v4308 = vrsqrt.pop %v4307
      %v4309 = vmul.f32 %v4301, %v4308
      %v4311 = vlaneseq
      %v4312 = vshrl.u32 %v4311, 7
      %v4313 = vsub.s32 0, %v4312
      %v4314 = vrot.slane %v4295, %v4313
      %v4316 = vmul.f32 %v4309, %v4314
      %v4318 = vlaneseq
      %v4319 = vshrl.u32 %v4318, 7
      %v4320 = vsub.s32 0, %v4319
      %v4321 = vrot.slane %v4296, %v4320
      %v4323 = vadd.f32 %v4316, %v4321
      %v4324 = vld [vmem:[%s51] sm:$0xf]
      %v4325 = vld [vmem:[%s51 + $0x4] sm:$0xf]
      %v4326 = vld [vmem:[%s51 + $0x8] sm:$0xf]
      %v4327 = vld [vmem:[%s51 + $0xc] sm:$0xf]
      %v4328 = vld [vmem:[%s53] sm:$0x1]
      %v4329 = vpack.c.bf16 %v4323, %v4323
      %v4331 = vlaneseq
      %v4332 = vshrl.u32 %v4331, 7
      %v4333 = vsub.s32 0, %v4332
      %v4334 = vrot.slane %v4328, %v4333
      %v4340 = vunpack.c.l.b16 %v4324
      %v4341 = vunpack.c.l.b16 %v4325
      %v4342 = vunpack.c.l.b16 %v4326
      %v4343 = vunpack.c.l.b16 %v4327
      %v4344 = vpack.c.b16 %v4341, %v4340
      %v4345 = vpack.c.b16 %v4343, %v4342
      %v4349 = vsel %vm1342, %v4329, 0
      %4351 = vmatprep.subr.bf16.mxu0 0
      %4352 = vmatpush1.bf16.msra.mxu0 %v4344
      %4353 = vmatprep.subr.bf16.mxu0 0
      %4354 = vmatpush1.bf16.msra.mxu0 %v4345
      %4355 = vmatprep.subr.bf16.mxu0 0
      %4356 = vmatpush1.bf16.msra.mxu0 0
      %4357 = vmatprep.subr.bf16.mxu0 0
      %4358 = vmatpush1.bf16.msra.mxu0 0
      %4359 = vmatprep.subr.bf16.mxu0 0
      %4360 = vmatpush1.bf16.msra.mxu0 0
      %4361 = vmatprep.subr.bf16.mxu0 0
      %4362 = vmatpush1.bf16.msra.mxu0 0
      %4363 = vmatprep.subr.bf16.mxu0 0
      %4364 = vmatpush1.bf16.msra.mxu0 0
      %4365 = vmatprep.subr.bf16.mxu0 0
      %4366 = vmatpush1.bf16.msra.mxu0 0
      %4367 = vmatprep.subr.bf16.mxu0 0
      %4368 = vmatpush1.bf16.msra.mxu0 0
      %4369 = vmatprep.subr.bf16.mxu0 0
      %4370 = vmatpush1.bf16.msra.mxu0 0
      %4371 = vmatprep.subr.bf16.mxu0 0
      %4372 = vmatpush1.bf16.msra.mxu0 0
      %4373 = vmatprep.subr.bf16.mxu0 0
      %4374 = vmatpush1.bf16.msra.mxu0 0
      %4375 = vmatprep.subr.bf16.mxu0 0
      %4376 = vmatpush1.bf16.msra.mxu0 0
      %4377 = vmatprep.subr.bf16.mxu0 0
      %4378 = vmatpush1.bf16.msra.mxu0 0
      %4379 = vmatprep.subr.bf16.mxu0 0
      %4380 = vmatpush1.bf16.msra.mxu0 0
      %4381 = vmatprep.subr.bf16.mxu0 0
      %4382 = vmatpush1.bf16.msra.mxu0 0
      %4383 = vmatprep.mubr.bf16.mxu0 0
      %4384 = vmatmul.mubr.bf16.gmra.mrb[0].mxu0 %v4349
      %v4385 = vpop.f32.mrb[0].mxu0
      %v4386 = vadd.f32 %v4334, %v4385
      %v4387 = vpop.f32.mrb[0].mxu0
      %v4388 = vpop.f32.mrb[0].mxu0
      %v4389 = vpop.f32.mrb[0].mxu0
      %4390 = vdwg.mxu0
      %v4391 = vmax.f32 %v4386, 0.0
      %v4392 = vld [vmem:[%s55] sm:$0xf]
      %v4393 = vld [vmem:[%s55 + $0x4] sm:$0xf]
      %v4394 = vld [vmem:[%s55 + $0x8] sm:$0xf]
      %v4395 = vld [vmem:[%s55 + $0xc] sm:$0xf]
      %v4396 = vld [vmem:[%s55 + $0x10] sm:$0xf]
      %v4397 = vld [vmem:[%s55 + $0x14] sm:$0xf]
      %v4398 = vld [vmem:[%s55 + $0x18] sm:$0xf]
      %v4399 = vld [vmem:[%s55 + $0x1c] sm:$0xf]
      %v4400 = vld [vmem:[%s57] sm:$0x1]
      %v4401 = vpack.c.bf16 %v4391, %v4391
      %v4403 = vlaneseq
      %v4404 = vshrl.u32 %v4403, 7
      %v4405 = vsub.s32 0, %v4404
      %v4406 = vrot.slane %v4400, %v4405
      %v4416 = vunpack.c.l.b16 %v4392
      %v4417 = vunpack.c.l.b16 %v4393
      %v4418 = vunpack.c.l.b16 %v4394
      %v4419 = vunpack.c.l.b16 %v4395
      %v4420 = vunpack.c.l.b16 %v4396
      %v4421 = vunpack.c.l.b16 %v4397
      %v4422 = vunpack.c.l.b16 %v4398
      %v4423 = vunpack.c.l.b16 %v4399
      %v4424 = vpack.c.b16 %v4417, %v4416
      %v4425 = vpack.c.b16 %v4419, %v4418
      %v4426 = vpack.c.b16 %v4421, %v4420
      %v4427 = vpack.c.b16 %v4423, %v4422
      %v4433 = vsel %vm2055, %v4401, 0
      %4435 = vmatprep.subr.bf16.mxu0 0
      %4436 = vmatpush1.bf16.msra.mxu0 %v4424
      %4437 = vmatprep.subr.bf16.mxu0 0
      %4438 = vmatpush1.bf16.msra.mxu0 %v4425
      %4439 = vmatprep.subr.bf16.mxu0 0
      %4440 = vmatpush1.bf16.msra.mxu0 %v4426
      %4441 = vmatprep.subr.bf16.mxu0 0
      %4442 = vmatpush1.bf16.msra.mxu0 %v4427
      %4443 = vmatprep.subr.bf16.mxu0 0
      %4444 = vmatpush1.bf16.msra.mxu0 0
      %4445 = vmatprep.subr.bf16.mxu0 0
      %4446 = vmatpush1.bf16.msra.mxu0 0
      %4447 = vmatprep.subr.bf16.mxu0 0
      %4448 = vmatpush1.bf16.msra.mxu0 0
      %4449 = vmatprep.subr.bf16.mxu0 0
      %4450 = vmatpush1.bf16.msra.mxu0 0
      %4451 = vmatprep.subr.bf16.mxu0 0
      %4452 = vmatpush1.bf16.msra.mxu0 0
      %4453 = vmatprep.subr.bf16.mxu0 0
      %4454 = vmatpush1.bf16.msra.mxu0 0
      %4455 = vmatprep.subr.bf16.mxu0 0
      %4456 = vmatpush1.bf16.msra.mxu0 0
      %4457 = vmatprep.subr.bf16.mxu0 0
      %4458 = vmatpush1.bf16.msra.mxu0 0
      %4459 = vmatprep.subr.bf16.mxu0 0
      %4460 = vmatpush1.bf16.msra.mxu0 0
      %4461 = vmatprep.subr.bf16.mxu0 0
      %4462 = vmatpush1.bf16.msra.mxu0 0
      %4463 = vmatprep.subr.bf16.mxu0 0
      %4464 = vmatpush1.bf16.msra.mxu0 0
      %4465 = vmatprep.subr.bf16.mxu0 0
      %4466 = vmatpush1.bf16.msra.mxu0 0
      %4467 = vmatprep.mubr.bf16.mxu0 0
      %4468 = vmatmul.mubr.bf16.gmra.mrb[0].mxu0 %v4433
      %v4469 = vpop.f32.mrb[0].mxu0
      %v4470 = vadd.f32 %v4406, %v4469
      %v4471 = vpop.f32.mrb[0].mxu0
      %v4472 = vpop.f32.mrb[0].mxu0
      %v4473 = vpop.f32.mrb[0].mxu0
      %4474 = vdwg.mxu0
      %v4475 = vadd.f32 %v4323, %v4470
      %v4476 = vld [vmem:[%s67] sm:$0x1]
      %v4477 = vld [vmem:[%s69] sm:$0x1]
      %v4478 = vsel %vm1342, %v4475, 0.0
      %4479 = vadd.xlane.f32.xlu0 %v4478
      %v4480 = vpop.xlane.xlu0 %4479
      %v4481 = vmul.f32 %v4480, %v1922
      %v4482 = vsub.f32 %v4475, %v4481
      %v4483 = vmul.f32 %v4482, %v4482
      %v4484 = vsel %vm1342, %v4483, 0.0
      %4485 = vadd.xlane.f32.xlu0 %v4484
      %v4486 = vpop.xlane.xlu0 %4485
      %v4487 = vmul.f32 %v4486, %v1922
      %v4488 = vadd.f32 %v4487, 1e-05
      %v4489 = vrsqrt.pop %v4488
      %v4490 = vmul.f32 %v4482, %v4489
      %v4492 = vlaneseq
      %v4493 = vshrl.u32 %v4492, 7
      %v4494 = vsub.s32 0, %v4493
      %v4495 = vrot.slane %v4476, %v4494
      %v4497 = vmul.f32 %v4490, %v4495
      %v4499 = vlaneseq
      %v4500 = vshrl.u32 %v4499, 7
      %v4501 = vsub.s32 0, %v4500
      %v4502 = vrot.slane %v4477, %v4501
      %v4504 = vadd.f32 %v4497, %v4502
      %s4505 = scalar_lea.vmem %s31, 16
      %v4506 = vld [vmem:[%s4505] sm:$0xf]
      %v4507 = vld [vmem:[%s4505 + $0x4] sm:$0xf]
      %v4508 = vld [vmem:[%s4505 + $0x8] sm:$0xf]
      %v4509 = vld [vmem:[%s4505 + $0xc] sm:$0xf]
      %s4510 = scalar_lea.vmem %s33, 1
      %v4511 = vld [vmem:[%s4510] sm:$0x1]
      %v4512 = vpack.c.bf16 %v4504, %v4504
      %v4514 = vlaneseq
      %v4515 = vshrl.u32 %v4514, 7
      %v4516 = vsub.s32 0, %v4515
      %v4517 = vrot.slane %v4511, %v4516
      %v4523 = vunpack.c.l.b16 %v4506
      %v4524 = vunpack.c.l.b16 %v4507
      %v4525 = vunpack.c.l.b16 %v4508
      %v4526 = vunpack.c.l.b16 %v4509
      %v4527 = vpack.c.b16 %v4524, %v4523
      %v4528 = vpack.c.b16 %v4526, %v4525
      %v4532 = vsel %vm1342, %v4512, 0
      %4534 = vmatprep.subr.bf16.mxu0 0
      %4535 = vmatpush1.bf16.msra.mxu0 %v4527
      %4536 = vmatprep.subr.bf16.mxu0 0
      %4537 = vmatpush1.bf16.msra.mxu0 %v4528
      %4538 = vmatprep.subr.bf16.mxu0 0
      %4539 = vmatpush1.bf16.msra.mxu0 0
      %4540 = vmatprep.subr.bf16.mxu0 0
      %4541 = vmatpush1.bf16.msra.mxu0 0
      %4542 = vmatprep.subr.bf16.mxu0 0
      %4543 = vmatpush1.bf16.msra.mxu0 0
      %4544 = vmatprep.subr.bf16.mxu0 0
      %4545 = vmatpush1.bf16.msra.mxu0 0
      %4546 = vmatprep.subr.bf16.mxu0 0
      %4547 = vmatpush1.bf16.msra.mxu0 0
      %4548 = vmatprep.subr.bf16.mxu0 0
      %4549 = vmatpush1.bf16.msra.mxu0 0
      %4550 = vmatprep.subr.bf16.mxu0 0
      %4551 = vmatpush1.bf16.msra.mxu0 0
      %4552 = vmatprep.subr.bf16.mxu0 0
      %4553 = vmatpush1.bf16.msra.mxu0 0
      %4554 = vmatprep.subr.bf16.mxu0 0
      %4555 = vmatpush1.bf16.msra.mxu0 0
      %4556 = vmatprep.subr.bf16.mxu0 0
      %4557 = vmatpush1.bf16.msra.mxu0 0
      %4558 = vmatprep.subr.bf16.mxu0 0
      %4559 = vmatpush1.bf16.msra.mxu0 0
      %4560 = vmatprep.subr.bf16.mxu0 0
      %4561 = vmatpush1.bf16.msra.mxu0 0
      %4562 = vmatprep.subr.bf16.mxu0 0
      %4563 = vmatpush1.bf16.msra.mxu0 0
      %4564 = vmatprep.subr.bf16.mxu0 0
      %4565 = vmatpush1.bf16.msra.mxu0 0
      %4566 = vmatprep.mubr.bf16.mxu0 0
      %4567 = vmatmul.mubr.bf16.gmra.mrb[0].mxu0 %v4532
      %v4568 = vpop.f32.mrb[0].mxu0
      %v4569 = vadd.f32 %v4517, %v4568
      %v4570 = vpop.f32.mrb[0].mxu0
      %v4571 = vpop.f32.mrb[0].mxu0
      %v4572 = vpop.f32.mrb[0].mxu0
      %4573 = vdwg.mxu0
      %s4574 = scalar_lea.vmem %s35, 16
      %v4575 = vld [vmem:[%s4574] sm:$0xf]
      %v4576 = vld [vmem:[%s4574 + $0x4] sm:$0xf]
      %v4577 = vld [vmem:[%s4574 + $0x8] sm:$0xf]
      %v4578 = vld [vmem:[%s4574 + $0xc] sm:$0xf]
      %s4579 = scalar_lea.vmem %s37, 1
      %v4580 = vld [vmem:[%s4579] sm:$0x1]
      %v4581 = vpack.c.bf16 %v4569, %v4569
      %4583 = vrot.lane.b32.xlu0 %v4581, 96
      %v4584 = vpop.permute.xlu0 %4583
      %v4586 = vsel %vm1395, %v4581, 0
      %v4589 = vsel %vm1395, %v4584, 0
      %4591 = vmatprep.subr.bf16.mxu0 0
      %4592 = vmatpush1.bf16.xpose.msra.mxu0 %v4589
      %4593 = vmatprep.subr.bf16.mxu0 0
      %4594 = vmatpush1.bf16.xpose.msra.mxu0 0
      %4595 = vmatprep.subr.bf16.mxu0 0
      %4596 = vmatpush1.bf16.xpose.msra.mxu0 0
      %4597 = vmatprep.subr.bf16.mxu0 0
      %4598 = vmatpush1.bf16.xpose.msra.mxu0 0
      %4599 = vmatprep.subr.bf16.mxu0 0
      %4600 = vmatpush1.bf16.xpose.msra.mxu0 0
      %4601 = vmatprep.subr.bf16.mxu0 0
      %4602 = vmatpush1.bf16.xpose.msra.mxu0 0
      %4603 = vmatprep.subr.bf16.mxu0 0
      %4604 = vmatpush1.bf16.xpose.msra.mxu0 0
      %4605 = vmatprep.subr.bf16.mxu0 0
      %4606 = vmatpush1.bf16.xpose.msra.mxu0 0
      %4607 = vmatprep.subr.bf16.mxu0 0
      %4608 = vmatpush1.bf16.xpose.msra.mxu0 0
      %4609 = vmatprep.subr.bf16.mxu0 0
      %4610 = vmatpush1.bf16.xpose.msra.mxu0 0
      %4611 = vmatprep.subr.bf16.mxu0 0
      %4612 = vmatpush1.bf16.xpose.msra.mxu0 0
      %4613 = vmatprep.subr.bf16.mxu0 0
      %4614 = vmatpush1.bf16.xpose.msra.mxu0 0
      %4615 = vmatprep.subr.bf16.mxu0 0
      %4616 = vmatpush1.bf16.xpose.msra.mxu0 0
      %4617 = vmatprep.subr.bf16.mxu0 0
      %4618 = vmatpush1.bf16.xpose.msra.mxu0 0
      %4619 = vmatprep.subr.bf16.mxu0 0
      %4620 = vmatpush1.bf16.xpose.msra.mxu0 0
      %4621 = vmatprep.subr.bf16.mxu0 0
      %4622 = vmatpush1.bf16.xpose.msra.mxu0 0
      %4623 = vmatprep.mubr.bf16.mxu0 0
      %4624 = vmatmul.mubr.bf16.gmra.mrb[0].mxu0 %v4586
      %v4625 = vpop.f32.mrb[0].mxu0
      %v4626 = vadd.f32 0.0, %v4625
      %v4627 = vpop.f32.mrb[0].mxu0
      %v4628 = vpop.f32.mrb[0].mxu0
      %v4629 = vpop.f32.mrb[0].mxu0
      %4630 = vdwg.mxu0
      %v4631 = vmul.f32 %v4626, 0.35355338
      %v4632 = vsel %vm1395, %v4631, -inf
      %4633 = vmax.xlane.f32.xlu0 %v4632
      %v4634 = vpop.xlane.xlu0 %4633
      %v4635 = vsub.f32 %v4631, %v4634
      %v4636 = vmul.f32 %v4635, 1.442695
      %v4637 = vpow.pop %v4636
      %v4638 = vsel %vm1395, %v4637, 0.0
      %4639 = vadd.xlane.f32.xlu0 %v4638
      %v4640 = vpop.xlane.xlu0 %4639
      %v4641 = vrcp.pop %v4640
      %v4642 = vmul.f32 %v4637, %v4641
      %v4643 = vpack.c.bf16 %v4642, %v4642
      %4644 = vrot.lane.b32.xlu0 %v4581, 64
      %v4645 = vpop.permute.xlu0 %4644
      %v4647 = vsel %vm1395, %v4643, 0
      %v4650 = vsel %vm1460, %v4645, 0
      %4652 = vmatprep.subr.bf16.mxu0 0
      %4653 = vmatpush1.bf16.msra.mxu0 %v4650
      %4654 = vmatprep.subr.bf16.mxu0 0
      %4655 = vmatpush1.bf16.msra.mxu0 0
      %4656 = vmatprep.subr.bf16.mxu0 0
      %4657 = vmatpush1.bf16.msra.mxu0 0
      %4658 = vmatprep.subr.bf16.mxu0 0
      %4659 = vmatpush1.bf16.msra.mxu0 0
      %4660 = vmatprep.subr.bf16.mxu0 0
      %4661 = vmatpush1.bf16.msra.mxu0 0
      %4662 = vmatprep.subr.bf16.mxu0 0
      %4663 = vmatpush1.bf16.msra.mxu0 0
      %4664 = vmatprep.subr.bf16.mxu0 0
      %4665 = vmatpush1.bf16.msra.mxu0 0
      %4666 = vmatprep.subr.bf16.mxu0 0
      %4667 = vmatpush1.bf16.msra.mxu0 0
      %4668 = vmatprep.subr.bf16.mxu0 0
      %4669 = vmatpush1.bf16.msra.mxu0 0
      %4670 = vmatprep.subr.bf16.mxu0 0
      %4671 = vmatpush1.bf16.msra.mxu0 0
      %4672 = vmatprep.subr.bf16.mxu0 0
      %4673 = vmatpush1.bf16.msra.mxu0 0
      %4674 = vmatprep.subr.bf16.mxu0 0
      %4675 = vmatpush1.bf16.msra.mxu0 0
      %4676 = vmatprep.subr.bf16.mxu0 0
      %4677 = vmatpush1.bf16.msra.mxu0 0
      %4678 = vmatprep.subr.bf16.mxu0 0
      %4679 = vmatpush1.bf16.msra.mxu0 0
      %4680 = vmatprep.subr.bf16.mxu0 0
      %4681 = vmatpush1.bf16.msra.mxu0 0
      %4682 = vmatprep.subr.bf16.mxu0 0
      %4683 = vmatpush1.bf16.msra.mxu0 0
      %4684 = vmatprep.mubr.bf16.mxu0 0
      %4685 = vmatmul.mubr.bf16.gmra.mrb[0].mxu0 %v4647
      %v4686 = vpop.f32.mrb[0].mxu0
      %v4687 = vadd.f32 0.0, %v4686
      %v4688 = vpop.f32.mrb[0].mxu0
      %v4689 = vpop.f32.mrb[0].mxu0
      %v4690 = vpop.f32.mrb[0].mxu0
      %4691 = vdwg.mxu0
      %4692 = vrot.lane.b32.xlu0 %v4581, 120
      %v4693 = vpop.permute.xlu0 %4692
      %4694 = vrot.lane.b32.xlu0 %v4581, 88
      %v4695 = vpop.permute.xlu0 %4694
      %v4697 = vsel %vm1395, %v4693, 0
      %v4700 = vsel %vm1395, %v4695, 0
      %4702 = vmatprep.subr.bf16.mxu0 0
      %4703 = vmatpush1.bf16.xpose.msra.mxu0 %v4700
      %4704 = vmatprep.subr.bf16.mxu0 0
      %4705 = vmatpush1.bf16.xpose.msra.mxu0 0
      %4706 = vmatprep.subr.bf16.mxu0 0
      %4707 = vmatpush1.bf16.xpose.msra.mxu0 0
      %4708 = vmatprep.subr.bf16.mxu0 0
      %4709 = vmatpush1.bf16.xpose.msra.mxu0 0
      %4710 = vmatprep.subr.bf16.mxu0 0
      %4711 = vmatpush1.bf16.xpose.msra.mxu0 0
      %4712 = vmatprep.subr.bf16.mxu0 0
      %4713 = vmatpush1.bf16.xpose.msra.mxu0 0
      %4714 = vmatprep.subr.bf16.mxu0 0
      %4715 = vmatpush1.bf16.xpose.msra.mxu0 0
      %4716 = vmatprep.subr.bf16.mxu0 0
      %4717 = vmatpush1.bf16.xpose.msra.mxu0 0
      %4718 = vmatprep.subr.bf16.mxu0 0
      %4719 = vmatpush1.bf16.xpose.msra.mxu0 0
      %4720 = vmatprep.subr.bf16.mxu0 0
      %4721 = vmatpush1.bf16.xpose.msra.mxu0 0
      %4722 = vmatprep.subr.bf16.mxu0 0
      %4723 = vmatpush1.bf16.xpose.msra.mxu0 0
      %4724 = vmatprep.subr.bf16.mxu0 0
      %4725 = vmatpush1.bf16.xpose.msra.mxu0 0
      %4726 = vmatprep.subr.bf16.mxu0 0
      %4727 = vmatpush1.bf16.xpose.msra.mxu0 0
      %4728 = vmatprep.subr.bf16.mxu0 0
      %4729 = vmatpush1.bf16.xpose.msra.mxu0 0
      %4730 = vmatprep.subr.bf16.mxu0 0
      %4731 = vmatpush1.bf16.xpose.msra.mxu0 0
      %4732 = vmatprep.subr.bf16.mxu0 0
      %4733 = vmatpush1.bf16.xpose.msra.mxu0 0
      %4734 = vmatprep.mubr.bf16.mxu0 0
      %4735 = vmatmul.mubr.bf16.gmra.mrb[0].mxu0 %v4697
      %v4736 = vpop.f32.mrb[0].mxu0
      %v4737 = vadd.f32 0.0, %v4736
      %v4738 = vpop.f32.mrb[0].mxu0
      %v4739 = vpop.f32.mrb[0].mxu0
      %v4740 = vpop.f32.mrb[0].mxu0
      %4741 = vdwg.mxu0
      %v4742 = vmul.f32 %v4737, 0.35355338
      %v4743 = vsel %vm1395, %v4742, -inf
      %4744 = vmax.xlane.f32.xlu0 %v4743
      %v4745 = vpop.xlane.xlu0 %4744
      %v4746 = vsub.f32 %v4742, %v4745
      %v4747 = vmul.f32 %v4746, 1.442695
      %v4748 = vpow.pop %v4747
      %v4749 = vsel %vm1395, %v4748, 0.0
      %4750 = vadd.xlane.f32.xlu0 %v4749
      %v4751 = vpop.xlane.xlu0 %4750
      %v4752 = vrcp.pop %v4751
      %v4753 = vmul.f32 %v4748, %v4752
      %v4754 = vpack.c.bf16 %v4753, %v4753
      %4755 = vrot.lane.b32.xlu0 %v4581, 56
      %v4756 = vpop.permute.xlu0 %4755
      %v4758 = vsel %vm1395, %v4754, 0
      %v4761 = vsel %vm1460, %v4756, 0
      %4763 = vmatprep.subr.bf16.mxu0 0
      %4764 = vmatpush1.bf16.msra.mxu0 %v4761
      %4765 = vmatprep.subr.bf16.mxu0 0
      %4766 = vmatpush1.bf16.msra.mxu0 0
      %4767 = vmatprep.subr.bf16.mxu0 0
      %4768 = vmatpush1.bf16.msra.mxu0 0
      %4769 = vmatprep.subr.bf16.mxu0 0
      %4770 = vmatpush1.bf16.msra.mxu0 0
      %4771 = vmatprep.subr.bf16.mxu0 0
      %4772 = vmatpush1.bf16.msra.mxu0 0
      %4773 = vmatprep.subr.bf16.mxu0 0
      %4774 = vmatpush1.bf16.msra.mxu0 0
      %4775 = vmatprep.subr.bf16.mxu0 0
      %4776 = vmatpush1.bf16.msra.mxu0 0
      %4777 = vmatprep.subr.bf16.mxu0 0
      %4778 = vmatpush1.bf16.msra.mxu0 0
      %4779 = vmatprep.subr.bf16.mxu0 0
      %4780 = vmatpush1.bf16.msra.mxu0 0
      %4781 = vmatprep.subr.bf16.mxu0 0
      %4782 = vmatpush1.bf16.msra.mxu0 0
      %4783 = vmatprep.subr.bf16.mxu0 0
      %4784 = vmatpush1.bf16.msra.mxu0 0
      %4785 = vmatprep.subr.bf16.mxu0 0
      %4786 = vmatpush1.bf16.msra.mxu0 0
      %4787 = vmatprep.subr.bf16.mxu0 0
      %4788 = vmatpush1.bf16.msra.mxu0 0
      %4789 = vmatprep.subr.bf16.mxu0 0
      %4790 = vmatpush1.bf16.msra.mxu0 0
      %4791 = vmatprep.subr.bf16.mxu0 0
      %4792 = vmatpush1.bf16.msra.mxu0 0
      %4793 = vmatprep.subr.bf16.mxu0 0
      %4794 = vmatpush1.bf16.msra.mxu0 0
      %4795 = vmatprep.mubr.bf16.mxu0 0
      %4796 = vmatmul.mubr.bf16.gmra.mrb[0].mxu0 %v4758
      %v4797 = vpop.f32.mrb[0].mxu0
      %v4798 = vadd.f32 0.0, %v4797
      %v4799 = vpop.f32.mrb[0].mxu0
      %v4800 = vpop.f32.mrb[0].mxu0
      %v4801 = vpop.f32.mrb[0].mxu0
      %4802 = vdwg.mxu0
      %4803 = vrot.lane.b32.xlu0 %v4581, 112
      %v4804 = vpop.permute.xlu0 %4803
      %4805 = vrot.lane.b32.xlu0 %v4581, 80
      %v4806 = vpop.permute.xlu0 %4805
      %v4808 = vsel %vm1395, %v4804, 0
      %v4811 = vsel %vm1395, %v4806, 0
      %4813 = vmatprep.subr.bf16.mxu0 0
      %4814 = vmatpush1.bf16.xpose.msra.mxu0 %v4811
      %4815 = vmatprep.subr.bf16.mxu0 0
      %4816 = vmatpush1.bf16.xpose.msra.mxu0 0
      %4817 = vmatprep.subr.bf16.mxu0 0
      %4818 = vmatpush1.bf16.xpose.msra.mxu0 0
      %4819 = vmatprep.subr.bf16.mxu0 0
      %4820 = vmatpush1.bf16.xpose.msra.mxu0 0
      %4821 = vmatprep.subr.bf16.mxu0 0
      %4822 = vmatpush1.bf16.xpose.msra.mxu0 0
      %4823 = vmatprep.subr.bf16.mxu0 0
      %4824 = vmatpush1.bf16.xpose.msra.mxu0 0
      %4825 = vmatprep.subr.bf16.mxu0 0
      %4826 = vmatpush1.bf16.xpose.msra.mxu0 0
      %4827 = vmatprep.subr.bf16.mxu0 0
      %4828 = vmatpush1.bf16.xpose.msra.mxu0 0
      %4829 = vmatprep.subr.bf16.mxu0 0
      %4830 = vmatpush1.bf16.xpose.msra.mxu0 0
      %4831 = vmatprep.subr.bf16.mxu0 0
      %4832 = vmatpush1.bf16.xpose.msra.mxu0 0
      %4833 = vmatprep.subr.bf16.mxu0 0
      %4834 = vmatpush1.bf16.xpose.msra.mxu0 0
      %4835 = vmatprep.subr.bf16.mxu0 0
      %4836 = vmatpush1.bf16.xpose.msra.mxu0 0
      %4837 = vmatprep.subr.bf16.mxu0 0
      %4838 = vmatpush1.bf16.xpose.msra.mxu0 0
      %4839 = vmatprep.subr.bf16.mxu0 0
      %4840 = vmatpush1.bf16.xpose.msra.mxu0 0
      %4841 = vmatprep.subr.bf16.mxu0 0
      %4842 = vmatpush1.bf16.xpose.msra.mxu0 0
      %4843 = vmatprep.subr.bf16.mxu0 0
      %4844 = vmatpush1.bf16.xpose.msra.mxu0 0
      %4845 = vmatprep.mubr.bf16.mxu0 0
      %4846 = vmatmul.mubr.bf16.gmra.mrb[0].mxu0 %v4808
      %v4847 = vpop.f32.mrb[0].mxu0
      %v4848 = vadd.f32 0.0, %v4847
      %v4849 = vpop.f32.mrb[0].mxu0
      %v4850 = vpop.f32.mrb[0].mxu0
      %v4851 = vpop.f32.mrb[0].mxu0
      %4852 = vdwg.mxu0
      %v4853 = vmul.f32 %v4848, 0.35355338
      %v4854 = vsel %vm1395, %v4853, -inf
      %4855 = vmax.xlane.f32.xlu0 %v4854
      %v4856 = vpop.xlane.xlu0 %4855
      %v4857 = vsub.f32 %v4853, %v4856
      %v4858 = vmul.f32 %v4857, 1.442695
      %v4859 = vpow.pop %v4858
      %v4860 = vsel %vm1395, %v4859, 0.0
      %4861 = vadd.xlane.f32.xlu0 %v4860
      %v4862 = vpop.xlane.xlu0 %4861
      %v4863 = vrcp.pop %v4862
      %v4864 = vmul.f32 %v4859, %v4863
      %v4865 = vpack.c.bf16 %v4864, %v4864
      %4866 = vrot.lane.b32.xlu0 %v4581, 48
      %v4867 = vpop.permute.xlu0 %4866
      %v4869 = vsel %vm1395, %v4865, 0
      %v4872 = vsel %vm1460, %v4867, 0
      %4874 = vmatprep.subr.bf16.mxu0 0
      %4875 = vmatpush1.bf16.msra.mxu0 %v4872
      %4876 = vmatprep.subr.bf16.mxu0 0
      %4877 = vmatpush1.bf16.msra.mxu0 0
      %4878 = vmatprep.subr.bf16.mxu0 0
      %4879 = vmatpush1.bf16.msra.mxu0 0
      %4880 = vmatprep.subr.bf16.mxu0 0
      %4881 = vmatpush1.bf16.msra.mxu0 0
      %4882 = vmatprep.subr.bf16.mxu0 0
      %4883 = vmatpush1.bf16.msra.mxu0 0
      %4884 = vmatprep.subr.bf16.mxu0 0
      %4885 = vmatpush1.bf16.msra.mxu0 0
      %4886 = vmatprep.subr.bf16.mxu0 0
      %4887 = vmatpush1.bf16.msra.mxu0 0
      %4888 = vmatprep.subr.bf16.mxu0 0
      %4889 = vmatpush1.bf16.msra.mxu0 0
      %4890 = vmatprep.subr.bf16.mxu0 0
      %4891 = vmatpush1.bf16.msra.mxu0 0
      %4892 = vmatprep.subr.bf16.mxu0 0
      %4893 = vmatpush1.bf16.msra.mxu0 0
      %4894 = vmatprep.subr.bf16.mxu0 0
      %4895 = vmatpush1.bf16.msra.mxu0 0
      %4896 = vmatprep.subr.bf16.mxu0 0
      %4897 = vmatpush1.bf16.msra.mxu0 0
      %4898 = vmatprep.subr.bf16.mxu0 0
      %4899 = vmatpush1.bf16.msra.mxu0 0
      %4900 = vmatprep.subr.bf16.mxu0 0
      %4901 = vmatpush1.bf16.msra.mxu0 0
      %4902 = vmatprep.subr.bf16.mxu0 0
      %4903 = vmatpush1.bf16.msra.mxu0 0
      %4904 = vmatprep.subr.bf16.mxu0 0
      %4905 = vmatpush1.bf16.msra.mxu0 0
      %4906 = vmatprep.mubr.bf16.mxu0 0
      %4907 = vmatmul.mubr.bf16.gmra.mrb[0].mxu0 %v4869
      %v4908 = vpop.f32.mrb[0].mxu0
      %v4909 = vadd.f32 0.0, %v4908
      %v4910 = vpop.f32.mrb[0].mxu0
      %v4911 = vpop.f32.mrb[0].mxu0
      %v4912 = vpop.f32.mrb[0].mxu0
      %4913 = vdwg.mxu0
      %4914 = vrot.lane.b32.xlu0 %v4581, 104
      %v4915 = vpop.permute.xlu0 %4914
      %4916 = vrot.lane.b32.xlu0 %v4581, 72
      %v4917 = vpop.permute.xlu0 %4916
      %v4919 = vsel %vm1395, %v4915, 0
      %v4922 = vsel %vm1395, %v4917, 0
      %4924 = vmatprep.subr.bf16.mxu0 0
      %4925 = vmatpush1.bf16.xpose.msra.mxu0 %v4922
      %4926 = vmatprep.subr.bf16.mxu0 0
      %4927 = vmatpush1.bf16.xpose.msra.mxu0 0
      %4928 = vmatprep.subr.bf16.mxu0 0
      %4929 = vmatpush1.bf16.xpose.msra.mxu0 0
      %4930 = vmatprep.subr.bf16.mxu0 0
      %4931 = vmatpush1.bf16.xpose.msra.mxu0 0
      %4932 = vmatprep.subr.bf16.mxu0 0
      %4933 = vmatpush1.bf16.xpose.msra.mxu0 0
      %4934 = vmatprep.subr.bf16.mxu0 0
      %4935 = vmatpush1.bf16.xpose.msra.mxu0 0
      %4936 = vmatprep.subr.bf16.mxu0 0
      %4937 = vmatpush1.bf16.xpose.msra.mxu0 0
      %4938 = vmatprep.subr.bf16.mxu0 0
      %4939 = vmatpush1.bf16.xpose.msra.mxu0 0
      %4940 = vmatprep.subr.bf16.mxu0 0
      %4941 = vmatpush1.bf16.xpose.msra.mxu0 0
      %4942 = vmatprep.subr.bf16.mxu0 0
      %4943 = vmatpush1.bf16.xpose.msra.mxu0 0
      %4944 = vmatprep.subr.bf16.mxu0 0
      %4945 = vmatpush1.bf16.xpose.msra.mxu0 0
      %4946 = vmatprep.subr.bf16.mxu0 0
      %4947 = vmatpush1.bf16.xpose.msra.mxu0 0
      %4948 = vmatprep.subr.bf16.mxu0 0
      %4949 = vmatpush1.bf16.xpose.msra.mxu0 0
      %4950 = vmatprep.subr.bf16.mxu0 0
      %4951 = vmatpush1.bf16.xpose.msra.mxu0 0
      %4952 = vmatprep.subr.bf16.mxu0 0
      %4953 = vmatpush1.bf16.xpose.msra.mxu0 0
      %4954 = vmatprep.subr.bf16.mxu0 0
      %4955 = vmatpush1.bf16.xpose.msra.mxu0 0
      %4956 = vmatprep.mubr.bf16.mxu0 0
      %4957 = vmatmul.mubr.bf16.gmra.mrb[0].mxu0 %v4919
      %v4958 = vpop.f32.mrb[0].mxu0
      %v4959 = vadd.f32 0.0, %v4958
      %v4960 = vpop.f32.mrb[0].mxu0
      %v4961 = vpop.f32.mrb[0].mxu0
      %v4962 = vpop.f32.mrb[0].mxu0
      %4963 = vdwg.mxu0
      %v4964 = vmul.f32 %v4959, 0.35355338
      %v4965 = vsel %vm1395, %v4964, -inf
      %4966 = vmax.xlane.f32.xlu0 %v4965
      %v4967 = vpop.xlane.xlu0 %4966
      %v4968 = vsub.f32 %v4964, %v4967
      %v4969 = vmul.f32 %v4968, 1.442695
      %v4970 = vpow.pop %v4969
      %v4971 = vsel %vm1395, %v4970, 0.0
      %4972 = vadd.xlane.f32.xlu0 %v4971
      %v4973 = vpop.xlane.xlu0 %4972
      %v4974 = vrcp.pop %v4973
      %v4975 = vmul.f32 %v4970, %v4974
      %v4976 = vpack.c.bf16 %v4975, %v4975
      %4977 = vrot.lane.b32.xlu0 %v4581, 40
      %v4978 = vpop.permute.xlu0 %4977
      %v4980 = vsel %vm1395, %v4976, 0
      %v4983 = vsel %vm1460, %v4978, 0
      %4985 = vmatprep.subr.bf16.mxu0 0
      %4986 = vmatpush1.bf16.msra.mxu0 %v4983
      %4987 = vmatprep.subr.bf16.mxu0 0
      %4988 = vmatpush1.bf16.msra.mxu0 0
      %4989 = vmatprep.subr.bf16.mxu0 0
      %4990 = vmatpush1.bf16.msra.mxu0 0
      %4991 = vmatprep.subr.bf16.mxu0 0
      %4992 = vmatpush1.bf16.msra.mxu0 0
      %4993 = vmatprep.subr.bf16.mxu0 0
      %4994 = vmatpush1.bf16.msra.mxu0 0
      %4995 = vmatprep.subr.bf16.mxu0 0
      %4996 = vmatpush1.bf16.msra.mxu0 0
      %4997 = vmatprep.subr.bf16.mxu0 0
      %4998 = vmatpush1.bf16.msra.mxu0 0
      %4999 = vmatprep.subr.bf16.mxu0 0
      %5000 = vmatpush1.bf16.msra.mxu0 0
      %5001 = vmatprep.subr.bf16.mxu0 0
      %5002 = vmatpush1.bf16.msra.mxu0 0
      %5003 = vmatprep.subr.bf16.mxu0 0
      %5004 = vmatpush1.bf16.msra.mxu0 0
      %5005 = vmatprep.subr.bf16.mxu0 0
      %5006 = vmatpush1.bf16.msra.mxu0 0
      %5007 = vmatprep.subr.bf16.mxu0 0
      %5008 = vmatpush1.bf16.msra.mxu0 0
      %5009 = vmatprep.subr.bf16.mxu0 0
      %5010 = vmatpush1.bf16.msra.mxu0 0
      %5011 = vmatprep.subr.bf16.mxu0 0
      %5012 = vmatpush1.bf16.msra.mxu0 0
      %5013 = vmatprep.subr.bf16.mxu0 0
      %5014 = vmatpush1.bf16.msra.mxu0 0
      %5015 = vmatprep.subr.bf16.mxu0 0
      %5016 = vmatpush1.bf16.msra.mxu0 0
      %5017 = vmatprep.mubr.bf16.mxu0 0
      %5018 = vmatmul.mubr.bf16.gmra.mrb[0].mxu0 %v4980
      %v5019 = vpop.f32.mrb[0].mxu0
      %v5020 = vadd.f32 0.0, %v5019
      %v5021 = vpop.f32.mrb[0].mxu0
      %v5022 = vpop.f32.mrb[0].mxu0
      %v5023 = vpop.f32.mrb[0].mxu0
      %5024 = vdwg.mxu0
      %5026 = vrot.lane.b32.xlu0 %v4798, 8
      %v5027 = vpop.permute.xlu0 %5026
      %5030 = vrot.lane.b32.xlu0 %v4909, 16
      %v5031 = vpop.permute.xlu0 %5030
      %5034 = vrot.lane.b32.xlu0 %v5020, 24
      %v5035 = vpop.permute.xlu0 %5034
      %v5037 = vsel %vm1395, %v4687, %v5027
      %v5038 = vsel %vm1850, %v5037, %v5031
      %v5039 = vsel %vm1852, %v5038, %v5035
      %v5040 = vpack.c.bf16 %v5039, %v5039
      %v5042 = vlaneseq
      %v5043 = vshrl.u32 %v5042, 7
      %v5044 = vsub.s32 0, %v5043
      %v5045 = vrot.slane %v4580, %v5044
      %v5051 = vunpack.c.l.b16 %v4575
      %v5052 = vunpack.c.l.b16 %v4576
      %v5053 = vunpack.c.l.b16 %v4577
      %v5054 = vunpack.c.l.b16 %v4578
      %v5055 = vpack.c.b16 %v5052, %v5051
      %v5056 = vpack.c.b16 %v5054, %v5053
      %v5060 = vsel %vm1342, %v5040, 0
      %5062 = vmatprep.subr.bf16.mxu0 0
      %5063 = vmatpush1.bf16.msra.mxu0 %v5055
      %5064 = vmatprep.subr.bf16.mxu0 0
      %5065 = vmatpush1.bf16.msra.mxu0 %v5056
      %5066 = vmatprep.subr.bf16.mxu0 0
      %5067 = vmatpush1.bf16.msra.mxu0 0
      %5068 = vmatprep.subr.bf16.mxu0 0
      %5069 = vmatpush1.bf16.msra.mxu0 0
      %5070 = vmatprep.subr.bf16.mxu0 0
      %5071 = vmatpush1.bf16.msra.mxu0 0
      %5072 = vmatprep.subr.bf16.mxu0 0
      %5073 = vmatpush1.bf16.msra.mxu0 0
      %5074 = vmatprep.subr.bf16.mxu0 0
      %5075 = vmatpush1.bf16.msra.mxu0 0
      %5076 = vmatprep.subr.bf16.mxu0 0
      %5077 = vmatpush1.bf16.msra.mxu0 0
      %5078 = vmatprep.subr.bf16.mxu0 0
      %5079 = vmatpush1.bf16.msra.mxu0 0
      %5080 = vmatprep.subr.bf16.mxu0 0
      %5081 = vmatpush1.bf16.msra.mxu0 0
      %5082 = vmatprep.subr.bf16.mxu0 0
      %5083 = vmatpush1.bf16.msra.mxu0 0
      %5084 = vmatprep.subr.bf16.mxu0 0
      %5085 = vmatpush1.bf16.msra.mxu0 0
      %5086 = vmatprep.subr.bf16.mxu0 0
      %5087 = vmatpush1.bf16.msra.mxu0 0
      %5088 = vmatprep.subr.bf16.mxu0 0
      %5089 = vmatpush1.bf16.msra.mxu0 0
      %5090 = vmatprep.subr.bf16.mxu0 0
      %5091 = vmatpush1.bf16.msra.mxu0 0
      %5092 = vmatprep.subr.bf16.mxu0 0
      %5093 = vmatpush1.bf16.msra.mxu0 0
      %5094 = vmatprep.mubr.bf16.mxu0 0
      %5095 = vmatmul.mubr.bf16.gmra.mrb[0].mxu0 %v5060
      %v5096 = vpop.f32.mrb[0].mxu0
      %v5097 = vadd.f32 %v5045, %v5096
      %v5098 = vpop.f32.mrb[0].mxu0
      %v5099 = vpop.f32.mrb[0].mxu0
      %v5100 = vpop.f32.mrb[0].mxu0
      %5101 = vdwg.mxu0
      %v5102 = vadd.f32 %v4504, %v5097
      %s5103 = scalar_lea.vmem %s59, 1
      %v5104 = vld [vmem:[%s5103] sm:$0x1]
      %s5105 = scalar_lea.vmem %s61, 1
      %v5106 = vld [vmem:[%s5105] sm:$0x1]
      %v5107 = vsel %vm1342, %v5102, 0.0
      %5108 = vadd.xlane.f32.xlu0 %v5107
      %v5109 = vpop.xlane.xlu0 %5108
      %v5110 = vmul.f32 %v5109, %v1922
      %v5111 = vsub.f32 %v5102, %v5110
      %v5112 = vmul.f32 %v5111, %v5111
      %v5113 = vsel %vm1342, %v5112, 0.0
      %5114 = vadd.xlane.f32.xlu0 %v5113
      %v5115 = vpop.xlane.xlu0 %5114
      %v5116 = vmul.f32 %v5115, %v1922
      %v5117 = vadd.f32 %v5116, 1e-05
      %v5118 = vrsqrt.pop %v5117
      %v5119 = vmul.f32 %v5111, %v5118
      %v5121 = vlaneseq
      %v5122 = vshrl.u32 %v5121, 7
      %v5123 = vsub.s32 0, %v5122
      %v5124 = vrot.slane %v5104, %v5123
      %v5126 = vmul.f32 %v5119, %v5124
      %v5128 = vlaneseq
      %v5129 = vshrl.u32 %v5128, 7
      %v5130 = vsub.s32 0, %v5129
      %v5131 = vrot.slane %v5106, %v5130
      %v5133 = vadd.f32 %v5126, %v5131
      %s5134 = scalar_lea.vmem %s39, 16
      %v5135 = vld [vmem:[%s5134] sm:$0xf]
      %v5136 = vld [vmem:[%s5134 + $0x4] sm:$0xf]
      %v5137 = vld [vmem:[%s5134 + $0x8] sm:$0xf]
      %v5138 = vld [vmem:[%s5134 + $0xc] sm:$0xf]
      %s5139 = scalar_lea.vmem %s41, 1
      %v5140 = vld [vmem:[%s5139] sm:$0x1]
      %v5141 = vpack.c.bf16 %v5133, %v5133
      %v5143 = vlaneseq
      %v5144 = vshrl.u32 %v5143, 7
      %v5145 = vsub.s32 0, %v5144
      %v5146 = vrot.slane %v5140, %v5145
      %v5152 = vunpack.c.l.b16 %v5135
      %v5153 = vunpack.c.l.b16 %v5136
      %v5154 = vunpack.c.l.b16 %v5137
      %v5155 = vunpack.c.l.b16 %v5138
      %v5156 = vpack.c.b16 %v5153, %v5152
      %v5157 = vpack.c.b16 %v5155, %v5154
      %v5161 = vsel %vm1342, %v5141, 0
      %5163 = vmatprep.subr.bf16.mxu0 0
      %5164 = vmatpush1.bf16.msra.mxu0 %v5156
      %5165 = vmatprep.subr.bf16.mxu0 0
      %5166 = vmatpush1.bf16.msra.mxu0 %v5157
      %5167 = vmatprep.subr.bf16.mxu0 0
      %5168 = vmatpush1.bf16.msra.mxu0 0
      %5169 = vmatprep.subr.bf16.mxu0 0
      %5170 = vmatpush1.bf16.msra.mxu0 0
      %5171 = vmatprep.subr.bf16.mxu0 0
      %5172 = vmatpush1.bf16.msra.mxu0 0
      %5173 = vmatprep.subr.bf16.mxu0 0
      %5174 = vmatpush1.bf16.msra.mxu0 0
      %5175 = vmatprep.subr.bf16.mxu0 0
      %5176 = vmatpush1.bf16.msra.mxu0 0
      %5177 = vmatprep.subr.bf16.mxu0 0
      %5178 = vmatpush1.bf16.msra.mxu0 0
      %5179 = vmatprep.subr.bf16.mxu0 0
      %5180 = vmatpush1.bf16.msra.mxu0 0
      %5181 = vmatprep.subr.bf16.mxu0 0
      %5182 = vmatpush1.bf16.msra.mxu0 0
      %5183 = vmatprep.subr.bf16.mxu0 0
      %5184 = vmatpush1.bf16.msra.mxu0 0
      %5185 = vmatprep.subr.bf16.mxu0 0
      %5186 = vmatpush1.bf16.msra.mxu0 0
      %5187 = vmatprep.subr.bf16.mxu0 0
      %5188 = vmatpush1.bf16.msra.mxu0 0
      %5189 = vmatprep.subr.bf16.mxu0 0
      %5190 = vmatpush1.bf16.msra.mxu0 0
      %5191 = vmatprep.subr.bf16.mxu0 0
      %5192 = vmatpush1.bf16.msra.mxu0 0
      %5193 = vmatprep.subr.bf16.mxu0 0
      %5194 = vmatpush1.bf16.msra.mxu0 0
      %5195 = vmatprep.mubr.bf16.mxu0 0
      %5196 = vmatmul.mubr.bf16.gmra.mrb[0].mxu0 %v5161
      %v5197 = vpop.f32.mrb[0].mxu0
      %v5198 = vadd.f32 %v5146, %v5197
      %v5199 = vpop.f32.mrb[0].mxu0
      %v5200 = vpop.f32.mrb[0].mxu0
      %v5201 = vpop.f32.mrb[0].mxu0
      %5202 = vdwg.mxu0
      %s5203 = scalar_lea.vmem %s43, 16
      %v5204 = vld [vmem:[%s5203] sm:$0xf]
      %v5205 = vld [vmem:[%s5203 + $0x4] sm:$0xf]
      %v5206 = vld [vmem:[%s5203 + $0x8] sm:$0xf]
      %v5207 = vld [vmem:[%s5203 + $0xc] sm:$0xf]
      %s5208 = scalar_lea.vmem %s45, 1
      %v5209 = vld [vmem:[%s5208] sm:$0x1]
      %v5211 = vlaneseq
      %v5212 = vshrl.u32 %v5211, 7
      %v5213 = vsub.s32 0, %v5212
      %v5214 = vrot.slane %v5209, %v5213
      %v5220 = vunpack.c.l.b16 %v5204
      %v5221 = vunpack.c.l.b16 %v5205
      %v5222 = vunpack.c.l.b16 %v5206
      %v5223 = vunpack.c.l.b16 %v5207
      %v5224 = vpack.c.b16 %v5221, %v5220
      %v5225 = vpack.c.b16 %v5223, %v5222
      %5228 = vmatprep.subr.bf16.mxu0 0
      %5229 = vmatpush1.bf16.msra.mxu0 %v5224
      %5230 = vmatprep.subr.bf16.mxu0 0
      %5231 = vmatpush1.bf16.msra.mxu0 %v5225
      %5232 = vmatprep.subr.bf16.mxu0 0
      %5233 = vmatpush1.bf16.msra.mxu0 0
      %5234 = vmatprep.subr.bf16.mxu0 0
      %5235 = vmatpush1.bf16.msra.mxu0 0
      %5236 = vmatprep.subr.bf16.mxu0 0
      %5237 = vmatpush1.bf16.msra.mxu0 0
      %5238 = vmatprep.subr.bf16.mxu0 0
      %5239 = vmatpush1.bf16.msra.mxu0 0
      %5240 = vmatprep.subr.bf16.mxu0 0
      %5241 = vmatpush1.bf16.msra.mxu0 0
      %5242 = vmatprep.subr.bf16.mxu0 0
      %5243 = vmatpush1.bf16.msra.mxu0 0
      %5244 = vmatprep.subr.bf16.mxu0 0
      %5245 = vmatpush1.bf16.msra.mxu0 0
      %5246 = vmatprep.subr.bf16.mxu0 0
      %5247 = vmatpush1.bf16.msra.mxu0 0
      %5248 = vmatprep.subr.bf16.mxu0 0
      %5249 = vmatpush1.bf16.msra.mxu0 0
      %5250 = vmatprep.subr.bf16.mxu0 0
      %5251 = vmatpush1.bf16.msra.mxu0 0
      %5252 = vmatprep.subr.bf16.mxu0 0
      %5253 = vmatpush1.bf16.msra.mxu0 0
      %5254 = vmatprep.subr.bf16.mxu0 0
      %5255 = vmatpush1.bf16.msra.mxu0 0
      %5256 = vmatprep.subr.bf16.mxu0 0
      %5257 = vmatpush1.bf16.msra.mxu0 0
      %5258 = vmatprep.subr.bf16.mxu0 0
      %5259 = vmatpush1.bf16.msra.mxu0 0
      %5260 = vmatprep.mubr.bf16.mxu0 0
      %5261 = vmatmul.mubr.bf16.gmra.mrb[0].mxu0 %v3726
      %v5262 = vpop.f32.mrb[0].mxu0
      %v5263 = vadd.f32 %v5214, %v5262
      %v5264 = vpop.f32.mrb[0].mxu0
      %v5265 = vpop.f32.mrb[0].mxu0
      %v5266 = vpop.f32.mrb[0].mxu0
      %5267 = vdwg.mxu0
      %s5268 = scalar_lea.vmem %s47, 16
      %v5269 = vld [vmem:[%s5268] sm:$0xf]
      %v5270 = vld [vmem:[%s5268 + $0x4] sm:$0xf]
      %v5271 = vld [vmem:[%s5268 + $0x8] sm:$0xf]
      %v5272 = vld [vmem:[%s5268 + $0xc] sm:$0xf]
      %s5273 = scalar_lea.vmem %s49, 1
      %v5274 = vld [vmem:[%s5273] sm:$0x1]
      %v5275 = vpack.c.bf16 %v5198, %v5198
      %v5276 = vpack.c.bf16 %v5263, %v5263
      %v5278 = vsel %vm1395, %v5275, 0
      %v5281 = vsel %vm1395, %v5276, 0
      %5283 = vmatprep.subr.bf16.mxu0 0
      %5284 = vmatpush1.bf16.xpose.msra.mxu0 %v5281
      %5285 = vmatprep.subr.bf16.mxu0 0
      %5286 = vmatpush1.bf16.xpose.msra.mxu0 0
      %5287 = vmatprep.subr.bf16.mxu0 0
      %5288 = vmatpush1.bf16.xpose.msra.mxu0 0
      %5289 = vmatprep.subr.bf16.mxu0 0
      %5290 = vmatpush1.bf16.xpose.msra.mxu0 0
      %5291 = vmatprep.subr.bf16.mxu0 0
      %5292 = vmatpush1.bf16.xpose.msra.mxu0 0
      %5293 = vmatprep.subr.bf16.mxu0 0
      %5294 = vmatpush1.bf16.xpose.msra.mxu0 0
      %5295 = vmatprep.subr.bf16.mxu0 0
      %5296 = vmatpush1.bf16.xpose.msra.mxu0 0
      %5297 = vmatprep.subr.bf16.mxu0 0
      %5298 = vmatpush1.bf16.xpose.msra.mxu0 0
      %5299 = vmatprep.subr.bf16.mxu0 0
      %5300 = vmatpush1.bf16.xpose.msra.mxu0 0
      %5301 = vmatprep.subr.bf16.mxu0 0
      %5302 = vmatpush1.bf16.xpose.msra.mxu0 0
      %5303 = vmatprep.subr.bf16.mxu0 0
      %5304 = vmatpush1.bf16.xpose.msra.mxu0 0
      %5305 = vmatprep.subr.bf16.mxu0 0
      %5306 = vmatpush1.bf16.xpose.msra.mxu0 0
      %5307 = vmatprep.subr.bf16.mxu0 0
      %5308 = vmatpush1.bf16.xpose.msra.mxu0 0
      %5309 = vmatprep.subr.bf16.mxu0 0
      %5310 = vmatpush1.bf16.xpose.msra.mxu0 0
      %5311 = vmatprep.subr.bf16.mxu0 0
      %5312 = vmatpush1.bf16.xpose.msra.mxu0 0
      %5313 = vmatprep.subr.bf16.mxu0 0
      %5314 = vmatpush1.bf16.xpose.msra.mxu0 0
      %5315 = vmatprep.mubr.bf16.mxu0 0
      %5316 = vmatmul.mubr.bf16.gmra.mrb[0].mxu0 %v5278
      %v5317 = vpop.f32.mrb[0].mxu0
      %v5318 = vadd.f32 0.0, %v5317
      %v5319 = vpop.f32.mrb[0].mxu0
      %v5320 = vpop.f32.mrb[0].mxu0
      %v5321 = vpop.f32.mrb[0].mxu0
      %5322 = vdwg.mxu0
      %v5323 = vmul.f32 %v5318, 0.35355338
      %v5324 = vsel %vm1395, %v5323, -inf
      %5325 = vmax.xlane.f32.xlu0 %v5324
      %v5326 = vpop.xlane.xlu0 %5325
      %v5327 = vsub.f32 %v5323, %v5326
      %v5328 = vmul.f32 %v5327, 1.442695
      %v5329 = vpow.pop %v5328
      %v5330 = vsel %vm1395, %v5329, 0.0
      %5331 = vadd.xlane.f32.xlu0 %v5330
      %v5332 = vpop.xlane.xlu0 %5331
      %v5333 = vrcp.pop %v5332
      %v5334 = vmul.f32 %v5329, %v5333
      %v5335 = vpack.c.bf16 %v5334, %v5334
      %5337 = vrot.lane.b32.xlu0 %v5276, 96
      %v5338 = vpop.permute.xlu0 %5337
      %v5340 = vsel %vm1395, %v5335, 0
      %v5343 = vsel %vm1460, %v5338, 0
      %5345 = vmatprep.subr.bf16.mxu0 0
      %5346 = vmatpush1.bf16.msra.mxu0 %v5343
      %5347 = vmatprep.subr.bf16.mxu0 0
      %5348 = vmatpush1.bf16.msra.mxu0 0
      %5349 = vmatprep.subr.bf16.mxu0 0
      %5350 = vmatpush1.bf16.msra.mxu0 0
      %5351 = vmatprep.subr.bf16.mxu0 0
      %5352 = vmatpush1.bf16.msra.mxu0 0
      %5353 = vmatprep.subr.bf16.mxu0 0
      %5354 = vmatpush1.bf16.msra.mxu0 0
      %5355 = vmatprep.subr.bf16.mxu0 0
      %5356 = vmatpush1.bf16.msra.mxu0 0
      %5357 = vmatprep.subr.bf16.mxu0 0
      %5358 = vmatpush1.bf16.msra.mxu0 0
      %5359 = vmatprep.subr.bf16.mxu0 0
      %5360 = vmatpush1.bf16.msra.mxu0 0
      %5361 = vmatprep.subr.bf16.mxu0 0
      %5362 = vmatpush1.bf16.msra.mxu0 0
      %5363 = vmatprep.subr.bf16.mxu0 0
      %5364 = vmatpush1.bf16.msra.mxu0 0
      %5365 = vmatprep.subr.bf16.mxu0 0
      %5366 = vmatpush1.bf16.msra.mxu0 0
      %5367 = vmatprep.subr.bf16.mxu0 0
      %5368 = vmatpush1.bf16.msra.mxu0 0
      %5369 = vmatprep.subr.bf16.mxu0 0
      %5370 = vmatpush1.bf16.msra.mxu0 0
      %5371 = vmatprep.subr.bf16.mxu0 0
      %5372 = vmatpush1.bf16.msra.mxu0 0
      %5373 = vmatprep.subr.bf16.mxu0 0
      %5374 = vmatpush1.bf16.msra.mxu0 0
      %5375 = vmatprep.subr.bf16.mxu0 0
      %5376 = vmatpush1.bf16.msra.mxu0 0
      %5377 = vmatprep.mubr.bf16.mxu0 0
      %5378 = vmatmul.mubr.bf16.gmra.mrb[0].mxu0 %v5340
      %v5379 = vpop.f32.mrb[0].mxu0
      %v5380 = vadd.f32 0.0, %v5379
      %v5381 = vpop.f32.mrb[0].mxu0
      %v5382 = vpop.f32.mrb[0].mxu0
      %v5383 = vpop.f32.mrb[0].mxu0
      %5384 = vdwg.mxu0
      %5386 = vrot.lane.b32.xlu0 %v5275, 120
      %v5387 = vpop.permute.xlu0 %5386
      %5388 = vrot.lane.b32.xlu0 %v5276, 120
      %v5389 = vpop.permute.xlu0 %5388
      %v5391 = vsel %vm1395, %v5387, 0
      %v5394 = vsel %vm1395, %v5389, 0
      %5396 = vmatprep.subr.bf16.mxu0 0
      %5397 = vmatpush1.bf16.xpose.msra.mxu0 %v5394
      %5398 = vmatprep.subr.bf16.mxu0 0
      %5399 = vmatpush1.bf16.xpose.msra.mxu0 0
      %5400 = vmatprep.subr.bf16.mxu0 0
      %5401 = vmatpush1.bf16.xpose.msra.mxu0 0
      %5402 = vmatprep.subr.bf16.mxu0 0
      %5403 = vmatpush1.bf16.xpose.msra.mxu0 0
      %5404 = vmatprep.subr.bf16.mxu0 0
      %5405 = vmatpush1.bf16.xpose.msra.mxu0 0
      %5406 = vmatprep.subr.bf16.mxu0 0
      %5407 = vmatpush1.bf16.xpose.msra.mxu0 0
      %5408 = vmatprep.subr.bf16.mxu0 0
      %5409 = vmatpush1.bf16.xpose.msra.mxu0 0
      %5410 = vmatprep.subr.bf16.mxu0 0
      %5411 = vmatpush1.bf16.xpose.msra.mxu0 0
      %5412 = vmatprep.subr.bf16.mxu0 0
      %5413 = vmatpush1.bf16.xpose.msra.mxu0 0
      %5414 = vmatprep.subr.bf16.mxu0 0
      %5415 = vmatpush1.bf16.xpose.msra.mxu0 0
      %5416 = vmatprep.subr.bf16.mxu0 0
      %5417 = vmatpush1.bf16.xpose.msra.mxu0 0
      %5418 = vmatprep.subr.bf16.mxu0 0
      %5419 = vmatpush1.bf16.xpose.msra.mxu0 0
      %5420 = vmatprep.subr.bf16.mxu0 0
      %5421 = vmatpush1.bf16.xpose.msra.mxu0 0
      %5422 = vmatprep.subr.bf16.mxu0 0
      %5423 = vmatpush1.bf16.xpose.msra.mxu0 0
      %5424 = vmatprep.subr.bf16.mxu0 0
      %5425 = vmatpush1.bf16.xpose.msra.mxu0 0
      %5426 = vmatprep.subr.bf16.mxu0 0
      %5427 = vmatpush1.bf16.xpose.msra.mxu0 0
      %5428 = vmatprep.mubr.bf16.mxu0 0
      %5429 = vmatmul.mubr.bf16.gmra.mrb[0].mxu0 %v5391
      %v5430 = vpop.f32.mrb[0].mxu0
      %v5431 = vadd.f32 0.0, %v5430
      %v5432 = vpop.f32.mrb[0].mxu0
      %v5433 = vpop.f32.mrb[0].mxu0
      %v5434 = vpop.f32.mrb[0].mxu0
      %5435 = vdwg.mxu0
      %v5436 = vmul.f32 %v5431, 0.35355338
      %v5437 = vsel %vm1395, %v5436, -inf
      %5438 = vmax.xlane.f32.xlu0 %v5437
      %v5439 = vpop.xlane.xlu0 %5438
      %v5440 = vsub.f32 %v5436, %v5439
      %v5441 = vmul.f32 %v5440, 1.442695
      %v5442 = vpow.pop %v5441
      %v5443 = vsel %vm1395, %v5442, 0.0
      %5444 = vadd.xlane.f32.xlu0 %v5443
      %v5445 = vpop.xlane.xlu0 %5444
      %v5446 = vrcp.pop %v5445
      %v5447 = vmul.f32 %v5442, %v5446
      %v5448 = vpack.c.bf16 %v5447, %v5447
      %5449 = vrot.lane.b32.xlu0 %v5276, 88
      %v5450 = vpop.permute.xlu0 %5449
      %v5452 = vsel %vm1395, %v5448, 0
      %v5455 = vsel %vm1460, %v5450, 0
      %5457 = vmatprep.subr.bf16.mxu0 0
      %5458 = vmatpush1.bf16.msra.mxu0 %v5455
      %5459 = vmatprep.subr.bf16.mxu0 0
      %5460 = vmatpush1.bf16.msra.mxu0 0
      %5461 = vmatprep.subr.bf16.mxu0 0
      %5462 = vmatpush1.bf16.msra.mxu0 0
      %5463 = vmatprep.subr.bf16.mxu0 0
      %5464 = vmatpush1.bf16.msra.mxu0 0
      %5465 = vmatprep.subr.bf16.mxu0 0
      %5466 = vmatpush1.bf16.msra.mxu0 0
      %5467 = vmatprep.subr.bf16.mxu0 0
      %5468 = vmatpush1.bf16.msra.mxu0 0
      %5469 = vmatprep.subr.bf16.mxu0 0
      %5470 = vmatpush1.bf16.msra.mxu0 0
      %5471 = vmatprep.subr.bf16.mxu0 0
      %5472 = vmatpush1.bf16.msra.mxu0 0
      %5473 = vmatprep.subr.bf16.mxu0 0
      %5474 = vmatpush1.bf16.msra.mxu0 0
      %5475 = vmatprep.subr.bf16.mxu0 0
      %5476 = vmatpush1.bf16.msra.mxu0 0
      %5477 = vmatprep.subr.bf16.mxu0 0
      %5478 = vmatpush1.bf16.msra.mxu0 0
      %5479 = vmatprep.subr.bf16.mxu0 0
      %5480 = vmatpush1.bf16.msra.mxu0 0
      %5481 = vmatprep.subr.bf16.mxu0 0
      %5482 = vmatpush1.bf16.msra.mxu0 0
      %5483 = vmatprep.subr.bf16.mxu0 0
      %5484 = vmatpush1.bf16.msra.mxu0 0
      %5485 = vmatprep.subr.bf16.mxu0 0
      %5486 = vmatpush1.bf16.msra.mxu0 0
      %5487 = vmatprep.subr.bf16.mxu0 0
      %5488 = vmatpush1.bf16.msra.mxu0 0
      %5489 = vmatprep.mubr.bf16.mxu0 0
      %5490 = vmatmul.mubr.bf16.gmra.mrb[0].mxu0 %v5452
      %v5491 = vpop.f32.mrb[0].mxu0
      %v5492 = vadd.f32 0.0, %v5491
      %v5493 = vpop.f32.mrb[0].mxu0
      %v5494 = vpop.f32.mrb[0].mxu0
      %v5495 = vpop.f32.mrb[0].mxu0
      %5496 = vdwg.mxu0
      %5497 = vrot.lane.b32.xlu0 %v5275, 112
      %v5498 = vpop.permute.xlu0 %5497
      %5499 = vrot.lane.b32.xlu0 %v5276, 112
      %v5500 = vpop.permute.xlu0 %5499
      %v5502 = vsel %vm1395, %v5498, 0
      %v5505 = vsel %vm1395, %v5500, 0
      %5507 = vmatprep.subr.bf16.mxu0 0
      %5508 = vmatpush1.bf16.xpose.msra.mxu0 %v5505
      %5509 = vmatprep.subr.bf16.mxu0 0
      %5510 = vmatpush1.bf16.xpose.msra.mxu0 0
      %5511 = vmatprep.subr.bf16.mxu0 0
      %5512 = vmatpush1.bf16.xpose.msra.mxu0 0
      %5513 = vmatprep.subr.bf16.mxu0 0
      %5514 = vmatpush1.bf16.xpose.msra.mxu0 0
      %5515 = vmatprep.subr.bf16.mxu0 0
      %5516 = vmatpush1.bf16.xpose.msra.mxu0 0
      %5517 = vmatprep.subr.bf16.mxu0 0
      %5518 = vmatpush1.bf16.xpose.msra.mxu0 0
      %5519 = vmatprep.subr.bf16.mxu0 0
      %5520 = vmatpush1.bf16.xpose.msra.mxu0 0
      %5521 = vmatprep.subr.bf16.mxu0 0
      %5522 = vmatpush1.bf16.xpose.msra.mxu0 0
      %5523 = vmatprep.subr.bf16.mxu0 0
      %5524 = vmatpush1.bf16.xpose.msra.mxu0 0
      %5525 = vmatprep.subr.bf16.mxu0 0
      %5526 = vmatpush1.bf16.xpose.msra.mxu0 0
      %5527 = vmatprep.subr.bf16.mxu0 0
      %5528 = vmatpush1.bf16.xpose.msra.mxu0 0
      %5529 = vmatprep.subr.bf16.mxu0 0
      %5530 = vmatpush1.bf16.xpose.msra.mxu0 0
      %5531 = vmatprep.subr.bf16.mxu0 0
      %5532 = vmatpush1.bf16.xpose.msra.mxu0 0
      %5533 = vmatprep.subr.bf16.mxu0 0
      %5534 = vmatpush1.bf16.xpose.msra.mxu0 0
      %5535 = vmatprep.subr.bf16.mxu0 0
      %5536 = vmatpush1.bf16.xpose.msra.mxu0 0
      %5537 = vmatprep.subr.bf16.mxu0 0
      %5538 = vmatpush1.bf16.xpose.msra.mxu0 0
      %5539 = vmatprep.mubr.bf16.mxu0 0
      %5540 = vmatmul.mubr.bf16.gmra.mrb[0].mxu0 %v5502
      %v5541 = vpop.f32.mrb[0].mxu0
      %v5542 = vadd.f32 0.0, %v5541
      %v5543 = vpop.f32.mrb[0].mxu0
      %v5544 = vpop.f32.mrb[0].mxu0
      %v5545 = vpop.f32.mrb[0].mxu0
      %5546 = vdwg.mxu0
      %v5547 = vmul.f32 %v5542, 0.35355338
      %v5548 = vsel %vm1395, %v5547, -inf
      %5549 = vmax.xlane.f32.xlu0 %v5548
      %v5550 = vpop.xlane.xlu0 %5549
      %v5551 = vsub.f32 %v5547, %v5550
      %v5552 = vmul.f32 %v5551, 1.442695
      %v5553 = vpow.pop %v5552
      %v5554 = vsel %vm1395, %v5553, 0.0
      %5555 = vadd.xlane.f32.xlu0 %v5554
      %v5556 = vpop.xlane.xlu0 %5555
      %v5557 = vrcp.pop %v5556
      %v5558 = vmul.f32 %v5553, %v5557
      %v5559 = vpack.c.bf16 %v5558, %v5558
      %5560 = vrot.lane.b32.xlu0 %v5276, 80
      %v5561 = vpop.permute.xlu0 %5560
      %v5563 = vsel %vm1395, %v5559, 0
      %v5566 = vsel %vm1460, %v5561, 0
      %5568 = vmatprep.subr.bf16.mxu0 0
      %5569 = vmatpush1.bf16.msra.mxu0 %v5566
      %5570 = vmatprep.subr.bf16.mxu0 0
      %5571 = vmatpush1.bf16.msra.mxu0 0
      %5572 = vmatprep.subr.bf16.mxu0 0
      %5573 = vmatpush1.bf16.msra.mxu0 0
      %5574 = vmatprep.subr.bf16.mxu0 0
      %5575 = vmatpush1.bf16.msra.mxu0 0
      %5576 = vmatprep.subr.bf16.mxu0 0
      %5577 = vmatpush1.bf16.msra.mxu0 0
      %5578 = vmatprep.subr.bf16.mxu0 0
      %5579 = vmatpush1.bf16.msra.mxu0 0
      %5580 = vmatprep.subr.bf16.mxu0 0
      %5581 = vmatpush1.bf16.msra.mxu0 0
      %5582 = vmatprep.subr.bf16.mxu0 0
      %5583 = vmatpush1.bf16.msra.mxu0 0
      %5584 = vmatprep.subr.bf16.mxu0 0
      %5585 = vmatpush1.bf16.msra.mxu0 0
      %5586 = vmatprep.subr.bf16.mxu0 0
      %5587 = vmatpush1.bf16.msra.mxu0 0
      %5588 = vmatprep.subr.bf16.mxu0 0
      %5589 = vmatpush1.bf16.msra.mxu0 0
      %5590 = vmatprep.subr.bf16.mxu0 0
      %5591 = vmatpush1.bf16.msra.mxu0 0
      %5592 = vmatprep.subr.bf16.mxu0 0
      %5593 = vmatpush1.bf16.msra.mxu0 0
      %5594 = vmatprep.subr.bf16.mxu0 0
      %5595 = vmatpush1.bf16.msra.mxu0 0
      %5596 = vmatprep.subr.bf16.mxu0 0
      %5597 = vmatpush1.bf16.msra.mxu0 0
      %5598 = vmatprep.subr.bf16.mxu0 0
      %5599 = vmatpush1.bf16.msra.mxu0 0
      %5600 = vmatprep.mubr.bf16.mxu0 0
      %5601 = vmatmul.mubr.bf16.gmra.mrb[0].mxu0 %v5563
      %v5602 = vpop.f32.mrb[0].mxu0
      %v5603 = vadd.f32 0.0, %v5602
      %v5604 = vpop.f32.mrb[0].mxu0
      %v5605 = vpop.f32.mrb[0].mxu0
      %v5606 = vpop.f32.mrb[0].mxu0
      %5607 = vdwg.mxu0
      %5608 = vrot.lane.b32.xlu0 %v5275, 104
      %v5609 = vpop.permute.xlu0 %5608
      %5610 = vrot.lane.b32.xlu0 %v5276, 104
      %v5611 = vpop.permute.xlu0 %5610
      %v5613 = vsel %vm1395, %v5609, 0
      %v5616 = vsel %vm1395, %v5611, 0
      %5618 = vmatprep.subr.bf16.mxu0 0
      %5619 = vmatpush1.bf16.xpose.msra.mxu0 %v5616
      %5620 = vmatprep.subr.bf16.mxu0 0
      %5621 = vmatpush1.bf16.xpose.msra.mxu0 0
      %5622 = vmatprep.subr.bf16.mxu0 0
      %5623 = vmatpush1.bf16.xpose.msra.mxu0 0
      %5624 = vmatprep.subr.bf16.mxu0 0
      %5625 = vmatpush1.bf16.xpose.msra.mxu0 0
      %5626 = vmatprep.subr.bf16.mxu0 0
      %5627 = vmatpush1.bf16.xpose.msra.mxu0 0
      %5628 = vmatprep.subr.bf16.mxu0 0
      %5629 = vmatpush1.bf16.xpose.msra.mxu0 0
      %5630 = vmatprep.subr.bf16.mxu0 0
      %5631 = vmatpush1.bf16.xpose.msra.mxu0 0
      %5632 = vmatprep.subr.bf16.mxu0 0
      %5633 = vmatpush1.bf16.xpose.msra.mxu0 0
      %5634 = vmatprep.subr.bf16.mxu0 0
      %5635 = vmatpush1.bf16.xpose.msra.mxu0 0
      %5636 = vmatprep.subr.bf16.mxu0 0
      %5637 = vmatpush1.bf16.xpose.msra.mxu0 0
      %5638 = vmatprep.subr.bf16.mxu0 0
      %5639 = vmatpush1.bf16.xpose.msra.mxu0 0
      %5640 = vmatprep.subr.bf16.mxu0 0
      %5641 = vmatpush1.bf16.xpose.msra.mxu0 0
      %5642 = vmatprep.subr.bf16.mxu0 0
      %5643 = vmatpush1.bf16.xpose.msra.mxu0 0
      %5644 = vmatprep.subr.bf16.mxu0 0
      %5645 = vmatpush1.bf16.xpose.msra.mxu0 0
      %5646 = vmatprep.subr.bf16.mxu0 0
      %5647 = vmatpush1.bf16.xpose.msra.mxu0 0
      %5648 = vmatprep.subr.bf16.mxu0 0
      %5649 = vmatpush1.bf16.xpose.msra.mxu0 0
      %5650 = vmatprep.mubr.bf16.mxu0 0
      %5651 = vmatmul.mubr.bf16.gmra.mrb[0].mxu0 %v5613
      %v5652 = vpop.f32.mrb[0].mxu0
      %v5653 = vadd.f32 0.0, %v5652
      %v5654 = vpop.f32.mrb[0].mxu0
      %v5655 = vpop.f32.mrb[0].mxu0
      %v5656 = vpop.f32.mrb[0].mxu0
      %5657 = vdwg.mxu0
      %v5658 = vmul.f32 %v5653, 0.35355338
      %v5659 = vsel %vm1395, %v5658, -inf
      %5660 = vmax.xlane.f32.xlu0 %v5659
      %v5661 = vpop.xlane.xlu0 %5660
      %v5662 = vsub.f32 %v5658, %v5661
      %v5663 = vmul.f32 %v5662, 1.442695
      %v5664 = vpow.pop %v5663
      %v5665 = vsel %vm1395, %v5664, 0.0
      %5666 = vadd.xlane.f32.xlu0 %v5665
      %v5667 = vpop.xlane.xlu0 %5666
      %v5668 = vrcp.pop %v5667
      %v5669 = vmul.f32 %v5664, %v5668
      %v5670 = vpack.c.bf16 %v5669, %v5669
      %5671 = vrot.lane.b32.xlu0 %v5276, 72
      %v5672 = vpop.permute.xlu0 %5671
      %v5674 = vsel %vm1395, %v5670, 0
      %v5677 = vsel %vm1460, %v5672, 0
      %5679 = vmatprep.subr.bf16.mxu0 0
      %5680 = vmatpush1.bf16.msra.mxu0 %v5677
      %5681 = vmatprep.subr.bf16.mxu0 0
      %5682 = vmatpush1.bf16.msra.mxu0 0
      %5683 = vmatprep.subr.bf16.mxu0 0
      %5684 = vmatpush1.bf16.msra.mxu0 0
      %5685 = vmatprep.subr.bf16.mxu0 0
      %5686 = vmatpush1.bf16.msra.mxu0 0
      %5687 = vmatprep.subr.bf16.mxu0 0
      %5688 = vmatpush1.bf16.msra.mxu0 0
      %5689 = vmatprep.subr.bf16.mxu0 0
      %5690 = vmatpush1.bf16.msra.mxu0 0
      %5691 = vmatprep.subr.bf16.mxu0 0
      %5692 = vmatpush1.bf16.msra.mxu0 0
      %5693 = vmatprep.subr.bf16.mxu0 0
      %5694 = vmatpush1.bf16.msra.mxu0 0
      %5695 = vmatprep.subr.bf16.mxu0 0
      %5696 = vmatpush1.bf16.msra.mxu0 0
      %5697 = vmatprep.subr.bf16.mxu0 0
      %5698 = vmatpush1.bf16.msra.mxu0 0
      %5699 = vmatprep.subr.bf16.mxu0 0
      %5700 = vmatpush1.bf16.msra.mxu0 0
      %5701 = vmatprep.subr.bf16.mxu0 0
      %5702 = vmatpush1.bf16.msra.mxu0 0
      %5703 = vmatprep.subr.bf16.mxu0 0
      %5704 = vmatpush1.bf16.msra.mxu0 0
      %5705 = vmatprep.subr.bf16.mxu0 0
      %5706 = vmatpush1.bf16.msra.mxu0 0
      %5707 = vmatprep.subr.bf16.mxu0 0
      %5708 = vmatpush1.bf16.msra.mxu0 0
      %5709 = vmatprep.subr.bf16.mxu0 0
      %5710 = vmatpush1.bf16.msra.mxu0 0
      %5711 = vmatprep.mubr.bf16.mxu0 0
      %5712 = vmatmul.mubr.bf16.gmra.mrb[0].mxu0 %v5674
      %v5713 = vpop.f32.mrb[0].mxu0
      %v5714 = vadd.f32 0.0, %v5713
      %v5715 = vpop.f32.mrb[0].mxu0
      %v5716 = vpop.f32.mrb[0].mxu0
      %v5717 = vpop.f32.mrb[0].mxu0
      %5718 = vdwg.mxu0
      %5720 = vrot.lane.b32.xlu0 %v5492, 8
      %v5721 = vpop.permute.xlu0 %5720
      %5724 = vrot.lane.b32.xlu0 %v5603, 16
      %v5725 = vpop.permute.xlu0 %5724
      %5728 = vrot.lane.b32.xlu0 %v5714, 24
      %v5729 = vpop.permute.xlu0 %5728
      %v5731 = vsel %vm1395, %v5380, %v5721
      %v5732 = vsel %vm1850, %v5731, %v5725
      %v5733 = vsel %vm1852, %v5732, %v5729
      %v5734 = vpack.c.bf16 %v5733, %v5733
      %v5736 = vlaneseq
      %v5737 = vshrl.u32 %v5736, 7
      %v5738 = vsub.s32 0, %v5737
      %v5739 = vrot.slane %v5274, %v5738
      %v5745 = vunpack.c.l.b16 %v5269
      %v5746 = vunpack.c.l.b16 %v5270
      %v5747 = vunpack.c.l.b16 %v5271
      %v5748 = vunpack.c.l.b16 %v5272
      %v5749 = vpack.c.b16 %v5746, %v5745
      %v5750 = vpack.c.b16 %v5748, %v5747
      %v5754 = vsel %vm1342, %v5734, 0
      %5756 = vmatprep.subr.bf16.mxu0 0
      %5757 = vmatpush1.bf16.msra.mxu0 %v5749
      %5758 = vmatprep.subr.bf16.mxu0 0
      %5759 = vmatpush1.bf16.msra.mxu0 %v5750
      %5760 = vmatprep.subr.bf16.mxu0 0
      %5761 = vmatpush1.bf16.msra.mxu0 0
      %5762 = vmatprep.subr.bf16.mxu0 0
      %5763 = vmatpush1.bf16.msra.mxu0 0
      %5764 = vmatprep.subr.bf16.mxu0 0
      %5765 = vmatpush1.bf16.msra.mxu0 0
      %5766 = vmatprep.subr.bf16.mxu0 0
      %5767 = vmatpush1.bf16.msra.mxu0 0
      %5768 = vmatprep.subr.bf16.mxu0 0
      %5769 = vmatpush1.bf16.msra.mxu0 0
      %5770 = vmatprep.subr.bf16.mxu0 0
      %5771 = vmatpush1.bf16.msra.mxu0 0
      %5772 = vmatprep.subr.bf16.mxu0 0
      %5773 = vmatpush1.bf16.msra.mxu0 0
      %5774 = vmatprep.subr.bf16.mxu0 0
      %5775 = vmatpush1.bf16.msra.mxu0 0
      %5776 = vmatprep.subr.bf16.mxu0 0
      %5777 = vmatpush1.bf16.msra.mxu0 0
      %5778 = vmatprep.subr.bf16.mxu0 0
      %5779 = vmatpush1.bf16.msra.mxu0 0
      %5780 = vmatprep.subr.bf16.mxu0 0
      %5781 = vmatpush1.bf16.msra.mxu0 0
      %5782 = vmatprep.subr.bf16.mxu0 0
      %5783 = vmatpush1.bf16.msra.mxu0 0
      %5784 = vmatprep.subr.bf16.mxu0 0
      %5785 = vmatpush1.bf16.msra.mxu0 0
      %5786 = vmatprep.subr.bf16.mxu0 0
      %5787 = vmatpush1.bf16.msra.mxu0 0
      %5788 = vmatprep.mubr.bf16.mxu0 0
      %5789 = vmatmul.mubr.bf16.gmra.mrb[0].mxu0 %v5754
      %v5790 = vpop.f32.mrb[0].mxu0
      %v5791 = vadd.f32 %v5739, %v5790
      %v5792 = vpop.f32.mrb[0].mxu0
      %v5793 = vpop.f32.mrb[0].mxu0
      %v5794 = vpop.f32.mrb[0].mxu0
      %5795 = vdwg.mxu0
      %v5796 = vadd.f32 %v5133, %v5791
      %s5797 = scalar_lea.vmem %s63, 1
      %v5798 = vld [vmem:[%s5797] sm:$0x1]
      %s5799 = scalar_lea.vmem %s65, 1
      %v5800 = vld [vmem:[%s5799] sm:$0x1]
      %v5801 = vsel %vm1342, %v5796, 0.0
      %5802 = vadd.xlane.f32.xlu0 %v5801
      %v5803 = vpop.xlane.xlu0 %5802
      %v5804 = vmul.f32 %v5803, %v1922
      %v5805 = vsub.f32 %v5796, %v5804
      %v5806 = vmul.f32 %v5805, %v5805
      %v5807 = vsel %vm1342, %v5806, 0.0
      %5808 = vadd.xlane.f32.xlu0 %v5807
      %v5809 = vpop.xlane.xlu0 %5808
      %v5810 = vmul.f32 %v5809, %v1922
      %v5811 = vadd.f32 %v5810, 1e-05
      %v5812 = vrsqrt.pop %v5811
      %v5813 = vmul.f32 %v5805, %v5812
      %v5815 = vlaneseq
      %v5816 = vshrl.u32 %v5815, 7
      %v5817 = vsub.s32 0, %v5816
      %v5818 = vrot.slane %v5798, %v5817
      %v5820 = vmul.f32 %v5813, %v5818
      %v5822 = vlaneseq
      %v5823 = vshrl.u32 %v5822, 7
      %v5824 = vsub.s32 0, %v5823
      %v5825 = vrot.slane %v5800, %v5824
      %v5827 = vadd.f32 %v5820, %v5825
      %s5828 = scalar_lea.vmem %s51, 16
      %v5829 = vld [vmem:[%s5828] sm:$0xf]
      %v5830 = vld [vmem:[%s5828 + $0x4] sm:$0xf]
      %v5831 = vld [vmem:[%s5828 + $0x8] sm:$0xf]
      %v5832 = vld [vmem:[%s5828 + $0xc] sm:$0xf]
      %s5833 = scalar_lea.vmem %s53, 1
      %v5834 = vld [vmem:[%s5833] sm:$0x1]
      %v5835 = vpack.c.bf16 %v5827, %v5827
      %v5837 = vlaneseq
      %v5838 = vshrl.u32 %v5837, 7
      %v5839 = vsub.s32 0, %v5838
      %v5840 = vrot.slane %v5834, %v5839
      %v5846 = vunpack.c.l.b16 %v5829
      %v5847 = vunpack.c.l.b16 %v5830
      %v5848 = vunpack.c.l.b16 %v5831
      %v5849 = vunpack.c.l.b16 %v5832
      %v5850 = vpack.c.b16 %v5847, %v5846
      %v5851 = vpack.c.b16 %v5849, %v5848
      %v5855 = vsel %vm1342, %v5835, 0
      %5857 = vmatprep.subr.bf16.mxu0 0
      %5858 = vmatpush1.bf16.msra.mxu0 %v5850
      %5859 = vmatprep.subr.bf16.mxu0 0
      %5860 = vmatpush1.bf16.msra.mxu0 %v5851
      %5861 = vmatprep.subr.bf16.mxu0 0
      %5862 = vmatpush1.bf16.msra.mxu0 0
      %5863 = vmatprep.subr.bf16.mxu0 0
      %5864 = vmatpush1.bf16.msra.mxu0 0
      %5865 = vmatprep.subr.bf16.mxu0 0
      %5866 = vmatpush1.bf16.msra.mxu0 0
      %5867 = vmatprep.subr.bf16.mxu0 0
      %5868 = vmatpush1.bf16.msra.mxu0 0
      %5869 = vmatprep.subr.bf16.mxu0 0
      %5870 = vmatpush1.bf16.msra.mxu0 0
      %5871 = vmatprep.subr.bf16.mxu0 0
      %5872 = vmatpush1.bf16.msra.mxu0 0
      %5873 = vmatprep.subr.bf16.mxu0 0
      %5874 = vmatpush1.bf16.msra.mxu0 0
      %5875 = vmatprep.subr.bf16.mxu0 0
      %5876 = vmatpush1.bf16.msra.mxu0 0
      %5877 = vmatprep.subr.bf16.mxu0 0
      %5878 = vmatpush1.bf16.msra.mxu0 0
      %5879 = vmatprep.subr.bf16.mxu0 0
      %5880 = vmatpush1.bf16.msra.mxu0 0
      %5881 = vmatprep.subr.bf16.mxu0 0
      %5882 = vmatpush1.bf16.msra.mxu0 0
      %5883 = vmatprep.subr.bf16.mxu0 0
      %5884 = vmatpush1.bf16.msra.mxu0 0
      %5885 = vmatprep.subr.bf16.mxu0 0
      %5886 = vmatpush1.bf16.msra.mxu0 0
      %5887 = vmatprep.subr.bf16.mxu0 0
      %5888 = vmatpush1.bf16.msra.mxu0 0
      %5889 = vmatprep.mubr.bf16.mxu0 0
      %5890 = vmatmul.mubr.bf16.gmra.mrb[0].mxu0 %v5855
      %v5891 = vpop.f32.mrb[0].mxu0
      %v5892 = vadd.f32 %v5840, %v5891
      %v5893 = vpop.f32.mrb[0].mxu0
      %v5894 = vpop.f32.mrb[0].mxu0
      %v5895 = vpop.f32.mrb[0].mxu0
      %5896 = vdwg.mxu0
      %v5897 = vmax.f32 %v5892, 0.0
      %s5898 = scalar_lea.vmem %s55, 32
      %v5899 = vld [vmem:[%s5898] sm:$0xf]
      %v5900 = vld [vmem:[%s5898 + $0x4] sm:$0xf]
      %v5901 = vld [vmem:[%s5898 + $0x8] sm:$0xf]
      %v5902 = vld [vmem:[%s5898 + $0xc] sm:$0xf]
      %v5903 = vld [vmem:[%s5898 + $0x10] sm:$0xf]
      %v5904 = vld [vmem:[%s5898 + $0x14] sm:$0xf]
      %v5905 = vld [vmem:[%s5898 + $0x18] sm:$0xf]
      %v5906 = vld [vmem:[%s5898 + $0x1c] sm:$0xf]
      %s5907 = scalar_lea.vmem %s57, 1
      %v5908 = vld [vmem:[%s5907] sm:$0x1]
      %v5909 = vpack.c.bf16 %v5897, %v5897
      %v5911 = vlaneseq
      %v5912 = vshrl.u32 %v5911, 7
      %v5913 = vsub.s32 0, %v5912
      %v5914 = vrot.slane %v5908, %v5913
      %v5924 = vunpack.c.l.b16 %v5899
      %v5925 = vunpack.c.l.b16 %v5900
      %v5926 = vunpack.c.l.b16 %v5901
      %v5927 = vunpack.c.l.b16 %v5902
      %v5928 = vunpack.c.l.b16 %v5903
      %v5929 = vunpack.c.l.b16 %v5904
      %v5930 = vunpack.c.l.b16 %v5905
      %v5931 = vunpack.c.l.b16 %v5906
      %v5932 = vpack.c.b16 %v5925, %v5924
      %v5933 = vpack.c.b16 %v5927, %v5926
      %v5934 = vpack.c.b16 %v5929, %v5928
      %v5935 = vpack.c.b16 %v5931, %v5930
      %v5941 = vsel %vm2055, %v5909, 0
      %5943 = vmatprep.subr.bf16.mxu0 0
      %5944 = vmatpush1.bf16.msra.mxu0 %v5932
      %5945 = vmatprep.subr.bf16.mxu0 0
      %5946 = vmatpush1.bf16.msra.mxu0 %v5933
      %5947 = vmatprep.subr.bf16.mxu0 0
      %5948 = vmatpush1.bf16.msra.mxu0 %v5934
      %5949 = vmatprep.subr.bf16.mxu0 0
      %5950 = vmatpush1.bf16.msra.mxu0 %v5935
      %5951 = vmatprep.subr.bf16.mxu0 0
      %5952 = vmatpush1.bf16.msra.mxu0 0
      %5953 = vmatprep.subr.bf16.mxu0 0
      %5954 = vmatpush1.bf16.msra.mxu0 0
      %5955 = vmatprep.subr.bf16.mxu0 0
      %5956 = vmatpush1.bf16.msra.mxu0 0
      %5957 = vmatprep.subr.bf16.mxu0 0
      %5958 = vmatpush1.bf16.msra.mxu0 0
      %5959 = vmatprep.subr.bf16.mxu0 0
      %5960 = vmatpush1.bf16.msra.mxu0 0
      %5961 = vmatprep.subr.bf16.mxu0 0
      %5962 = vmatpush1.bf16.msra.mxu0 0
      %5963 = vmatprep.subr.bf16.mxu0 0
      %5964 = vmatpush1.bf16.msra.mxu0 0
      %5965 = vmatprep.subr.bf16.mxu0 0
      %5966 = vmatpush1.bf16.msra.mxu0 0
      %5967 = vmatprep.subr.bf16.mxu0 0
      %5968 = vmatpush1.bf16.msra.mxu0 0
      %5969 = vmatprep.subr.bf16.mxu0 0
      %5970 = vmatpush1.bf16.msra.mxu0 0
      %5971 = vmatprep.subr.bf16.mxu0 0
      %5972 = vmatpush1.bf16.msra.mxu0 0
      %5973 = vmatprep.subr.bf16.mxu0 0
      %5974 = vmatpush1.bf16.msra.mxu0 0
      %5975 = vmatprep.mubr.bf16.mxu0 0
      %5976 = vmatmul.mubr.bf16.gmra.mrb[0].mxu0 %v5941
      %v5977 = vpop.f32.mrb[0].mxu0
      %v5978 = vadd.f32 %v5914, %v5977
      %v5979 = vpop.f32.mrb[0].mxu0
      %v5980 = vpop.f32.mrb[0].mxu0
      %v5981 = vpop.f32.mrb[0].mxu0
      %5982 = vdwg.mxu0
      %v5983 = vadd.f32 %v5827, %v5978
      %s5984 = scalar_lea.vmem %s67, 1
      %v5985 = vld [vmem:[%s5984] sm:$0x1]
      %s5986 = scalar_lea.vmem %s69, 1
      %v5987 = vld [vmem:[%s5986] sm:$0x1]
      %v5988 = vsel %vm1342, %v5983, 0.0
      %5989 = vadd.xlane.f32.xlu0 %v5988
      %v5990 = vpop.xlane.xlu0 %5989
      %v5991 = vmul.f32 %v5990, %v1922
      %v5992 = vsub.f32 %v5983, %v5991
      %v5993 = vmul.f32 %v5992, %v5992
      %v5994 = vsel %vm1342, %v5993, 0.0
      %5995 = vadd.xlane.f32.xlu0 %v5994
      %v5996 = vpop.xlane.xlu0 %5995
      %v5997 = vmul.f32 %v5996, %v1922
      %v5998 = vadd.f32 %v5997, 1e-05
      %v5999 = vrsqrt.pop %v5998
      %v6000 = vmul.f32 %v5992, %v5999
      %v6002 = vlaneseq
      %v6003 = vshrl.u32 %v6002, 7
      %v6004 = vsub.s32 0, %v6003
      %v6005 = vrot.slane %v5985, %v6004
      %v6007 = vmul.f32 %v6000, %v6005
      %v6009 = vlaneseq
      %v6010 = vshrl.u32 %v6009, 7
      %v6011 = vsub.s32 0, %v6010
      %v6012 = vrot.slane %v5987, %v6011
      %v6014 = vadd.f32 %v6007, %v6012
      %v6015 = vld [vmem:[%s75] sm:$0x1]
      %v6016 = vld [vmem:[%s77] sm:$0x1]
      %v6017 = vsel %vm1342, %v6014, 0.0
      %6018 = vadd.xlane.f32.xlu0 %v6017
      %v6019 = vpop.xlane.xlu0 %6018
      %v6020 = vmul.f32 %v6019, %v1922
      %v6021 = vsub.f32 %v6014, %v6020
      %v6022 = vmul.f32 %v6021, %v6021
      %v6023 = vsel %vm1342, %v6022, 0.0
      %6024 = vadd.xlane.f32.xlu0 %v6023
      %v6025 = vpop.xlane.xlu0 %6024
      %v6026 = vmul.f32 %v6025, %v1922
      %v6027 = vadd.f32 %v6026, 1e-05
      %v6028 = vrsqrt.pop %v6027
      %v6029 = vmul.f32 %v6021, %v6028
      %v6031 = vlaneseq
      %v6032 = vshrl.u32 %v6031, 7
      %v6033 = vsub.s32 0, %v6032
      %v6034 = vrot.slane %v6015, %v6033
      %v6036 = vmul.f32 %v6029, %v6034
      %v6038 = vlaneseq
      %v6039 = vshrl.u32 %v6038, 7
      %v6040 = vsub.s32 0, %v6039
      %v6041 = vrot.slane %v6016, %v6040
      %v6043 = vadd.f32 %v6036, %v6041
      %v6044 = vld [vmem:[%s79] sm:$0xf]
      %v6045 = vld [vmem:[%s79 + $0x4] sm:$0xf]
      %v6046 = vld [vmem:[%s79 + $0x8] sm:$0xf]
      %v6047 = vld [vmem:[%s79 + $0xc] sm:$0xf]
      %v6048 = vld [vmem:[%s81] sm:$0x1]
      %v6049 = vpack.c.bf16 %v6043, %v6043
      %v6051 = vlaneseq
      %v6052 = vshrl.u32 %v6051, 7
      %v6053 = vsub.s32 0, %v6052
      %v6054 = vrot.slane %v6048, %v6053
      %v6060 = vunpack.c.l.b16 %v6044
      %v6061 = vunpack.c.l.b16 %v6045
      %v6062 = vunpack.c.l.b16 %v6046
      %v6063 = vunpack.c.l.b16 %v6047
      %v6064 = vpack.c.b16 %v6061, %v6060
      %v6065 = vpack.c.b16 %v6063, %v6062
      %v6069 = vsel %vm1342, %v6049, 0
      %6071 = vmatprep.subr.bf16.mxu0 0
      %6072 = vmatpush1.bf16.msra.mxu0 %v6064
      %6073 = vmatprep.subr.bf16.mxu0 0
      %6074 = vmatpush1.bf16.msra.mxu0 %v6065
      %6075 = vmatprep.subr.bf16.mxu0 0
      %6076 = vmatpush1.bf16.msra.mxu0 0
      %6077 = vmatprep.subr.bf16.mxu0 0
      %6078 = vmatpush1.bf16.msra.mxu0 0
      %6079 = vmatprep.subr.bf16.mxu0 0
      %6080 = vmatpush1.bf16.msra.mxu0 0
      %6081 = vmatprep.subr.bf16.mxu0 0
      %6082 = vmatpush1.bf16.msra.mxu0 0
      %6083 = vmatprep.subr.bf16.mxu0 0
      %6084 = vmatpush1.bf16.msra.mxu0 0
      %6085 = vmatprep.subr.bf16.mxu0 0
      %6086 = vmatpush1.bf16.msra.mxu0 0
      %6087 = vmatprep.subr.bf16.mxu0 0
      %6088 = vmatpush1.bf16.msra.mxu0 0
      %6089 = vmatprep.subr.bf16.mxu0 0
      %6090 = vmatpush1.bf16.msra.mxu0 0
      %6091 = vmatprep.subr.bf16.mxu0 0
      %6092 = vmatpush1.bf16.msra.mxu0 0
      %6093 = vmatprep.subr.bf16.mxu0 0
      %6094 = vmatpush1.bf16.msra.mxu0 0
      %6095 = vmatprep.subr.bf16.mxu0 0
      %6096 = vmatpush1.bf16.msra.mxu0 0
      %6097 = vmatprep.subr.bf16.mxu0 0
      %6098 = vmatpush1.bf16.msra.mxu0 0
      %6099 = vmatprep.subr.bf16.mxu0 0
      %6100 = vmatpush1.bf16.msra.mxu0 0
      %6101 = vmatprep.subr.bf16.mxu0 0
      %6102 = vmatpush1.bf16.msra.mxu0 0
      %6103 = vmatprep.mubr.bf16.mxu0 0
      %6104 = vmatmul.mubr.bf16.gmra.mrb[0].mxu0 %v6069
      %v6105 = vpop.f32.mrb[0].mxu0
      %v6106 = vadd.f32 %v6054, %v6105
      %v6107 = vpop.f32.mrb[0].mxu0
      %v6108 = vpop.f32.mrb[0].mxu0
      %v6109 = vpop.f32.mrb[0].mxu0
      %6110 = vdwg.mxu0
      %6111 = vxpose.xlu0.b32.start [1/16] %v6106, 128
      %6112 = vxpose.xlu0.b32.cont [2/16] 0.0, 128
      %6113 = vxpose.xlu0.b32.cont [3/16] 0.0, 128
      %6114 = vxpose.xlu0.b32.cont [4/16] 0.0, 128
      %6115 = vxpose.xlu0.b32.cont [5/16] 0.0, 128
      %6116 = vxpose.xlu0.b32.cont [6/16] 0.0, 128
      %6117 = vxpose.xlu0.b32.cont [7/16] 0.0, 128
      %6118 = vxpose.xlu0.b32.cont [8/16] 0.0, 128
      %6119 = vxpose.xlu0.b32.cont [9/16] 0.0, 128
      %6120 = vxpose.xlu0.b32.cont [10/16] 0.0, 128
      %6121 = vxpose.xlu0.b32.cont [11/16] 0.0, 128
      %6122 = vxpose.xlu0.b32.cont [12/16] 0.0, 128
      %6123 = vxpose.xlu0.b32.cont [13/16] 0.0, 128
      %6124 = vxpose.xlu0.b32.cont [14/16] 0.0, 128
      %6125 = vxpose.xlu0.b32.cont [15/16] 0.0, 128
      %6126 = vxpose.xlu0.b32.end [16/16] 0.0, 128
      %v6127 = vpop.trf.xlu0
      %v6128 = vpop.trf.xlu0
      %v6129 = vpop.trf.xlu0
      %v6130 = vpop.trf.xlu0
      %v6131 = vpop.trf.xlu0
      %v6132 = vpop.trf.xlu0
      %v6133 = vpop.trf.xlu0
      %v6134 = vpop.trf.xlu0
      %v6135 = vpop.trf.xlu0
      %v6136 = vpop.trf.xlu0
      %v6137 = vpop.trf.xlu0
      %v6138 = vpop.trf.xlu0
      %v6139 = vpop.trf.xlu0
      %v6140 = vpop.trf.xlu0
      %v6141 = vpop.trf.xlu0
      %v6142 = vpop.trf.xlu0
      %6143 = vst.msk [vmem:[%s1272] sm:$0xff] %vm1395, %v6127
      %6144 = vst.msk [vmem:[%s1272 + $0x8] sm:$0xff] %vm1395, %v6128
      %6145 = vst.msk [vmem:[%s1272 + $0x10] sm:$0xff] %vm1395, %v6129
      %6146 = vst.msk [vmem:[%s1272 + $0x18] sm:$0xff] %vm1395, %v6130
      %p6147 = scmp.lt.s32.totalorder %s94, 1
      %s6148 = scalar_select %p6147, %s94, 1
      %s6149 = smul.addr %s6148, 4
      %s6150 = smul.addr %s6149, 8
      %s6151 = scalar_lea.vmem %s83, %s6150
      // Predicated region
      $region185: #{transformer_forward.1} parent=183 // pred_check
        %p6152 = pneg %p988
      $region186: #{transformer_forward.1} parent=183 // pred_check_branch
        %6154 = sbr.rel (%p6152) target = $region188
      $region187: #{transformer_forward.1} parent=183 // pred_region
        _
      $region188: #{transformer_forward.1} parent=183 // pred_fallthru
        _
    $region184: #{transformer_forward.1} parent=5 // pred_fallthru
      _
    %p6155 = scmp.le.s32.totalorder 2, %s89
    // Predicated region
    $region189: #{transformer_forward.1} parent=5 // pred_check
      %p6156 = pneg %p6155
    $region190: #{transformer_forward.1} parent=5 // pred_check_branch
      %6158 = sbr.rel (%p6156) target = $region192
    $region191: #{transformer_forward.1} parent=5 // pred_region
      %s6159 = ssub.s32 %s89, 2
      // Predicated region
      $region193: #{transformer_forward.1} parent=191 // pred_check
        %p6160 = pneg %p994
      $region194: #{transformer_forward.1} parent=191 // pred_check_branch
        %6162 = sbr.rel (%p6160) target = $region196
      $region195: #{transformer_forward.1} parent=191 // pred_region
        %p6163 = scmp.lt.s32.totalorder %s95, 1
        %s6164 = scalar_select %p6163, %s95, 1
        %s6165 = smul.addr %s6164, 4
        %s6166 = smul.addr %s6165, 8
        %s6167 = scalar_lea.vmem %s83, %s6166
      $region196: #{transformer_forward.1} parent=191 // pred_fallthru
        _
    $region192: #{transformer_forward.1} parent=5 // pred_fallthru
      _
  $region6: #{transformer_forward.1} parent=0 // loop_footer
    %s93 = sadd.s32 1, %s89
  $region7: #{transformer_forward.1} parent=0 // loop_footer_branch
    %88 = sbr.rel target = $region3
  $region8: #{transformer_forward.1} parent=0 // loop_exit
    _

</llo_original>
